<compile_context>
chip_gen: v7x
topology: tpu7x:2x2x1
jax: 0.10.0
libtpu: 0.0.40
codegen_flags: <defaults>
</compile_context>

<pallas_src>
import functools

import jax
import jax.numpy as jnp
from jax.experimental import pallas as pl
from jax.experimental.pallas import tpu as pltpu

# ---- scaled-down channel configuration (original counts in comments) -------
C_IN  = 64     # 2048  encoder channels
C_OUT = 32     # 256   per-branch / final output channels
C_MID = 16     # 64    branch-2/3/4 intermediate channels
RATES = (3, 6, 12)
R_MAX = max(RATES)
EPS   = 1e-5

COMPUTE_DTYPE = jnp.bfloat16


def _round_up(x, m):
    return (x + m - 1) // m * m


def _stem_rows(m):
    """Row padding + tile for the stem matmul.  Prefer tm=512 (~85% of HBM
    roofline) while keeping >=2 grid steps; cap at 512 so the double-buffered
    blocks stay inside v5e's 16 MiB scoped-VMEM default and v7x's 64 MiB."""
    for t in (512, 256, 128):
        if m > t:
            return _round_up(m, t), t
    m_pad = _round_up(m, 8)
    return m_pad, m_pad


def _final_tile(hw):
    """Spatial tile for the final 1x1 conv; allows 384 so the real 24x48
    (hw=1152) gets 3 steps/batch instead of 9."""
    for t in (512, 384, 256, 128):
        if hw % t == 0:
            return t
    return hw


# ---------------------------------------------------------------------------
# Kernel 1: fused "stem" matmul (branch-1 1x1 + the three branch 1x1 bottlenecks)
# ---------------------------------------------------------------------------
def _stem_kernel(x_ref, w_ref, b_ref, o_ref):
    """relu(x @ [W_b1|W_c1r3|W_c1r6|W_c1r12] + b) with ONE lane-dense store;
    the per-branch column slices are split in the wrapper (not in-kernel)."""
    acc = jnp.dot(x_ref[...], w_ref[...], preferred_element_type=jnp.float32)
    o_ref[...] = jnp.maximum(acc + b_ref[...], 0.0).astype(o_ref.dtype)


def stem_matmul(xf, w_cat, b_cat):
    m, k = xf.shape
    wtot = w_cat.shape[1]
    wpad = _round_up(wtot, 128)                   # lane-dense output width
    m_pad, tm = _stem_rows(m)
    if m_pad != m:                                # zero-padded tail rows
        xf = jnp.pad(xf, ((0, m_pad - m), (0, 0)))
    if wpad != wtot:                              # zero-padded tail columns
        w_cat = jnp.pad(w_cat, ((0, 0), (0, wpad - wtot)))
        b_cat = jnp.pad(b_cat, ((0, 0), (0, wpad - wtot)))

    out = pl.pallas_call(
        _stem_kernel,
        out_shape=jax.ShapeDtypeStruct((m_pad, wpad), COMPUTE_DTYPE),
        grid_spec=pltpu.PrefetchScalarGridSpec(
            num_scalar_prefetch=0,
            grid=(m_pad // tm,),
            in_specs=[
                pl.BlockSpec((tm, k), lambda i: (i, 0)),
                pl.BlockSpec((k, wpad), lambda i: (0, 0)),
                pl.BlockSpec((1, wpad), lambda i: (0, 0)),
            ],
            out_specs=pl.BlockSpec((tm, wpad), lambda i: (i, 0)),
        ),
        compiler_params=pltpu.CompilerParams(
            dimension_semantics=("parallel",)),
    )(xf, w_cat, b_cat)
    return out[:m, :wtot]


# ---------------------------------------------------------------------------
# Kernel 2: merged per-rate branch chains  dilated3x3 -> dilated3x3 -> 1x1
# ---------------------------------------------------------------------------
def _branch_kernel(y1_ref, w2_ref, b2_ref, w3_ref, b3_ref, w4_ref, b4_ref,
                   o_ref, pad_ref, col_ref, *, rates, h, w, w0, cmid):
    """grid = (rate, batch).  All intermediates stay in VMEM.  Each dilated
    3x3 conv is im2col'd into a (hw, 9*cmid) buffer and computed as ONE MXU
    matmul (taps folded into K); accumulation happens inside the MXU pass."""
    hw = h * w
    r_max = max(rates)
    r_idx = pl.program_id(0)

    # Scratch persists across grid steps.  The image interior is fully
    # overwritten every step, so zero-filling on rate-0 steps only keeps the
    # halo zero for every later (rate, batch) step.  The rate axis is
    # "arbitrary" (sequential per batch, never sharded), so on any core the
    # rate-0 step of a batch runs before its rate-1/2 steps.
    @pl.when(r_idx == 0)
    def _zero_halo():
        pad_ref[...] = jnp.zeros_like(pad_ref)

    def run(rate):
        # place the bottleneck image at a sublane-aligned offset (w0 % 8 == 0)
        pad_ref[r_max:r_max + h, w0:w0 + w, :] = y1_ref[0, 0].astype(pad_ref.dtype)

        def dilated_conv(wt_ref, bias_ref):
            # im2col: 9 halo-window copies, then ONE dot with K = 9*cmid.
            for t in range(9):
                dh = r_max + (t // 3 - 1) * rate
                dw = w0 + (t % 3 - 1) * rate
                col_ref[:, t * cmid:(t + 1) * cmid] = (
                    pad_ref[dh:dh + h, dw:dw + w, :].reshape(hw, cmid))
            acc = jnp.dot(col_ref[...], wt_ref[0],
                          preferred_element_type=jnp.float32)
            return jnp.maximum(acc + bias_ref[0], 0.0)        # (hw, cmid) f32

        y2 = dilated_conv(w2_ref, b2_ref)
        pad_ref[r_max:r_max + h, w0:w0 + w, :] = (
            y2.reshape(h, w, cmid).astype(pad_ref.dtype))
        y3 = dilated_conv(w3_ref, b3_ref)

        y4 = jnp.dot(y3.astype(w4_ref.dtype), w4_ref[0],
                     preferred_element_type=jnp.float32)
        o_ref[0, 0] = jnp.maximum(y4 + b4_ref[0], 0.0).astype(o_ref.dtype)

    for kk, rate in enumerate(rates):
        @pl.when(r_idx == kk)
        def _(rate=rate):                 # static rate per pl.when branch
            run(rate)


def branch_chain_all(y1_stack, bp, rates):
    nr, n, h, w, cmid = y1_stack.shape
    cout = bp["w4"].shape[-1]
    hw = h * w
    # W must be a multiple of 8 so the in-kernel (h,w,c)<->(hw,c) reshapes are
    # pure retilings (true for this example and the real 24x48).
    assert w % 8 == 0, "W must be a multiple of 8"
    w0 = _round_up(max(rates), 8)                       # aligned left halo
    hp = h + 2 * max(rates)
    wp = _round_up(w0 + w + max(rates), 8)

    kernel = functools.partial(_branch_kernel, rates=rates, h=h, w=w,
                               w0=w0, cmid=cmid)
    return pl.pallas_call(
        kernel,
        out_shape=jax.ShapeDtypeStruct((n, nr, hw, cout), COMPUTE_DTYPE),
        grid_spec=pltpu.PrefetchScalarGridSpec(
            num_scalar_prefetch=0,
            grid=(nr, n),
            in_specs=[
                pl.BlockSpec((1, 1, h, w, cmid), lambda r, b: (r, b, 0, 0, 0)),
                pl.BlockSpec((1, 9 * cmid, cmid), lambda r, b: (r, 0, 0)),
                pl.BlockSpec((1, 1, cmid), lambda r, b: (r, 0, 0)),
                pl.BlockSpec((1, 9 * cmid, cmid), lambda r, b: (r, 0, 0)),
                pl.BlockSpec((1, 1, cmid), lambda r, b: (r, 0, 0)),
                pl.BlockSpec((1, cmid, cout), lambda r, b: (r, 0, 0)),
                pl.BlockSpec((1, 1, cout), lambda r, b: (r, 0, 0)),
            ],
            out_specs=pl.BlockSpec((1, 1, hw, cout), lambda r, b: (b, r, 0, 0)),
            scratch_shapes=[
                pltpu.VMEM((hp, wp, cmid), COMPUTE_DTYPE),      # halo-padded img
                pltpu.VMEM((hw, 9 * cmid), COMPUTE_DTYPE),      # im2col buffer
            ],
        ),
        compiler_params=pltpu.CompilerParams(
            dimension_semantics=("arbitrary", "parallel")),
    )(y1_stack, bp["w2"], bp["b2"], bp["w3"], bp["b3"], bp["w4"], bp["b4"])


# ---------------------------------------------------------------------------
# Kernel 3: final fused 1x1 conv over the (never materialized) concat
# ---------------------------------------------------------------------------
def _final_kernel(b1_ref, y_ref, w_ref, bias_ref, o_ref, *, nr):
    """relu(b1 @ Wf_0 + sum_r y_r @ Wf_{1+r} + per-batch bias); the bias
    already contains branch-5's (spatially constant) contribution."""
    acc = jnp.dot(b1_ref[0], w_ref[0], preferred_element_type=jnp.float32)
    for r in range(nr):
        acc += jnp.dot(y_ref[0, r], w_ref[1 + r],
                       preferred_element_type=jnp.float32)
    acc += bias_ref[0]
    o_ref[0] = jnp.maximum(acc, 0.0).astype(o_ref.dtype)


def final_conv(b1, y234, wf_stack, bias_n1c):
    n, hw, cout = b1.shape
    nr = y234.shape[1]
    ts = _final_tile(hw)
    return pl.pallas_call(
        functools.partial(_final_kernel, nr=nr),
        out_shape=jax.ShapeDtypeStruct((n, hw, cout), jnp.float32),
        grid_spec=pltpu.PrefetchScalarGridSpec(
            num_scalar_prefetch=0,
            grid=(n, hw // ts),
            in_specs=[
                pl.BlockSpec((1, ts, cout), lambda b, i: (b, i, 0)),
                pl.BlockSpec((1, nr, ts, cout), lambda b, i: (b, 0, i, 0)),
                pl.BlockSpec((1 + nr, cout, cout), lambda b, i: (0, 0, 0)),
                pl.BlockSpec((1, 1, cout), lambda b, i: (b, 0, 0)),
            ],
            out_specs=pl.BlockSpec((1, ts, cout), lambda b, i: (b, i, 0)),
        ),
        compiler_params=pltpu.CompilerParams(
            dimension_semantics=("parallel", "parallel")),
    )(b1, y234, wf_stack, bias_n1c)


# ---------------------------------------------------------------------------
# Parameter construction (deterministic, synthetic) + conv/BN folding + packing
# ---------------------------------------------------------------------------
def conv_init(key, cout, cin, k):
    kw, kb = jax.random.split(key)
    fan_in = cin * k * k
    bound = (6.0 / fan_in) ** 0.5                 # kaiming_uniform-style range
    w = jax.random.uniform(kw, (cout, cin, k, k), jnp.float32, -bound, bound)
    b = 0.1 * jax.random.uniform(kb, (cout,), jnp.float32, -bound, bound)
    return w, b


def bn_init(key, c):
    k1, k2, k3, k4 = jax.random.split(key, 4)
    gamma = jax.random.uniform(k1, (c,), jnp.float32, 0.5, 1.5)
    beta = 0.1 * jax.random.normal(k2, (c,), jnp.float32)
    mean = 0.1 * jax.random.normal(k3, (c,), jnp.float32)
    var = jax.random.uniform(k4, (c,), jnp.float32, 0.5, 1.5)
    return gamma, beta, mean, var


def fold_bn_1x1(w, b, bn):
    """(cout,cin,1,1) conv + BN -> (cin,cout) weight, (cout,) bias."""
    gamma, beta, mean, var = bn
    scale = gamma / jnp.sqrt(var + EPS)
    w2 = w[:, :, 0, 0].T * scale[None, :]
    b2 = (b - mean) * scale + beta
    return w2, b2


def fold_bn_3x3(w, b, bn):
    """(cout,cin,3,3) conv + BN -> (9*cin,cout) tap-major weight, (cout,) bias.
    Row order t*cin + ci matches the kernel's im2col column order."""
    gamma, beta, mean, var = bn
    scale = gamma / jnp.sqrt(var + EPS)
    cout, cin = w.shape[0], w.shape[1]
    w_taps = jnp.transpose(w, (2, 3, 1, 0)).reshape(9, cin, cout)
    w_taps = (w_taps * scale[None, None, :]).reshape(9 * cin, cout)
    b2 = (b - mean) * scale + beta
    return w_taps, b2


def init_easpp_params(key):
    keys = iter(jax.random.split(key, 64))
    w_b1, b_b1 = fold_bn_1x1(*conv_init(next(keys), C_OUT, C_IN, 1),
                             bn_init(next(keys), C_OUT))
    c1_w, c1_b = [], []
    w2s, b2s, w3s, b3s, w4s, b4s = [], [], [], [], [], []
    for _rate in RATES:
        w_c1, b_c1 = fold_bn_1x1(*conv_init(next(keys), C_MID, C_IN, 1),
                                 bn_init(next(keys), C_MID))
        w_c2, b_c2 = fold_bn_3x3(*conv_init(next(keys), C_MID, C_MID, 3),
                                 bn_init(next(keys), C_MID))
        w_c3, b_c3 = fold_bn_3x3(*conv_init(next(keys), C_MID, C_MID, 3),
                                 bn_init(next(keys), C_MID))
        w_c4, b_c4 = fold_bn_1x1(*conv_init(next(keys), C_OUT, C_MID, 1),
                                 bn_init(next(keys), C_OUT))
        c1_w.append(w_c1)
        c1_b.append(b_c1)
        w2s.append(w_c2); b2s.append(b_c2.reshape(1, C_MID))
        w3s.append(w_c3); b3s.append(b_c3.reshape(1, C_MID))
        w4s.append(w_c4); b4s.append(b_c4.reshape(1, C_OUT))
    w_b5, b_b5 = fold_bn_1x1(*conv_init(next(keys), C_OUT, C_IN, 1),
                             bn_init(next(keys), C_OUT))
    w_fin, b_fin = fold_bn_1x1(*conv_init(next(keys), C_OUT, 5 * C_OUT, 1),
                               bn_init(next(keys), C_OUT))

    # ---- pack for the fused kernels ----
    stem_w = jnp.concatenate([w_b1] + c1_w, axis=1)      # (C_IN, C_OUT+3*C_MID)
    stem_b = jnp.concatenate([b_b1] + c1_b, axis=0)
    wf_blocks = [w_fin[i * C_OUT:(i + 1) * C_OUT] for i in range(5)]
    return {
        "stem_w": stem_w.astype(COMPUTE_DTYPE),
        "stem_b": stem_b.reshape(1, -1),                 # f32 bias
        "branch": {
            "w2": jnp.stack(w2s).astype(COMPUTE_DTYPE),  # (3, 9*C_MID, C_MID)
            "b2": jnp.stack(b2s),                        # (3, 1, C_MID) f32
            "w3": jnp.stack(w3s).astype(COMPUTE_DTYPE),
            "b3": jnp.stack(b3s),
            "w4": jnp.stack(w4s).astype(COMPUTE_DTYPE),  # (3, C_MID, C_OUT)
            "b4": jnp.stack(b4s),                        # (3, 1, C_OUT) f32
        },
        "w5": w_b5, "b5": b_b5,                          # branch-5 (tiny), f32
        "wf_stack": jnp.stack(wf_blocks[:4]).astype(COMPUTE_DTYPE),
        "wf5": wf_blocks[4],                             # f32
        "bf": b_fin,                                     # f32
    }


# ---------------------------------------------------------------------------
# eASPP forward pass
# ---------------------------------------------------------------------------
def easpp_forward(params, x_nchw):
    n, c, h, w = x_nchw.shape
    hw = h * w
    # bf16 BEFORE the layout transpose: halves the HBM traffic of the largest
    # tensor on the mem-bound critical path.
    # TODO(synk): accept NHWC encoder features directly to drop this transpose.
    x_nhwc = jnp.transpose(x_nchw.astype(COMPUTE_DTYPE), (0, 2, 3, 1))
    xf = x_nhwc.reshape(n * hw, c)

    # fused stem: branch-1 + the three branch-{2,3,4} 1x1 bottlenecks in one
    # MXU pass over the encoder features, lane-dense output split here (tiny).
    stem_out = stem_matmul(xf, params["stem_w"], params["stem_b"])
    b1 = stem_out[:, :C_OUT].reshape(n, hw, C_OUT)
    y1 = stem_out[:, C_OUT:].reshape(n, h, w, len(RATES), C_MID)
    y1_stack = jnp.moveaxis(y1, 3, 0)                 # (3, N, H, W, C_MID)

    # branches 2-4: ONE pallas_call over grid=(rates, batch); fully fused
    # dilated chains, intermediates never hit HBM, taps folded into MXU-K.
    y234 = branch_chain_all(y1_stack, params["branch"], RATES)  # (N,3,HW,C_OUT)

    # branch 5: global avg pool -> 1x1+BN+ReLU (tiny, left to XLA).  Bilinear
    # upsample of a 1x1 map is an exact constant broadcast, so its contribution
    # to the final 1x1 conv is folded into a per-batch bias.
    pooled = jnp.mean(x_nhwc, axis=(1, 2), dtype=jnp.float32)   # (N, C_IN)
    z5 = jnp.maximum(pooled @ params["w5"] + params["b5"], 0.0)
    bias_nc = (z5 @ params["wf5"] + params["bf"]).astype(jnp.float32)
    # TODO(synk): PyTorch upsamples branch 5 to a fixed (24,48); here the
    # (exact) constant broadcast targets the actual (H,W) of the input.

    # final fused 1x1 conv: relu(b1@Wf0 + sum_r y_r@Wf_{1+r} + bias); the
    # 1280-channel concat is never materialized in HBM.
    out = final_conv(b1, y234, params["wf_stack"], bias_nc.reshape(n, 1, C_OUT))
    out = out.reshape(n, h, w, C_OUT)
    return jnp.transpose(out, (0, 3, 1, 2))           # NHWC -> NCHW


# ---------------------------------------------------------------------------
if __name__ == "__main__":
    key = jax.random.PRNGKey(0)
    kp, kx = jax.random.split(key)
    params = init_easpp_params(kp)

    N, H, W = 2, 8, 16
    x = jax.random.normal(kx, (N, C_IN, H, W), jnp.float32)  # NCHW like PyTorch

    fwd = jax.jit(easpp_forward)
    out = jax.block_until_ready(fwd(params, x))

    assert out.shape == (N, C_OUT, H, W), out.shape
    assert bool(jnp.all(jnp.isfinite(out)))
    print("KERNEL_OK")
</pallas_src>

<mosaic_0001>
module attributes {stable_mosaic.version = 11 : i64} {
  func.func @_stem_kernel(%arg0: i32, %arg1: memref<128x64xbf16, #tpu.memory_space<vmem>>, %arg2: memref<64x128xbf16, #tpu.memory_space<vmem>>, %arg3: memref<1x128xf32, #tpu.memory_space<vmem>>, %arg4: memref<128x128xbf16, #tpu.memory_space<vmem>>) attributes {dimension_semantics = [#tpu.dimension_semantics<parallel>], iteration_bounds = array<i64: 2>, scalar_prefetch = 0 : i64, scratch_operands = 0 : i64, tpu.core_type = #tpu.core_type<tc>, window_params = [{transform_indices = @transform_0, window_bounds = array<i64: 128, 64>}, {pipeline_mode = #tpu.pipeline_mode<synchronous>, transform_indices = @transform_1, window_bounds = array<i64: 64, 128>}, {pipeline_mode = #tpu.pipeline_mode<synchronous>, transform_indices = @transform_2, window_bounds = array<i64: 1, 128>}, {transform_indices = @transform_3, window_bounds = array<i64: 128, 128>}]} {
    %c0 = arith.constant 0 : index
    %c0_0 = arith.constant 0 : index
    %0 = vector.load %arg1[%c0, %c0_0] : memref<128x64xbf16, #tpu.memory_space<vmem>>, vector<128x64xbf16>
    %c0_1 = arith.constant 0 : index
    %c0_2 = arith.constant 0 : index
    %1 = vector.load %arg2[%c0_1, %c0_2] : memref<64x128xbf16, #tpu.memory_space<vmem>>, vector<64x128xbf16>
    %cst = arith.constant dense<0.000000e+00> : vector<128x128xf32>
    %2 = tpu.matmul %0, %1, %cst {dimension_numbers = #tpu.dot_dimension_numbers<[1], [0], [0], [1], [0, 0, 1, 1], [], []>} : vector<128x64xbf16>, vector<64x128xbf16>, vector<128x128xf32> -> vector<128x128xf32>
    %c0_3 = arith.constant 0 : index
    %c0_4 = arith.constant 0 : index
    %3 = vector.load %arg3[%c0_3, %c0_4] : memref<1x128xf32, #tpu.memory_space<vmem>>, vector<1x128xf32>
    %4 = vector.broadcast %3 : vector<1x128xf32> to vector<128x128xf32>
    %5 = arith.addf %2, %4 : vector<128x128xf32>
    %cst_5 = arith.constant 0.000000e+00 : f32
    %6 = vector.broadcast %cst_5 : f32 to vector<128x128xf32>
    %7 = arith.maximumf %5, %6 : vector<128x128xf32>
    %8 = arith.truncf %7 : vector<128x128xf32> to vector<128x128xbf16>
    %c0_6 = arith.constant 0 : index
    %c0_7 = arith.constant 0 : index
    %9 = vector.load %arg4[%c0_6, %c0_7] : memref<128x128xbf16, #tpu.memory_space<vmem>>, vector<128x128xbf16>
    tpu.vector_store %arg4[%c0_6, %c0_7], %8 {strides = array<i32>} : memref<128x128xbf16, #tpu.memory_space<vmem>>, vector<128x128xbf16>,
    return
  }
  func.func @transform_0(%arg0: i32) -> (i32, i32) {
    %c0_i32 = arith.constant 0 : i32
    %c0_i32_0 = arith.constant 0 : i32
    return %arg0, %c0_i32 : i32, i32
  }
  func.func @transform_1(%arg0: i32) -> (i32, i32) {
    %c0_i32 = arith.constant 0 : i32
    %c0_i32_0 = arith.constant 0 : i32
    %c0_i32_1 = arith.constant 0 : i32
    return %c0_i32, %c0_i32_0 : i32, i32
  }
  func.func @transform_2(%arg0: i32) -> (i32, i32) {
    %c0_i32 = arith.constant 0 : i32
    %c0_i32_0 = arith.constant 0 : i32
    %c0_i32_1 = arith.constant 0 : i32
    return %c0_i32, %c0_i32_0 : i32, i32
  }
  func.func @transform_3(%arg0: i32) -> (i32, i32) {
    %c0_i32 = arith.constant 0 : i32
    %c0_i32_0 = arith.constant 0 : i32
    return %arg0, %c0_i32 : i32, i32
  }
}

module attributes {stable_mosaic.version = 11 : i64} {
  func.func @_branch_kernel(%arg0: i32, %arg1: i32, %arg2: memref<1x1x8x16x16xbf16, #tpu.memory_space<vmem>>, %arg3: memref<1x144x16xbf16, #tpu.memory_space<vmem>>, %arg4: memref<1x1x16xf32, #tpu.memory_space<vmem>>, %arg5: memref<1x144x16xbf16, #tpu.memory_space<vmem>>, %arg6: memref<1x1x16xf32, #tpu.memory_space<vmem>>, %arg7: memref<1x16x32xbf16, #tpu.memory_space<vmem>>, %arg8: memref<1x1x32xf32, #tpu.memory_space<vmem>>, %arg9: memref<1x1x128x32xbf16, #tpu.memory_space<vmem>>, %arg10: memref<32x48x16xbf16, #tpu.memory_space<vmem>>, %arg11: memref<128x144xbf16, #tpu.memory_space<vmem>>) attributes {dimension_semantics = [#tpu.dimension_semantics<arbitrary>, #tpu.dimension_semantics<parallel>], iteration_bounds = array<i64: 3, 2>, scalar_prefetch = 0 : i64, scratch_operands = 2 : i64, tpu.core_type = #tpu.core_type<tc>, window_params = [{transform_indices = @transform_0, window_bounds = array<i64: 1, 1, 8, 16, 16>}, {transform_indices = @transform_1, window_bounds = array<i64: 1, 144, 16>}, {transform_indices = @transform_2, window_bounds = array<i64: 1, 1, 16>}, {transform_indices = @transform_3, window_bounds = array<i64: 1, 144, 16>}, {transform_indices = @transform_4, window_bounds = array<i64: 1, 1, 16>}, {transform_indices = @transform_5, window_bounds = array<i64: 1, 16, 32>}, {transform_indices = @transform_6, window_bounds = array<i64: 1, 1, 32>}, {transform_indices = @transform_7, window_bounds = array<i64: 1, 1, 128, 32>}]} {
    %c0_i32 = arith.constant 0 : i32
    %0 = arith.cmpi eq, %arg0, %c0_i32 : i32
    %1 = arith.extui %0 : i1 to i32
    %c0_i32_0 = arith.constant 0 : i32
    %2 = arith.cmpi ne, %1, %c0_i32_0 : i32
    scf.if %2 {
      %cst = arith.constant 0.000000e+00 : bf16
      %12 = vector.broadcast %cst : bf16 to vector<32x48x16xbf16>
      %c0 = arith.constant 0 : index
      %c0_5 = arith.constant 0 : index
      %c0_6 = arith.constant 0 : index
      %13 = vector.load %arg10[%c0, %c0_5, %c0_6] : memref<32x48x16xbf16, #tpu.memory_space<vmem>>, vector<32x48x16xbf16>
      tpu.vector_store %arg10[%c0, %c0_5, %c0_6], %12 {strides = array<i32>} : memref<32x48x16xbf16, #tpu.memory_space<vmem>>, vector<32x48x16xbf16>,
    } else {
    }
    %c0_i32_1 = arith.constant 0 : i32
    %3 = arith.cmpi eq, %arg0, %c0_i32_1 : i32
    %4 = arith.extui %3 : i1 to i32
    %c0_i32_2 = arith.constant 0 : i32
    %5 = arith.cmpi ne, %4, %c0_i32_2 : i32
    scf.if %5 {
      %c0 = arith.constant 0 : index
      %c0_5 = arith.constant 0 : index
      %c0_6 = arith.constant 0 : index
      %c0_7 = arith.constant 0 : index
      %c0_8 = arith.constant 0 : index
      %12 = vector.load %arg2[%c0, %c0_5, %c0_6, %c0_7, %c0_8] : memref<1x1x8x16x16xbf16, #tpu.memory_space<vmem>>, vector<1x1x8x16x16xbf16>
      %13 = vector.shape_cast %12 : vector<1x1x8x16x16xbf16> to vector<8x16x16xbf16>
      %c12 = arith.constant 12 : index
      %c16 = arith.constant 16 : index
      %c0_9 = arith.constant 0 : index
      %14 = vector.load %arg10[%c12, %c16, %c0_9] : memref<32x48x16xbf16, #tpu.memory_space<vmem>>, vector<8x16x16xbf16>
      tpu.vector_store %arg10[%c12, %c16, %c0_9], %13 {strides = array<i32>} : memref<32x48x16xbf16, #tpu.memory_space<vmem>>, vector<8x16x16xbf16>,
      %c9 = arith.constant 9 : index
      %c13 = arith.constant 13 : index
      %c0_10 = arith.constant 0 : index
      %15 = vector.load %arg10[%c9, %c13, %c0_10] : memref<32x48x16xbf16, #tpu.memory_space<vmem>>, vector<8x16x16xbf16>
      %16 = vector.shape_cast %15 : vector<8x16x16xbf16> to vector<128x16xbf16>
      %c0_11 = arith.constant 0 : index
      %c0_12 = arith.constant 0 : index
      %17 = vector.load %arg11[%c0_11, %c0_12] : memref<128x144xbf16, #tpu.memory_space<vmem>>, vector<128x16xbf16>
      tpu.vector_store %arg11[%c0_11, %c0_12], %16 {strides = array<i32>} : memref<128x144xbf16, #tpu.memory_space<vmem>>, vector<128x16xbf16>,
      %c9_13 = arith.constant 9 : index
      %c16_14 = arith.constant 16 : index
      %c0_15 = arith.constant 0 : index
      %18 = vector.load %arg10[%c9_13, %c16_14, %c0_15] : memref<32x48x16xbf16, #tpu.memory_space<vmem>>, vector<8x16x16xbf16>
      %19 = vector.shape_cast %18 : vector<8x16x16xbf16> to vector<128x16xbf16>
      %c0_16 = arith.constant 0 : index
      %c16_17 = arith.constant 16 : index
      %20 = vector.load %arg11[%c0_16, %c16_17] : memref<128x144xbf16, #tpu.memory_space<vmem>>, vector<128x16xbf16>
      tpu.vector_store %arg11[%c0_16, %c16_17], %19 {strides = array<i32>} : memref<128x144xbf16, #tpu.memory_space<vmem>>, vector<128x16xbf16>,
      %c9_18 = arith.constant 9 : index
      %c19 = arith.constant 19 : index
      %c0_19 = arith.constant 0 : index
      %21 = vector.load %arg10[%c9_18, %c19, %c0_19] : memref<32x48x16xbf16, #tpu.memory_space<vmem>>, vector<8x16x16xbf16>
      %22 = vector.shape_cast %21 : vector<8x16x16xbf16> to vector<128x16xbf16>
      %c0_20 = arith.constant 0 : index
      %c32 = arith.constant 32 : index
      %23 = vector.load %arg11[%c0_20, %c32] : memref<128x144xbf16, #tpu.memory_space<vmem>>, vector<128x16xbf16>
      tpu.vector_store %arg11[%c0_20, %c32], %22 {strides = array<i32>} : memref<128x144xbf16, #tpu.memory_space<vmem>>, vector<128x16xbf16>,
      %c12_21 = arith.constant 12 : index
      %c13_22 = arith.constant 13 : index
      %c0_23 = arith.constant 0 : index
      %24 = vector.load %arg10[%c12_21, %c13_22, %c0_23] : memref<32x48x16xbf16, #tpu.memory_space<vmem>>, vector<8x16x16xbf16>
      %25 = vector.shape_cast %24 : vector<8x16x16xbf16> to vector<128x16xbf16>
      %c0_24 = arith.constant 0 : index
      %c48 = arith.constant 48 : index
      %26 = vector.load %arg11[%c0_24, %c48] : memref<128x144xbf16, #tpu.memory_space<vmem>>, vector<128x16xbf16>
      tpu.vector_store %arg11[%c0_24, %c48], %25 {strides = array<i32>} : memref<128x144xbf16, #tpu.memory_space<vmem>>, vector<128x16xbf16>,
      %c12_25 = arith.constant 12 : index
      %c16_26 = arith.constant 16 : index
      %c0_27 = arith.constant 0 : index
      %27 = vector.load %arg10[%c12_25, %c16_26, %c0_27] : memref<32x48x16xbf16, #tpu.memory_space<vmem>>, vector<8x16x16xbf16>
      %28 = vector.shape_cast %27 : vector<8x16x16xbf16> to vector<128x16xbf16>
      %c0_28 = arith.constant 0 : index
      %c64 = arith.constant 64 : index
      %29 = vector.load %arg11[%c0_28, %c64] : memref<128x144xbf16, #tpu.memory_space<vmem>>, vector<128x16xbf16>
      tpu.vector_store %arg11[%c0_28, %c64], %28 {strides = array<i32>} : memref<128x144xbf16, #tpu.memory_space<vmem>>, vector<128x16xbf16>,
      %c12_29 = arith.constant 12 : index
      %c19_30 = arith.constant 19 : index
      %c0_31 = arith.constant 0 : index
      %30 = vector.load %arg10[%c12_29, %c19_30, %c0_31] : memref<32x48x16xbf16, #tpu.memory_space<vmem>>, vector<8x16x16xbf16>
      %31 = vector.shape_cast %30 : vector<8x16x16xbf16> to vector<128x16xbf16>
      %c0_32 = arith.constant 0 : index
      %c80 = arith.constant 80 : index
      %32 = vector.load %arg11[%c0_32, %c80] : memref<128x144xbf16, #tpu.memory_space<vmem>>, vector<128x16xbf16>
      tpu.vector_store %arg11[%c0_32, %c80], %31 {strides = array<i32>} : memref<128x144xbf16, #tpu.memory_space<vmem>>, vector<128x16xbf16>,
      %c15 = arith.constant 15 : index
      %c13_33 = arith.constant 13 : index
      %c0_34 = arith.constant 0 : index
      %33 = vector.load %arg10[%c15, %c13_33, %c0_34] : memref<32x48x16xbf16, #tpu.memory_space<vmem>>, vector<8x16x16xbf16>
      %34 = vector.shape_cast %33 : vector<8x16x16xbf16> to vector<128x16xbf16>
      %c0_35 = arith.constant 0 : index
      %c96 = arith.constant 96 : index
      %35 = vector.load %arg11[%c0_35, %c96] : memref<128x144xbf16, #tpu.memory_space<vmem>>, vector<128x16xbf16>
      tpu.vector_store %arg11[%c0_35, %c96], %34 {strides = array<i32>} : memref<128x144xbf16, #tpu.memory_space<vmem>>, vector<128x16xbf16>,
      %c15_36 = arith.constant 15 : index
      %c16_37 = arith.constant 16 : index
      %c0_38 = arith.constant 0 : index
      %36 = vector.load %arg10[%c15_36, %c16_37, %c0_38] : memref<32x48x16xbf16, #tpu.memory_space<vmem>>, vector<8x16x16xbf16>
      %37 = vector.shape_cast %36 : vector<8x16x16xbf16> to vector<128x16xbf16>
      %c0_39 = arith.constant 0 : index
      %c112 = arith.constant 112 : index
      %38 = vector.load %arg11[%c0_39, %c112] : memref<128x144xbf16, #tpu.memory_space<vmem>>, vector<128x16xbf16>
      tpu.vector_store %arg11[%c0_39, %c112], %37 {strides = array<i32>} : memref<128x144xbf16, #tpu.memory_space<vmem>>, vector<128x16xbf16>,
      %c15_40 = arith.constant 15 : index
      %c19_41 = arith.constant 19 : index
      %c0_42 = arith.constant 0 : index
      %39 = vector.load %arg10[%c15_40, %c19_41, %c0_42] : memref<32x48x16xbf16, #tpu.memory_space<vmem>>, vector<8x16x16xbf16>
      %40 = vector.shape_cast %39 : vector<8x16x16xbf16> to vector<128x16xbf16>
      %c0_43 = arith.constant 0 : index
      %c128 = arith.constant 128 : index
      %41 = vector.load %arg11[%c0_43, %c128] : memref<128x144xbf16, #tpu.memory_space<vmem>>, vector<128x16xbf16>
      tpu.vector_store %arg11[%c0_43, %c128], %40 {strides = array<i32>} : memref<128x144xbf16, #tpu.memory_space<vmem>>, vector<128x16xbf16>,
      %c0_44 = arith.constant 0 : index
      %c0_45 = arith.constant 0 : index
      %42 = vector.load %arg11[%c0_44, %c0_45] : memref<128x144xbf16, #tpu.memory_space<vmem>>, vector<128x144xbf16>
      %c0_46 = arith.constant 0 : index
      %c0_47 = arith.constant 0 : index
      %c0_48 = arith.constant 0 : index
      %43 = vector.load %arg3[%c0_46, %c0_47, %c0_48] : memref<1x144x16xbf16, #tpu.memory_space<vmem>>, vector<1x144x16xbf16>
      %44 = vector.shape_cast %43 : vector<1x144x16xbf16> to vector<144x16xbf16>
      %cst = arith.constant dense<0.000000e+00> : vector<128x16xf32>
      %45 = tpu.matmul %42, %44, %cst {dimension_numbers = #tpu.dot_dimension_numbers<[1], [0], [0], [1], [0, 0, 1, 1], [], []>} : vector<128x144xbf16>, vector<144x16xbf16>, vector<128x16xf32> -> vector<128x16xf32>
      %c0_49 = arith.constant 0 : index
      %c0_50 = arith.constant 0 : index
      %c0_51 = arith.constant 0 : index
      %46 = vector.load %arg4[%c0_49, %c0_50, %c0_51] : memref<1x1x16xf32, #tpu.memory_space<vmem>>, vector<1x1x16xf32>
      %47 = vector.shape_cast %46 : vector<1x1x16xf32> to vector<1x16xf32>
      %48 = vector.broadcast %47 : vector<1x16xf32> to vector<128x16xf32>
      %49 = arith.addf %45, %48 : vector<128x16xf32>
      %cst_52 = arith.constant 0.000000e+00 : f32
      %50 = vector.broadcast %cst_52 : f32 to vector<128x16xf32>
      %51 = arith.maximumf %49, %50 : vector<128x16xf32>
      %52 = vector.shape_cast %51 : vector<128x16xf32> to vector<8x16x16xf32>
      %53 = arith.truncf %52 : vector<8x16x16xf32> to vector<8x16x16xbf16>
      %c12_53 = arith.constant 12 : index
      %c16_54 = arith.constant 16 : index
      %c0_55 = arith.constant 0 : index
      %54 = vector.load %arg10[%c12_53, %c16_54, %c0_55] : memref<32x48x16xbf16, #tpu.memory_space<vmem>>, vector<8x16x16xbf16>
      tpu.vector_store %arg10[%c12_53, %c16_54, %c0_55], %53 {strides = array<i32>} : memref<32x48x16xbf16, #tpu.memory_space<vmem>>, vector<8x16x16xbf16>,
      %c9_56 = arith.constant 9 : index
      %c13_57 = arith.constant 13 : index
      %c0_58 = arith.constant 0 : index
      %55 = vector.load %arg10[%c9_56, %c13_57, %c0_58] : memref<32x48x16xbf16, #tpu.memory_space<vmem>>, vector<8x16x16xbf16>
      %56 = vector.shape_cast %55 : vector<8x16x16xbf16> to vector<128x16xbf16>
      %c0_59 = arith.constant 0 : index
      %c0_60 = arith.constant 0 : index
      %57 = vector.load %arg11[%c0_59, %c0_60] : memref<128x144xbf16, #tpu.memory_space<vmem>>, vector<128x16xbf16>
      tpu.vector_store %arg11[%c0_59, %c0_60], %56 {strides = array<i32>} : memref<128x144xbf16, #tpu.memory_space<vmem>>, vector<128x16xbf16>,
      %c9_61 = arith.constant 9 : index
      %c16_62 = arith.constant 16 : index
      %c0_63 = arith.constant 0 : index
      %58 = vector.load %arg10[%c9_61, %c16_62, %c0_63] : memref<32x48x16xbf16, #tpu.memory_space<vmem>>, vector<8x16x16xbf16>
      %59 = vector.shape_cast %58 : vector<8x16x16xbf16> to vector<128x16xbf16>
      %c0_64 = arith.constant 0 : index
      %c16_65 = arith.constant 16 : index
      %60 = vector.load %arg11[%c0_64, %c16_65] : memref<128x144xbf16, #tpu.memory_space<vmem>>, vector<128x16xbf16>
      tpu.vector_store %arg11[%c0_64, %c16_65], %59 {strides = array<i32>} : memref<128x144xbf16, #tpu.memory_space<vmem>>, vector<128x16xbf16>,
      %c9_66 = arith.constant 9 : index
      %c19_67 = arith.constant 19 : index
      %c0_68 = arith.constant 0 : index
      %61 = vector.load %arg10[%c9_66, %c19_67, %c0_68] : memref<32x48x16xbf16, #tpu.memory_space<vmem>>, vector<8x16x16xbf16>
      %62 = vector.shape_cast %61 : vector<8x16x16xbf16> to vector<128x16xbf16>
      %c0_69 = arith.constant 0 : index
      %c32_70 = arith.constant 32 : index
      %63 = vector.load %arg11[%c0_69, %c32_70] : memref<128x144xbf16, #tpu.memory_space<vmem>>, vector<128x16xbf16>
      tpu.vector_store %arg11[%c0_69, %c32_70], %62 {strides = array<i32>} : memref<128x144xbf16, #tpu.memory_space<vmem>>, vector<128x16xbf16>,
      %c12_71 = arith.constant 12 : index
      %c13_72 = arith.constant 13 : index
      %c0_73 = arith.constant 0 : index
      %64 = vector.load %arg10[%c12_71, %c13_72, %c0_73] : memref<32x48x16xbf16, #tpu.memory_space<vmem>>, vector<8x16x16xbf16>
      %65 = vector.shape_cast %64 : vector<8x16x16xbf16> to vector<128x16xbf16>
      %c0_74 = arith.constant 0 : index
      %c48_75 = arith.constant 48 : index
      %66 = vector.load %arg11[%c0_74, %c48_75] : memref<128x144xbf16, #tpu.memory_space<vmem>>, vector<128x16xbf16>
      tpu.vector_store %arg11[%c0_74, %c48_75], %65 {strides = array<i32>} : memref<128x144xbf16, #tpu.memory_space<vmem>>, vector<128x16xbf16>,
      %c12_76 = arith.constant 12 : index
      %c16_77 = arith.constant 16 : index
      %c0_78 = arith.constant 0 : index
      %67 = vector.load %arg10[%c12_76, %c16_77, %c0_78] : memref<32x48x16xbf16, #tpu.memory_space<vmem>>, vector<8x16x16xbf16>
      %68 = vector.shape_cast %67 : vector<8x16x16xbf16> to vector<128x16xbf16>
      %c0_79 = arith.constant 0 : index
      %c64_80 = arith.constant 64 : index
      %69 = vector.load %arg11[%c0_79, %c64_80] : memref<128x144xbf16, #tpu.memory_space<vmem>>, vector<128x16xbf16>
      tpu.vector_store %arg11[%c0_79, %c64_80], %68 {strides = array<i32>} : memref<128x144xbf16, #tpu.memory_space<vmem>>, vector<128x16xbf16>,
      %c12_81 = arith.constant 12 : index
      %c19_82 = arith.constant 19 : index
      %c0_83 = arith.constant 0 : index
      %70 = vector.load %arg10[%c12_81, %c19_82, %c0_83] : memref<32x48x16xbf16, #tpu.memory_space<vmem>>, vector<8x16x16xbf16>
      %71 = vector.shape_cast %70 : vector<8x16x16xbf16> to vector<128x16xbf16>
      %c0_84 = arith.constant 0 : index
      %c80_85 = arith.constant 80 : index
      %72 = vector.load %arg11[%c0_84, %c80_85] : memref<128x144xbf16, #tpu.memory_space<vmem>>, vector<128x16xbf16>
      tpu.vector_store %arg11[%c0_84, %c80_85], %71 {strides = array<i32>} : memref<128x144xbf16, #tpu.memory_space<vmem>>, vector<128x16xbf16>,
      %c15_86 = arith.constant 15 : index
      %c13_87 = arith.constant 13 : index
      %c0_88 = arith.constant 0 : index
      %73 = vector.load %arg10[%c15_86, %c13_87, %c0_88] : memref<32x48x16xbf16, #tpu.memory_space<vmem>>, vector<8x16x16xbf16>
      %74 = vector.shape_cast %73 : vector<8x16x16xbf16> to vector<128x16xbf16>
      %c0_89 = arith.constant 0 : index
      %c96_90 = arith.constant 96 : index
      %75 = vector.load %arg11[%c0_89, %c96_90] : memref<128x144xbf16, #tpu.memory_space<vmem>>, vector<128x16xbf16>
      tpu.vector_store %arg11[%c0_89, %c96_90], %74 {strides = array<i32>} : memref<128x144xbf16, #tpu.memory_space<vmem>>, vector<128x16xbf16>,
      %c15_91 = arith.constant 15 : index
      %c16_92 = arith.constant 16 : index
      %c0_93 = arith.constant 0 : index
      %76 = vector.load %arg10[%c15_91, %c16_92, %c0_93] : memref<32x48x16xbf16, #tpu.memory_space<vmem>>, vector<8x16x16xbf16>
      %77 = vector.shape_cast %76 : vector<8x16x16xbf16> to vector<128x16xbf16>
      %c0_94 = arith.constant 0 : index
      %c112_95 = arith.constant 112 : index
      %78 = vector.load %arg11[%c0_94, %c112_95] : memref<128x144xbf16, #tpu.memory_space<vmem>>, vector<128x16xbf16>
      tpu.vector_store %arg11[%c0_94, %c112_95], %77 {strides = array<i32>} : memref<128x144xbf16, #tpu.memory_space<vmem>>, vector<128x16xbf16>,
      %c15_96 = arith.constant 15 : index
      %c19_97 = arith.constant 19 : index
      %c0_98 = arith.constant 0 : index
      %79 = vector.load %arg10[%c15_96, %c19_97, %c0_98] : memref<32x48x16xbf16, #tpu.memory_space<vmem>>, vector<8x16x16xbf16>
      %80 = vector.shape_cast %79 : vector<8x16x16xbf16> to vector<128x16xbf16>
      %c0_99 = arith.constant 0 : index
      %c128_100 = arith.constant 128 : index
      %81 = vector.load %arg11[%c0_99, %c128_100] : memref<128x144xbf16, #tpu.memory_space<vmem>>, vector<128x16xbf16>
      tpu.vector_store %arg11[%c0_99, %c128_100], %80 {strides = array<i32>} : memref<128x144xbf16, #tpu.memory_space<vmem>>, vector<128x16xbf16>,
      %c0_101 = arith.constant 0 : index
      %c0_102 = arith.constant 0 : index
      %82 = vector.load %arg11[%c0_101, %c0_102] : memref<128x144xbf16, #tpu.memory_space<vmem>>, vector<128x144xbf16>
      %c0_103 = arith.constant 0 : index
      %c0_104 = arith.constant 0 : index
      %c0_105 = arith.constant 0 : index
      %83 = vector.load %arg5[%c0_103, %c0_104, %c0_105] : memref<1x144x16xbf16, #tpu.memory_space<vmem>>, vector<1x144x16xbf16>
      %84 = vector.shape_cast %83 : vector<1x144x16xbf16> to vector<144x16xbf16>
      %cst_106 = arith.constant dense<0.000000e+00> : vector<128x16xf32>
      %85 = tpu.matmul %82, %84, %cst_106 {dimension_numbers = #tpu.dot_dimension_numbers<[1], [0], [0], [1], [0, 0, 1, 1], [], []>} : vector<128x144xbf16>, vector<144x16xbf16>, vector<128x16xf32> -> vector<128x16xf32>
      %c0_107 = arith.constant 0 : index
      %c0_108 = arith.constant 0 : index
      %c0_109 = arith.constant 0 : index
      %86 = vector.load %arg6[%c0_107, %c0_108, %c0_109] : memref<1x1x16xf32, #tpu.memory_space<vmem>>, vector<1x1x16xf32>
      %87 = vector.shape_cast %86 : vector<1x1x16xf32> to vector<1x16xf32>
      %88 = vector.broadcast %87 : vector<1x16xf32> to vector<128x16xf32>
      %89 = arith.addf %85, %88 : vector<128x16xf32>
      %cst_110 = arith.constant 0.000000e+00 : f32
      %90 = vector.broadcast %cst_110 : f32 to vector<128x16xf32>
      %91 = arith.maximumf %89, %90 : vector<128x16xf32>
      %92 = arith.truncf %91 : vector<128x16xf32> to vector<128x16xbf16>
      %c0_111 = arith.constant 0 : index
      %c0_112 = arith.constant 0 : index
      %c0_113 = arith.constant 0 : index
      %93 = vector.load %arg7[%c0_111, %c0_112, %c0_113] : memref<1x16x32xbf16, #tpu.memory_space<vmem>>, vector<1x16x32xbf16>
      %94 = vector.shape_cast %93 : vector<1x16x32xbf16> to vector<16x32xbf16>
      %cst_114 = arith.constant dense<0.000000e+00> : vector<128x32xf32>
      %95 = tpu.matmul %92, %94, %cst_114 {dimension_numbers = #tpu.dot_dimension_numbers<[1], [0], [0], [1], [0, 0, 1, 1], [], []>} : vector<128x16xbf16>, vector<16x32xbf16>, vector<128x32xf32> -> vector<128x32xf32>
      %c0_115 = arith.constant 0 : index
      %c0_116 = arith.constant 0 : index
      %c0_117 = arith.constant 0 : index
      %96 = vector.load %arg8[%c0_115, %c0_116, %c0_117] : memref<1x1x32xf32, #tpu.memory_space<vmem>>, vector<1x1x32xf32>
      %97 = vector.shape_cast %96 : vector<1x1x32xf32> to vector<1x32xf32>
      %98 = vector.broadcast %97 : vector<1x32xf32> to vector<128x32xf32>
      %99 = arith.addf %95, %98 : vector<128x32xf32>
      %cst_118 = arith.constant 0.000000e+00 : f32
      %100 = vector.broadcast %cst_118 : f32 to vector<128x32xf32>
      %101 = arith.maximumf %99, %100 : vector<128x32xf32>
      %102 = arith.truncf %101 : vector<128x32xf32> to vector<128x32xbf16>
      %c0_119 = arith.constant 0 : index
      %c0_120 = arith.constant 0 : index
      %c0_121 = arith.constant 0 : index
      %c0_122 = arith.constant 0 : index
      %103 = vector.load %arg9[%c0_119, %c0_120, %c0_121, %c0_122] : memref<1x1x128x32xbf16, #tpu.memory_space<vmem>>, vector<1x1x128x32xbf16>
      %104 = vector.shape_cast %103 : vector<1x1x128x32xbf16> to vector<128x32xbf16>
      %105 = vector.shape_cast %102 : vector<128x32xbf16> to vector<1x1x128x32xbf16>
      tpu.vector_store %arg9[%c0_119, %c0_120, %c0_121, %c0_122], %105 {strides = array<i32>} : memref<1x1x128x32xbf16, #tpu.memory_space<vmem>>, vector<1x1x128x32xbf16>,
    } else {
    }
    %c1_i32 = arith.constant 1 : i32
    %6 = arith.cmpi eq, %arg0, %c1_i32 : i32
    %7 = arith.extui %6 : i1 to i32
    %c0_i32_3 = arith.constant 0 : i32
    %8 = arith.cmpi ne, %7, %c0_i32_3 : i32
    scf.if %8 {
      %c0 = arith.constant 0 : index
      %c0_5 = arith.constant 0 : index
      %c0_6 = arith.constant 0 : index
      %c0_7 = arith.constant 0 : index
      %c0_8 = arith.constant 0 : index
      %12 = vector.load %arg2[%c0, %c0_5, %c0_6, %c0_7, %c0_8] : memref<1x1x8x16x16xbf16, #tpu.memory_space<vmem>>, vector<1x1x8x16x16xbf16>
      %13 = vector.shape_cast %12 : vector<1x1x8x16x16xbf16> to vector<8x16x16xbf16>
      %c12 = arith.constant 12 : index
      %c16 = arith.constant 16 : index
      %c0_9 = arith.constant 0 : index
      %14 = vector.load %arg10[%c12, %c16, %c0_9] : memref<32x48x16xbf16, #tpu.memory_space<vmem>>, vector<8x16x16xbf16>
      tpu.vector_store %arg10[%c12, %c16, %c0_9], %13 {strides = array<i32>} : memref<32x48x16xbf16, #tpu.memory_space<vmem>>, vector<8x16x16xbf16>,
      %c6 = arith.constant 6 : index
      %c10 = arith.constant 10 : index
      %c0_10 = arith.constant 0 : index
      %15 = vector.load %arg10[%c6, %c10, %c0_10] : memref<32x48x16xbf16, #tpu.memory_space<vmem>>, vector<8x16x16xbf16>
      %16 = vector.shape_cast %15 : vector<8x16x16xbf16> to vector<128x16xbf16>
      %c0_11 = arith.constant 0 : index
      %c0_12 = arith.constant 0 : index
      %17 = vector.load %arg11[%c0_11, %c0_12] : memref<128x144xbf16, #tpu.memory_space<vmem>>, vector<128x16xbf16>
      tpu.vector_store %arg11[%c0_11, %c0_12], %16 {strides = array<i32>} : memref<128x144xbf16, #tpu.memory_space<vmem>>, vector<128x16xbf16>,
      %c6_13 = arith.constant 6 : index
      %c16_14 = arith.constant 16 : index
      %c0_15 = arith.constant 0 : index
      %18 = vector.load %arg10[%c6_13, %c16_14, %c0_15] : memref<32x48x16xbf16, #tpu.memory_space<vmem>>, vector<8x16x16xbf16>
      %19 = vector.shape_cast %18 : vector<8x16x16xbf16> to vector<128x16xbf16>
      %c0_16 = arith.constant 0 : index
      %c16_17 = arith.constant 16 : index
      %20 = vector.load %arg11[%c0_16, %c16_17] : memref<128x144xbf16, #tpu.memory_space<vmem>>, vector<128x16xbf16>
      tpu.vector_store %arg11[%c0_16, %c16_17], %19 {strides = array<i32>} : memref<128x144xbf16, #tpu.memory_space<vmem>>, vector<128x16xbf16>,
      %c6_18 = arith.constant 6 : index
      %c22 = arith.constant 22 : index
      %c0_19 = arith.constant 0 : index
      %21 = vector.load %arg10[%c6_18, %c22, %c0_19] : memref<32x48x16xbf16, #tpu.memory_space<vmem>>, vector<8x16x16xbf16>
      %22 = vector.shape_cast %21 : vector<8x16x16xbf16> to vector<128x16xbf16>
      %c0_20 = arith.constant 0 : index
      %c32 = arith.constant 32 : index
      %23 = vector.load %arg11[%c0_20, %c32] : memref<128x144xbf16, #tpu.memory_space<vmem>>, vector<128x16xbf16>
      tpu.vector_store %arg11[%c0_20, %c32], %22 {strides = array<i32>} : memref<128x144xbf16, #tpu.memory_space<vmem>>, vector<128x16xbf16>,
      %c12_21 = arith.constant 12 : index
      %c10_22 = arith.constant 10 : index
      %c0_23 = arith.constant 0 : index
      %24 = vector.load %arg10[%c12_21, %c10_22, %c0_23] : memref<32x48x16xbf16, #tpu.memory_space<vmem>>, vector<8x16x16xbf16>
      %25 = vector.shape_cast %24 : vector<8x16x16xbf16> to vector<128x16xbf16>
      %c0_24 = arith.constant 0 : index
      %c48 = arith.constant 48 : index
      %26 = vector.load %arg11[%c0_24, %c48] : memref<128x144xbf16, #tpu.memory_space<vmem>>, vector<128x16xbf16>
      tpu.vector_store %arg11[%c0_24, %c48], %25 {strides = array<i32>} : memref<128x144xbf16, #tpu.memory_space<vmem>>, vector<128x16xbf16>,
      %c12_25 = arith.constant 12 : index
      %c16_26 = arith.constant 16 : index
      %c0_27 = arith.constant 0 : index
      %27 = vector.load %arg10[%c12_25, %c16_26, %c0_27] : memref<32x48x16xbf16, #tpu.memory_space<vmem>>, vector<8x16x16xbf16>
      %28 = vector.shape_cast %27 : vector<8x16x16xbf16> to vector<128x16xbf16>
      %c0_28 = arith.constant 0 : index
      %c64 = arith.constant 64 : index
      %29 = vector.load %arg11[%c0_28, %c64] : memref<128x144xbf16, #tpu.memory_space<vmem>>, vector<128x16xbf16>
      tpu.vector_store %arg11[%c0_28, %c64], %28 {strides = array<i32>} : memref<128x144xbf16, #tpu.memory_space<vmem>>, vector<128x16xbf16>,
      %c12_29 = arith.constant 12 : index
      %c22_30 = arith.constant 22 : index
      %c0_31 = arith.constant 0 : index
      %30 = vector.load %arg10[%c12_29, %c22_30, %c0_31] : memref<32x48x16xbf16, #tpu.memory_space<vmem>>, vector<8x16x16xbf16>
      %31 = vector.shape_cast %30 : vector<8x16x16xbf16> to vector<128x16xbf16>
      %c0_32 = arith.constant 0 : index
      %c80 = arith.constant 80 : index
      %32 = vector.load %arg11[%c0_32, %c80] : memref<128x144xbf16, #tpu.memory_space<vmem>>, vector<128x16xbf16>
      tpu.vector_store %arg11[%c0_32, %c80], %31 {strides = array<i32>} : memref<128x144xbf16, #tpu.memory_space<vmem>>, vector<128x16xbf16>,
      %c18 = arith.constant 18 : index
      %c10_33 = arith.constant 10 : index
      %c0_34 = arith.constant 0 : index
      %33 = vector.load %arg10[%c18, %c10_33, %c0_34] : memref<32x48x16xbf16, #tpu.memory_space<vmem>>, vector<8x16x16xbf16>
      %34 = vector.shape_cast %33 : vector<8x16x16xbf16> to vector<128x16xbf16>
      %c0_35 = arith.constant 0 : index
      %c96 = arith.constant 96 : index
      %35 = vector.load %arg11[%c0_35, %c96] : memref<128x144xbf16, #tpu.memory_space<vmem>>, vector<128x16xbf16>
      tpu.vector_store %arg11[%c0_35, %c96], %34 {strides = array<i32>} : memref<128x144xbf16, #tpu.memory_space<vmem>>, vector<128x16xbf16>,
      %c18_36 = arith.constant 18 : index
      %c16_37 = arith.constant 16 : index
      %c0_38 = arith.constant 0 : index
      %36 = vector.load %arg10[%c18_36, %c16_37, %c0_38] : memref<32x48x16xbf16, #tpu.memory_space<vmem>>, vector<8x16x16xbf16>
      %37 = vector.shape_cast %36 : vector<8x16x16xbf16> to vector<128x16xbf16>
      %c0_39 = arith.constant 0 : index
      %c112 = arith.constant 112 : index
      %38 = vector.load %arg11[%c0_39, %c112] : memref<128x144xbf16, #tpu.memory_space<vmem>>, vector<128x16xbf16>
      tpu.vector_store %arg11[%c0_39, %c112], %37 {strides = array<i32>} : memref<128x144xbf16, #tpu.memory_space<vmem>>, vector<128x16xbf16>,
      %c18_40 = arith.constant 18 : index
      %c22_41 = arith.constant 22 : index
      %c0_42 = arith.constant 0 : index
      %39 = vector.load %arg10[%c18_40, %c22_41, %c0_42] : memref<32x48x16xbf16, #tpu.memory_space<vmem>>, vector<8x16x16xbf16>
      %40 = vector.shape_cast %39 : vector<8x16x16xbf16> to vector<128x16xbf16>
      %c0_43 = arith.constant 0 : index
      %c128 = arith.constant 128 : index
      %41 = vector.load %arg11[%c0_43, %c128] : memref<128x144xbf16, #tpu.memory_space<vmem>>, vector<128x16xbf16>
      tpu.vector_store %arg11[%c0_43, %c128], %40 {strides = array<i32>} : memref<128x144xbf16, #tpu.memory_space<vmem>>, vector<128x16xbf16>,
      %c0_44 = arith.constant 0 : index
      %c0_45 = arith.constant 0 : index
      %42 = vector.load %arg11[%c0_44, %c0_45] : memref<128x144xbf16, #tpu.memory_space<vmem>>, vector<128x144xbf16>
      %c0_46 = arith.constant 0 : index
      %c0_47 = arith.constant 0 : index
      %c0_48 = arith.constant 0 : index
      %43 = vector.load %arg3[%c0_46, %c0_47, %c0_48] : memref<1x144x16xbf16, #tpu.memory_space<vmem>>, vector<1x144x16xbf16>
      %44 = vector.shape_cast %43 : vector<1x144x16xbf16> to vector<144x16xbf16>
      %cst = arith.constant dense<0.000000e+00> : vector<128x16xf32>
      %45 = tpu.matmul %42, %44, %cst {dimension_numbers = #tpu.dot_dimension_numbers<[1], [0], [0], [1], [0, 0, 1, 1], [], []>} : vector<128x144xbf16>, vector<144x16xbf16>, vector<128x16xf32> -> vector<128x16xf32>
      %c0_49 = arith.constant 0 : index
      %c0_50 = arith.constant 0 : index
      %c0_51 = arith.constant 0 : index
      %46 = vector.load %arg4[%c0_49, %c0_50, %c0_51] : memref<1x1x16xf32, #tpu.memory_space<vmem>>, vector<1x1x16xf32>
      %47 = vector.shape_cast %46 : vector<1x1x16xf32> to vector<1x16xf32>
      %48 = vector.broadcast %47 : vector<1x16xf32> to vector<128x16xf32>
      %49 = arith.addf %45, %48 : vector<128x16xf32>
      %cst_52 = arith.constant 0.000000e+00 : f32
      %50 = vector.broadcast %cst_52 : f32 to vector<128x16xf32>
      %51 = arith.maximumf %49, %50 : vector<128x16xf32>
      %52 = vector.shape_cast %51 : vector<128x16xf32> to vector<8x16x16xf32>
      %53 = arith.truncf %52 : vector<8x16x16xf32> to vector<8x16x16xbf16>
      %c12_53 = arith.constant 12 : index
      %c16_54 = arith.constant 16 : index
      %c0_55 = arith.constant 0 : index
      %54 = vector.load %arg10[%c12_53, %c16_54, %c0_55] : memref<32x48x16xbf16, #tpu.memory_space<vmem>>, vector<8x16x16xbf16>
      tpu.vector_store %arg10[%c12_53, %c16_54, %c0_55], %53 {strides = array<i32>} : memref<32x48x16xbf16, #tpu.memory_space<vmem>>, vector<8x16x16xbf16>,
      %c6_56 = arith.constant 6 : index
      %c10_57 = arith.constant 10 : index
      %c0_58 = arith.constant 0 : index
      %55 = vector.load %arg10[%c6_56, %c10_57, %c0_58] : memref<32x48x16xbf16, #tpu.memory_space<vmem>>, vector<8x16x16xbf16>
      %56 = vector.shape_cast %55 : vector<8x16x16xbf16> to vector<128x16xbf16>
      %c0_59 = arith.constant 0 : index
      %c0_60 = arith.constant 0 : index
      %57 = vector.load %arg11[%c0_59, %c0_60] : memref<128x144xbf16, #tpu.memory_space<vmem>>, vector<128x16xbf16>
      tpu.vector_store %arg11[%c0_59, %c0_60], %56 {strides = array<i32>} : memref<128x144xbf16, #tpu.memory_space<vmem>>, vector<128x16xbf16>,
      %c6_61 = arith.constant 6 : index
      %c16_62 = arith.constant 16 : index
      %c0_63 = arith.constant 0 : index
      %58 = vector.load %arg10[%c6_61, %c16_62, %c0_63] : memref<32x48x16xbf16, #tpu.memory_space<vmem>>, vector<8x16x16xbf16>
      %59 = vector.shape_cast %58 : vector<8x16x16xbf16> to vector<128x16xbf16>
      %c0_64 = arith.constant 0 : index
      %c16_65 = arith.constant 16 : index
      %60 = vector.load %arg11[%c0_64, %c16_65] : memref<128x144xbf16, #tpu.memory_space<vmem>>, vector<128x16xbf16>
      tpu.vector_store %arg11[%c0_64, %c16_65], %59 {strides = array<i32>} : memref<128x144xbf16, #tpu.memory_space<vmem>>, vector<128x16xbf16>,
      %c6_66 = arith.constant 6 : index
      %c22_67 = arith.constant 22 : index
      %c0_68 = arith.constant 0 : index
      %61 = vector.load %arg10[%c6_66, %c22_67, %c0_68] : memref<32x48x16xbf16, #tpu.memory_space<vmem>>, vector<8x16x16xbf16>
      %62 = vector.shape_cast %61 : vector<8x16x16xbf16> to vector<128x16xbf16>
      %c0_69 = arith.constant 0 : index
      %c32_70 = arith.constant 32 : index
      %63 = vector.load %arg11[%c0_69, %c32_70] : memref<128x144xbf16, #tpu.memory_space<vmem>>, vector<128x16xbf16>
      tpu.vector_store %arg11[%c0_69, %c32_70], %62 {strides = array<i32>} : memref<128x144xbf16, #tpu.memory_space<vmem>>, vector<128x16xbf16>,
      %c12_71 = arith.constant 12 : index
      %c10_72 = arith.constant 10 : index
      %c0_73 = arith.constant 0 : index
      %64 = vector.load %arg10[%c12_71, %c10_72, %c0_73] : memref<32x48x16xbf16, #tpu.memory_space<vmem>>, vector<8x16x16xbf16>
      %65 = vector.shape_cast %64 : vector<8x16x16xbf16> to vector<128x16xbf16>
      %c0_74 = arith.constant 0 : index
      %c48_75 = arith.constant 48 : index
      %66 = vector.load %arg11[%c0_74, %c48_75] : memref<128x144xbf16, #tpu.memory_space<vmem>>, vector<128x16xbf16>
      tpu.vector_store %arg11[%c0_74, %c48_75], %65 {strides = array<i32>} : memref<128x144xbf16, #tpu.memory_space<vmem>>, vector<128x16xbf16>,
      %c12_76 = arith.constant 12 : index
      %c16_77 = arith.constant 16 : index
      %c0_78 = arith.constant 0 : index
      %67 = vector.load %arg10[%c12_76, %c16_77, %c0_78] : memref<32x48x16xbf16, #tpu.memory_space<vmem>>, vector<8x16x16xbf16>
      %68 = vector.shape_cast %67 : vector<8x16x16xbf16> to vector<128x16xbf16>
      %c0_79 = arith.constant 0 : index
      %c64_80 = arith.constant 64 : index
      %69 = vector.load %arg11[%c0_79, %c64_80] : memref<128x144xbf16, #tpu.memory_space<vmem>>, vector<128x16xbf16>
      tpu.vector_store %arg11[%c0_79, %c64_80], %68 {strides = array<i32>} : memref<128x144xbf16, #tpu.memory_space<vmem>>, vector<128x16xbf16>,
      %c12_81 = arith.constant 12 : index
      %c22_82 = arith.constant 22 : index
      %c0_83 = arith.constant 0 : index
      %70 = vector.load %arg10[%c12_81, %c22_82, %c0_83] : memref<32x48x16xbf16, #tpu.memory_space<vmem>>, vector<8x16x16xbf16>
      %71 = vector.shape_cast %70 : vector<8x16x16xbf16> to vector<128x16xbf16>
      %c0_84 = arith.constant 0 : index
      %c80_85 = arith.constant 80 : index
      %72 = vector.load %arg11[%c0_84, %c80_85] : memref<128x144xbf16, #tpu.memory_space<vmem>>, vector<128x16xbf16>
      tpu.vector_store %arg11[%c0_84, %c80_85], %71 {strides = array<i32>} : memref<128x144xbf16, #tpu.memory_space<vmem>>, vector<128x16xbf16>,
      %c18_86 = arith.constant 18 : index
      %c10_87 = arith.constant 10 : index
      %c0_88 = arith.constant 0 : index
      %73 = vector.load %arg10[%c18_86, %c10_87, %c0_88] : memref<32x48x16xbf16, #tpu.memory_space<vmem>>, vector<8x16x16xbf16>
      %74 = vector.shape_cast %73 : vector<8x16x16xbf16> to vector<128x16xbf16>
      %c0_89 = arith.constant 0 : index
      %c96_90 = arith.constant 96 : index
      %75 = vector.load %arg11[%c0_89, %c96_90] : memref<128x144xbf16, #tpu.memory_space<vmem>>, vector<128x16xbf16>
      tpu.vector_store %arg11[%c0_89, %c96_90], %74 {strides = array<i32>} : memref<128x144xbf16, #tpu.memory_space<vmem>>, vector<128x16xbf16>,
      %c18_91 = arith.constant 18 : index
      %c16_92 = arith.constant 16 : index
      %c0_93 = arith.constant 0 : index
      %76 = vector.load %arg10[%c18_91, %c16_92, %c0_93] : memref<32x48x16xbf16, #tpu.memory_space<vmem>>, vector<8x16x16xbf16>
      %77 = vector.shape_cast %76 : vector<8x16x16xbf16> to vector<128x16xbf16>
      %c0_94 = arith.constant 0 : index
      %c112_95 = arith.constant 112 : index
      %78 = vector.load %arg11[%c0_94, %c112_95] : memref<128x144xbf16, #tpu.memory_space<vmem>>, vector<128x16xbf16>
      tpu.vector_store %arg11[%c0_94, %c112_95], %77 {strides = array<i32>} : memref<128x144xbf16, #tpu.memory_space<vmem>>, vector<128x16xbf16>,
      %c18_96 = arith.constant 18 : index
      %c22_97 = arith.constant 22 : index
      %c0_98 = arith.constant 0 : index
      %79 = vector.load %arg10[%c18_96, %c22_97, %c0_98] : memref<32x48x16xbf16, #tpu.memory_space<vmem>>, vector<8x16x16xbf16>
      %80 = vector.shape_cast %79 : vector<8x16x16xbf16> to vector<128x16xbf16>
      %c0_99 = arith.constant 0 : index
      %c128_100 = arith.constant 128 : index
      %81 = vector.load %arg11[%c0_99, %c128_100] : memref<128x144xbf16, #tpu.memory_space<vmem>>, vector<128x16xbf16>
      tpu.vector_store %arg11[%c0_99, %c128_100], %80 {strides = array<i32>} : memref<128x144xbf16, #tpu.memory_space<vmem>>, vector<128x16xbf16>,
      %c0_101 = arith.constant 0 : index
      %c0_102 = arith.constant 0 : index
      %82 = vector.load %arg11[%c0_101, %c0_102] : memref<128x144xbf16, #tpu.memory_space<vmem>>, vector<128x144xbf16>
      %c0_103 = arith.constant 0 : index
      %c0_104 = arith.constant 0 : index
      %c0_105 = arith.constant 0 : index
      %83 = vector.load %arg5[%c0_103, %c0_104, %c0_105] : memref<1x144x16xbf16, #tpu.memory_space<vmem>>, vector<1x144x16xbf16>
      %84 = vector.shape_cast %83 : vector<1x144x16xbf16> to vector<144x16xbf16>
      %cst_106 = arith.constant dense<0.000000e+00> : vector<128x16xf32>
      %85 = tpu.matmul %82, %84, %cst_106 {dimension_numbers = #tpu.dot_dimension_numbers<[1], [0], [0], [1], [0, 0, 1, 1], [], []>} : vector<128x144xbf16>, vector<144x16xbf16>, vector<128x16xf32> -> vector<128x16xf32>
      %c0_107 = arith.constant 0 : index
      %c0_108 = arith.constant 0 : index
      %c0_109 = arith.constant 0 : index
      %86 = vector.load %arg6[%c0_107, %c0_108, %c0_109] : memref<1x1x16xf32, #tpu.memory_space<vmem>>, vector<1x1x16xf32>
      %87 = vector.shape_cast %86 : vector<1x1x16xf32> to vector<1x16xf32>
      %88 = vector.broadcast %87 : vector<1x16xf32> to vector<128x16xf32>
      %89 = arith.addf %85, %88 : vector<128x16xf32>
      %cst_110 = arith.constant 0.000000e+00 : f32
      %90 = vector.broadcast %cst_110 : f32 to vector<128x16xf32>
      %91 = arith.maximumf %89, %90 : vector<128x16xf32>
      %92 = arith.truncf %91 : vector<128x16xf32> to vector<128x16xbf16>
      %c0_111 = arith.constant 0 : index
      %c0_112 = arith.constant 0 : index
      %c0_113 = arith.constant 0 : index
      %93 = vector.load %arg7[%c0_111, %c0_112, %c0_113] : memref<1x16x32xbf16, #tpu.memory_space<vmem>>, vector<1x16x32xbf16>
      %94 = vector.shape_cast %93 : vector<1x16x32xbf16> to vector<16x32xbf16>
      %cst_114 = arith.constant dense<0.000000e+00> : vector<128x32xf32>
      %95 = tpu.matmul %92, %94, %cst_114 {dimension_numbers = #tpu.dot_dimension_numbers<[1], [0], [0], [1], [0, 0, 1, 1], [], []>} : vector<128x16xbf16>, vector<16x32xbf16>, vector<128x32xf32> -> vector<128x32xf32>
      %c0_115 = arith.constant 0 : index
      %c0_116 = arith.constant 0 : index
      %c0_117 = arith.constant 0 : index
      %96 = vector.load %arg8[%c0_115, %c0_116, %c0_117] : memref<1x1x32xf32, #tpu.memory_space<vmem>>, vector<1x1x32xf32>
      %97 = vector.shape_cast %96 : vector<1x1x32xf32> to vector<1x32xf32>
      %98 = vector.broadcast %97 : vector<1x32xf32> to vector<128x32xf32>
      %99 = arith.addf %95, %98 : vector<128x32xf32>
      %cst_118 = arith.constant 0.000000e+00 : f32
      %100 = vector.broadcast %cst_118 : f32 to vector<128x32xf32>
      %101 = arith.maximumf %99, %100 : vector<128x32xf32>
      %102 = arith.truncf %101 : vector<128x32xf32> to vector<128x32xbf16>
      %c0_119 = arith.constant 0 : index
      %c0_120 = arith.constant 0 : index
      %c0_121 = arith.constant 0 : index
      %c0_122 = arith.constant 0 : index
      %103 = vector.load %arg9[%c0_119, %c0_120, %c0_121, %c0_122] : memref<1x1x128x32xbf16, #tpu.memory_space<vmem>>, vector<1x1x128x32xbf16>
      %104 = vector.shape_cast %103 : vector<1x1x128x32xbf16> to vector<128x32xbf16>
      %105 = vector.shape_cast %102 : vector<128x32xbf16> to vector<1x1x128x32xbf16>
      tpu.vector_store %arg9[%c0_119, %c0_120, %c0_121, %c0_122], %105 {strides = array<i32>} : memref<1x1x128x32xbf16, #tpu.memory_space<vmem>>, vector<1x1x128x32xbf16>,
    } else {
    }
    %c2_i32 = arith.constant 2 : i32
    %9 = arith.cmpi eq, %arg0, %c2_i32 : i32
    %10 = arith.extui %9 : i1 to i32
    %c0_i32_4 = arith.constant 0 : i32
    %11 = arith.cmpi ne, %10, %c0_i32_4 : i32
    scf.if %11 {
      %c0 = arith.constant 0 : index
      %c0_5 = arith.constant 0 : index
      %c0_6 = arith.constant 0 : index
      %c0_7 = arith.constant 0 : index
      %c0_8 = arith.constant 0 : index
      %12 = vector.load %arg2[%c0, %c0_5, %c0_6, %c0_7, %c0_8] : memref<1x1x8x16x16xbf16, #tpu.memory_space<vmem>>, vector<1x1x8x16x16xbf16>
      %13 = vector.shape_cast %12 : vector<1x1x8x16x16xbf16> to vector<8x16x16xbf16>
      %c12 = arith.constant 12 : index
      %c16 = arith.constant 16 : index
      %c0_9 = arith.constant 0 : index
      %14 = vector.load %arg10[%c12, %c16, %c0_9] : memref<32x48x16xbf16, #tpu.memory_space<vmem>>, vector<8x16x16xbf16>
      tpu.vector_store %arg10[%c12, %c16, %c0_9], %13 {strides = array<i32>} : memref<32x48x16xbf16, #tpu.memory_space<vmem>>, vector<8x16x16xbf16>,
      %c0_10 = arith.constant 0 : index
      %c4 = arith.constant 4 : index
      %c0_11 = arith.constant 0 : index
      %15 = vector.load %arg10[%c0_10, %c4, %c0_11] : memref<32x48x16xbf16, #tpu.memory_space<vmem>>, vector<8x16x16xbf16>
      %16 = vector.shape_cast %15 : vector<8x16x16xbf16> to vector<128x16xbf16>
      %c0_12 = arith.constant 0 : index
      %c0_13 = arith.constant 0 : index
      %17 = vector.load %arg11[%c0_12, %c0_13] : memref<128x144xbf16, #tpu.memory_space<vmem>>, vector<128x16xbf16>
      tpu.vector_store %arg11[%c0_12, %c0_13], %16 {strides = array<i32>} : memref<128x144xbf16, #tpu.memory_space<vmem>>, vector<128x16xbf16>,
      %c0_14 = arith.constant 0 : index
      %c16_15 = arith.constant 16 : index
      %c0_16 = arith.constant 0 : index
      %18 = vector.load %arg10[%c0_14, %c16_15, %c0_16] : memref<32x48x16xbf16, #tpu.memory_space<vmem>>, vector<8x16x16xbf16>
      %19 = vector.shape_cast %18 : vector<8x16x16xbf16> to vector<128x16xbf16>
      %c0_17 = arith.constant 0 : index
      %c16_18 = arith.constant 16 : index
      %20 = vector.load %arg11[%c0_17, %c16_18] : memref<128x144xbf16, #tpu.memory_space<vmem>>, vector<128x16xbf16>
      tpu.vector_store %arg11[%c0_17, %c16_18], %19 {strides = array<i32>} : memref<128x144xbf16, #tpu.memory_space<vmem>>, vector<128x16xbf16>,
      %c0_19 = arith.constant 0 : index
      %c28 = arith.constant 28 : index
      %c0_20 = arith.constant 0 : index
      %21 = vector.load %arg10[%c0_19, %c28, %c0_20] : memref<32x48x16xbf16, #tpu.memory_space<vmem>>, vector<8x16x16xbf16>
      %22 = vector.shape_cast %21 : vector<8x16x16xbf16> to vector<128x16xbf16>
      %c0_21 = arith.constant 0 : index
      %c32 = arith.constant 32 : index
      %23 = vector.load %arg11[%c0_21, %c32] : memref<128x144xbf16, #tpu.memory_space<vmem>>, vector<128x16xbf16>
      tpu.vector_store %arg11[%c0_21, %c32], %22 {strides = array<i32>} : memref<128x144xbf16, #tpu.memory_space<vmem>>, vector<128x16xbf16>,
      %c12_22 = arith.constant 12 : index
      %c4_23 = arith.constant 4 : index
      %c0_24 = arith.constant 0 : index
      %24 = vector.load %arg10[%c12_22, %c4_23, %c0_24] : memref<32x48x16xbf16, #tpu.memory_space<vmem>>, vector<8x16x16xbf16>
      %25 = vector.shape_cast %24 : vector<8x16x16xbf16> to vector<128x16xbf16>
      %c0_25 = arith.constant 0 : index
      %c48 = arith.constant 48 : index
      %26 = vector.load %arg11[%c0_25, %c48] : memref<128x144xbf16, #tpu.memory_space<vmem>>, vector<128x16xbf16>
      tpu.vector_store %arg11[%c0_25, %c48], %25 {strides = array<i32>} : memref<128x144xbf16, #tpu.memory_space<vmem>>, vector<128x16xbf16>,
      %c12_26 = arith.constant 12 : index
      %c16_27 = arith.constant 16 : index
      %c0_28 = arith.constant 0 : index
      %27 = vector.load %arg10[%c12_26, %c16_27, %c0_28] : memref<32x48x16xbf16, #tpu.memory_space<vmem>>, vector<8x16x16xbf16>
      %28 = vector.shape_cast %27 : vector<8x16x16xbf16> to vector<128x16xbf16>
      %c0_29 = arith.constant 0 : index
      %c64 = arith.constant 64 : index
      %29 = vector.load %arg11[%c0_29, %c64] : memref<128x144xbf16, #tpu.memory_space<vmem>>, vector<128x16xbf16>
      tpu.vector_store %arg11[%c0_29, %c64], %28 {strides = array<i32>} : memref<128x144xbf16, #tpu.memory_space<vmem>>, vector<128x16xbf16>,
      %c12_30 = arith.constant 12 : index
      %c28_31 = arith.constant 28 : index
      %c0_32 = arith.constant 0 : index
      %30 = vector.load %arg10[%c12_30, %c28_31, %c0_32] : memref<32x48x16xbf16, #tpu.memory_space<vmem>>, vector<8x16x16xbf16>
      %31 = vector.shape_cast %30 : vector<8x16x16xbf16> to vector<128x16xbf16>
      %c0_33 = arith.constant 0 : index
      %c80 = arith.constant 80 : index
      %32 = vector.load %arg11[%c0_33, %c80] : memref<128x144xbf16, #tpu.memory_space<vmem>>, vector<128x16xbf16>
      tpu.vector_store %arg11[%c0_33, %c80], %31 {strides = array<i32>} : memref<128x144xbf16, #tpu.memory_space<vmem>>, vector<128x16xbf16>,
      %c24 = arith.constant 24 : index
      %c4_34 = arith.constant 4 : index
      %c0_35 = arith.constant 0 : index
      %33 = vector.load %arg10[%c24, %c4_34, %c0_35] : memref<32x48x16xbf16, #tpu.memory_space<vmem>>, vector<8x16x16xbf16>
      %34 = vector.shape_cast %33 : vector<8x16x16xbf16> to vector<128x16xbf16>
      %c0_36 = arith.constant 0 : index
      %c96 = arith.constant 96 : index
      %35 = vector.load %arg11[%c0_36, %c96] : memref<128x144xbf16, #tpu.memory_space<vmem>>, vector<128x16xbf16>
      tpu.vector_store %arg11[%c0_36, %c96], %34 {strides = array<i32>} : memref<128x144xbf16, #tpu.memory_space<vmem>>, vector<128x16xbf16>,
      %c24_37 = arith.constant 24 : index
      %c16_38 = arith.constant 16 : index
      %c0_39 = arith.constant 0 : index
      %36 = vector.load %arg10[%c24_37, %c16_38, %c0_39] : memref<32x48x16xbf16, #tpu.memory_space<vmem>>, vector<8x16x16xbf16>
      %37 = vector.shape_cast %36 : vector<8x16x16xbf16> to vector<128x16xbf16>
      %c0_40 = arith.constant 0 : index
      %c112 = arith.constant 112 : index
      %38 = vector.load %arg11[%c0_40, %c112] : memref<128x144xbf16, #tpu.memory_space<vmem>>, vector<128x16xbf16>
      tpu.vector_store %arg11[%c0_40, %c112], %37 {strides = array<i32>} : memref<128x144xbf16, #tpu.memory_space<vmem>>, vector<128x16xbf16>,
      %c24_41 = arith.constant 24 : index
      %c28_42 = arith.constant 28 : index
      %c0_43 = arith.constant 0 : index
      %39 = vector.load %arg10[%c24_41, %c28_42, %c0_43] : memref<32x48x16xbf16, #tpu.memory_space<vmem>>, vector<8x16x16xbf16>
      %40 = vector.shape_cast %39 : vector<8x16x16xbf16> to vector<128x16xbf16>
      %c0_44 = arith.constant 0 : index
      %c128 = arith.constant 128 : index
      %41 = vector.load %arg11[%c0_44, %c128] : memref<128x144xbf16, #tpu.memory_space<vmem>>, vector<128x16xbf16>
      tpu.vector_store %arg11[%c0_44, %c128], %40 {strides = array<i32>} : memref<128x144xbf16, #tpu.memory_space<vmem>>, vector<128x16xbf16>,
      %c0_45 = arith.constant 0 : index
      %c0_46 = arith.constant 0 : index
      %42 = vector.load %arg11[%c0_45, %c0_46] : memref<128x144xbf16, #tpu.memory_space<vmem>>, vector<128x144xbf16>
      %c0_47 = arith.constant 0 : index
      %c0_48 = arith.constant 0 : index
      %c0_49 = arith.constant 0 : index
      %43 = vector.load %arg3[%c0_47, %c0_48, %c0_49] : memref<1x144x16xbf16, #tpu.memory_space<vmem>>, vector<1x144x16xbf16>
      %44 = vector.shape_cast %43 : vector<1x144x16xbf16> to vector<144x16xbf16>
      %cst = arith.constant dense<0.000000e+00> : vector<128x16xf32>
      %45 = tpu.matmul %42, %44, %cst {dimension_numbers = #tpu.dot_dimension_numbers<[1], [0], [0], [1], [0, 0, 1, 1], [], []>} : vector<128x144xbf16>, vector<144x16xbf16>, vector<128x16xf32> -> vector<128x16xf32>
      %c0_50 = arith.constant 0 : index
      %c0_51 = arith.constant 0 : index
      %c0_52 = arith.constant 0 : index
      %46 = vector.load %arg4[%c0_50, %c0_51, %c0_52] : memref<1x1x16xf32, #tpu.memory_space<vmem>>, vector<1x1x16xf32>
      %47 = vector.shape_cast %46 : vector<1x1x16xf32> to vector<1x16xf32>
      %48 = vector.broadcast %47 : vector<1x16xf32> to vector<128x16xf32>
      %49 = arith.addf %45, %48 : vector<128x16xf32>
      %cst_53 = arith.constant 0.000000e+00 : f32
      %50 = vector.broadcast %cst_53 : f32 to vector<128x16xf32>
      %51 = arith.maximumf %49, %50 : vector<128x16xf32>
      %52 = vector.shape_cast %51 : vector<128x16xf32> to vector<8x16x16xf32>
      %53 = arith.truncf %52 : vector<8x16x16xf32> to vector<8x16x16xbf16>
      %c12_54 = arith.constant 12 : index
      %c16_55 = arith.constant 16 : index
      %c0_56 = arith.constant 0 : index
      %54 = vector.load %arg10[%c12_54, %c16_55, %c0_56] : memref<32x48x16xbf16, #tpu.memory_space<vmem>>, vector<8x16x16xbf16>
      tpu.vector_store %arg10[%c12_54, %c16_55, %c0_56], %53 {strides = array<i32>} : memref<32x48x16xbf16, #tpu.memory_space<vmem>>, vector<8x16x16xbf16>,
      %c0_57 = arith.constant 0 : index
      %c4_58 = arith.constant 4 : index
      %c0_59 = arith.constant 0 : index
      %55 = vector.load %arg10[%c0_57, %c4_58, %c0_59] : memref<32x48x16xbf16, #tpu.memory_space<vmem>>, vector<8x16x16xbf16>
      %56 = vector.shape_cast %55 : vector<8x16x16xbf16> to vector<128x16xbf16>
      %c0_60 = arith.constant 0 : index
      %c0_61 = arith.constant 0 : index
      %57 = vector.load %arg11[%c0_60, %c0_61] : memref<128x144xbf16, #tpu.memory_space<vmem>>, vector<128x16xbf16>
      tpu.vector_store %arg11[%c0_60, %c0_61], %56 {strides = array<i32>} : memref<128x144xbf16, #tpu.memory_space<vmem>>, vector<128x16xbf16>,
      %c0_62 = arith.constant 0 : index
      %c16_63 = arith.constant 16 : index
      %c0_64 = arith.constant 0 : index
      %58 = vector.load %arg10[%c0_62, %c16_63, %c0_64] : memref<32x48x16xbf16, #tpu.memory_space<vmem>>, vector<8x16x16xbf16>
      %59 = vector.shape_cast %58 : vector<8x16x16xbf16> to vector<128x16xbf16>
      %c0_65 = arith.constant 0 : index
      %c16_66 = arith.constant 16 : index
      %60 = vector.load %arg11[%c0_65, %c16_66] : memref<128x144xbf16, #tpu.memory_space<vmem>>, vector<128x16xbf16>
      tpu.vector_store %arg11[%c0_65, %c16_66], %59 {strides = array<i32>} : memref<128x144xbf16, #tpu.memory_space<vmem>>, vector<128x16xbf16>,
      %c0_67 = arith.constant 0 : index
      %c28_68 = arith.constant 28 : index
      %c0_69 = arith.constant 0 : index
      %61 = vector.load %arg10[%c0_67, %c28_68, %c0_69] : memref<32x48x16xbf16, #tpu.memory_space<vmem>>, vector<8x16x16xbf16>
      %62 = vector.shape_cast %61 : vector<8x16x16xbf16> to vector<128x16xbf16>
      %c0_70 = arith.constant 0 : index
      %c32_71 = arith.constant 32 : index
      %63 = vector.load %arg11[%c0_70, %c32_71] : memref<128x144xbf16, #tpu.memory_space<vmem>>, vector<128x16xbf16>
      tpu.vector_store %arg11[%c0_70, %c32_71], %62 {strides = array<i32>} : memref<128x144xbf16, #tpu.memory_space<vmem>>, vector<128x16xbf16>,
      %c12_72 = arith.constant 12 : index
      %c4_73 = arith.constant 4 : index
      %c0_74 = arith.constant 0 : index
      %64 = vector.load %arg10[%c12_72, %c4_73, %c0_74] : memref<32x48x16xbf16, #tpu.memory_space<vmem>>, vector<8x16x16xbf16>
      %65 = vector.shape_cast %64 : vector<8x16x16xbf16> to vector<128x16xbf16>
      %c0_75 = arith.constant 0 : index
      %c48_76 = arith.constant 48 : index
      %66 = vector.load %arg11[%c0_75, %c48_76] : memref<128x144xbf16, #tpu.memory_space<vmem>>, vector<128x16xbf16>
      tpu.vector_store %arg11[%c0_75, %c48_76], %65 {strides = array<i32>} : memref<128x144xbf16, #tpu.memory_space<vmem>>, vector<128x16xbf16>,
      %c12_77 = arith.constant 12 : index
      %c16_78 = arith.constant 16 : index
      %c0_79 = arith.constant 0 : index
      %67 = vector.load %arg10[%c12_77, %c16_78, %c0_79] : memref<32x48x16xbf16, #tpu.memory_space<vmem>>, vector<8x16x16xbf16>
      %68 = vector.shape_cast %67 : vector<8x16x16xbf16> to vector<128x16xbf16>
      %c0_80 = arith.constant 0 : index
      %c64_81 = arith.constant 64 : index
      %69 = vector.load %arg11[%c0_80, %c64_81] : memref<128x144xbf16, #tpu.memory_space<vmem>>, vector<128x16xbf16>
      tpu.vector_store %arg11[%c0_80, %c64_81], %68 {strides = array<i32>} : memref<128x144xbf16, #tpu.memory_space<vmem>>, vector<128x16xbf16>,
      %c12_82 = arith.constant 12 : index
      %c28_83 = arith.constant 28 : index
      %c0_84 = arith.constant 0 : index
      %70 = vector.load %arg10[%c12_82, %c28_83, %c0_84] : memref<32x48x16xbf16, #tpu.memory_space<vmem>>, vector<8x16x16xbf16>
      %71 = vector.shape_cast %70 : vector<8x16x16xbf16> to vector<128x16xbf16>
      %c0_85 = arith.constant 0 : index
      %c80_86 = arith.constant 80 : index
      %72 = vector.load %arg11[%c0_85, %c80_86] : memref<128x144xbf16, #tpu.memory_space<vmem>>, vector<128x16xbf16>
      tpu.vector_store %arg11[%c0_85, %c80_86], %71 {strides = array<i32>} : memref<128x144xbf16, #tpu.memory_space<vmem>>, vector<128x16xbf16>,
      %c24_87 = arith.constant 24 : index
      %c4_88 = arith.constant 4 : index
      %c0_89 = arith.constant 0 : index
      %73 = vector.load %arg10[%c24_87, %c4_88, %c0_89] : memref<32x48x16xbf16, #tpu.memory_space<vmem>>, vector<8x16x16xbf16>
      %74 = vector.shape_cast %73 : vector<8x16x16xbf16> to vector<128x16xbf16>
      %c0_90 = arith.constant 0 : index
      %c96_91 = arith.constant 96 : index
      %75 = vector.load %arg11[%c0_90, %c96_91] : memref<128x144xbf16, #tpu.memory_space<vmem>>, vector<128x16xbf16>
      tpu.vector_store %arg11[%c0_90, %c96_91], %74 {strides = array<i32>} : memref<128x144xbf16, #tpu.memory_space<vmem>>, vector<128x16xbf16>,
      %c24_92 = arith.constant 24 : index
      %c16_93 = arith.constant 16 : index
      %c0_94 = arith.constant 0 : index
      %76 = vector.load %arg10[%c24_92, %c16_93, %c0_94] : memref<32x48x16xbf16, #tpu.memory_space<vmem>>, vector<8x16x16xbf16>
      %77 = vector.shape_cast %76 : vector<8x16x16xbf16> to vector<128x16xbf16>
      %c0_95 = arith.constant 0 : index
      %c112_96 = arith.constant 112 : index
      %78 = vector.load %arg11[%c0_95, %c112_96] : memref<128x144xbf16, #tpu.memory_space<vmem>>, vector<128x16xbf16>
      tpu.vector_store %arg11[%c0_95, %c112_96], %77 {strides = array<i32>} : memref<128x144xbf16, #tpu.memory_space<vmem>>, vector<128x16xbf16>,
      %c24_97 = arith.constant 24 : index
      %c28_98 = arith.constant 28 : index
      %c0_99 = arith.constant 0 : index
      %79 = vector.load %arg10[%c24_97, %c28_98, %c0_99] : memref<32x48x16xbf16, #tpu.memory_space<vmem>>, vector<8x16x16xbf16>
      %80 = vector.shape_cast %79 : vector<8x16x16xbf16> to vector<128x16xbf16>
      %c0_100 = arith.constant 0 : index
      %c128_101 = arith.constant 128 : index
      %81 = vector.load %arg11[%c0_100, %c128_101] : memref<128x144xbf16, #tpu.memory_space<vmem>>, vector<128x16xbf16>
      tpu.vector_store %arg11[%c0_100, %c128_101], %80 {strides = array<i32>} : memref<128x144xbf16, #tpu.memory_space<vmem>>, vector<128x16xbf16>,
      %c0_102 = arith.constant 0 : index
      %c0_103 = arith.constant 0 : index
      %82 = vector.load %arg11[%c0_102, %c0_103] : memref<128x144xbf16, #tpu.memory_space<vmem>>, vector<128x144xbf16>
      %c0_104 = arith.constant 0 : index
      %c0_105 = arith.constant 0 : index
      %c0_106 = arith.constant 0 : index
      %83 = vector.load %arg5[%c0_104, %c0_105, %c0_106] : memref<1x144x16xbf16, #tpu.memory_space<vmem>>, vector<1x144x16xbf16>
      %84 = vector.shape_cast %83 : vector<1x144x16xbf16> to vector<144x16xbf16>
      %cst_107 = arith.constant dense<0.000000e+00> : vector<128x16xf32>
      %85 = tpu.matmul %82, %84, %cst_107 {dimension_numbers = #tpu.dot_dimension_numbers<[1], [0], [0], [1], [0, 0, 1, 1], [], []>} : vector<128x144xbf16>, vector<144x16xbf16>, vector<128x16xf32> -> vector<128x16xf32>
      %c0_108 = arith.constant 0 : index
      %c0_109 = arith.constant 0 : index
      %c0_110 = arith.constant 0 : index
      %86 = vector.load %arg6[%c0_108, %c0_109, %c0_110] : memref<1x1x16xf32, #tpu.memory_space<vmem>>, vector<1x1x16xf32>
      %87 = vector.shape_cast %86 : vector<1x1x16xf32> to vector<1x16xf32>
      %88 = vector.broadcast %87 : vector<1x16xf32> to vector<128x16xf32>
      %89 = arith.addf %85, %88 : vector<128x16xf32>
      %cst_111 = arith.constant 0.000000e+00 : f32
      %90 = vector.broadcast %cst_111 : f32 to vector<128x16xf32>
      %91 = arith.maximumf %89, %90 : vector<128x16xf32>
      %92 = arith.truncf %91 : vector<128x16xf32> to vector<128x16xbf16>
      %c0_112 = arith.constant 0 : index
      %c0_113 = arith.constant 0 : index
      %c0_114 = arith.constant 0 : index
      %93 = vector.load %arg7[%c0_112, %c0_113, %c0_114] : memref<1x16x32xbf16, #tpu.memory_space<vmem>>, vector<1x16x32xbf16>
      %94 = vector.shape_cast %93 : vector<1x16x32xbf16> to vector<16x32xbf16>
      %cst_115 = arith.constant dense<0.000000e+00> : vector<128x32xf32>
      %95 = tpu.matmul %92, %94, %cst_115 {dimension_numbers = #tpu.dot_dimension_numbers<[1], [0], [0], [1], [0, 0, 1, 1], [], []>} : vector<128x16xbf16>, vector<16x32xbf16>, vector<128x32xf32> -> vector<128x32xf32>
      %c0_116 = arith.constant 0 : index
      %c0_117 = arith.constant 0 : index
      %c0_118 = arith.constant 0 : index
      %96 = vector.load %arg8[%c0_116, %c0_117, %c0_118] : memref<1x1x32xf32, #tpu.memory_space<vmem>>, vector<1x1x32xf32>
      %97 = vector.shape_cast %96 : vector<1x1x32xf32> to vector<1x32xf32>
      %98 = vector.broadcast %97 : vector<1x32xf32> to vector<128x32xf32>
      %99 = arith.addf %95, %98 : vector<128x32xf32>
      %cst_119 = arith.constant 0.000000e+00 : f32
      %100 = vector.broadcast %cst_119 : f32 to vector<128x32xf32>
      %101 = arith.maximumf %99, %100 : vector<128x32xf32>
      %102 = arith.truncf %101 : vector<128x32xf32> to vector<128x32xbf16>
      %c0_120 = arith.constant 0 : index
      %c0_121 = arith.constant 0 : index
      %c0_122 = arith.constant 0 : index
      %c0_123 = arith.constant 0 : index
      %103 = vector.load %arg9[%c0_120, %c0_121, %c0_122, %c0_123] : memref<1x1x128x32xbf16, #tpu.memory_space<vmem>>, vector<1x1x128x32xbf16>
      %104 = vector.shape_cast %103 : vector<1x1x128x32xbf16> to vector<128x32xbf16>
      %105 = vector.shape_cast %102 : vector<128x32xbf16> to vector<1x1x128x32xbf16>
      tpu.vector_store %arg9[%c0_120, %c0_121, %c0_122, %c0_123], %105 {strides = array<i32>} : memref<1x1x128x32xbf16, #tpu.memory_space<vmem>>, vector<1x1x128x32xbf16>,
    } else {
    }
    return
  }
  func.func @transform_0(%arg0: i32, %arg1: i32) -> (i32, i32, i32, i32, i32) {
    %c0_i32 = arith.constant 0 : i32
    %c0_i32_0 = arith.constant 0 : i32
    %c0_i32_1 = arith.constant 0 : i32
    %c0_i32_2 = arith.constant 0 : i32
    return %arg0, %arg1, %c0_i32, %c0_i32_0, %c0_i32_1 : i32, i32, i32, i32, i32
  }
  func.func @transform_1(%arg0: i32, %arg1: i32) -> (i32, i32, i32) {
    %c0_i32 = arith.constant 0 : i32
    %c0_i32_0 = arith.constant 0 : i32
    %c0_i32_1 = arith.constant 0 : i32
    return %arg0, %c0_i32, %c0_i32_0 : i32, i32, i32
  }
  func.func @transform_2(%arg0: i32, %arg1: i32) -> (i32, i32, i32) {
    %c0_i32 = arith.constant 0 : i32
    %c0_i32_0 = arith.constant 0 : i32
    %c0_i32_1 = arith.constant 0 : i32
    return %arg0, %c0_i32, %c0_i32_0 : i32, i32, i32
  }
  func.func @transform_3(%arg0: i32, %arg1: i32) -> (i32, i32, i32) {
    %c0_i32 = arith.constant 0 : i32
    %c0_i32_0 = arith.constant 0 : i32
    %c0_i32_1 = arith.constant 0 : i32
    return %arg0, %c0_i32, %c0_i32_0 : i32, i32, i32
  }
  func.func @transform_4(%arg0: i32, %arg1: i32) -> (i32, i32, i32) {
    %c0_i32 = arith.constant 0 : i32
    %c0_i32_0 = arith.constant 0 : i32
    %c0_i32_1 = arith.constant 0 : i32
    return %arg0, %c0_i32, %c0_i32_0 : i32, i32, i32
  }
  func.func @transform_5(%arg0: i32, %arg1: i32) -> (i32, i32, i32) {
    %c0_i32 = arith.constant 0 : i32
    %c0_i32_0 = arith.constant 0 : i32
    %c0_i32_1 = arith.constant 0 : i32
    return %arg0, %c0_i32, %c0_i32_0 : i32, i32, i32
  }
  func.func @transform_6(%arg0: i32, %arg1: i32) -> (i32, i32, i32) {
    %c0_i32 = arith.constant 0 : i32
    %c0_i32_0 = arith.constant 0 : i32
    %c0_i32_1 = arith.constant 0 : i32
    return %arg0, %c0_i32, %c0_i32_0 : i32, i32, i32
  }
  func.func @transform_7(%arg0: i32, %arg1: i32) -> (i32, i32, i32, i32) {
    %c0_i32 = arith.constant 0 : i32
    %c0_i32_0 = arith.constant 0 : i32
    %c0_i32_1 = arith.constant 0 : i32
    return %arg1, %arg0, %c0_i32, %c0_i32_0 : i32, i32, i32, i32
  }
}

module attributes {stable_mosaic.version = 11 : i64} {
  func.func @_final_kernel(%arg0: i32, %arg1: i32, %arg2: memref<1x128x32xbf16, #tpu.memory_space<vmem>>, %arg3: memref<1x3x128x32xbf16, #tpu.memory_space<vmem>>, %arg4: memref<4x32x32xbf16, #tpu.memory_space<vmem>>, %arg5: memref<1x1x32xf32, #tpu.memory_space<vmem>>, %arg6: memref<1x128x32xf32, #tpu.memory_space<vmem>>) attributes {dimension_semantics = [#tpu.dimension_semantics<parallel>, #tpu.dimension_semantics<parallel>], iteration_bounds = array<i64: 2, 1>, scalar_prefetch = 0 : i64, scratch_operands = 0 : i64, tpu.core_type = #tpu.core_type<tc>, window_params = [{transform_indices = @transform_0, window_bounds = array<i64: 1, 128, 32>}, {transform_indices = @transform_1, window_bounds = array<i64: 1, 3, 128, 32>}, {pipeline_mode = #tpu.pipeline_mode<synchronous>, transform_indices = @transform_2, window_bounds = array<i64: 4, 32, 32>}, {transform_indices = @transform_3, window_bounds = array<i64: 1, 1, 32>}, {transform_indices = @transform_4, window_bounds = array<i64: 1, 128, 32>}]} {
    %c0 = arith.constant 0 : index
    %c0_0 = arith.constant 0 : index
    %c0_1 = arith.constant 0 : index
    %0 = vector.load %arg2[%c0, %c0_0, %c0_1] : memref<1x128x32xbf16, #tpu.memory_space<vmem>>, vector<1x128x32xbf16>
    %1 = vector.shape_cast %0 : vector<1x128x32xbf16> to vector<128x32xbf16>
    %c0_2 = arith.constant 0 : index
    %c0_3 = arith.constant 0 : index
    %c0_4 = arith.constant 0 : index
    %2 = vector.load %arg4[%c0_2, %c0_3, %c0_4] : memref<4x32x32xbf16, #tpu.memory_space<vmem>>, vector<1x32x32xbf16>
    %3 = vector.shape_cast %2 : vector<1x32x32xbf16> to vector<32x32xbf16>
    %cst = arith.constant dense<0.000000e+00> : vector<128x32xf32>
    %4 = tpu.matmul %1, %3, %cst {dimension_numbers = #tpu.dot_dimension_numbers<[1], [0], [0], [1], [0, 0, 1, 1], [], []>} : vector<128x32xbf16>, vector<32x32xbf16>, vector<128x32xf32> -> vector<128x32xf32>
    %c0_5 = arith.constant 0 : index
    %c0_6 = arith.constant 0 : index
    %c0_7 = arith.constant 0 : index
    %c0_8 = arith.constant 0 : index
    %5 = vector.load %arg3[%c0_5, %c0_6, %c0_7, %c0_8] : memref<1x3x128x32xbf16, #tpu.memory_space<vmem>>, vector<1x1x128x32xbf16>
    %6 = vector.shape_cast %5 : vector<1x1x128x32xbf16> to vector<128x32xbf16>
    %c1 = arith.constant 1 : index
    %c0_9 = arith.constant 0 : index
    %c0_10 = arith.constant 0 : index
    %7 = vector.load %arg4[%c1, %c0_9, %c0_10] : memref<4x32x32xbf16, #tpu.memory_space<vmem>>, vector<1x32x32xbf16>
    %8 = vector.shape_cast %7 : vector<1x32x32xbf16> to vector<32x32xbf16>
    %cst_11 = arith.constant dense<0.000000e+00> : vector<128x32xf32>
    %9 = tpu.matmul %6, %8, %cst_11 {dimension_numbers = #tpu.dot_dimension_numbers<[1], [0], [0], [1], [0, 0, 1, 1], [], []>} : vector<128x32xbf16>, vector<32x32xbf16>, vector<128x32xf32> -> vector<128x32xf32>
    %10 = arith.addf %4, %9 : vector<128x32xf32>
    %c0_12 = arith.constant 0 : index
    %c1_13 = arith.constant 1 : index
    %c0_14 = arith.constant 0 : index
    %c0_15 = arith.constant 0 : index
    %11 = vector.load %arg3[%c0_12, %c1_13, %c0_14, %c0_15] : memref<1x3x128x32xbf16, #tpu.memory_space<vmem>>, vector<1x1x128x32xbf16>
    %12 = vector.shape_cast %11 : vector<1x1x128x32xbf16> to vector<128x32xbf16>
    %c2 = arith.constant 2 : index
    %c0_16 = arith.constant 0 : index
    %c0_17 = arith.constant 0 : index
    %13 = vector.load %arg4[%c2, %c0_16, %c0_17] : memref<4x32x32xbf16, #tpu.memory_space<vmem>>, vector<1x32x32xbf16>
    %14 = vector.shape_cast %13 : vector<1x32x32xbf16> to vector<32x32xbf16>
    %cst_18 = arith.constant dense<0.000000e+00> : vector<128x32xf32>
    %15 = tpu.matmul %12, %14, %cst_18 {dimension_numbers = #tpu.dot_dimension_numbers<[1], [0], [0], [1], [0, 0, 1, 1], [], []>} : vector<128x32xbf16>, vector<32x32xbf16>, vector<128x32xf32> -> vector<128x32xf32>
    %16 = arith.addf %10, %15 : vector<128x32xf32>
    %c0_19 = arith.constant 0 : index
    %c2_20 = arith.constant 2 : index
    %c0_21 = arith.constant 0 : index
    %c0_22 = arith.constant 0 : index
    %17 = vector.load %arg3[%c0_19, %c2_20, %c0_21, %c0_22] : memref<1x3x128x32xbf16, #tpu.memory_space<vmem>>, vector<1x1x128x32xbf16>
    %18 = vector.shape_cast %17 : vector<1x1x128x32xbf16> to vector<128x32xbf16>
    %c3 = arith.constant 3 : index
    %c0_23 = arith.constant 0 : index
    %c0_24 = arith.constant 0 : index
    %19 = vector.load %arg4[%c3, %c0_23, %c0_24] : memref<4x32x32xbf16, #tpu.memory_space<vmem>>, vector<1x32x32xbf16>
    %20 = vector.shape_cast %19 : vector<1x32x32xbf16> to vector<32x32xbf16>
    %cst_25 = arith.constant dense<0.000000e+00> : vector<128x32xf32>
    %21 = tpu.matmul %18, %20, %cst_25 {dimension_numbers = #tpu.dot_dimension_numbers<[1], [0], [0], [1], [0, 0, 1, 1], [], []>} : vector<128x32xbf16>, vector<32x32xbf16>, vector<128x32xf32> -> vector<128x32xf32>
    %22 = arith.addf %16, %21 : vector<128x32xf32>
    %c0_26 = arith.constant 0 : index
    %c0_27 = arith.constant 0 : index
    %c0_28 = arith.constant 0 : index
    %23 = vector.load %arg5[%c0_26, %c0_27, %c0_28] : memref<1x1x32xf32, #tpu.memory_space<vmem>>, vector<1x1x32xf32>
    %24 = vector.shape_cast %23 : vector<1x1x32xf32> to vector<1x32xf32>
    %25 = vector.broadcast %24 : vector<1x32xf32> to vector<128x32xf32>
    %26 = arith.addf %22, %25 : vector<128x32xf32>
    %cst_29 = arith.constant 0.000000e+00 : f32
    %27 = vector.broadcast %cst_29 : f32 to vector<128x32xf32>
    %28 = arith.maximumf %26, %27 : vector<128x32xf32>
    %c0_30 = arith.constant 0 : index
    %c0_31 = arith.constant 0 : index
    %c0_32 = arith.constant 0 : index
    %29 = vector.load %arg6[%c0_30, %c0_31, %c0_32] : memref<1x128x32xf32, #tpu.memory_space<vmem>>, vector<1x128x32xf32>
    %30 = vector.shape_cast %29 : vector<1x128x32xf32> to vector<128x32xf32>
    %31 = vector.shape_cast %28 : vector<128x32xf32> to vector<1x128x32xf32>
    tpu.vector_store %arg6[%c0_30, %c0_31, %c0_32], %31 {strides = array<i32>} : memref<1x128x32xf32, #tpu.memory_space<vmem>>, vector<1x128x32xf32>,
    return
  }
  func.func @transform_0(%arg0: i32, %arg1: i32) -> (i32, i32, i32) {
    %c0_i32 = arith.constant 0 : i32
    %c0_i32_0 = arith.constant 0 : i32
    return %arg0, %arg1, %c0_i32 : i32, i32, i32
  }
  func.func @transform_1(%arg0: i32, %arg1: i32) -> (i32, i32, i32, i32) {
    %c0_i32 = arith.constant 0 : i32
    %c0_i32_0 = arith.constant 0 : i32
    %c0_i32_1 = arith.constant 0 : i32
    return %arg0, %c0_i32, %arg1, %c0_i32_0 : i32, i32, i32, i32
  }
  func.func @transform_2(%arg0: i32, %arg1: i32) -> (i32, i32, i32) {
    %c0_i32 = arith.constant 0 : i32
    %c0_i32_0 = arith.constant 0 : i32
    %c0_i32_1 = arith.constant 0 : i32
    %c0_i32_2 = arith.constant 0 : i32
    return %c0_i32, %c0_i32_0, %c0_i32_1 : i32, i32, i32
  }
  func.func @transform_3(%arg0: i32, %arg1: i32) -> (i32, i32, i32) {
    %c0_i32 = arith.constant 0 : i32
    %c0_i32_0 = arith.constant 0 : i32
    %c0_i32_1 = arith.constant 0 : i32
    return %arg0, %c0_i32, %c0_i32_0 : i32, i32, i32
  }
  func.func @transform_4(%arg0: i32, %arg1: i32) -> (i32, i32, i32) {
    %c0_i32 = arith.constant 0 : i32
    %c0_i32_0 = arith.constant 0 : i32
    return %arg0, %arg1, %c0_i32 : i32, i32, i32
  }
}

</mosaic_0001>

<llo_original>
// kernel: easpp_forward.3
$region0: #{easpp_forward.3}
  #allocation0 [shape = 'u32[]', space=smem, size = 0x4, offset = 0x4, fixed_abs, tag = 'smem constant byte address 0x4 - core index']
  #allocation1 [shape = 'u32[144,128]{1,0:T(1,128)}', space=vmem, size = 0x12000, scoped, tag = 'internal scratch']
  %s0 = inlined_call_operand.vmem [shape: bf16[256,64], index: 0, kind: input, shape index: {}]
  %s1 = inlined_call_operand.vmem [shape: bf16[64,128], index: 1, kind: input, shape index: {}]
  %s2 = inlined_call_operand.vmem [shape: f32[1,128], index: 2, kind: input, shape index: {}]
  %s3 = inlined_call_operand.vmem [shape: bf16[256,128], index: 3, kind: output, shape index: {}]
  %s4 = sld [smem:[#allocation0]]
  $region45: #{easpp_forward.3} parent=0
    _
  %s6 = ssub.s32 1, %s4
  %s7 = scalar_select 0, %s6, %s4
  loop: start=0, step=1, limit=4
  $region2: #{easpp_forward.3} parent=0 // loop_pre_header
    _
  $region3: #{easpp_forward.3} parent=0 // loop_header
    %s9 = sphi 0, %s13
    %p10 = scmp.ge.s32.totalorder %s9, 4
    %s19 = sphi 0, %s21
    %s22 = sphi 0, %s19
    %s23 = sphi 0, %s22
    %s39 = sphi 0, %s23
    %s43 = sphi 0, %s43
    %s45 = sphi 0, %s43
    %s46 = sphi 0, %s45
    %s60 = sphi 0, %s46
    %s64 = sphi 0, %s64
    %s66 = sphi 0, %s64
    %s67 = sphi 0, %s66
    %s81 = sphi 0, %s67
    %s87 = sphi 0, %s89
    %s90 = sphi 0, %s87
    %s91 = sphi 0, %s90
    %s107 = sphi 0, %s91
  $region4: #{easpp_forward.3} parent=0 // loop_header_branch
    %12 = sbr.rel (%p10) target = $region8
  $region5: #{easpp_forward.3} parent=0 // loop_body
    %s14 = ssub.s32 %s9, 1
    %s15 = ssub.s32 %s9, 2
    %s16 = sadd.s32 %s9, 1
    %s17 = ssub.s32 %s9, %s16
    %p18 = scmp.eq.s32.totalorder %s17, 0
    %s20 = sadd.s32 %s19, 1
    %s21 = scalar_select %p18, %s19, %s20
    %p24 = pneg %p18
    %p25 = scmp.eq.s32.totalorder %s9, 1
    %p26 = por %p24, %p25
    %p27 = scmp.ne.s32.totalorder %s19, %s22
    %p28 = scmp.eq.s32.totalorder %s9, 0
    %p29 = por %p27, %p28
    %p30 = scmp.ne.s32.totalorder %s19, %s22
    %p31 = scmp.eq.s32.totalorder %s14, 1
    %p32 = por %p30, %p31
    %p33 = scmp.ne.s32.totalorder %s22, %s23
    %p34 = scmp.eq.s32.totalorder %s14, 0
    %p35 = por %p33, %p34
    %p36 = scmp.ne.s32.totalorder %s22, %s23
    %p37 = scmp.eq.s32.totalorder %s15, 1
    %p38 = por %p36, %p37
    %p40 = scmp.ne.s32.totalorder %s23, %s39
    %p41 = scmp.eq.s32.totalorder %s15, 0
    %p42 = por %p40, %p41
    %s44 = sadd.s32 %s43, 1
    %p47 = scmp.eq.s32.totalorder %s9, 1
    %p48 = scmp.ne.s32.totalorder %s43, %s45
    %p49 = scmp.eq.s32.totalorder %s9, 0
    %p50 = por %p48, %p49
    %p51 = scmp.ne.s32.totalorder %s43, %s45
    %p52 = scmp.eq.s32.totalorder %s14, 1
    %p53 = por %p51, %p52
    %p54 = scmp.ne.s32.totalorder %s45, %s46
    %p55 = scmp.eq.s32.totalorder %s14, 0
    %p56 = por %p54, %p55
    %p57 = scmp.ne.s32.totalorder %s45, %s46
    %p58 = scmp.eq.s32.totalorder %s15, 1
    %p59 = por %p57, %p58
    %p61 = scmp.ne.s32.totalorder %s46, %s60
    %p62 = scmp.eq.s32.totalorder %s15, 0
    %p63 = por %p61, %p62
    %s65 = sadd.s32 %s64, 1
    %p68 = scmp.eq.s32.totalorder %s9, 1
    %p69 = scmp.ne.s32.totalorder %s64, %s66
    %p70 = scmp.eq.s32.totalorder %s9, 0
    %p71 = por %p69, %p70
    %p72 = scmp.ne.s32.totalorder %s64, %s66
    %p73 = scmp.eq.s32.totalorder %s14, 1
    %p74 = por %p72, %p73
    %p75 = scmp.ne.s32.totalorder %s66, %s67
    %p76 = scmp.eq.s32.totalorder %s14, 0
    %p77 = por %p75, %p76
    %p78 = scmp.ne.s32.totalorder %s66, %s67
    %p79 = scmp.eq.s32.totalorder %s15, 1
    %p80 = por %p78, %p79
    %p82 = scmp.ne.s32.totalorder %s67, %s81
    %p83 = scmp.eq.s32.totalorder %s15, 0
    %p84 = por %p82, %p83
    %s85 = ssub.s32 %s9, %s16
    %p86 = scmp.eq.s32.totalorder %s85, 0
    %s88 = sadd.s32 %s87, 1
    %s89 = scalar_select %p86, %s87, %s88
    %p92 = pneg %p86
    %p93 = scmp.eq.s32.totalorder %s9, 1
    %p94 = por %p92, %p93
    %p95 = scmp.ne.s32.totalorder %s87, %s90
    %p96 = scmp.eq.s32.totalorder %s9, 0
    %p97 = por %p95, %p96
    %p98 = scmp.ne.s32.totalorder %s87, %s90
    %p99 = scmp.eq.s32.totalorder %s14, 1
    %p100 = por %p98, %p99
    %p101 = scmp.ne.s32.totalorder %s90, %s91
    %p102 = scmp.eq.s32.totalorder %s14, 0
    %p103 = por %p101, %p102
    %p104 = scmp.ne.s32.totalorder %s90, %s91
    %p105 = scmp.eq.s32.totalorder %s15, 1
    %p106 = por %p104, %p105
    %p108 = scmp.ne.s32.totalorder %s91, %s107
    %p109 = scmp.eq.s32.totalorder %s15, 0
    %p110 = por %p108, %p109
    %p111 = scmp.le.s32.totalorder 1, %s9
    %p112 = scmp.lt.s32.totalorder %s9, 3
    %p113 = pnand %p111, %p112
    %p114 = pneg %p113
    // Predicated region
    $region9: #{easpp_forward.3} parent=5 // pred_check
      _
    $region10: #{easpp_forward.3} parent=5 // pred_check_branch
      %116 = sbr.rel (%p113) target = $region12
    $region11: #{easpp_forward.3} parent=5 // pred_region
      %s117 = ssub.s32 %s9, 1
      // Predicated region
      $region13: #{easpp_forward.3} parent=11 // pred_check
        %p118 = pneg %p56
      $region14: #{easpp_forward.3} parent=11 // pred_check_branch
        %120 = sbr.rel (%p118) target = $region16
      $region15: #{easpp_forward.3} parent=11 // pred_region
        _
      $region16: #{easpp_forward.3} parent=11 // pred_fallthru
        _
      // Predicated region
      $region17: #{easpp_forward.3} parent=11 // pred_check
        %p121 = pneg %p77
      $region18: #{easpp_forward.3} parent=11 // pred_check_branch
        %123 = sbr.rel (%p121) target = $region20
      $region19: #{easpp_forward.3} parent=11 // pred_region
        _
      $region20: #{easpp_forward.3} parent=11 // pred_fallthru
        _
    $region12: #{easpp_forward.3} parent=5 // pred_fallthru
      _
    %p124 = scmp.lt.s32.totalorder %s9, 2
    // Predicated region
    $region21: #{easpp_forward.3} parent=5 // pred_check
      %p125 = pneg %p124
    $region22: #{easpp_forward.3} parent=5 // pred_check_branch
      %127 = sbr.rel (%p125) target = $region24
    $region23: #{easpp_forward.3} parent=5 // pred_region
      // Predicated region
      $region25: #{easpp_forward.3} parent=23 // pred_check
        %p128 = pneg %p29
      $region26: #{easpp_forward.3} parent=23 // pred_check_branch
        %130 = sbr.rel (%p128) target = $region28
      $region27: #{easpp_forward.3} parent=23 // pred_region
        %s131 = smul.u32 16, %s9
        %p132 = scmp.lt.s32.totalorder %s131, 31
        %s133 = scalar_select %p132, %s131, 31
        %s134 = smul.addr %s133, 4
        %s135 = scalar_lea.vmem %s0, %s134
        %s136 = smul.u32 16, %s9
      $region28: #{easpp_forward.3} parent=23 // pred_fallthru
        _
    $region24: #{easpp_forward.3} parent=5 // pred_fallthru
      _
    %p137 = scmp.le.s32.totalorder 1, %s9
    %p138 = scmp.lt.s32.totalorder %s9, 3
    %p139 = pnand %p137, %p138
    %p140 = pneg %p139
    // Predicated region
    $region29: #{easpp_forward.3} parent=5 // pred_check
      _
    $region30: #{easpp_forward.3} parent=5 // pred_check_branch
      %142 = sbr.rel (%p139) target = $region32
    $region31: #{easpp_forward.3} parent=5 // pred_region
      %s143 = ssub.s32 %s9, 1
      %s144 = smul.u32 16, %s14
      %p145 = scmp.lt.s32.totalorder %s144, 31
      %s146 = scalar_select %p145, %s144, 31
      %s147 = smul.addr %s146, 4
      %s148 = scalar_lea.vmem %s0, %s147
      %p149 = pneg %p35
      %p150 = pneg %p32
      %p151 = pneg %p56
      %p152 = pneg %p53
      %p153 = pneg %p77
      %p154 = pneg %p74
      %p155 = pneg %p103
      %p156 = pneg %p100
      %s157 = smul.u32 16, %s14
      %p158 = scmp.lt.s32.totalorder %s157, 31
      %s159 = scalar_select %p158, %s157, 31
      %s160 = smul.addr %s159, 4
      %s161 = scalar_lea.vmem %s3, %s160
      %s162 = smul.u32 16, %s14
      %p163 = scmp.lt.s32.totalorder %s162, 31
      %s164 = scalar_select %p163, %s162, 31
      %s165 = smul.addr %s164, 4
      %s166 = scalar_lea.vmem %s0, %s165
      %s167 = smul.u32 16, %s14
      %s168 = smul.u32 16, %s14
      %p169 = scmp.lt.s32.totalorder %s168, 31
      %s170 = scalar_select %p169, %s168, 31
      %s171 = smul.addr %s170, 4
      %s172 = scalar_lea.vmem %s3, %s171
      %s173 = smul.u32 16, %s14
      %v175 = vld [vmem:[%s166] sm:$0xf]
      %v176 = vld [vmem:[%s166 + $0x4] sm:$0xf]
      %v177 = vld [vmem:[%s166 + $0x8] sm:$0xf]
      %v178 = vld [vmem:[%s166 + $0xc] sm:$0xf]
      %v179 = vld [vmem:[%s166 + $0x10] sm:$0xf]
      %v180 = vld [vmem:[%s166 + $0x14] sm:$0xf]
      %v181 = vld [vmem:[%s166 + $0x18] sm:$0xf]
      %v182 = vld [vmem:[%s166 + $0x1c] sm:$0xf]
      %v183 = vld [vmem:[%s166 + $0x20] sm:$0xf]
      %v184 = vld [vmem:[%s166 + $0x24] sm:$0xf]
      %v185 = vld [vmem:[%s166 + $0x28] sm:$0xf]
      %v186 = vld [vmem:[%s166 + $0x2c] sm:$0xf]
      %v187 = vld [vmem:[%s166 + $0x30] sm:$0xf]
      %v188 = vld [vmem:[%s166 + $0x34] sm:$0xf]
      %v189 = vld [vmem:[%s166 + $0x38] sm:$0xf]
      %v190 = vld [vmem:[%s166 + $0x3c] sm:$0xf]
      %v191 = vld [vmem:[%s1] sm:$0xf]
      %v192 = vld [vmem:[%s1 + $0x4] sm:$0xf]
      %v193 = vld [vmem:[%s1 + $0x8] sm:$0xf]
      %v194 = vld [vmem:[%s1 + $0xc] sm:$0xf]
      %v195 = vld [vmem:[%s1 + $0x10] sm:$0xf]
      %v196 = vld [vmem:[%s1 + $0x14] sm:$0xf]
      %v197 = vld [vmem:[%s1 + $0x18] sm:$0xf]
      %v198 = vld [vmem:[%s1 + $0x1c] sm:$0xf]
      %v199 = vld [vmem:[%s2] sm:$0x1]
      %v201 = vlaneseq
      %v202 = vshrl.u32 %v201, 7
      %v203 = vsub.s32 0, %v202
      %v204 = vrot.slane %v199, %v203
      %v222 = vunpack.c.l.b16 %v175
      %v223 = vunpack.c.l.b16 %v176
      %v224 = vunpack.c.l.b16 %v177
      %v225 = vunpack.c.l.b16 %v178
      %v226 = vunpack.c.l.b16 %v179
      %v227 = vunpack.c.l.b16 %v180
      %v228 = vunpack.c.l.b16 %v181
      %v229 = vunpack.c.l.b16 %v182
      %v230 = vunpack.c.l.b16 %v183
      %v231 = vunpack.c.l.b16 %v184
      %v232 = vunpack.c.l.b16 %v185
      %v233 = vunpack.c.l.b16 %v186
      %v234 = vunpack.c.l.b16 %v187
      %v235 = vunpack.c.l.b16 %v188
      %v236 = vunpack.c.l.b16 %v189
      %v237 = vunpack.c.l.b16 %v190
      %v238 = vpack.c.b16 %v223, %v222
      %v239 = vpack.c.b16 %v225, %v224
      %v240 = vpack.c.b16 %v227, %v226
      %v241 = vpack.c.b16 %v229, %v228
      %v242 = vpack.c.b16 %v231, %v230
      %v243 = vpack.c.b16 %v233, %v232
      %v244 = vpack.c.b16 %v235, %v234
      %v245 = vpack.c.b16 %v237, %v236
      %v254 = vunpack.c.l.b16 %v191
      %v255 = vunpack.c.l.b16 %v192
      %v256 = vunpack.c.l.b16 %v193
      %v257 = vunpack.c.l.b16 %v194
      %v258 = vunpack.c.l.b16 %v195
      %v259 = vunpack.c.l.b16 %v196
      %v260 = vunpack.c.l.b16 %v197
      %v261 = vunpack.c.l.b16 %v198
      %v262 = vpack.c.b16 %v255, %v254
      %v263 = vpack.c.b16 %v257, %v256
      %v264 = vpack.c.b16 %v259, %v258
      %v265 = vpack.c.b16 %v261, %v260
      %vm270 = vcmask 523264
      %v272 = vsel %vm270, %v238, 0
      %v275 = vsel %vm270, %v239, 0
      %v278 = vsel %vm270, %v240, 0
      %v281 = vsel %vm270, %v241, 0
      %v284 = vsel %vm270, %v242, 0
      %v287 = vsel %vm270, %v243, 0
      %v290 = vsel %vm270, %v244, 0
      %v293 = vsel %vm270, %v245, 0
      %295 = vmatprep.subr.bf16.mxu0 0
      %296 = vmatpush1.bf16.msra.mxu0 %v262
      %297 = vmatprep.subr.bf16.mxu0 0
      %298 = vmatpush1.bf16.msra.mxu0 %v263
      %299 = vmatprep.subr.bf16.mxu0 0
      %300 = vmatpush1.bf16.msra.mxu0 %v264
      %301 = vmatprep.subr.bf16.mxu0 0
      %302 = vmatpush1.bf16.msra.mxu0 %v265
      %303 = vmatprep.subr.bf16.mxu0 0
      %304 = vmatpush1.bf16.msra.mxu0 0
      %305 = vmatprep.subr.bf16.mxu0 0
      %306 = vmatpush1.bf16.msra.mxu0 0
      %307 = vmatprep.subr.bf16.mxu0 0
      %308 = vmatpush1.bf16.msra.mxu0 0
      %309 = vmatprep.subr.bf16.mxu0 0
      %310 = vmatpush1.bf16.msra.mxu0 0
      %311 = vmatprep.subr.bf16.mxu0 0
      %312 = vmatpush1.bf16.msra.mxu0 0
      %313 = vmatprep.subr.bf16.mxu0 0
      %314 = vmatpush1.bf16.msra.mxu0 0
      %315 = vmatprep.subr.bf16.mxu0 0
      %316 = vmatpush1.bf16.msra.mxu0 0
      %317 = vmatprep.subr.bf16.mxu0 0
      %318 = vmatpush1.bf16.msra.mxu0 0
      %319 = vmatprep.subr.bf16.mxu0 0
      %320 = vmatpush1.bf16.msra.mxu0 0
      %321 = vmatprep.subr.bf16.mxu0 0
      %322 = vmatpush1.bf16.msra.mxu0 0
      %323 = vmatprep.subr.bf16.mxu0 0
      %324 = vmatpush1.bf16.msra.mxu0 0
      %325 = vmatprep.subr.bf16.mxu0 0
      %326 = vmatpush1.bf16.msra.mxu0 0
      %327 = vmatprep.mubr.bf16.mxu0 0
      %328 = vmatmul.mubr.bf16.gmra.mrb[0].mxu0 %v272
      %v329 = vpop.f32.mrb[0].mxu0
      %v330 = vadd.f32 %v204, %v329
      %v331 = vpop.f32.mrb[0].mxu0
      %v332 = vpop.f32.mrb[0].mxu0
      %v333 = vadd.f32 %v204, %v332
      %v334 = vpop.f32.mrb[0].mxu0
      %335 = vmatprep.mubr.bf16.mxu0 0
      %336 = vmatmul.mubr.bf16.gmra.mrb[0].mxu0 %v275
      %v337 = vpop.f32.mrb[0].mxu0
      %v338 = vadd.f32 %v204, %v337
      %v339 = vpop.f32.mrb[0].mxu0
      %v340 = vpop.f32.mrb[0].mxu0
      %v341 = vadd.f32 %v204, %v340
      %v342 = vpop.f32.mrb[0].mxu0
      %343 = vmatprep.mubr.bf16.mxu0 0
      %344 = vmatmul.mubr.bf16.gmra.mrb[0].mxu0 %v278
      %v345 = vpop.f32.mrb[0].mxu0
      %v346 = vadd.f32 %v204, %v345
      %v347 = vpop.f32.mrb[0].mxu0
      %v348 = vpop.f32.mrb[0].mxu0
      %v349 = vadd.f32 %v204, %v348
      %v350 = vpop.f32.mrb[0].mxu0
      %351 = vmatprep.mubr.bf16.mxu0 0
      %352 = vmatmul.mubr.bf16.gmra.mrb[0].mxu0 %v281
      %v353 = vpop.f32.mrb[0].mxu0
      %v354 = vadd.f32 %v204, %v353
      %v355 = vpop.f32.mrb[0].mxu0
      %v356 = vpop.f32.mrb[0].mxu0
      %v357 = vadd.f32 %v204, %v356
      %v358 = vpop.f32.mrb[0].mxu0
      %359 = vmatprep.mubr.bf16.mxu0 0
      %360 = vmatmul.mubr.bf16.gmra.mrb[0].mxu0 %v284
      %v361 = vpop.f32.mrb[0].mxu0
      %v362 = vadd.f32 %v204, %v361
      %v363 = vpop.f32.mrb[0].mxu0
      %v364 = vpop.f32.mrb[0].mxu0
      %v365 = vadd.f32 %v204, %v364
      %v366 = vpop.f32.mrb[0].mxu0
      %367 = vmatprep.mubr.bf16.mxu0 0
      %368 = vmatmul.mubr.bf16.gmra.mrb[0].mxu0 %v287
      %v369 = vpop.f32.mrb[0].mxu0
      %v370 = vadd.f32 %v204, %v369
      %v371 = vpop.f32.mrb[0].mxu0
      %v372 = vpop.f32.mrb[0].mxu0
      %v373 = vadd.f32 %v204, %v372
      %v374 = vpop.f32.mrb[0].mxu0
      %375 = vmatprep.mubr.bf16.mxu0 0
      %376 = vmatmul.mubr.bf16.gmra.mrb[0].mxu0 %v290
      %v377 = vpop.f32.mrb[0].mxu0
      %v378 = vadd.f32 %v204, %v377
      %v379 = vpop.f32.mrb[0].mxu0
      %v380 = vpop.f32.mrb[0].mxu0
      %v381 = vadd.f32 %v204, %v380
      %v382 = vpop.f32.mrb[0].mxu0
      %383 = vmatprep.mubr.bf16.mxu0 0
      %384 = vmatmul.mubr.bf16.gmra.mrb[0].mxu0 %v293
      %v385 = vpop.f32.mrb[0].mxu0
      %v386 = vadd.f32 %v204, %v385
      %v387 = vpop.f32.mrb[0].mxu0
      %v388 = vpop.f32.mrb[0].mxu0
      %v389 = vadd.f32 %v204, %v388
      %v390 = vpop.f32.mrb[0].mxu0
      %391 = vdwg.mxu0
      %v392 = vmax.f32 %v330, 0.0
      %v393 = vmax.f32 %v333, 0.0
      %v394 = vmax.f32 %v338, 0.0
      %v395 = vmax.f32 %v341, 0.0
      %v396 = vmax.f32 %v346, 0.0
      %v397 = vmax.f32 %v349, 0.0
      %v398 = vmax.f32 %v354, 0.0
      %v399 = vmax.f32 %v357, 0.0
      %v400 = vmax.f32 %v362, 0.0
      %v401 = vmax.f32 %v365, 0.0
      %v402 = vmax.f32 %v370, 0.0
      %v403 = vmax.f32 %v373, 0.0
      %v404 = vmax.f32 %v378, 0.0
      %v405 = vmax.f32 %v381, 0.0
      %v406 = vmax.f32 %v386, 0.0
      %v407 = vmax.f32 %v389, 0.0
      %v408 = vpack.c.bf16 %v393, %v392
      %v409 = vpack.c.bf16 %v395, %v394
      %v410 = vpack.c.bf16 %v397, %v396
      %v411 = vpack.c.bf16 %v399, %v398
      %v412 = vpack.c.bf16 %v401, %v400
      %v413 = vpack.c.bf16 %v403, %v402
      %v414 = vpack.c.bf16 %v405, %v404
      %v415 = vpack.c.bf16 %v407, %v406
      %v424 = vunpack.c.l.b16 %v408
      %v425 = vunpack.c.h.b16 %v408
      %v426 = vunpack.c.l.b16 %v409
      %v427 = vunpack.c.h.b16 %v409
      %v428 = vunpack.c.l.b16 %v410
      %v429 = vunpack.c.h.b16 %v410
      %v430 = vunpack.c.l.b16 %v411
      %v431 = vunpack.c.h.b16 %v411
      %v432 = vunpack.c.l.b16 %v412
      %v433 = vunpack.c.h.b16 %v412
      %v434 = vunpack.c.l.b16 %v413
      %v435 = vunpack.c.h.b16 %v413
      %v436 = vunpack.c.l.b16 %v414
      %v437 = vunpack.c.h.b16 %v414
      %v438 = vunpack.c.l.b16 %v415
      %v439 = vunpack.c.h.b16 %v415
      %v440 = vpack.c.b16 %v424, %v424
      %v441 = vpack.c.b16 %v425, %v425
      %v442 = vpack.c.b16 %v426, %v426
      %v443 = vpack.c.b16 %v427, %v427
      %v444 = vpack.c.b16 %v428, %v428
      %v445 = vpack.c.b16 %v429, %v429
      %v446 = vpack.c.b16 %v430, %v430
      %v447 = vpack.c.b16 %v431, %v431
      %v448 = vpack.c.b16 %v432, %v432
      %v449 = vpack.c.b16 %v433, %v433
      %v450 = vpack.c.b16 %v434, %v434
      %v451 = vpack.c.b16 %v435, %v435
      %v452 = vpack.c.b16 %v436, %v436
      %v453 = vpack.c.b16 %v437, %v437
      %v454 = vpack.c.b16 %v438, %v438
      %v455 = vpack.c.b16 %v439, %v439
      %472 = vst [vmem:[%s172] sm:$0xf] %v440
      %473 = vst [vmem:[%s172 + $0x4] sm:$0xf] %v441
      %474 = vst [vmem:[%s172 + $0x8] sm:$0xf] %v442
      %475 = vst [vmem:[%s172 + $0xc] sm:$0xf] %v443
      %476 = vst [vmem:[%s172 + $0x10] sm:$0xf] %v444
      %477 = vst [vmem:[%s172 + $0x14] sm:$0xf] %v445
      %478 = vst [vmem:[%s172 + $0x18] sm:$0xf] %v446
      %479 = vst [vmem:[%s172 + $0x1c] sm:$0xf] %v447
      %480 = vst [vmem:[%s172 + $0x20] sm:$0xf] %v448
      %481 = vst [vmem:[%s172 + $0x24] sm:$0xf] %v449
      %482 = vst [vmem:[%s172 + $0x28] sm:$0xf] %v450
      %483 = vst [vmem:[%s172 + $0x2c] sm:$0xf] %v451
      %484 = vst [vmem:[%s172 + $0x30] sm:$0xf] %v452
      %485 = vst [vmem:[%s172 + $0x34] sm:$0xf] %v453
      %486 = vst [vmem:[%s172 + $0x38] sm:$0xf] %v454
      %487 = vst [vmem:[%s172 + $0x3c] sm:$0xf] %v455
      %s488 = smul.u32 16, %s14
      %p489 = scmp.lt.s32.totalorder %s488, 31
      %s490 = scalar_select %p489, %s488, 31
      %s491 = smul.addr %s490, 4
      %s492 = scalar_lea.vmem %s3, %s491
      // Predicated region
      $region33: #{easpp_forward.3} parent=31 // pred_check
        %p493 = pneg %p100
      $region34: #{easpp_forward.3} parent=31 // pred_check_branch
        %495 = sbr.rel (%p493) target = $region36
      $region35: #{easpp_forward.3} parent=31 // pred_region
        %s496 = smul.u32 16, %s14
      $region36: #{easpp_forward.3} parent=31 // pred_fallthru
        _
    $region32: #{easpp_forward.3} parent=5 // pred_fallthru
      _
    %p497 = scmp.le.s32.totalorder 2, %s9
    // Predicated region
    $region37: #{easpp_forward.3} parent=5 // pred_check
      %p498 = pneg %p497
    $region38: #{easpp_forward.3} parent=5 // pred_check_branch
      %500 = sbr.rel (%p498) target = $region40
    $region39: #{easpp_forward.3} parent=5 // pred_region
      %s501 = ssub.s32 %s9, 2
      // Predicated region
      $region41: #{easpp_forward.3} parent=39 // pred_check
        %p502 = pneg %p106
      $region42: #{easpp_forward.3} parent=39 // pred_check_branch
        %504 = sbr.rel (%p502) target = $region44
      $region43: #{easpp_forward.3} parent=39 // pred_region
        %s505 = smul.u32 16, %s15
        %p506 = scmp.lt.s32.totalorder %s505, 31
        %s507 = scalar_select %p506, %s505, 31
        %s508 = smul.addr %s507, 4
        %s509 = scalar_lea.vmem %s3, %s508
      $region44: #{easpp_forward.3} parent=39 // pred_fallthru
        _
    $region40: #{easpp_forward.3} parent=5 // pred_fallthru
      _
  $region6: #{easpp_forward.3} parent=0 // loop_footer
    %s13 = sadd.s32 1, %s9
  $region7: #{easpp_forward.3} parent=0 // loop_footer_branch
    %8 = sbr.rel target = $region3
  $region8: #{easpp_forward.3} parent=0 // loop_exit
    _

// kernel: easpp_forward.5
$region0: #{easpp_forward.5}
  #allocation0 [shape = 'u32[]', space=smem, size = 0x4, offset = 0x4, fixed_abs, tag = 'smem constant byte address 0x4 - core index']
  #allocation1 [shape = 'u32[144,128]{1,0:T(1,128)}', space=vmem, size = 0x12000, scoped, tag = 'internal scratch']
  %s0 = inlined_call_operand.vmem [shape: bf16[2,128,32], index: 0, kind: input, shape index: {}]
  %s1 = inlined_call_operand.vmem [shape: bf16[2,3,128,32], index: 1, kind: input, shape index: {}]
  %s2 = inlined_call_operand.vmem [shape: bf16[4,32,32], index: 2, kind: input, shape index: {}]
  %s3 = inlined_call_operand.vmem [shape: f32[2,1,32], index: 3, kind: input, shape index: {}]
  %s4 = inlined_call_operand.hbm [shape: f32[2,128,32], index: 4, kind: output, shape index: {}]
  %s5 = sld [smem:[#allocation0]]
  $region49: #{easpp_forward.5} parent=0
    _
  %s7 = ssub.s32 1, %s5
  %s8 = scalar_select 0, %s7, %s5
  $region1: #{easpp_forward.5} parent=0
    #allocation2 [shape = 'u8[131072]{0}', space=vmem, size = 0x20000, scoped, tag = 'output window, operand 0']
    #allocation3 [shape = 's32[2]{0}', space=sflag, size = 0x8, scoped, tag = 'scoped memory for easpp_forward.5']
    %9 = vsyncpa [#allocation3], 0
    %s10 = scalar_lea.sflag [#allocation3], 1
    %11 = vsyncpa %s10, 0
    loop: start=0, step=1, limit=4
    $region2: #{easpp_forward.5} parent=1 // loop_pre_header
      _
    $region3: #{easpp_forward.5} parent=1 // loop_header
      %s13 = sphi 0, %s17
      %p14 = scmp.ge.s32.totalorder %s13, 4
      %s20 = sphi 0, %s32
      %s21 = sphi 0, %s28
      %s22 = sphi 0, %s20
      %s23 = sphi 0, %s21
      %s24 = sphi 0, %s22
      %s25 = sphi 0, %s23
      %s37 = sphi 0, %s39
      %s40 = sphi 0, %s37
      %s41 = sphi 0, %s40
      %s57 = sphi 0, %s41
      %s65 = sphi 0, %s67
      %s68 = sphi 0, %s65
      %s69 = sphi 0, %s68
      %s85 = sphi 0, %s69
      %s89 = sphi 0, %s89
      %s91 = sphi 0, %s89
      %s92 = sphi 0, %s91
      %s106 = sphi 0, %s92
      %s112 = sphi 0, %s114
      %s115 = sphi 0, %s112
      %s116 = sphi 0, %s115
      %s132 = sphi 0, %s116
      %s140 = sphi 0, %s142
      %s143 = sphi 0, %s140
      %s144 = sphi 0, %s143
      %s160 = sphi 0, %s144
    $region4: #{easpp_forward.5} parent=1 // loop_header_branch
      %16 = sbr.rel (%p14) target = $region8
    $region5: #{easpp_forward.5} parent=1 // loop_body
      %s18 = ssub.s32 %s13, 1
      %s19 = ssub.s32 %s13, 2
      %s26 = sadd.s32 1, %s21
      %p27 = scmp.ge.s32.totalorder %s26, 1
      %s28 = scalar_select %p27, 0, %s26
      %s29 = sadd.s32 1, %s20
      %s30 = scalar_select %p27, %s29, %s20
      %p31 = scmp.ge.s32.totalorder %s30, 2
      %s32 = scalar_select %p31, 0, %s30
      %s33 = ssub.s32 %s20, %s32
      %s34 = ssub.s32 %s21, %s28
      %s35 = sor.u32 %s33, %s34
      %p36 = scmp.eq.s32.totalorder %s35, 0
      %s38 = sadd.s32 %s37, 1
      %s39 = scalar_select %p36, %s37, %s38
      %p42 = pneg %p36
      %p43 = scmp.eq.s32.totalorder %s13, 1
      %p44 = por %p42, %p43
      %p45 = scmp.ne.s32.totalorder %s37, %s40
      %p46 = scmp.eq.s32.totalorder %s13, 0
      %p47 = por %p45, %p46
      %p48 = scmp.ne.s32.totalorder %s37, %s40
      %p49 = scmp.eq.s32.totalorder %s18, 1
      %p50 = por %p48, %p49
      %p51 = scmp.ne.s32.totalorder %s40, %s41
      %p52 = scmp.eq.s32.totalorder %s18, 0
      %p53 = por %p51, %p52
      %p54 = scmp.ne.s32.totalorder %s40, %s41
      %p55 = scmp.eq.s32.totalorder %s19, 1
      %p56 = por %p54, %p55
      %p58 = scmp.ne.s32.totalorder %s41, %s57
      %p59 = scmp.eq.s32.totalorder %s19, 0
      %p60 = por %p58, %p59
      %s61 = ssub.s32 %s20, %s32
      %s62 = ssub.s32 %s21, %s28
      %s63 = sor.u32 %s61, %s62
      %p64 = scmp.eq.s32.totalorder %s63, 0
      %s66 = sadd.s32 %s65, 1
      %s67 = scalar_select %p64, %s65, %s66
      %p70 = pneg %p64
      %p71 = scmp.eq.s32.totalorder %s13, 1
      %p72 = por %p70, %p71
      %p73 = scmp.ne.s32.totalorder %s65, %s68
      %p74 = scmp.eq.s32.totalorder %s13, 0
      %p75 = por %p73, %p74
      %p76 = scmp.ne.s32.totalorder %s65, %s68
      %p77 = scmp.eq.s32.totalorder %s18, 1
      %p78 = por %p76, %p77
      %p79 = scmp.ne.s32.totalorder %s68, %s69
      %p80 = scmp.eq.s32.totalorder %s18, 0
      %p81 = por %p79, %p80
      %p82 = scmp.ne.s32.totalorder %s68, %s69
      %p83 = scmp.eq.s32.totalorder %s19, 1
      %p84 = por %p82, %p83
      %p86 = scmp.ne.s32.totalorder %s69, %s85
      %p87 = scmp.eq.s32.totalorder %s19, 0
      %p88 = por %p86, %p87
      %s90 = sadd.s32 %s89, 1
      %p93 = scmp.eq.s32.totalorder %s13, 1
      %p94 = scmp.ne.s32.totalorder %s89, %s91
      %p95 = scmp.eq.s32.totalorder %s13, 0
      %p96 = por %p94, %p95
      %p97 = scmp.ne.s32.totalorder %s89, %s91
      %p98 = scmp.eq.s32.totalorder %s18, 1
      %p99 = por %p97, %p98
      %p100 = scmp.ne.s32.totalorder %s91, %s92
      %p101 = scmp.eq.s32.totalorder %s18, 0
      %p102 = por %p100, %p101
      %p103 = scmp.ne.s32.totalorder %s91, %s92
      %p104 = scmp.eq.s32.totalorder %s19, 1
      %p105 = por %p103, %p104
      %p107 = scmp.ne.s32.totalorder %s92, %s106
      %p108 = scmp.eq.s32.totalorder %s19, 0
      %p109 = por %p107, %p108
      %s110 = ssub.s32 %s20, %s32
      %p111 = scmp.eq.s32.totalorder %s110, 0
      %s113 = sadd.s32 %s112, 1
      %s114 = scalar_select %p111, %s112, %s113
      %p117 = pneg %p111
      %p118 = scmp.eq.s32.totalorder %s13, 1
      %p119 = por %p117, %p118
      %p120 = scmp.ne.s32.totalorder %s112, %s115
      %p121 = scmp.eq.s32.totalorder %s13, 0
      %p122 = por %p120, %p121
      %p123 = scmp.ne.s32.totalorder %s112, %s115
      %p124 = scmp.eq.s32.totalorder %s18, 1
      %p125 = por %p123, %p124
      %p126 = scmp.ne.s32.totalorder %s115, %s116
      %p127 = scmp.eq.s32.totalorder %s18, 0
      %p128 = por %p126, %p127
      %p129 = scmp.ne.s32.totalorder %s115, %s116
      %p130 = scmp.eq.s32.totalorder %s19, 1
      %p131 = por %p129, %p130
      %p133 = scmp.ne.s32.totalorder %s116, %s132
      %p134 = scmp.eq.s32.totalorder %s19, 0
      %p135 = por %p133, %p134
      %s136 = ssub.s32 %s20, %s32
      %s137 = ssub.s32 %s21, %s28
      %s138 = sor.u32 %s136, %s137
      %p139 = scmp.eq.s32.totalorder %s138, 0
      %s141 = sadd.s32 %s140, 1
      %s142 = scalar_select %p139, %s140, %s141
      %p145 = pneg %p139
      %p146 = scmp.eq.s32.totalorder %s13, 1
      %p147 = por %p145, %p146
      %p148 = scmp.ne.s32.totalorder %s140, %s143
      %p149 = scmp.eq.s32.totalorder %s13, 0
      %p150 = por %p148, %p149
      %p151 = scmp.ne.s32.totalorder %s140, %s143
      %p152 = scmp.eq.s32.totalorder %s18, 1
      %p153 = por %p151, %p152
      %p154 = scmp.ne.s32.totalorder %s143, %s144
      %p155 = scmp.eq.s32.totalorder %s18, 0
      %p156 = por %p154, %p155
      %p157 = scmp.ne.s32.totalorder %s143, %s144
      %p158 = scmp.eq.s32.totalorder %s19, 1
      %p159 = por %p157, %p158
      %p161 = scmp.ne.s32.totalorder %s144, %s160
      %p162 = scmp.eq.s32.totalorder %s19, 0
      %p163 = por %p161, %p162
      %p164 = scmp.le.s32.totalorder 1, %s13
      %p165 = scmp.lt.s32.totalorder %s13, 3
      %p166 = pnand %p164, %p165
      %p167 = pneg %p166
      // Predicated region
      $region9: #{easpp_forward.5} parent=5 // pred_check
        _
      $region10: #{easpp_forward.5} parent=5 // pred_check_branch
        %169 = sbr.rel (%p166) target = $region12
      $region11: #{easpp_forward.5} parent=5 // pred_region
        %s170 = ssub.s32 %s13, 1
        // Predicated region
        $region13: #{easpp_forward.5} parent=11 // pred_check
          %p171 = pneg %p102
        $region14: #{easpp_forward.5} parent=11 // pred_check_branch
          %173 = sbr.rel (%p171) target = $region16
        $region15: #{easpp_forward.5} parent=11 // pred_region
          _
        $region16: #{easpp_forward.5} parent=11 // pred_fallthru
          _
      $region12: #{easpp_forward.5} parent=5 // pred_fallthru
        _
      %p174 = scmp.lt.s32.totalorder %s13, 2
      // Predicated region
      $region17: #{easpp_forward.5} parent=5 // pred_check
        %p175 = pneg %p174
      $region18: #{easpp_forward.5} parent=5 // pred_check_branch
        %177 = sbr.rel (%p175) target = $region20
      $region19: #{easpp_forward.5} parent=5 // pred_region
        // Predicated region
        $region21: #{easpp_forward.5} parent=19 // pred_check
          %p178 = pneg %p47
        $region22: #{easpp_forward.5} parent=19 // pred_check_branch
          %180 = sbr.rel (%p178) target = $region24
        $region23: #{easpp_forward.5} parent=19 // pred_region
          %s181 = smul.u32 16, %s21
          %p182 = scmp.lt.s32.totalorder %s20, 1
          %s183 = scalar_select %p182, %s20, 1
          %p184 = scmp.lt.s32.totalorder %s181, 15
          %s185 = scalar_select %p184, %s181, 15
          %s186 = smul.addr %s183, 16
          %s187 = sadd.s32 %s185, %s186
          %s188 = smul.addr %s187, 4
          %s189 = scalar_lea.vmem %s0, %s188
          %s190 = smul.u32 16, %s21
        $region24: #{easpp_forward.5} parent=19 // pred_fallthru
          _
        // Predicated region
        $region25: #{easpp_forward.5} parent=19 // pred_check
          %p191 = pneg %p75
        $region26: #{easpp_forward.5} parent=19 // pred_check_branch
          %193 = sbr.rel (%p191) target = $region28
        $region27: #{easpp_forward.5} parent=19 // pred_region
          %s194 = smul.u32 16, %s21
          %p195 = scmp.lt.s32.totalorder %s20, 1
          %s196 = scalar_select %p195, %s20, 1
          %p197 = scmp.lt.s32.totalorder %s194, 15
          %s198 = scalar_select %p197, %s194, 15
          %s199 = smul.addr %s196, 48
          %s200 = sadd.s32 %s198, %s199
          %s201 = smul.addr %s200, 4
          %s202 = scalar_lea.vmem %s1, %s201
          %s203 = smul.u32 16, %s21
        $region28: #{easpp_forward.5} parent=19 // pred_fallthru
          _
        // Predicated region
        $region29: #{easpp_forward.5} parent=19 // pred_check
          %p204 = pneg %p122
        $region30: #{easpp_forward.5} parent=19 // pred_check_branch
          %206 = sbr.rel (%p204) target = $region32
        $region31: #{easpp_forward.5} parent=19 // pred_region
          %p207 = scmp.lt.s32.totalorder %s20, 1
          %s208 = scalar_select %p207, %s20, 1
          %s209 = scalar_lea.vmem %s3, %s208
        $region32: #{easpp_forward.5} parent=19 // pred_fallthru
          _
      $region20: #{easpp_forward.5} parent=5 // pred_fallthru
        _
      %p210 = scmp.le.s32.totalorder 1, %s13
      %p211 = scmp.lt.s32.totalorder %s13, 3
      %p212 = pnand %p210, %p211
      %p213 = pneg %p212
      // Predicated region
      $region33: #{easpp_forward.5} parent=5 // pred_check
        _
      $region34: #{easpp_forward.5} parent=5 // pred_check_branch
        %215 = sbr.rel (%p212) target = $region36
      $region35: #{easpp_forward.5} parent=5 // pred_region
        %s216 = ssub.s32 %s13, 1
        %s217 = smul.u32 16, %s23
        %p218 = scmp.lt.s32.totalorder %s22, 1
        %s219 = scalar_select %p218, %s22, 1
        %p220 = scmp.lt.s32.totalorder %s217, 15
        %s221 = scalar_select %p220, %s217, 15
        %s222 = smul.addr %s219, 16
        %s223 = sadd.s32 %s221, %s222
        %s224 = smul.addr %s223, 4
        %s225 = scalar_lea.vmem %s0, %s224
        %p226 = pneg %p53
        %p227 = pneg %p50
        %s228 = smul.u32 16, %s23
        %p229 = scmp.lt.s32.totalorder %s22, 1
        %s230 = scalar_select %p229, %s22, 1
        %p231 = scmp.lt.s32.totalorder %s228, 15
        %s232 = scalar_select %p231, %s228, 15
        %s233 = smul.addr %s230, 48
        %s234 = sadd.s32 %s232, %s233
        %s235 = smul.addr %s234, 4
        %s236 = scalar_lea.vmem %s1, %s235
        %p237 = pneg %p81
        %p238 = pneg %p78
        %p239 = pneg %p102
        %p240 = pneg %p99
        %p241 = scmp.lt.s32.totalorder %s22, 1
        %s242 = scalar_select %p241, %s22, 1
        %s243 = scalar_lea.vmem %s3, %s242
        %p244 = pneg %p128
        %p245 = pneg %p125
        %p246 = pneg %p156
        %p247 = pneg %p153
        %s248 = sand.u32 %s143, 1
        %s249 = scalar_lea.sflag [#allocation3], %s248
        %s250 = sand.u32 %s143, 1
        %s251 = smul.addr %s250, 128
        %s252 = scalar_lea.vmem [#allocation2], %s251
        %s253 = smul.u32 16, %s23
        %p254 = scmp.lt.s32.totalorder %s22, 1
        %s255 = scalar_select %p254, %s22, 1
        %p256 = scmp.lt.s32.totalorder %s253, 15
        %s257 = scalar_select %p256, %s253, 15
        %s258 = smul.addr %s255, 16
        %s259 = sadd.s32 %s257, %s258
        %s260 = smul.addr %s259, 4
        %s261 = scalar_lea.vmem %s0, %s260
        %s262 = smul.u32 16, %s23
        %s263 = smul.u32 16, %s23
        %p264 = scmp.lt.s32.totalorder %s22, 1
        %s265 = scalar_select %p264, %s22, 1
        %p266 = scmp.lt.s32.totalorder %s263, 15
        %s267 = scalar_select %p266, %s263, 15
        %s268 = smul.addr %s265, 48
        %s269 = sadd.s32 %s267, %s268
        %s270 = smul.addr %s269, 4
        %s271 = scalar_lea.vmem %s1, %s270
        %s272 = smul.u32 16, %s23
        %p273 = scmp.lt.s32.totalorder %s22, 1
        %s274 = scalar_select %p273, %s22, 1
        %s275 = scalar_lea.vmem %s3, %s274
        %s276 = smul.u32 16, %s23
        %v278 = vld [vmem:[%s261] sm:$0xf]
        %v279 = vld [vmem:[%s261 + $0x4] sm:$0xf]
        %v280 = vld [vmem:[%s261 + $0x8] sm:$0xf]
        %v281 = vld [vmem:[%s261 + $0xc] sm:$0xf]
        %v282 = vld [vmem:[%s261 + $0x10] sm:$0xf]
        %v283 = vld [vmem:[%s261 + $0x14] sm:$0xf]
        %v284 = vld [vmem:[%s261 + $0x18] sm:$0xf]
        %v285 = vld [vmem:[%s261 + $0x1c] sm:$0xf]
        %v286 = vld [vmem:[%s261 + $0x20] sm:$0xf]
        %v287 = vld [vmem:[%s261 + $0x24] sm:$0xf]
        %v288 = vld [vmem:[%s261 + $0x28] sm:$0xf]
        %v289 = vld [vmem:[%s261 + $0x2c] sm:$0xf]
        %v290 = vld [vmem:[%s261 + $0x30] sm:$0xf]
        %v291 = vld [vmem:[%s261 + $0x34] sm:$0xf]
        %v292 = vld [vmem:[%s261 + $0x38] sm:$0xf]
        %v293 = vld [vmem:[%s261 + $0x3c] sm:$0xf]
        %v294 = vld [vmem:[%s2] sm:$0xf]
        %v295 = vld [vmem:[%s2 + $0x4] sm:$0xf]
        %v296 = vld [vmem:[%s2 + $0x8] sm:$0xf]
        %v297 = vld [vmem:[%s2 + $0xc] sm:$0xf]
        %v298 = vld [vmem:[%s271] sm:$0xf]
        %v299 = vld [vmem:[%s271 + $0x4] sm:$0xf]
        %v300 = vld [vmem:[%s271 + $0x8] sm:$0xf]
        %v301 = vld [vmem:[%s271 + $0xc] sm:$0xf]
        %v302 = vld [vmem:[%s271 + $0x10] sm:$0xf]
        %v303 = vld [vmem:[%s271 + $0x14] sm:$0xf]
        %v304 = vld [vmem:[%s271 + $0x18] sm:$0xf]
        %v305 = vld [vmem:[%s271 + $0x1c] sm:$0xf]
        %v306 = vld [vmem:[%s271 + $0x20] sm:$0xf]
        %v307 = vld [vmem:[%s271 + $0x24] sm:$0xf]
        %v308 = vld [vmem:[%s271 + $0x28] sm:$0xf]
        %v309 = vld [vmem:[%s271 + $0x2c] sm:$0xf]
        %v310 = vld [vmem:[%s271 + $0x30] sm:$0xf]
        %v311 = vld [vmem:[%s271 + $0x34] sm:$0xf]
        %v312 = vld [vmem:[%s271 + $0x38] sm:$0xf]
        %v313 = vld [vmem:[%s271 + $0x3c] sm:$0xf]
        %s314 = scalar_lea.vmem %s2, 16
        %v315 = vld [vmem:[%s314] sm:$0xf]
        %v316 = vld [vmem:[%s314 + $0x4] sm:$0xf]
        %v317 = vld [vmem:[%s314 + $0x8] sm:$0xf]
        %v318 = vld [vmem:[%s314 + $0xc] sm:$0xf]
        %v335 = vunpack.c.l.b16 %v298
        %v336 = vunpack.c.l.b16 %v299
        %v337 = vunpack.c.l.b16 %v300
        %v338 = vunpack.c.l.b16 %v301
        %v339 = vunpack.c.l.b16 %v302
        %v340 = vunpack.c.l.b16 %v303
        %v341 = vunpack.c.l.b16 %v304
        %v342 = vunpack.c.l.b16 %v305
        %v343 = vunpack.c.l.b16 %v306
        %v344 = vunpack.c.l.b16 %v307
        %v345 = vunpack.c.l.b16 %v308
        %v346 = vunpack.c.l.b16 %v309
        %v347 = vunpack.c.l.b16 %v310
        %v348 = vunpack.c.l.b16 %v311
        %v349 = vunpack.c.l.b16 %v312
        %v350 = vunpack.c.l.b16 %v313
        %v351 = vpack.c.b16 %v336, %v335
        %v352 = vpack.c.b16 %v338, %v337
        %v353 = vpack.c.b16 %v340, %v339
        %v354 = vpack.c.b16 %v342, %v341
        %v355 = vpack.c.b16 %v344, %v343
        %v356 = vpack.c.b16 %v346, %v345
        %v357 = vpack.c.b16 %v348, %v347
        %v358 = vpack.c.b16 %v350, %v349
        %v363 = vunpack.c.l.b16 %v315
        %v364 = vunpack.c.l.b16 %v316
        %v365 = vunpack.c.l.b16 %v317
        %v366 = vunpack.c.l.b16 %v318
        %v367 = vpack.c.b16 %v364, %v363
        %v368 = vpack.c.b16 %v366, %v365
        %vm371 = vcmask 261120
        %v373 = vsel %vm371, %v351, 0
        %v376 = vsel %vm371, %v352, 0
        %v379 = vsel %vm371, %v353, 0
        %v382 = vsel %vm371, %v354, 0
        %v385 = vsel %vm371, %v355, 0
        %v388 = vsel %vm371, %v356, 0
        %v391 = vsel %vm371, %v357, 0
        %v394 = vsel %vm371, %v358, 0
        %396 = vmatprep.subr.bf16.mxu0 0
        %397 = vmatpush1.bf16.msra.mxu0 %v367
        %398 = vmatprep.subr.bf16.mxu0 0
        %399 = vmatpush1.bf16.msra.mxu0 %v368
        %400 = vmatprep.subr.bf16.mxu0 0
        %401 = vmatpush1.bf16.msra.mxu0 0
        %402 = vmatprep.subr.bf16.mxu0 0
        %403 = vmatpush1.bf16.msra.mxu0 0
        %404 = vmatprep.subr.bf16.mxu0 0
        %405 = vmatpush1.bf16.msra.mxu0 0
        %406 = vmatprep.subr.bf16.mxu0 0
        %407 = vmatpush1.bf16.msra.mxu0 0
        %408 = vmatprep.subr.bf16.mxu0 0
        %409 = vmatpush1.bf16.msra.mxu0 0
        %410 = vmatprep.subr.bf16.mxu0 0
        %411 = vmatpush1.bf16.msra.mxu0 0
        %412 = vmatprep.subr.bf16.mxu0 0
        %413 = vmatpush1.bf16.msra.mxu0 0
        %414 = vmatprep.subr.bf16.mxu0 0
        %415 = vmatpush1.bf16.msra.mxu0 0
        %416 = vmatprep.subr.bf16.mxu0 0
        %417 = vmatpush1.bf16.msra.mxu0 0
        %418 = vmatprep.subr.bf16.mxu0 0
        %419 = vmatpush1.bf16.msra.mxu0 0
        %420 = vmatprep.subr.bf16.mxu0 0
        %421 = vmatpush1.bf16.msra.mxu0 0
        %422 = vmatprep.subr.bf16.mxu0 0
        %423 = vmatpush1.bf16.msra.mxu0 0
        %424 = vmatprep.subr.bf16.mxu0 0
        %425 = vmatpush1.bf16.msra.mxu0 0
        %426 = vmatprep.subr.bf16.mxu0 0
        %427 = vmatpush1.bf16.msra.mxu0 0
        %428 = vmatprep.mubr.bf16.mxu0 0
        %429 = vmatmul.mubr.bf16.gmra.mrb[0].mxu0 %v373
        %v430 = vpop.f32.mrb[0].mxu0
        %v431 = vadd.f32 0.0, %v430
        %v432 = vpop.f32.mrb[0].mxu0
        %v433 = vpop.f32.mrb[0].mxu0
        %v434 = vadd.f32 0.0, %v433
        %v435 = vpop.f32.mrb[0].mxu0
        %436 = vmatprep.mubr.bf16.mxu0 0
        %437 = vmatmul.mubr.bf16.gmra.mrb[0].mxu0 %v376
        %v438 = vpop.f32.mrb[0].mxu0
        %v439 = vadd.f32 0.0, %v438
        %v440 = vpop.f32.mrb[0].mxu0
        %v441 = vpop.f32.mrb[0].mxu0
        %v442 = vadd.f32 0.0, %v441
        %v443 = vpop.f32.mrb[0].mxu0
        %444 = vmatprep.mubr.bf16.mxu0 0
        %445 = vmatmul.mubr.bf16.gmra.mrb[0].mxu0 %v379
        %v446 = vpop.f32.mrb[0].mxu0
        %v447 = vadd.f32 0.0, %v446
        %v448 = vpop.f32.mrb[0].mxu0
        %v449 = vpop.f32.mrb[0].mxu0
        %v450 = vadd.f32 0.0, %v449
        %v451 = vpop.f32.mrb[0].mxu0
        %452 = vmatprep.mubr.bf16.mxu0 0
        %453 = vmatmul.mubr.bf16.gmra.mrb[0].mxu0 %v382
        %v454 = vpop.f32.mrb[0].mxu0
        %v455 = vadd.f32 0.0, %v454
        %v456 = vpop.f32.mrb[0].mxu0
        %v457 = vpop.f32.mrb[0].mxu0
        %v458 = vadd.f32 0.0, %v457
        %v459 = vpop.f32.mrb[0].mxu0
        %460 = vmatprep.mubr.bf16.mxu0 0
        %461 = vmatmul.mubr.bf16.gmra.mrb[0].mxu0 %v385
        %v462 = vpop.f32.mrb[0].mxu0
        %v463 = vadd.f32 0.0, %v462
        %v464 = vpop.f32.mrb[0].mxu0
        %v465 = vpop.f32.mrb[0].mxu0
        %v466 = vadd.f32 0.0, %v465
        %v467 = vpop.f32.mrb[0].mxu0
        %468 = vmatprep.mubr.bf16.mxu0 0
        %469 = vmatmul.mubr.bf16.gmra.mrb[0].mxu0 %v388
        %v470 = vpop.f32.mrb[0].mxu0
        %v471 = vadd.f32 0.0, %v470
        %v472 = vpop.f32.mrb[0].mxu0
        %v473 = vpop.f32.mrb[0].mxu0
        %v474 = vadd.f32 0.0, %v473
        %v475 = vpop.f32.mrb[0].mxu0
        %476 = vmatprep.mubr.bf16.mxu0 0
        %477 = vmatmul.mubr.bf16.gmra.mrb[0].mxu0 %v391
        %v478 = vpop.f32.mrb[0].mxu0
        %v479 = vadd.f32 0.0, %v478
        %v480 = vpop.f32.mrb[0].mxu0
        %v481 = vpop.f32.mrb[0].mxu0
        %v482 = vadd.f32 0.0, %v481
        %v483 = vpop.f32.mrb[0].mxu0
        %484 = vmatprep.mubr.bf16.mxu0 0
        %485 = vmatmul.mubr.bf16.gmra.mrb[0].mxu0 %v394
        %v486 = vpop.f32.mrb[0].mxu0
        %v487 = vadd.f32 0.0, %v486
        %v488 = vpop.f32.mrb[0].mxu0
        %v489 = vpop.f32.mrb[0].mxu0
        %v490 = vadd.f32 0.0, %v489
        %v491 = vpop.f32.mrb[0].mxu0
        %492 = vdwg.mxu0
        %v509 = vunpack.c.l.b16 %v278
        %v510 = vunpack.c.l.b16 %v279
        %v511 = vunpack.c.l.b16 %v280
        %v512 = vunpack.c.l.b16 %v281
        %v513 = vunpack.c.l.b16 %v282
        %v514 = vunpack.c.l.b16 %v283
        %v515 = vunpack.c.l.b16 %v284
        %v516 = vunpack.c.l.b16 %v285
        %v517 = vunpack.c.l.b16 %v286
        %v518 = vunpack.c.l.b16 %v287
        %v519 = vunpack.c.l.b16 %v288
        %v520 = vunpack.c.l.b16 %v289
        %v521 = vunpack.c.l.b16 %v290
        %v522 = vunpack.c.l.b16 %v291
        %v523 = vunpack.c.l.b16 %v292
        %v524 = vunpack.c.l.b16 %v293
        %v525 = vpack.c.b16 %v510, %v509
        %v526 = vpack.c.b16 %v512, %v511
        %v527 = vpack.c.b16 %v514, %v513
        %v528 = vpack.c.b16 %v516, %v515
        %v529 = vpack.c.b16 %v518, %v517
        %v530 = vpack.c.b16 %v520, %v519
        %v531 = vpack.c.b16 %v522, %v521
        %v532 = vpack.c.b16 %v524, %v523
        %v537 = vunpack.c.l.b16 %v294
        %v538 = vunpack.c.l.b16 %v295
        %v539 = vunpack.c.l.b16 %v296
        %v540 = vunpack.c.l.b16 %v297
        %v541 = vpack.c.b16 %v538, %v537
        %v542 = vpack.c.b16 %v540, %v539
        %v546 = vsel %vm371, %v525, 0
        %v549 = vsel %vm371, %v526, 0
        %v552 = vsel %vm371, %v527, 0
        %v555 = vsel %vm371, %v528, 0
        %v558 = vsel %vm371, %v529, 0
        %v561 = vsel %vm371, %v530, 0
        %v564 = vsel %vm371, %v531, 0
        %v567 = vsel %vm371, %v532, 0
        %569 = vmatprep.subr.bf16.mxu0 0
        %570 = vmatpush1.bf16.msra.mxu0 %v541
        %571 = vmatprep.subr.bf16.mxu0 0
        %572 = vmatpush1.bf16.msra.mxu0 %v542
        %573 = vmatprep.subr.bf16.mxu0 0
        %574 = vmatpush1.bf16.msra.mxu0 0
        %575 = vmatprep.subr.bf16.mxu0 0
        %576 = vmatpush1.bf16.msra.mxu0 0
        %577 = vmatprep.subr.bf16.mxu0 0
        %578 = vmatpush1.bf16.msra.mxu0 0
        %579 = vmatprep.subr.bf16.mxu0 0
        %580 = vmatpush1.bf16.msra.mxu0 0
        %581 = vmatprep.subr.bf16.mxu0 0
        %582 = vmatpush1.bf16.msra.mxu0 0
        %583 = vmatprep.subr.bf16.mxu0 0
        %584 = vmatpush1.bf16.msra.mxu0 0
        %585 = vmatprep.subr.bf16.mxu0 0
        %586 = vmatpush1.bf16.msra.mxu0 0
        %587 = vmatprep.subr.bf16.mxu0 0
        %588 = vmatpush1.bf16.msra.mxu0 0
        %589 = vmatprep.subr.bf16.mxu0 0
        %590 = vmatpush1.bf16.msra.mxu0 0
        %591 = vmatprep.subr.bf16.mxu0 0
        %592 = vmatpush1.bf16.msra.mxu0 0
        %593 = vmatprep.subr.bf16.mxu0 0
        %594 = vmatpush1.bf16.msra.mxu0 0
        %595 = vmatprep.subr.bf16.mxu0 0
        %596 = vmatpush1.bf16.msra.mxu0 0
        %597 = vmatprep.subr.bf16.mxu0 0
        %598 = vmatpush1.bf16.msra.mxu0 0
        %599 = vmatprep.subr.bf16.mxu0 0
        %600 = vmatpush1.bf16.msra.mxu0 0
        %601 = vmatprep.mubr.bf16.mxu0 0
        %602 = vmatmul.mubr.bf16.gmra.mrb[0].mxu0 %v546
        %v603 = vpop.f32.mrb[0].mxu0
        %v604 = vadd.f32 %v431, %v603
        %v605 = vpop.f32.mrb[0].mxu0
        %v606 = vpop.f32.mrb[0].mxu0
        %v607 = vadd.f32 %v434, %v606
        %v608 = vpop.f32.mrb[0].mxu0
        %609 = vmatprep.mubr.bf16.mxu0 0
        %610 = vmatmul.mubr.bf16.gmra.mrb[0].mxu0 %v549
        %v611 = vpop.f32.mrb[0].mxu0
        %v612 = vadd.f32 %v439, %v611
        %v613 = vpop.f32.mrb[0].mxu0
        %v614 = vpop.f32.mrb[0].mxu0
        %v615 = vadd.f32 %v442, %v614
        %v616 = vpop.f32.mrb[0].mxu0
        %617 = vmatprep.mubr.bf16.mxu0 0
        %618 = vmatmul.mubr.bf16.gmra.mrb[0].mxu0 %v552
        %v619 = vpop.f32.mrb[0].mxu0
        %v620 = vadd.f32 %v447, %v619
        %v621 = vpop.f32.mrb[0].mxu0
        %v622 = vpop.f32.mrb[0].mxu0
        %v623 = vadd.f32 %v450, %v622
        %v624 = vpop.f32.mrb[0].mxu0
        %625 = vmatprep.mubr.bf16.mxu0 0
        %626 = vmatmul.mubr.bf16.gmra.mrb[0].mxu0 %v555
        %v627 = vpop.f32.mrb[0].mxu0
        %v628 = vadd.f32 %v455, %v627
        %v629 = vpop.f32.mrb[0].mxu0
        %v630 = vpop.f32.mrb[0].mxu0
        %v631 = vadd.f32 %v458, %v630
        %v632 = vpop.f32.mrb[0].mxu0
        %633 = vmatprep.mubr.bf16.mxu0 0
        %634 = vmatmul.mubr.bf16.gmra.mrb[0].mxu0 %v558
        %v635 = vpop.f32.mrb[0].mxu0
        %v636 = vadd.f32 %v463, %v635
        %v637 = vpop.f32.mrb[0].mxu0
        %v638 = vpop.f32.mrb[0].mxu0
        %v639 = vadd.f32 %v466, %v638
        %v640 = vpop.f32.mrb[0].mxu0
        %641 = vmatprep.mubr.bf16.mxu0 0
        %642 = vmatmul.mubr.bf16.gmra.mrb[0].mxu0 %v561
        %v643 = vpop.f32.mrb[0].mxu0
        %v644 = vadd.f32 %v471, %v643
        %v645 = vpop.f32.mrb[0].mxu0
        %v646 = vpop.f32.mrb[0].mxu0
        %v647 = vadd.f32 %v474, %v646
        %v648 = vpop.f32.mrb[0].mxu0
        %649 = vmatprep.mubr.bf16.mxu0 0
        %650 = vmatmul.mubr.bf16.gmra.mrb[0].mxu0 %v564
        %v651 = vpop.f32.mrb[0].mxu0
        %v652 = vadd.f32 %v479, %v651
        %v653 = vpop.f32.mrb[0].mxu0
        %v654 = vpop.f32.mrb[0].mxu0
        %v655 = vadd.f32 %v482, %v654
        %v656 = vpop.f32.mrb[0].mxu0
        %657 = vmatprep.mubr.bf16.mxu0 0
        %658 = vmatmul.mubr.bf16.gmra.mrb[0].mxu0 %v567
        %v659 = vpop.f32.mrb[0].mxu0
        %v660 = vadd.f32 %v487, %v659
        %v661 = vpop.f32.mrb[0].mxu0
        %v662 = vpop.f32.mrb[0].mxu0
        %v663 = vadd.f32 %v490, %v662
        %v664 = vpop.f32.mrb[0].mxu0
        %665 = vdwg.mxu0
        %s666 = scalar_lea.vmem %s271, 64
        %v667 = vld [vmem:[%s666] sm:$0xf]
        %v668 = vld [vmem:[%s666 + $0x4] sm:$0xf]
        %v669 = vld [vmem:[%s666 + $0x8] sm:$0xf]
        %v670 = vld [vmem:[%s666 + $0xc] sm:$0xf]
        %v671 = vld [vmem:[%s666 + $0x10] sm:$0xf]
        %v672 = vld [vmem:[%s666 + $0x14] sm:$0xf]
        %v673 = vld [vmem:[%s666 + $0x18] sm:$0xf]
        %v674 = vld [vmem:[%s666 + $0x1c] sm:$0xf]
        %v675 = vld [vmem:[%s666 + $0x20] sm:$0xf]
        %v676 = vld [vmem:[%s666 + $0x24] sm:$0xf]
        %v677 = vld [vmem:[%s666 + $0x28] sm:$0xf]
        %v678 = vld [vmem:[%s666 + $0x2c] sm:$0xf]
        %v679 = vld [vmem:[%s666 + $0x30] sm:$0xf]
        %v680 = vld [vmem:[%s666 + $0x34] sm:$0xf]
        %v681 = vld [vmem:[%s666 + $0x38] sm:$0xf]
        %v682 = vld [vmem:[%s666 + $0x3c] sm:$0xf]
        %s683 = scalar_lea.vmem %s2, 32
        %v684 = vld [vmem:[%s683] sm:$0xf]
        %v685 = vld [vmem:[%s683 + $0x4] sm:$0xf]
        %v686 = vld [vmem:[%s683 + $0x8] sm:$0xf]
        %v687 = vld [vmem:[%s683 + $0xc] sm:$0xf]
        %v704 = vunpack.c.l.b16 %v667
        %v705 = vunpack.c.l.b16 %v668
        %v706 = vunpack.c.l.b16 %v669
        %v707 = vunpack.c.l.b16 %v670
        %v708 = vunpack.c.l.b16 %v671
        %v709 = vunpack.c.l.b16 %v672
        %v710 = vunpack.c.l.b16 %v673
        %v711 = vunpack.c.l.b16 %v674
        %v712 = vunpack.c.l.b16 %v675
        %v713 = vunpack.c.l.b16 %v676
        %v714 = vunpack.c.l.b16 %v677
        %v715 = vunpack.c.l.b16 %v678
        %v716 = vunpack.c.l.b16 %v679
        %v717 = vunpack.c.l.b16 %v680
        %v718 = vunpack.c.l.b16 %v681
        %v719 = vunpack.c.l.b16 %v682
        %v720 = vpack.c.b16 %v705, %v704
        %v721 = vpack.c.b16 %v707, %v706
        %v722 = vpack.c.b16 %v709, %v708
        %v723 = vpack.c.b16 %v711, %v710
        %v724 = vpack.c.b16 %v713, %v712
        %v725 = vpack.c.b16 %v715, %v714
        %v726 = vpack.c.b16 %v717, %v716
        %v727 = vpack.c.b16 %v719, %v718
        %v732 = vunpack.c.l.b16 %v684
        %v733 = vunpack.c.l.b16 %v685
        %v734 = vunpack.c.l.b16 %v686
        %v735 = vunpack.c.l.b16 %v687
        %v736 = vpack.c.b16 %v733, %v732
        %v737 = vpack.c.b16 %v735, %v734
        %v741 = vsel %vm371, %v720, 0
        %v744 = vsel %vm371, %v721, 0
        %v747 = vsel %vm371, %v722, 0
        %v750 = vsel %vm371, %v723, 0
        %v753 = vsel %vm371, %v724, 0
        %v756 = vsel %vm371, %v725, 0
        %v759 = vsel %vm371, %v726, 0
        %v762 = vsel %vm371, %v727, 0
        %764 = vmatprep.subr.bf16.mxu0 0
        %765 = vmatpush1.bf16.msra.mxu0 %v736
        %766 = vmatprep.subr.bf16.mxu0 0
        %767 = vmatpush1.bf16.msra.mxu0 %v737
        %768 = vmatprep.subr.bf16.mxu0 0
        %769 = vmatpush1.bf16.msra.mxu0 0
        %770 = vmatprep.subr.bf16.mxu0 0
        %771 = vmatpush1.bf16.msra.mxu0 0
        %772 = vmatprep.subr.bf16.mxu0 0
        %773 = vmatpush1.bf16.msra.mxu0 0
        %774 = vmatprep.subr.bf16.mxu0 0
        %775 = vmatpush1.bf16.msra.mxu0 0
        %776 = vmatprep.subr.bf16.mxu0 0
        %777 = vmatpush1.bf16.msra.mxu0 0
        %778 = vmatprep.subr.bf16.mxu0 0
        %779 = vmatpush1.bf16.msra.mxu0 0
        %780 = vmatprep.subr.bf16.mxu0 0
        %781 = vmatpush1.bf16.msra.mxu0 0
        %782 = vmatprep.subr.bf16.mxu0 0
        %783 = vmatpush1.bf16.msra.mxu0 0
        %784 = vmatprep.subr.bf16.mxu0 0
        %785 = vmatpush1.bf16.msra.mxu0 0
        %786 = vmatprep.subr.bf16.mxu0 0
        %787 = vmatpush1.bf16.msra.mxu0 0
        %788 = vmatprep.subr.bf16.mxu0 0
        %789 = vmatpush1.bf16.msra.mxu0 0
        %790 = vmatprep.subr.bf16.mxu0 0
        %791 = vmatpush1.bf16.msra.mxu0 0
        %792 = vmatprep.subr.bf16.mxu0 0
        %793 = vmatpush1.bf16.msra.mxu0 0
        %794 = vmatprep.subr.bf16.mxu0 0
        %795 = vmatpush1.bf16.msra.mxu0 0
        %796 = vmatprep.mubr.bf16.mxu0 0
        %797 = vmatmul.mubr.bf16.gmra.mrb[0].mxu0 %v741
        %v798 = vpop.f32.mrb[0].mxu0
        %v799 = vadd.f32 0.0, %v798
        %v800 = vpop.f32.mrb[0].mxu0
        %v801 = vpop.f32.mrb[0].mxu0
        %v802 = vadd.f32 0.0, %v801
        %v803 = vpop.f32.mrb[0].mxu0
        %804 = vmatprep.mubr.bf16.mxu0 0
        %805 = vmatmul.mubr.bf16.gmra.mrb[0].mxu0 %v744
        %v806 = vpop.f32.mrb[0].mxu0
        %v807 = vadd.f32 0.0, %v806
        %v808 = vpop.f32.mrb[0].mxu0
        %v809 = vpop.f32.mrb[0].mxu0
        %v810 = vadd.f32 0.0, %v809
        %v811 = vpop.f32.mrb[0].mxu0
        %812 = vmatprep.mubr.bf16.mxu0 0
        %813 = vmatmul.mubr.bf16.gmra.mrb[0].mxu0 %v747
        %v814 = vpop.f32.mrb[0].mxu0
        %v815 = vadd.f32 0.0, %v814
        %v816 = vpop.f32.mrb[0].mxu0
        %v817 = vpop.f32.mrb[0].mxu0
        %v818 = vadd.f32 0.0, %v817
        %v819 = vpop.f32.mrb[0].mxu0
        %820 = vmatprep.mubr.bf16.mxu0 0
        %821 = vmatmul.mubr.bf16.gmra.mrb[0].mxu0 %v750
        %v822 = vpop.f32.mrb[0].mxu0
        %v823 = vadd.f32 0.0, %v822
        %v824 = vpop.f32.mrb[0].mxu0
        %v825 = vpop.f32.mrb[0].mxu0
        %v826 = vadd.f32 0.0, %v825
        %v827 = vpop.f32.mrb[0].mxu0
        %828 = vmatprep.mubr.bf16.mxu0 0
        %829 = vmatmul.mubr.bf16.gmra.mrb[0].mxu0 %v753
        %v830 = vpop.f32.mrb[0].mxu0
        %v831 = vadd.f32 0.0, %v830
        %v832 = vpop.f32.mrb[0].mxu0
        %v833 = vpop.f32.mrb[0].mxu0
        %v834 = vadd.f32 0.0, %v833
        %v835 = vpop.f32.mrb[0].mxu0
        %836 = vmatprep.mubr.bf16.mxu0 0
        %837 = vmatmul.mubr.bf16.gmra.mrb[0].mxu0 %v756
        %v838 = vpop.f32.mrb[0].mxu0
        %v839 = vadd.f32 0.0, %v838
        %v840 = vpop.f32.mrb[0].mxu0
        %v841 = vpop.f32.mrb[0].mxu0
        %v842 = vadd.f32 0.0, %v841
        %v843 = vpop.f32.mrb[0].mxu0
        %844 = vmatprep.mubr.bf16.mxu0 0
        %845 = vmatmul.mubr.bf16.gmra.mrb[0].mxu0 %v759
        %v846 = vpop.f32.mrb[0].mxu0
        %v847 = vadd.f32 0.0, %v846
        %v848 = vpop.f32.mrb[0].mxu0
        %v849 = vpop.f32.mrb[0].mxu0
        %v850 = vadd.f32 0.0, %v849
        %v851 = vpop.f32.mrb[0].mxu0
        %852 = vmatprep.mubr.bf16.mxu0 0
        %853 = vmatmul.mubr.bf16.gmra.mrb[0].mxu0 %v762
        %v854 = vpop.f32.mrb[0].mxu0
        %v855 = vadd.f32 0.0, %v854
        %v856 = vpop.f32.mrb[0].mxu0
        %v857 = vpop.f32.mrb[0].mxu0
        %v858 = vadd.f32 0.0, %v857
        %v859 = vpop.f32.mrb[0].mxu0
        %860 = vdwg.mxu0
        %v861 = vadd.f32 %v604, %v799
        %v862 = vadd.f32 %v607, %v802
        %v863 = vadd.f32 %v612, %v807
        %v864 = vadd.f32 %v615, %v810
        %v865 = vadd.f32 %v620, %v815
        %v866 = vadd.f32 %v623, %v818
        %v867 = vadd.f32 %v628, %v823
        %v868 = vadd.f32 %v631, %v826
        %v869 = vadd.f32 %v636, %v831
        %v870 = vadd.f32 %v639, %v834
        %v871 = vadd.f32 %v644, %v839
        %v872 = vadd.f32 %v647, %v842
        %v873 = vadd.f32 %v652, %v847
        %v874 = vadd.f32 %v655, %v850
        %v875 = vadd.f32 %v660, %v855
        %v876 = vadd.f32 %v663, %v858
        %s877 = scalar_lea.vmem %s271, 128
        %v878 = vld [vmem:[%s877] sm:$0xf]
        %v879 = vld [vmem:[%s877 + $0x4] sm:$0xf]
        %v880 = vld [vmem:[%s877 + $0x8] sm:$0xf]
        %v881 = vld [vmem:[%s877 + $0xc] sm:$0xf]
        %v882 = vld [vmem:[%s877 + $0x10] sm:$0xf]
        %v883 = vld [vmem:[%s877 + $0x14] sm:$0xf]
        %v884 = vld [vmem:[%s877 + $0x18] sm:$0xf]
        %v885 = vld [vmem:[%s877 + $0x1c] sm:$0xf]
        %v886 = vld [vmem:[%s877 + $0x20] sm:$0xf]
        %v887 = vld [vmem:[%s877 + $0x24] sm:$0xf]
        %v888 = vld [vmem:[%s877 + $0x28] sm:$0xf]
        %v889 = vld [vmem:[%s877 + $0x2c] sm:$0xf]
        %v890 = vld [vmem:[%s877 + $0x30] sm:$0xf]
        %v891 = vld [vmem:[%s877 + $0x34] sm:$0xf]
        %v892 = vld [vmem:[%s877 + $0x38] sm:$0xf]
        %v893 = vld [vmem:[%s877 + $0x3c] sm:$0xf]
        %s894 = scalar_lea.vmem %s2, 48
        %v895 = vld [vmem:[%s894] sm:$0xf]
        %v896 = vld [vmem:[%s894 + $0x4] sm:$0xf]
        %v897 = vld [vmem:[%s894 + $0x8] sm:$0xf]
        %v898 = vld [vmem:[%s894 + $0xc] sm:$0xf]
        %v915 = vunpack.c.l.b16 %v878
        %v916 = vunpack.c.l.b16 %v879
        %v917 = vunpack.c.l.b16 %v880
        %v918 = vunpack.c.l.b16 %v881
        %v919 = vunpack.c.l.b16 %v882
        %v920 = vunpack.c.l.b16 %v883
        %v921 = vunpack.c.l.b16 %v884
        %v922 = vunpack.c.l.b16 %v885
        %v923 = vunpack.c.l.b16 %v886
        %v924 = vunpack.c.l.b16 %v887
        %v925 = vunpack.c.l.b16 %v888
        %v926 = vunpack.c.l.b16 %v889
        %v927 = vunpack.c.l.b16 %v890
        %v928 = vunpack.c.l.b16 %v891
        %v929 = vunpack.c.l.b16 %v892
        %v930 = vunpack.c.l.b16 %v893
        %v931 = vpack.c.b16 %v916, %v915
        %v932 = vpack.c.b16 %v918, %v917
        %v933 = vpack.c.b16 %v920, %v919
        %v934 = vpack.c.b16 %v922, %v921
        %v935 = vpack.c.b16 %v924, %v923
        %v936 = vpack.c.b16 %v926, %v925
        %v937 = vpack.c.b16 %v928, %v927
        %v938 = vpack.c.b16 %v930, %v929
        %v943 = vunpack.c.l.b16 %v895
        %v944 = vunpack.c.l.b16 %v896
        %v945 = vunpack.c.l.b16 %v897
        %v946 = vunpack.c.l.b16 %v898
        %v947 = vpack.c.b16 %v944, %v943
        %v948 = vpack.c.b16 %v946, %v945
        %v952 = vsel %vm371, %v931, 0
        %v955 = vsel %vm371, %v932, 0
        %v958 = vsel %vm371, %v933, 0
        %v961 = vsel %vm371, %v934, 0
        %v964 = vsel %vm371, %v935, 0
        %v967 = vsel %vm371, %v936, 0
        %v970 = vsel %vm371, %v937, 0
        %v973 = vsel %vm371, %v938, 0
        %975 = vmatprep.subr.bf16.mxu0 0
        %976 = vmatpush1.bf16.msra.mxu0 %v947
        %977 = vmatprep.subr.bf16.mxu0 0
        %978 = vmatpush1.bf16.msra.mxu0 %v948
        %979 = vmatprep.subr.bf16.mxu0 0
        %980 = vmatpush1.bf16.msra.mxu0 0
        %981 = vmatprep.subr.bf16.mxu0 0
        %982 = vmatpush1.bf16.msra.mxu0 0
        %983 = vmatprep.subr.bf16.mxu0 0
        %984 = vmatpush1.bf16.msra.mxu0 0
        %985 = vmatprep.subr.bf16.mxu0 0
        %986 = vmatpush1.bf16.msra.mxu0 0
        %987 = vmatprep.subr.bf16.mxu0 0
        %988 = vmatpush1.bf16.msra.mxu0 0
        %989 = vmatprep.subr.bf16.mxu0 0
        %990 = vmatpush1.bf16.msra.mxu0 0
        %991 = vmatprep.subr.bf16.mxu0 0
        %992 = vmatpush1.bf16.msra.mxu0 0
        %993 = vmatprep.subr.bf16.mxu0 0
        %994 = vmatpush1.bf16.msra.mxu0 0
        %995 = vmatprep.subr.bf16.mxu0 0
        %996 = vmatpush1.bf16.msra.mxu0 0
        %997 = vmatprep.subr.bf16.mxu0 0
        %998 = vmatpush1.bf16.msra.mxu0 0
        %999 = vmatprep.subr.bf16.mxu0 0
        %1000 = vmatpush1.bf16.msra.mxu0 0
        %1001 = vmatprep.subr.bf16.mxu0 0
        %1002 = vmatpush1.bf16.msra.mxu0 0
        %1003 = vmatprep.subr.bf16.mxu0 0
        %1004 = vmatpush1.bf16.msra.mxu0 0
        %1005 = vmatprep.subr.bf16.mxu0 0
        %1006 = vmatpush1.bf16.msra.mxu0 0
        %1007 = vmatprep.mubr.bf16.mxu0 0
        %1008 = vmatmul.mubr.bf16.gmra.mrb[0].mxu0 %v952
        %v1009 = vpop.f32.mrb[0].mxu0
        %v1010 = vadd.f32 0.0, %v1009
        %v1011 = vpop.f32.mrb[0].mxu0
        %v1012 = vpop.f32.mrb[0].mxu0
        %v1013 = vadd.f32 0.0, %v1012
        %v1014 = vpop.f32.mrb[0].mxu0
        %1015 = vmatprep.mubr.bf16.mxu0 0
        %1016 = vmatmul.mubr.bf16.gmra.mrb[0].mxu0 %v955
        %v1017 = vpop.f32.mrb[0].mxu0
        %v1018 = vadd.f32 0.0, %v1017
        %v1019 = vpop.f32.mrb[0].mxu0
        %v1020 = vpop.f32.mrb[0].mxu0
        %v1021 = vadd.f32 0.0, %v1020
        %v1022 = vpop.f32.mrb[0].mxu0
        %1023 = vmatprep.mubr.bf16.mxu0 0
        %1024 = vmatmul.mubr.bf16.gmra.mrb[0].mxu0 %v958
        %v1025 = vpop.f32.mrb[0].mxu0
        %v1026 = vadd.f32 0.0, %v1025
        %v1027 = vpop.f32.mrb[0].mxu0
        %v1028 = vpop.f32.mrb[0].mxu0
        %v1029 = vadd.f32 0.0, %v1028
        %v1030 = vpop.f32.mrb[0].mxu0
        %1031 = vmatprep.mubr.bf16.mxu0 0
        %1032 = vmatmul.mubr.bf16.gmra.mrb[0].mxu0 %v961
        %v1033 = vpop.f32.mrb[0].mxu0
        %v1034 = vadd.f32 0.0, %v1033
        %v1035 = vpop.f32.mrb[0].mxu0
        %v1036 = vpop.f32.mrb[0].mxu0
        %v1037 = vadd.f32 0.0, %v1036
        %v1038 = vpop.f32.mrb[0].mxu0
        %1039 = vmatprep.mubr.bf16.mxu0 0
        %1040 = vmatmul.mubr.bf16.gmra.mrb[0].mxu0 %v964
        %v1041 = vpop.f32.mrb[0].mxu0
        %v1042 = vadd.f32 0.0, %v1041
        %v1043 = vpop.f32.mrb[0].mxu0
        %v1044 = vpop.f32.mrb[0].mxu0
        %v1045 = vadd.f32 0.0, %v1044
        %v1046 = vpop.f32.mrb[0].mxu0
        %1047 = vmatprep.mubr.bf16.mxu0 0
        %1048 = vmatmul.mubr.bf16.gmra.mrb[0].mxu0 %v967
        %v1049 = vpop.f32.mrb[0].mxu0
        %v1050 = vadd.f32 0.0, %v1049
        %v1051 = vpop.f32.mrb[0].mxu0
        %v1052 = vpop.f32.mrb[0].mxu0
        %v1053 = vadd.f32 0.0, %v1052
        %v1054 = vpop.f32.mrb[0].mxu0
        %1055 = vmatprep.mubr.bf16.mxu0 0
        %1056 = vmatmul.mubr.bf16.gmra.mrb[0].mxu0 %v970
        %v1057 = vpop.f32.mrb[0].mxu0
        %v1058 = vadd.f32 0.0, %v1057
        %v1059 = vpop.f32.mrb[0].mxu0
        %v1060 = vpop.f32.mrb[0].mxu0
        %v1061 = vadd.f32 0.0, %v1060
        %v1062 = vpop.f32.mrb[0].mxu0
        %1063 = vmatprep.mubr.bf16.mxu0 0
        %1064 = vmatmul.mubr.bf16.gmra.mrb[0].mxu0 %v973
        %v1065 = vpop.f32.mrb[0].mxu0
        %v1066 = vadd.f32 0.0, %v1065
        %v1067 = vpop.f32.mrb[0].mxu0
        %v1068 = vpop.f32.mrb[0].mxu0
        %v1069 = vadd.f32 0.0, %v1068
        %v1070 = vpop.f32.mrb[0].mxu0
        %1071 = vdwg.mxu0
        %v1072 = vadd.f32 %v861, %v1010
        %v1073 = vadd.f32 %v862, %v1013
        %v1074 = vadd.f32 %v863, %v1018
        %v1075 = vadd.f32 %v864, %v1021
        %v1076 = vadd.f32 %v865, %v1026
        %v1077 = vadd.f32 %v866, %v1029
        %v1078 = vadd.f32 %v867, %v1034
        %v1079 = vadd.f32 %v868, %v1037
        %v1080 = vadd.f32 %v869, %v1042
        %v1081 = vadd.f32 %v870, %v1045
        %v1082 = vadd.f32 %v871, %v1050
        %v1083 = vadd.f32 %v872, %v1053
        %v1084 = vadd.f32 %v873, %v1058
        %v1085 = vadd.f32 %v874, %v1061
        %v1086 = vadd.f32 %v875, %v1066
        %v1087 = vadd.f32 %v876, %v1069
        %v1088 = vld [vmem:[%s275] sm:$0x1]
        %v1090 = vlaneseq
        %v1091 = vshrl.u32 %v1090, 7
        %v1092 = vsub.s32 0, %v1091
        %v1093 = vrot.slane %v1088, %v1092
        %v1095 = vadd.f32 %v1072, %v1093
        %v1096 = vadd.f32 %v1073, %v1093
        %v1097 = vadd.f32 %v1074, %v1093
        %v1098 = vadd.f32 %v1075, %v1093
        %v1099 = vadd.f32 %v1076, %v1093
        %v1100 = vadd.f32 %v1077, %v1093
        %v1101 = vadd.f32 %v1078, %v1093
        %v1102 = vadd.f32 %v1079, %v1093
        %v1103 = vadd.f32 %v1080, %v1093
        %v1104 = vadd.f32 %v1081, %v1093
        %v1105 = vadd.f32 %v1082, %v1093
        %v1106 = vadd.f32 %v1083, %v1093
        %v1107 = vadd.f32 %v1084, %v1093
        %v1108 = vadd.f32 %v1085, %v1093
        %v1109 = vadd.f32 %v1086, %v1093
        %v1110 = vadd.f32 %v1087, %v1093
        %v1111 = vmax.f32 %v1095, 0.0
        %v1112 = vmax.f32 %v1096, 0.0
        %v1113 = vmax.f32 %v1097, 0.0
        %v1114 = vmax.f32 %v1098, 0.0
        %v1115 = vmax.f32 %v1099, 0.0
        %v1116 = vmax.f32 %v1100, 0.0
        %v1117 = vmax.f32 %v1101, 0.0
        %v1118 = vmax.f32 %v1102, 0.0
        %v1119 = vmax.f32 %v1103, 0.0
        %v1120 = vmax.f32 %v1104, 0.0
        %v1121 = vmax.f32 %v1105, 0.0
        %v1122 = vmax.f32 %v1106, 0.0
        %v1123 = vmax.f32 %v1107, 0.0
        %v1124 = vmax.f32 %v1108, 0.0
        %v1125 = vmax.f32 %v1109, 0.0
        %v1126 = vmax.f32 %v1110, 0.0
        %1127 = vst.msk [vmem:[%s252] sm:$0xff] %vm371, %v1111
        %1128 = vst.msk [vmem:[%s252 + $0x8] sm:$0xff] %vm371, %v1112
        %1129 = vst.msk [vmem:[%s252 + $0x10] sm:$0xff] %vm371, %v1113
        %1130 = vst.msk [vmem:[%s252 + $0x18] sm:$0xff] %vm371, %v1114
        %1131 = vst.msk [vmem:[%s252 + $0x20] sm:$0xff] %vm371, %v1115
        %1132 = vst.msk [vmem:[%s252 + $0x28] sm:$0xff] %vm371, %v1116
        %1133 = vst.msk [vmem:[%s252 + $0x30] sm:$0xff] %vm371, %v1117
        %1134 = vst.msk [vmem:[%s252 + $0x38] sm:$0xff] %vm371, %v1118
        %1135 = vst.msk [vmem:[%s252 + $0x40] sm:$0xff] %vm371, %v1119
        %1136 = vst.msk [vmem:[%s252 + $0x48] sm:$0xff] %vm371, %v1120
        %1137 = vst.msk [vmem:[%s252 + $0x50] sm:$0xff] %vm371, %v1121
        %1138 = vst.msk [vmem:[%s252 + $0x58] sm:$0xff] %vm371, %v1122
        %1139 = vst.msk [vmem:[%s252 + $0x60] sm:$0xff] %vm371, %v1123
        %1140 = vst.msk [vmem:[%s252 + $0x68] sm:$0xff] %vm371, %v1124
        %1141 = vst.msk [vmem:[%s252 + $0x70] sm:$0xff] %vm371, %v1125
        %1142 = vst.msk [vmem:[%s252 + $0x78] sm:$0xff] %vm371, %v1126
        %s1143 = sand.u32 %s143, 1
        %s1144 = scalar_lea.sflag [#allocation3], %s1143
        %s1145 = sand.u32 %s143, 1
        %s1146 = smul.addr %s1145, 128
        %s1147 = scalar_lea.vmem [#allocation2], %s1146
        // Predicated region
        $region37: #{easpp_forward.5} parent=35 // pred_check
          %p1148 = pneg %p153
        $region38: #{easpp_forward.5} parent=35 // pred_check_branch
          %1150 = sbr.rel (%p1148) target = $region40
        $region39: #{easpp_forward.5} parent=35 // pred_region
          %s1151 = smul.u32 16, %s23
          %s1153 = ssub.s32 2048, 2048
          %1154 = vsyncadd %s1144, %s1153
          %s1155 = smul.addr %s22, 16
          %s1156 = sadd.s32 %s1151, %s1155
          %s1157 = smul.addr %s1156, 128
          %s1158 = scalar_lea.hbm %s4, %s1157
          %s1159 = sshll.u32 %s1147, 4
          %s1160 = int_to_ptr.vmem [resolvable:$true] %s1159
          %1165 = dma.vmem_to_hbm [thread:$0]  %s1160, 2048, %s1158, %s1144, 128, 128, 8
        $region40: #{easpp_forward.5} parent=35 // pred_fallthru
          _
      $region36: #{easpp_forward.5} parent=5 // pred_fallthru
        _
      %p1166 = scmp.le.s32.totalorder 2, %s13
      // Predicated region
      $region41: #{easpp_forward.5} parent=5 // pred_check
        %p1167 = pneg %p1166
      $region42: #{easpp_forward.5} parent=5 // pred_check_branch
        %1169 = sbr.rel (%p1167) target = $region44
      $region43: #{easpp_forward.5} parent=5 // pred_region
        %s1170 = ssub.s32 %s13, 2
        // Predicated region
        $region45: #{easpp_forward.5} parent=43 // pred_check
          %p1171 = pneg %p159
        $region46: #{easpp_forward.5} parent=43 // pred_check_branch
          %1173 = sbr.rel (%p1171) target = $region48
        $region47: #{easpp_forward.5} parent=43 // pred_region
          %s1174 = sand.u32 %s144, 1
          %s1175 = scalar_lea.sflag [#allocation3], %s1174
          %s1176 = sand.u32 %s144, 1
          %s1177 = smul.addr %s1176, 128
          %s1178 = scalar_lea.vmem [#allocation2], %s1177
          %1179 = dma.done %s1175, 2048
        $region48: #{easpp_forward.5} parent=43 // pred_fallthru
          _
      $region44: #{easpp_forward.5} parent=5 // pred_fallthru
        _
    $region6: #{easpp_forward.5} parent=1 // loop_footer
      %s17 = sadd.s32 1, %s13
    $region7: #{easpp_forward.5} parent=1 // loop_footer_branch
      %12 = sbr.rel target = $region3
    $region8: #{easpp_forward.5} parent=1 // loop_exit
      _
    %1180 = vsyncpa [#allocation3], 1
    %s1181 = scalar_lea.sflag [#allocation3], 1
    %1182 = vsyncpa %s1181, 1

// kernel: easpp_forward.4
$region0: #{easpp_forward.4}
  #allocation0 [shape = 'u32[]', space=smem, size = 0x4, offset = 0x4, fixed_abs, tag = 'smem constant byte address 0x4 - core index']
  #allocation1 [shape = 'u32[144,128]{1,0:T(1,128)}', space=vmem, size = 0x12000, scoped, tag = 'internal scratch']
  #allocation2 [shape = 'bf16[32,48,16]{2,1,0:T(16,128)(2,1)}', space=vmem, size = 0x60000, scoped, tag = 'scratch operand']
  #allocation3 [shape = 'bf16[128,144]{1,0:T(16,128)(2,1)}', space=vmem, size = 0x10000, scoped, tag = 'scratch operand']
  %s0 = inlined_call_operand.vmem [shape: bf16[3,2,8,16,16], index: 0, kind: input, shape index: {}]
  %s1 = inlined_call_operand.vmem [shape: bf16[3,144,16], index: 1, kind: input, shape index: {}]
  %s2 = inlined_call_operand.vmem [shape: f32[3,1,16], index: 2, kind: input, shape index: {}]
  %s3 = inlined_call_operand.vmem [shape: bf16[3,144,16], index: 3, kind: input, shape index: {}]
  %s4 = inlined_call_operand.vmem [shape: f32[3,1,16], index: 4, kind: input, shape index: {}]
  %s5 = inlined_call_operand.vmem [shape: bf16[3,16,32], index: 5, kind: input, shape index: {}]
  %s6 = inlined_call_operand.vmem [shape: f32[3,1,32], index: 6, kind: input, shape index: {}]
  %s7 = inlined_call_operand.vmem [shape: bf16[2,3,128,32], index: 7, kind: output, shape index: {}]
  %s8 = sld [smem:[#allocation0]]
  $region73: #{easpp_forward.4} parent=0
    _
  %s10 = ssub.s32 1, %s8
  %s11 = scalar_select 0, %s10, %s8
  loop: start=0, step=1, limit=8
  $region2: #{easpp_forward.4} parent=0 // loop_pre_header
    _
  $region3: #{easpp_forward.4} parent=0 // loop_header
    %s13 = sphi 0, %s17
    %p14 = scmp.ge.s32.totalorder %s13, 8
    %s20 = sphi 0, %s32
    %s21 = sphi 0, %s28
    %s22 = sphi 0, %s20
    %s23 = sphi 0, %s21
    %s24 = sphi 0, %s22
    %s25 = sphi 0, %s23
    %s37 = sphi 0, %s39
    %s40 = sphi 0, %s37
    %s41 = sphi 0, %s40
    %s57 = sphi 0, %s41
    %s63 = sphi 0, %s65
    %s66 = sphi 0, %s63
    %s67 = sphi 0, %s66
    %s83 = sphi 0, %s67
    %s89 = sphi 0, %s91
    %s92 = sphi 0, %s89
    %s93 = sphi 0, %s92
    %s109 = sphi 0, %s93
    %s115 = sphi 0, %s117
    %s118 = sphi 0, %s115
    %s119 = sphi 0, %s118
    %s135 = sphi 0, %s119
    %s141 = sphi 0, %s143
    %s144 = sphi 0, %s141
    %s145 = sphi 0, %s144
    %s161 = sphi 0, %s145
    %s167 = sphi 0, %s169
    %s170 = sphi 0, %s167
    %s171 = sphi 0, %s170
    %s187 = sphi 0, %s171
    %s193 = sphi 0, %s195
    %s196 = sphi 0, %s193
    %s197 = sphi 0, %s196
    %s213 = sphi 0, %s197
    %s221 = sphi 0, %s223
    %s224 = sphi 0, %s221
    %s225 = sphi 0, %s224
    %s241 = sphi 0, %s225
  $region4: #{easpp_forward.4} parent=0 // loop_header_branch
    %16 = sbr.rel (%p14) target = $region8
  $region5: #{easpp_forward.4} parent=0 // loop_body
    %s18 = ssub.s32 %s13, 1
    %s19 = ssub.s32 %s13, 2
    %s26 = sadd.s32 1, %s21
    %p27 = scmp.ge.s32.totalorder %s26, 2
    %s28 = scalar_select %p27, 0, %s26
    %s29 = sadd.s32 1, %s20
    %s30 = scalar_select %p27, %s29, %s20
    %p31 = scmp.ge.s32.totalorder %s30, 3
    %s32 = scalar_select %p31, 0, %s30
    %s33 = ssub.s32 %s20, %s32
    %s34 = ssub.s32 %s21, %s28
    %s35 = sor.u32 %s33, %s34
    %p36 = scmp.eq.s32.totalorder %s35, 0
    %s38 = sadd.s32 %s37, 1
    %s39 = scalar_select %p36, %s37, %s38
    %p42 = pneg %p36
    %p43 = scmp.eq.s32.totalorder %s13, 5
    %p44 = por %p42, %p43
    %p45 = scmp.ne.s32.totalorder %s37, %s40
    %p46 = scmp.eq.s32.totalorder %s13, 0
    %p47 = por %p45, %p46
    %p48 = scmp.ne.s32.totalorder %s37, %s40
    %p49 = scmp.eq.s32.totalorder %s18, 5
    %p50 = por %p48, %p49
    %p51 = scmp.ne.s32.totalorder %s40, %s41
    %p52 = scmp.eq.s32.totalorder %s18, 0
    %p53 = por %p51, %p52
    %p54 = scmp.ne.s32.totalorder %s40, %s41
    %p55 = scmp.eq.s32.totalorder %s19, 5
    %p56 = por %p54, %p55
    %p58 = scmp.ne.s32.totalorder %s41, %s57
    %p59 = scmp.eq.s32.totalorder %s19, 0
    %p60 = por %p58, %p59
    %s61 = ssub.s32 %s20, %s32
    %p62 = scmp.eq.s32.totalorder %s61, 0
    %s64 = sadd.s32 %s63, 1
    %s65 = scalar_select %p62, %s63, %s64
    %p68 = pneg %p62
    %p69 = scmp.eq.s32.totalorder %s13, 5
    %p70 = por %p68, %p69
    %p71 = scmp.ne.s32.totalorder %s63, %s66
    %p72 = scmp.eq.s32.totalorder %s13, 0
    %p73 = por %p71, %p72
    %p74 = scmp.ne.s32.totalorder %s63, %s66
    %p75 = scmp.eq.s32.totalorder %s18, 5
    %p76 = por %p74, %p75
    %p77 = scmp.ne.s32.totalorder %s66, %s67
    %p78 = scmp.eq.s32.totalorder %s18, 0
    %p79 = por %p77, %p78
    %p80 = scmp.ne.s32.totalorder %s66, %s67
    %p81 = scmp.eq.s32.totalorder %s19, 5
    %p82 = por %p80, %p81
    %p84 = scmp.ne.s32.totalorder %s67, %s83
    %p85 = scmp.eq.s32.totalorder %s19, 0
    %p86 = por %p84, %p85
    %s87 = ssub.s32 %s20, %s32
    %p88 = scmp.eq.s32.totalorder %s87, 0
    %s90 = sadd.s32 %s89, 1
    %s91 = scalar_select %p88, %s89, %s90
    %p94 = pneg %p88
    %p95 = scmp.eq.s32.totalorder %s13, 5
    %p96 = por %p94, %p95
    %p97 = scmp.ne.s32.totalorder %s89, %s92
    %p98 = scmp.eq.s32.totalorder %s13, 0
    %p99 = por %p97, %p98
    %p100 = scmp.ne.s32.totalorder %s89, %s92
    %p101 = scmp.eq.s32.totalorder %s18, 5
    %p102 = por %p100, %p101
    %p103 = scmp.ne.s32.totalorder %s92, %s93
    %p104 = scmp.eq.s32.totalorder %s18, 0
    %p105 = por %p103, %p104
    %p106 = scmp.ne.s32.totalorder %s92, %s93
    %p107 = scmp.eq.s32.totalorder %s19, 5
    %p108 = por %p106, %p107
    %p110 = scmp.ne.s32.totalorder %s93, %s109
    %p111 = scmp.eq.s32.totalorder %s19, 0
    %p112 = por %p110, %p111
    %s113 = ssub.s32 %s20, %s32
    %p114 = scmp.eq.s32.totalorder %s113, 0
    %s116 = sadd.s32 %s115, 1
    %s117 = scalar_select %p114, %s115, %s116
    %p120 = pneg %p114
    %p121 = scmp.eq.s32.totalorder %s13, 5
    %p122 = por %p120, %p121
    %p123 = scmp.ne.s32.totalorder %s115, %s118
    %p124 = scmp.eq.s32.totalorder %s13, 0
    %p125 = por %p123, %p124
    %p126 = scmp.ne.s32.totalorder %s115, %s118
    %p127 = scmp.eq.s32.totalorder %s18, 5
    %p128 = por %p126, %p127
    %p129 = scmp.ne.s32.totalorder %s118, %s119
    %p130 = scmp.eq.s32.totalorder %s18, 0
    %p131 = por %p129, %p130
    %p132 = scmp.ne.s32.totalorder %s118, %s119
    %p133 = scmp.eq.s32.totalorder %s19, 5
    %p134 = por %p132, %p133
    %p136 = scmp.ne.s32.totalorder %s119, %s135
    %p137 = scmp.eq.s32.totalorder %s19, 0
    %p138 = por %p136, %p137
    %s139 = ssub.s32 %s20, %s32
    %p140 = scmp.eq.s32.totalorder %s139, 0
    %s142 = sadd.s32 %s141, 1
    %s143 = scalar_select %p140, %s141, %s142
    %p146 = pneg %p140
    %p147 = scmp.eq.s32.totalorder %s13, 5
    %p148 = por %p146, %p147
    %p149 = scmp.ne.s32.totalorder %s141, %s144
    %p150 = scmp.eq.s32.totalorder %s13, 0
    %p151 = por %p149, %p150
    %p152 = scmp.ne.s32.totalorder %s141, %s144
    %p153 = scmp.eq.s32.totalorder %s18, 5
    %p154 = por %p152, %p153
    %p155 = scmp.ne.s32.totalorder %s144, %s145
    %p156 = scmp.eq.s32.totalorder %s18, 0
    %p157 = por %p155, %p156
    %p158 = scmp.ne.s32.totalorder %s144, %s145
    %p159 = scmp.eq.s32.totalorder %s19, 5
    %p160 = por %p158, %p159
    %p162 = scmp.ne.s32.totalorder %s145, %s161
    %p163 = scmp.eq.s32.totalorder %s19, 0
    %p164 = por %p162, %p163
    %s165 = ssub.s32 %s20, %s32
    %p166 = scmp.eq.s32.totalorder %s165, 0
    %s168 = sadd.s32 %s167, 1
    %s169 = scalar_select %p166, %s167, %s168
    %p172 = pneg %p166
    %p173 = scmp.eq.s32.totalorder %s13, 5
    %p174 = por %p172, %p173
    %p175 = scmp.ne.s32.totalorder %s167, %s170
    %p176 = scmp.eq.s32.totalorder %s13, 0
    %p177 = por %p175, %p176
    %p178 = scmp.ne.s32.totalorder %s167, %s170
    %p179 = scmp.eq.s32.totalorder %s18, 5
    %p180 = por %p178, %p179
    %p181 = scmp.ne.s32.totalorder %s170, %s171
    %p182 = scmp.eq.s32.totalorder %s18, 0
    %p183 = por %p181, %p182
    %p184 = scmp.ne.s32.totalorder %s170, %s171
    %p185 = scmp.eq.s32.totalorder %s19, 5
    %p186 = por %p184, %p185
    %p188 = scmp.ne.s32.totalorder %s171, %s187
    %p189 = scmp.eq.s32.totalorder %s19, 0
    %p190 = por %p188, %p189
    %s191 = ssub.s32 %s20, %s32
    %p192 = scmp.eq.s32.totalorder %s191, 0
    %s194 = sadd.s32 %s193, 1
    %s195 = scalar_select %p192, %s193, %s194
    %p198 = pneg %p192
    %p199 = scmp.eq.s32.totalorder %s13, 5
    %p200 = por %p198, %p199
    %p201 = scmp.ne.s32.totalorder %s193, %s196
    %p202 = scmp.eq.s32.totalorder %s13, 0
    %p203 = por %p201, %p202
    %p204 = scmp.ne.s32.totalorder %s193, %s196
    %p205 = scmp.eq.s32.totalorder %s18, 5
    %p206 = por %p204, %p205
    %p207 = scmp.ne.s32.totalorder %s196, %s197
    %p208 = scmp.eq.s32.totalorder %s18, 0
    %p209 = por %p207, %p208
    %p210 = scmp.ne.s32.totalorder %s196, %s197
    %p211 = scmp.eq.s32.totalorder %s19, 5
    %p212 = por %p210, %p211
    %p214 = scmp.ne.s32.totalorder %s197, %s213
    %p215 = scmp.eq.s32.totalorder %s19, 0
    %p216 = por %p214, %p215
    %s217 = ssub.s32 %s21, %s28
    %s218 = ssub.s32 %s20, %s32
    %s219 = sor.u32 %s217, %s218
    %p220 = scmp.eq.s32.totalorder %s219, 0
    %s222 = sadd.s32 %s221, 1
    %s223 = scalar_select %p220, %s221, %s222
    %p226 = pneg %p220
    %p227 = scmp.eq.s32.totalorder %s13, 5
    %p228 = por %p226, %p227
    %p229 = scmp.ne.s32.totalorder %s221, %s224
    %p230 = scmp.eq.s32.totalorder %s13, 0
    %p231 = por %p229, %p230
    %p232 = scmp.ne.s32.totalorder %s221, %s224
    %p233 = scmp.eq.s32.totalorder %s18, 5
    %p234 = por %p232, %p233
    %p235 = scmp.ne.s32.totalorder %s224, %s225
    %p236 = scmp.eq.s32.totalorder %s18, 0
    %p237 = por %p235, %p236
    %p238 = scmp.ne.s32.totalorder %s224, %s225
    %p239 = scmp.eq.s32.totalorder %s19, 5
    %p240 = por %p238, %p239
    %p242 = scmp.ne.s32.totalorder %s225, %s241
    %p243 = scmp.eq.s32.totalorder %s19, 0
    %p244 = por %p242, %p243
    %p245 = scmp.le.s32.totalorder 1, %s13
    %p246 = scmp.lt.s32.totalorder %s13, 7
    %p247 = pnand %p245, %p246
    %p248 = pneg %p247
    // Predicated region
    $region9: #{easpp_forward.4} parent=5 // pred_check
      _
    $region10: #{easpp_forward.4} parent=5 // pred_check_branch
      %250 = sbr.rel (%p247) target = $region12
    $region11: #{easpp_forward.4} parent=5 // pred_region
      %s251 = ssub.s32 %s13, 1
    $region12: #{easpp_forward.4} parent=5 // pred_fallthru
      _
    %p252 = scmp.lt.s32.totalorder %s13, 6
    // Predicated region
    $region13: #{easpp_forward.4} parent=5 // pred_check
      %p253 = pneg %p252
    $region14: #{easpp_forward.4} parent=5 // pred_check_branch
      %255 = sbr.rel (%p253) target = $region16
    $region15: #{easpp_forward.4} parent=5 // pred_region
      // Predicated region
      $region17: #{easpp_forward.4} parent=15 // pred_check
        %p256 = pneg %p47
      $region18: #{easpp_forward.4} parent=15 // pred_check_branch
        %258 = sbr.rel (%p256) target = $region20
      $region19: #{easpp_forward.4} parent=15 // pred_region
        %p259 = scmp.lt.s32.totalorder %s20, 2
        %s260 = scalar_select %p259, %s20, 2
        %p261 = scmp.lt.s32.totalorder %s21, 1
        %s262 = scalar_select %p261, %s21, 1
        %s263 = smul.addr %s262, 16
        %s264 = smul.addr %s260, 32
        %s265 = sadd.s32 %s263, %s264
        %s266 = smul.addr %s265, 4
        %s267 = scalar_lea.vmem %s0, %s266
      $region20: #{easpp_forward.4} parent=15 // pred_fallthru
        _
      // Predicated region
      $region21: #{easpp_forward.4} parent=15 // pred_check
        %p268 = pneg %p73
      $region22: #{easpp_forward.4} parent=15 // pred_check_branch
        %270 = sbr.rel (%p268) target = $region24
      $region23: #{easpp_forward.4} parent=15 // pred_region
        %p271 = scmp.lt.s32.totalorder %s20, 2
        %s272 = scalar_select %p271, %s20, 2
        %s273 = smul.addr %s272, 18
        %s274 = smul.addr %s273, 4
        %s275 = scalar_lea.vmem %s1, %s274
      $region24: #{easpp_forward.4} parent=15 // pred_fallthru
        _
      // Predicated region
      $region25: #{easpp_forward.4} parent=15 // pred_check
        %p276 = pneg %p99
      $region26: #{easpp_forward.4} parent=15 // pred_check_branch
        %278 = sbr.rel (%p276) target = $region28
      $region27: #{easpp_forward.4} parent=15 // pred_region
        %p279 = scmp.lt.s32.totalorder %s20, 2
        %s280 = scalar_select %p279, %s20, 2
        %s281 = scalar_lea.vmem %s2, %s280
      $region28: #{easpp_forward.4} parent=15 // pred_fallthru
        _
      // Predicated region
      $region29: #{easpp_forward.4} parent=15 // pred_check
        %p282 = pneg %p125
      $region30: #{easpp_forward.4} parent=15 // pred_check_branch
        %284 = sbr.rel (%p282) target = $region32
      $region31: #{easpp_forward.4} parent=15 // pred_region
        %p285 = scmp.lt.s32.totalorder %s20, 2
        %s286 = scalar_select %p285, %s20, 2
        %s287 = smul.addr %s286, 18
        %s288 = smul.addr %s287, 4
        %s289 = scalar_lea.vmem %s3, %s288
      $region32: #{easpp_forward.4} parent=15 // pred_fallthru
        _
      // Predicated region
      $region33: #{easpp_forward.4} parent=15 // pred_check
        %p290 = pneg %p151
      $region34: #{easpp_forward.4} parent=15 // pred_check_branch
        %292 = sbr.rel (%p290) target = $region36
      $region35: #{easpp_forward.4} parent=15 // pred_region
        %p293 = scmp.lt.s32.totalorder %s20, 2
        %s294 = scalar_select %p293, %s20, 2
        %s295 = scalar_lea.vmem %s4, %s294
      $region36: #{easpp_forward.4} parent=15 // pred_fallthru
        _
      // Predicated region
      $region37: #{easpp_forward.4} parent=15 // pred_check
        %p296 = pneg %p177
      $region38: #{easpp_forward.4} parent=15 // pred_check_branch
        %298 = sbr.rel (%p296) target = $region40
      $region39: #{easpp_forward.4} parent=15 // pred_region
        %p299 = scmp.lt.s32.totalorder %s20, 2
        %s300 = scalar_select %p299, %s20, 2
        %s301 = smul.addr %s300, 2
        %s302 = smul.addr %s301, 4
        %s303 = scalar_lea.vmem %s5, %s302
      $region40: #{easpp_forward.4} parent=15 // pred_fallthru
        _
      // Predicated region
      $region41: #{easpp_forward.4} parent=15 // pred_check
        %p304 = pneg %p203
      $region42: #{easpp_forward.4} parent=15 // pred_check_branch
        %306 = sbr.rel (%p304) target = $region44
      $region43: #{easpp_forward.4} parent=15 // pred_region
        %p307 = scmp.lt.s32.totalorder %s20, 2
        %s308 = scalar_select %p307, %s20, 2
        %s309 = scalar_lea.vmem %s6, %s308
      $region44: #{easpp_forward.4} parent=15 // pred_fallthru
        _
    $region16: #{easpp_forward.4} parent=5 // pred_fallthru
      _
    %p310 = scmp.le.s32.totalorder 1, %s13
    %p311 = scmp.lt.s32.totalorder %s13, 7
    %p312 = pnand %p310, %p311
    %p313 = pneg %p312
    // Predicated region
    $region45: #{easpp_forward.4} parent=5 // pred_check
      _
    $region46: #{easpp_forward.4} parent=5 // pred_check_branch
      %315 = sbr.rel (%p312) target = $region48
    $region47: #{easpp_forward.4} parent=5 // pred_region
      %s316 = ssub.s32 %s13, 1
      %p317 = scmp.lt.s32.totalorder %s22, 2
      %s318 = scalar_select %p317, %s22, 2
      %p319 = scmp.lt.s32.totalorder %s23, 1
      %s320 = scalar_select %p319, %s23, 1
      %s321 = smul.addr %s320, 16
      %s322 = smul.addr %s318, 32
      %s323 = sadd.s32 %s321, %s322
      %s324 = smul.addr %s323, 4
      %s325 = scalar_lea.vmem %s0, %s324
      %p326 = pneg %p53
      %p327 = pneg %p50
      %p328 = scmp.lt.s32.totalorder %s22, 2
      %s329 = scalar_select %p328, %s22, 2
      %s330 = smul.addr %s329, 18
      %s331 = smul.addr %s330, 4
      %s332 = scalar_lea.vmem %s1, %s331
      %p333 = pneg %p79
      %p334 = pneg %p76
      %p335 = scmp.lt.s32.totalorder %s22, 2
      %s336 = scalar_select %p335, %s22, 2
      %s337 = scalar_lea.vmem %s2, %s336
      %p338 = pneg %p105
      %p339 = pneg %p102
      %p340 = scmp.lt.s32.totalorder %s22, 2
      %s341 = scalar_select %p340, %s22, 2
      %s342 = smul.addr %s341, 18
      %s343 = smul.addr %s342, 4
      %s344 = scalar_lea.vmem %s3, %s343
      %p345 = pneg %p131
      %p346 = pneg %p128
      %p347 = scmp.lt.s32.totalorder %s22, 2
      %s348 = scalar_select %p347, %s22, 2
      %s349 = scalar_lea.vmem %s4, %s348
      %p350 = pneg %p157
      %p351 = pneg %p154
      %p352 = scmp.lt.s32.totalorder %s22, 2
      %s353 = scalar_select %p352, %s22, 2
      %s354 = smul.addr %s353, 2
      %s355 = smul.addr %s354, 4
      %s356 = scalar_lea.vmem %s5, %s355
      %p357 = pneg %p183
      %p358 = pneg %p180
      %p359 = scmp.lt.s32.totalorder %s22, 2
      %s360 = scalar_select %p359, %s22, 2
      %s361 = scalar_lea.vmem %s6, %s360
      %p362 = pneg %p209
      %p363 = pneg %p206
      %p364 = pneg %p237
      %p365 = pneg %p234
      %p366 = scmp.lt.s32.totalorder %s23, 1
      %s367 = scalar_select %p366, %s23, 1
      %p368 = scmp.lt.s32.totalorder %s22, 2
      %s369 = scalar_select %p368, %s22, 2
      %s370 = smul.addr %s369, 16
      %s371 = smul.addr %s367, 48
      %s372 = sadd.s32 %s370, %s371
      %s373 = smul.addr %s372, 4
      %s374 = scalar_lea.vmem %s7, %s373
      %p375 = scmp.lt.s32.totalorder %s22, 2
      %s376 = scalar_select %p375, %s22, 2
      %p377 = scmp.lt.s32.totalorder %s23, 1
      %s378 = scalar_select %p377, %s23, 1
      %s379 = smul.addr %s378, 16
      %s380 = smul.addr %s376, 32
      %s381 = sadd.s32 %s379, %s380
      %s382 = smul.addr %s381, 4
      %s383 = scalar_lea.vmem %s0, %s382
      %p384 = scmp.lt.s32.totalorder %s22, 2
      %s385 = scalar_select %p384, %s22, 2
      %s386 = smul.addr %s385, 18
      %s387 = smul.addr %s386, 4
      %s388 = scalar_lea.vmem %s1, %s387
      %p389 = scmp.lt.s32.totalorder %s22, 2
      %s390 = scalar_select %p389, %s22, 2
      %s391 = scalar_lea.vmem %s2, %s390
      %p392 = scmp.lt.s32.totalorder %s22, 2
      %s393 = scalar_select %p392, %s22, 2
      %s394 = smul.addr %s393, 18
      %s395 = smul.addr %s394, 4
      %s396 = scalar_lea.vmem %s3, %s395
      %p397 = scmp.lt.s32.totalorder %s22, 2
      %s398 = scalar_select %p397, %s22, 2
      %s399 = scalar_lea.vmem %s4, %s398
      %p400 = scmp.lt.s32.totalorder %s22, 2
      %s401 = scalar_select %p400, %s22, 2
      %s402 = smul.addr %s401, 2
      %s403 = smul.addr %s402, 4
      %s404 = scalar_lea.vmem %s5, %s403
      %p405 = scmp.lt.s32.totalorder %s22, 2
      %s406 = scalar_select %p405, %s22, 2
      %s407 = scalar_lea.vmem %s6, %s406
      %p408 = scmp.lt.s32.totalorder %s23, 1
      %s409 = scalar_select %p408, %s23, 1
      %p410 = scmp.lt.s32.totalorder %s22, 2
      %s411 = scalar_select %p410, %s22, 2
      %s412 = smul.addr %s411, 16
      %s413 = smul.addr %s409, 48
      %s414 = sadd.s32 %s412, %s413
      %s415 = smul.addr %s414, 4
      %s416 = scalar_lea.vmem %s7, %s415
      %p418 = scmp.eq.s32.totalorder %s22, 0
      // Predicated region
      $region49: #{easpp_forward.4} parent=47 // pred_check
        %p419 = pneg %p418
      $region50: #{easpp_forward.4} parent=47 // pred_check_branch
        %421 = sbr.rel (%p419) target = $region52
      $region51: #{easpp_forward.4} parent=47 // pred_region
        %vm422 = vcmask 130048
        %423 = vst.msk [vmem:[#allocation2] sm:$0xff] %vm422, 0
        %424 = vst.msk [vmem:[#allocation2 + $0x8] sm:$0xff] %vm422, 0
        %425 = vst.msk [vmem:[#allocation2 + $0x10] sm:$0xff] %vm422, 0
        %426 = vst.msk [vmem:[#allocation2 + $0x18] sm:$0xff] %vm422, 0
        %427 = vst.msk [vmem:[#allocation2 + $0x20] sm:$0xff] %vm422, 0
        %428 = vst.msk [vmem:[#allocation2 + $0x28] sm:$0xff] %vm422, 0
        %429 = vst.msk [vmem:[#allocation2 + $0x30] sm:$0xff] %vm422, 0
        %430 = vst.msk [vmem:[#allocation2 + $0x38] sm:$0xff] %vm422, 0
        %431 = vst.msk [vmem:[#allocation2 + $0x40] sm:$0xff] %vm422, 0
        %432 = vst.msk [vmem:[#allocation2 + $0x48] sm:$0xff] %vm422, 0
        %433 = vst.msk [vmem:[#allocation2 + $0x50] sm:$0xff] %vm422, 0
        %434 = vst.msk [vmem:[#allocation2 + $0x58] sm:$0xff] %vm422, 0
        %435 = vst.msk [vmem:[#allocation2 + $0x60] sm:$0xff] %vm422, 0
        %436 = vst.msk [vmem:[#allocation2 + $0x68] sm:$0xff] %vm422, 0
        %437 = vst.msk [vmem:[#allocation2 + $0x70] sm:$0xff] %vm422, 0
        %438 = vst.msk [vmem:[#allocation2 + $0x78] sm:$0xff] %vm422, 0
        %439 = vst.msk [vmem:[#allocation2 + $0x80] sm:$0xff] %vm422, 0
        %440 = vst.msk [vmem:[#allocation2 + $0x88] sm:$0xff] %vm422, 0
        %441 = vst.msk [vmem:[#allocation2 + $0x90] sm:$0xff] %vm422, 0
        %442 = vst.msk [vmem:[#allocation2 + $0x98] sm:$0xff] %vm422, 0
        %443 = vst.msk [vmem:[#allocation2 + $0xa0] sm:$0xff] %vm422, 0
        %444 = vst.msk [vmem:[#allocation2 + $0xa8] sm:$0xff] %vm422, 0
        %445 = vst.msk [vmem:[#allocation2 + $0xb0] sm:$0xff] %vm422, 0
        %446 = vst.msk [vmem:[#allocation2 + $0xb8] sm:$0xff] %vm422, 0
        %447 = vst.msk [vmem:[#allocation2 + $0xc0] sm:$0xff] %vm422, 0
        %448 = vst.msk [vmem:[#allocation2 + $0xc8] sm:$0xff] %vm422, 0
        %449 = vst.msk [vmem:[#allocation2 + $0xd0] sm:$0xff] %vm422, 0
        %450 = vst.msk [vmem:[#allocation2 + $0xd8] sm:$0xff] %vm422, 0
        %451 = vst.msk [vmem:[#allocation2 + $0xe0] sm:$0xff] %vm422, 0
        %452 = vst.msk [vmem:[#allocation2 + $0xe8] sm:$0xff] %vm422, 0
        %453 = vst.msk [vmem:[#allocation2 + $0xf0] sm:$0xff] %vm422, 0
        %454 = vst.msk [vmem:[#allocation2 + $0xf8] sm:$0xff] %vm422, 0
        %455 = vst.msk [vmem:[#allocation2 + $0x100] sm:$0xff] %vm422, 0
        %456 = vst.msk [vmem:[#allocation2 + $0x108] sm:$0xff] %vm422, 0
        %457 = vst.msk [vmem:[#allocation2 + $0x110] sm:$0xff] %vm422, 0
        %458 = vst.msk [vmem:[#allocation2 + $0x118] sm:$0xff] %vm422, 0
        %459 = vst.msk [vmem:[#allocation2 + $0x120] sm:$0xff] %vm422, 0
        %460 = vst.msk [vmem:[#allocation2 + $0x128] sm:$0xff] %vm422, 0
        %461 = vst.msk [vmem:[#allocation2 + $0x130] sm:$0xff] %vm422, 0
        %462 = vst.msk [vmem:[#allocation2 + $0x138] sm:$0xff] %vm422, 0
        %463 = vst.msk [vmem:[#allocation2 + $0x140] sm:$0xff] %vm422, 0
        %464 = vst.msk [vmem:[#allocation2 + $0x148] sm:$0xff] %vm422, 0
        %465 = vst.msk [vmem:[#allocation2 + $0x150] sm:$0xff] %vm422, 0
        %466 = vst.msk [vmem:[#allocation2 + $0x158] sm:$0xff] %vm422, 0
        %467 = vst.msk [vmem:[#allocation2 + $0x160] sm:$0xff] %vm422, 0
        %468 = vst.msk [vmem:[#allocation2 + $0x168] sm:$0xff] %vm422, 0
        %469 = vst.msk [vmem:[#allocation2 + $0x170] sm:$0xff] %vm422, 0
        %470 = vst.msk [vmem:[#allocation2 + $0x178] sm:$0xff] %vm422, 0
        %471 = vst.msk [vmem:[#allocation2 + $0x180] sm:$0xff] %vm422, 0
        %472 = vst.msk [vmem:[#allocation2 + $0x188] sm:$0xff] %vm422, 0
        %473 = vst.msk [vmem:[#allocation2 + $0x190] sm:$0xff] %vm422, 0
        %474 = vst.msk [vmem:[#allocation2 + $0x198] sm:$0xff] %vm422, 0
        %475 = vst.msk [vmem:[#allocation2 + $0x1a0] sm:$0xff] %vm422, 0
        %476 = vst.msk [vmem:[#allocation2 + $0x1a8] sm:$0xff] %vm422, 0
        %477 = vst.msk [vmem:[#allocation2 + $0x1b0] sm:$0xff] %vm422, 0
        %478 = vst.msk [vmem:[#allocation2 + $0x1b8] sm:$0xff] %vm422, 0
        %479 = vst.msk [vmem:[#allocation2 + $0x1c0] sm:$0xff] %vm422, 0
        %480 = vst.msk [vmem:[#allocation2 + $0x1c8] sm:$0xff] %vm422, 0
        %481 = vst.msk [vmem:[#allocation2 + $0x1d0] sm:$0xff] %vm422, 0
        %482 = vst.msk [vmem:[#allocation2 + $0x1d8] sm:$0xff] %vm422, 0
        %483 = vst.msk [vmem:[#allocation2 + $0x1e0] sm:$0xff] %vm422, 0
        %484 = vst.msk [vmem:[#allocation2 + $0x1e8] sm:$0xff] %vm422, 0
        %485 = vst.msk [vmem:[#allocation2 + $0x1f0] sm:$0xff] %vm422, 0
        %486 = vst.msk [vmem:[#allocation2 + $0x1f8] sm:$0xff] %vm422, 0
        %487 = vst.msk [vmem:[#allocation2 + $0x200] sm:$0xff] %vm422, 0
        %488 = vst.msk [vmem:[#allocation2 + $0x208] sm:$0xff] %vm422, 0
        %489 = vst.msk [vmem:[#allocation2 + $0x210] sm:$0xff] %vm422, 0
        %490 = vst.msk [vmem:[#allocation2 + $0x218] sm:$0xff] %vm422, 0
        %491 = vst.msk [vmem:[#allocation2 + $0x220] sm:$0xff] %vm422, 0
        %492 = vst.msk [vmem:[#allocation2 + $0x228] sm:$0xff] %vm422, 0
        %493 = vst.msk [vmem:[#allocation2 + $0x230] sm:$0xff] %vm422, 0
        %494 = vst.msk [vmem:[#allocation2 + $0x238] sm:$0xff] %vm422, 0
        %495 = vst.msk [vmem:[#allocation2 + $0x240] sm:$0xff] %vm422, 0
        %496 = vst.msk [vmem:[#allocation2 + $0x248] sm:$0xff] %vm422, 0
        %497 = vst.msk [vmem:[#allocation2 + $0x250] sm:$0xff] %vm422, 0
        %498 = vst.msk [vmem:[#allocation2 + $0x258] sm:$0xff] %vm422, 0
        %499 = vst.msk [vmem:[#allocation2 + $0x260] sm:$0xff] %vm422, 0
        %500 = vst.msk [vmem:[#allocation2 + $0x268] sm:$0xff] %vm422, 0
        %501 = vst.msk [vmem:[#allocation2 + $0x270] sm:$0xff] %vm422, 0
        %502 = vst.msk [vmem:[#allocation2 + $0x278] sm:$0xff] %vm422, 0
        %503 = vst.msk [vmem:[#allocation2 + $0x280] sm:$0xff] %vm422, 0
        %504 = vst.msk [vmem:[#allocation2 + $0x288] sm:$0xff] %vm422, 0
        %505 = vst.msk [vmem:[#allocation2 + $0x290] sm:$0xff] %vm422, 0
        %506 = vst.msk [vmem:[#allocation2 + $0x298] sm:$0xff] %vm422, 0
        %507 = vst.msk [vmem:[#allocation2 + $0x2a0] sm:$0xff] %vm422, 0
        %508 = vst.msk [vmem:[#allocation2 + $0x2a8] sm:$0xff] %vm422, 0
        %509 = vst.msk [vmem:[#allocation2 + $0x2b0] sm:$0xff] %vm422, 0
        %510 = vst.msk [vmem:[#allocation2 + $0x2b8] sm:$0xff] %vm422, 0
        %511 = vst.msk [vmem:[#allocation2 + $0x2c0] sm:$0xff] %vm422, 0
        %512 = vst.msk [vmem:[#allocation2 + $0x2c8] sm:$0xff] %vm422, 0
        %513 = vst.msk [vmem:[#allocation2 + $0x2d0] sm:$0xff] %vm422, 0
        %514 = vst.msk [vmem:[#allocation2 + $0x2d8] sm:$0xff] %vm422, 0
        %515 = vst.msk [vmem:[#allocation2 + $0x2e0] sm:$0xff] %vm422, 0
        %516 = vst.msk [vmem:[#allocation2 + $0x2e8] sm:$0xff] %vm422, 0
        %517 = vst.msk [vmem:[#allocation2 + $0x2f0] sm:$0xff] %vm422, 0
        %518 = vst.msk [vmem:[#allocation2 + $0x2f8] sm:$0xff] %vm422, 0
        %v519 = vld [vmem:[%s383] sm:$0xf]
        %v520 = vld [vmem:[%s383 + $0x4] sm:$0xf]
        %v521 = vld [vmem:[%s383 + $0x8] sm:$0xf]
        %v522 = vld [vmem:[%s383 + $0xc] sm:$0xf]
        %v523 = vld [vmem:[%s383 + $0x10] sm:$0xf]
        %v524 = vld [vmem:[%s383 + $0x14] sm:$0xf]
        %v525 = vld [vmem:[%s383 + $0x18] sm:$0xf]
        %v526 = vld [vmem:[%s383 + $0x1c] sm:$0xf]
        %v527 = vld [vmem:[%s383 + $0x20] sm:$0xf]
        %v528 = vld [vmem:[%s383 + $0x24] sm:$0xf]
        %v529 = vld [vmem:[%s383 + $0x28] sm:$0xf]
        %v530 = vld [vmem:[%s383 + $0x2c] sm:$0xf]
        %v531 = vld [vmem:[%s383 + $0x30] sm:$0xf]
        %v532 = vld [vmem:[%s383 + $0x34] sm:$0xf]
        %v533 = vld [vmem:[%s383 + $0x38] sm:$0xf]
        %v534 = vld [vmem:[%s383 + $0x3c] sm:$0xf]
        %v551 = vunpack.c.l.b16 %v519
        %v552 = vunpack.c.l.b16 %v520
        %v553 = vunpack.c.l.b16 %v521
        %v554 = vunpack.c.l.b16 %v522
        %v555 = vunpack.c.l.b16 %v523
        %v556 = vunpack.c.l.b16 %v524
        %v557 = vunpack.c.l.b16 %v525
        %v558 = vunpack.c.l.b16 %v526
        %v559 = vunpack.c.l.b16 %v527
        %v560 = vunpack.c.l.b16 %v528
        %v561 = vunpack.c.l.b16 %v529
        %v562 = vunpack.c.l.b16 %v530
        %v563 = vunpack.c.l.b16 %v531
        %v564 = vunpack.c.l.b16 %v532
        %v565 = vunpack.c.l.b16 %v533
        %v566 = vunpack.c.l.b16 %v534
        %v567 = vpack.c.b16 %v552, %v551
        %v568 = vpack.c.b16 %v554, %v553
        %v569 = vpack.c.b16 %v556, %v555
        %v570 = vpack.c.b16 %v558, %v557
        %v571 = vpack.c.b16 %v560, %v559
        %v572 = vpack.c.b16 %v562, %v561
        %v573 = vpack.c.b16 %v564, %v563
        %v574 = vpack.c.b16 %v566, %v565
        %s583 = scalar_lea.vmem [#allocation2], 288
        %584 = vst.msk [vmem:[%s583 + $0x8] sm:$0xff] %vm422, %v567
        %585 = vst.msk [vmem:[%s583 + $0x20] sm:$0xff] %vm422, %v568
        %586 = vst.msk [vmem:[%s583 + $0x38] sm:$0xff] %vm422, %v569
        %587 = vst.msk [vmem:[%s583 + $0x50] sm:$0xff] %vm422, %v570
        %588 = vst.msk [vmem:[%s583 + $0x68] sm:$0xff] %vm422, %v571
        %589 = vst.msk [vmem:[%s583 + $0x80] sm:$0xff] %vm422, %v572
        %590 = vst.msk [vmem:[%s583 + $0x98] sm:$0xff] %vm422, %v573
        %591 = vst.msk [vmem:[%s583 + $0xb0] sm:$0xff] %vm422, %v574
        %s592 = scalar_lea.vmem [#allocation2], 216
        %v593 = vld [vmem:[%s592] sm:$0xc0]
        %v594 = vld [vmem:[%s592 + $0x8] sm:$0x7f]
        %v595 = vld [vmem:[%s592 + $0x18] sm:$0xc0]
        %v596 = vld [vmem:[%s592 + $0x20] sm:$0x7f]
        %v597 = vld [vmem:[%s592 + $0x30] sm:$0xc0]
        %v598 = vld [vmem:[%s592 + $0x38] sm:$0x7f]
        %v599 = vld [vmem:[%s592 + $0x48] sm:$0xc0]
        %v600 = vld [vmem:[%s592 + $0x50] sm:$0x7f]
        %v601 = vld [vmem:[%s592 + $0x60] sm:$0xc0]
        %v602 = vld [vmem:[%s592 + $0x68] sm:$0x7f]
        %v603 = vld [vmem:[%s592 + $0x78] sm:$0xc0]
        %v604 = vld [vmem:[%s592 + $0x80] sm:$0x7f]
        %v605 = vld [vmem:[%s592 + $0x90] sm:$0xc0]
        %v606 = vld [vmem:[%s592 + $0x98] sm:$0x7f]
        %v607 = vld [vmem:[%s592 + $0xa8] sm:$0xc0]
        %v608 = vld [vmem:[%s592 + $0xb0] sm:$0x7f]
        %vm609 = vsmask.f32 1280
        %v611 = vshrl.u32 %v593, 16
        %v613 = vrot.slane %v611, 6
        %v614 = vshll.u32 %v593, 16
        %v616 = vrot.slane %v614, 7
        %v617 = vor.u32 %v613, %v616
        %v619 = vshrl.u32 %v594, 16
        %v621 = vrot.slane %v619, 6
        %v622 = vshll.u32 %v594, 16
        %v624 = vrot.slane %v622, 7
        %v625 = vor.u32 %v621, %v624
        %v626 = vsel %vm609, %v617, %v625
        %v628 = vshrl.u32 %v595, 16
        %v630 = vrot.slane %v628, 6
        %v631 = vshll.u32 %v595, 16
        %v633 = vrot.slane %v631, 7
        %v634 = vor.u32 %v630, %v633
        %v636 = vshrl.u32 %v596, 16
        %v638 = vrot.slane %v636, 6
        %v639 = vshll.u32 %v596, 16
        %v641 = vrot.slane %v639, 7
        %v642 = vor.u32 %v638, %v641
        %v643 = vsel %vm609, %v634, %v642
        %v645 = vshrl.u32 %v597, 16
        %v647 = vrot.slane %v645, 6
        %v648 = vshll.u32 %v597, 16
        %v650 = vrot.slane %v648, 7
        %v651 = vor.u32 %v647, %v650
        %v653 = vshrl.u32 %v598, 16
        %v655 = vrot.slane %v653, 6
        %v656 = vshll.u32 %v598, 16
        %v658 = vrot.slane %v656, 7
        %v659 = vor.u32 %v655, %v658
        %v660 = vsel %vm609, %v651, %v659
        %v662 = vshrl.u32 %v599, 16
        %v664 = vrot.slane %v662, 6
        %v665 = vshll.u32 %v599, 16
        %v667 = vrot.slane %v665, 7
        %v668 = vor.u32 %v664, %v667
        %v670 = vshrl.u32 %v600, 16
        %v672 = vrot.slane %v670, 6
        %v673 = vshll.u32 %v600, 16
        %v675 = vrot.slane %v673, 7
        %v676 = vor.u32 %v672, %v675
        %v677 = vsel %vm609, %v668, %v676
        %v679 = vshrl.u32 %v601, 16
        %v681 = vrot.slane %v679, 6
        %v682 = vshll.u32 %v601, 16
        %v684 = vrot.slane %v682, 7
        %v685 = vor.u32 %v681, %v684
        %v687 = vshrl.u32 %v602, 16
        %v689 = vrot.slane %v687, 6
        %v690 = vshll.u32 %v602, 16
        %v692 = vrot.slane %v690, 7
        %v693 = vor.u32 %v689, %v692
        %v694 = vsel %vm609, %v685, %v693
        %v696 = vshrl.u32 %v603, 16
        %v698 = vrot.slane %v696, 6
        %v699 = vshll.u32 %v603, 16
        %v701 = vrot.slane %v699, 7
        %v702 = vor.u32 %v698, %v701
        %v704 = vshrl.u32 %v604, 16
        %v706 = vrot.slane %v704, 6
        %v707 = vshll.u32 %v604, 16
        %v709 = vrot.slane %v707, 7
        %v710 = vor.u32 %v706, %v709
        %v711 = vsel %vm609, %v702, %v710
        %v713 = vshrl.u32 %v605, 16
        %v715 = vrot.slane %v713, 6
        %v716 = vshll.u32 %v605, 16
        %v718 = vrot.slane %v716, 7
        %v719 = vor.u32 %v715, %v718
        %v721 = vshrl.u32 %v606, 16
        %v723 = vrot.slane %v721, 6
        %v724 = vshll.u32 %v606, 16
        %v726 = vrot.slane %v724, 7
        %v727 = vor.u32 %v723, %v726
        %v728 = vsel %vm609, %v719, %v727
        %v730 = vshrl.u32 %v607, 16
        %v732 = vrot.slane %v730, 6
        %v733 = vshll.u32 %v607, 16
        %v735 = vrot.slane %v733, 7
        %v736 = vor.u32 %v732, %v735
        %v738 = vshrl.u32 %v608, 16
        %v740 = vrot.slane %v738, 6
        %v741 = vshll.u32 %v608, 16
        %v743 = vrot.slane %v741, 7
        %v744 = vor.u32 %v740, %v743
        %v745 = vsel %vm609, %v736, %v744
        %754 = vst.msk [vmem:[#allocation3] sm:$0xff] %vm422, %v626
        %755 = vst.msk [vmem:[#allocation3 + $0x10] sm:$0xff] %vm422, %v643
        %756 = vst.msk [vmem:[#allocation3 + $0x20] sm:$0xff] %vm422, %v660
        %757 = vst.msk [vmem:[#allocation3 + $0x30] sm:$0xff] %vm422, %v677
        %758 = vst.msk [vmem:[#allocation3 + $0x40] sm:$0xff] %vm422, %v694
        %759 = vst.msk [vmem:[#allocation3 + $0x50] sm:$0xff] %vm422, %v711
        %760 = vst.msk [vmem:[#allocation3 + $0x60] sm:$0xff] %vm422, %v728
        %761 = vst.msk [vmem:[#allocation3 + $0x70] sm:$0xff] %vm422, %v745
        %v762 = vld [vmem:[%s592 + $0x8] sm:$0xff]
        %v763 = vld [vmem:[%s592 + $0x20] sm:$0xff]
        %v764 = vld [vmem:[%s592 + $0x38] sm:$0xff]
        %v765 = vld [vmem:[%s592 + $0x50] sm:$0xff]
        %v766 = vld [vmem:[%s592 + $0x68] sm:$0xff]
        %v767 = vld [vmem:[%s592 + $0x80] sm:$0xff]
        %v768 = vld [vmem:[%s592 + $0x98] sm:$0xff]
        %v769 = vld [vmem:[%s592 + $0xb0] sm:$0xff]
        %778 = vrot.lane.b32.xlu0 %v762, 16
        %v779 = vpop.permute.xlu0 %778
        %780 = vrot.lane.b32.xlu0 %v763, 16
        %v781 = vpop.permute.xlu0 %780
        %782 = vrot.lane.b32.xlu0 %v764, 16
        %v783 = vpop.permute.xlu0 %782
        %784 = vrot.lane.b32.xlu0 %v765, 16
        %v785 = vpop.permute.xlu0 %784
        %786 = vrot.lane.b32.xlu0 %v766, 16
        %v787 = vpop.permute.xlu0 %786
        %788 = vrot.lane.b32.xlu0 %v767, 16
        %v789 = vpop.permute.xlu0 %788
        %790 = vrot.lane.b32.xlu0 %v768, 16
        %v791 = vpop.permute.xlu0 %790
        %792 = vrot.lane.b32.xlu0 %v769, 16
        %v793 = vpop.permute.xlu0 %792
        %vm802 = vcmask 261248
        %803 = vst.msk [vmem:[#allocation3] sm:$0xff] %vm802, %v779
        %804 = vst.msk [vmem:[#allocation3 + $0x10] sm:$0xff] %vm802, %v781
        %805 = vst.msk [vmem:[#allocation3 + $0x20] sm:$0xff] %vm802, %v783
        %806 = vst.msk [vmem:[#allocation3 + $0x30] sm:$0xff] %vm802, %v785
        %807 = vst.msk [vmem:[#allocation3 + $0x40] sm:$0xff] %vm802, %v787
        %808 = vst.msk [vmem:[#allocation3 + $0x50] sm:$0xff] %vm802, %v789
        %809 = vst.msk [vmem:[#allocation3 + $0x60] sm:$0xff] %vm802, %v791
        %810 = vst.msk [vmem:[#allocation3 + $0x70] sm:$0xff] %vm802, %v793
        %v811 = vld [vmem:[%s592 + $0x8] sm:$0xfe]
        %v812 = vld [vmem:[%s592 + $0x10] sm:$0x3]
        %v813 = vld [vmem:[%s592 + $0x20] sm:$0xfe]
        %v814 = vld [vmem:[%s592 + $0x28] sm:$0x3]
        %v815 = vld [vmem:[%s592 + $0x38] sm:$0xfe]
        %v816 = vld [vmem:[%s592 + $0x40] sm:$0x3]
        %v817 = vld [vmem:[%s592 + $0x50] sm:$0xfe]
        %v818 = vld [vmem:[%s592 + $0x58] sm:$0x3]
        %v819 = vld [vmem:[%s592 + $0x68] sm:$0xfe]
        %v820 = vld [vmem:[%s592 + $0x70] sm:$0x3]
        %v821 = vld [vmem:[%s592 + $0x80] sm:$0xfe]
        %v822 = vld [vmem:[%s592 + $0x88] sm:$0x3]
        %v823 = vld [vmem:[%s592 + $0x98] sm:$0xfe]
        %v824 = vld [vmem:[%s592 + $0xa0] sm:$0x3]
        %v825 = vld [vmem:[%s592 + $0xb0] sm:$0xfe]
        %v826 = vld [vmem:[%s592 + $0xb8] sm:$0x3]
        %vm827 = vsmask.f32 6400
        %v829 = vshrl.u32 %v811, 16
        %v831 = vrot.slane %v829, 1
        %v832 = vshll.u32 %v811, 16
        %v834 = vrot.slane %v832, 2
        %v835 = vor.u32 %v831, %v834
        %v837 = vshrl.u32 %v812, 16
        %v839 = vrot.slane %v837, 1
        %v840 = vshll.u32 %v812, 16
        %v842 = vrot.slane %v840, 2
        %v843 = vor.u32 %v839, %v842
        %v844 = vsel %vm827, %v835, %v843
        %v846 = vshrl.u32 %v813, 16
        %v848 = vrot.slane %v846, 1
        %v849 = vshll.u32 %v813, 16
        %v851 = vrot.slane %v849, 2
        %v852 = vor.u32 %v848, %v851
        %v854 = vshrl.u32 %v814, 16
        %v856 = vrot.slane %v854, 1
        %v857 = vshll.u32 %v814, 16
        %v859 = vrot.slane %v857, 2
        %v860 = vor.u32 %v856, %v859
        %v861 = vsel %vm827, %v852, %v860
        %v863 = vshrl.u32 %v815, 16
        %v865 = vrot.slane %v863, 1
        %v866 = vshll.u32 %v815, 16
        %v868 = vrot.slane %v866, 2
        %v869 = vor.u32 %v865, %v868
        %v871 = vshrl.u32 %v816, 16
        %v873 = vrot.slane %v871, 1
        %v874 = vshll.u32 %v816, 16
        %v876 = vrot.slane %v874, 2
        %v877 = vor.u32 %v873, %v876
        %v878 = vsel %vm827, %v869, %v877
        %v880 = vshrl.u32 %v817, 16
        %v882 = vrot.slane %v880, 1
        %v883 = vshll.u32 %v817, 16
        %v885 = vrot.slane %v883, 2
        %v886 = vor.u32 %v882, %v885
        %v888 = vshrl.u32 %v818, 16
        %v890 = vrot.slane %v888, 1
        %v891 = vshll.u32 %v818, 16
        %v893 = vrot.slane %v891, 2
        %v894 = vor.u32 %v890, %v893
        %v895 = vsel %vm827, %v886, %v894
        %v897 = vshrl.u32 %v819, 16
        %v899 = vrot.slane %v897, 1
        %v900 = vshll.u32 %v819, 16
        %v902 = vrot.slane %v900, 2
        %v903 = vor.u32 %v899, %v902
        %v905 = vshrl.u32 %v820, 16
        %v907 = vrot.slane %v905, 1
        %v908 = vshll.u32 %v820, 16
        %v910 = vrot.slane %v908, 2
        %v911 = vor.u32 %v907, %v910
        %v912 = vsel %vm827, %v903, %v911
        %v914 = vshrl.u32 %v821, 16
        %v916 = vrot.slane %v914, 1
        %v917 = vshll.u32 %v821, 16
        %v919 = vrot.slane %v917, 2
        %v920 = vor.u32 %v916, %v919
        %v922 = vshrl.u32 %v822, 16
        %v924 = vrot.slane %v922, 1
        %v925 = vshll.u32 %v822, 16
        %v927 = vrot.slane %v925, 2
        %v928 = vor.u32 %v924, %v927
        %v929 = vsel %vm827, %v920, %v928
        %v931 = vshrl.u32 %v823, 16
        %v933 = vrot.slane %v931, 1
        %v934 = vshll.u32 %v823, 16
        %v936 = vrot.slane %v934, 2
        %v937 = vor.u32 %v933, %v936
        %v939 = vshrl.u32 %v824, 16
        %v941 = vrot.slane %v939, 1
        %v942 = vshll.u32 %v824, 16
        %v944 = vrot.slane %v942, 2
        %v945 = vor.u32 %v941, %v944
        %v946 = vsel %vm827, %v937, %v945
        %v948 = vshrl.u32 %v825, 16
        %v950 = vrot.slane %v948, 1
        %v951 = vshll.u32 %v825, 16
        %v953 = vrot.slane %v951, 2
        %v954 = vor.u32 %v950, %v953
        %v956 = vshrl.u32 %v826, 16
        %v958 = vrot.slane %v956, 1
        %v959 = vshll.u32 %v826, 16
        %v961 = vrot.slane %v959, 2
        %v962 = vor.u32 %v958, %v961
        %v963 = vsel %vm827, %v954, %v962
        %964 = vrot.lane.b32.xlu0 %v844, 32
        %v965 = vpop.permute.xlu0 %964
        %966 = vrot.lane.b32.xlu0 %v861, 32
        %v967 = vpop.permute.xlu0 %966
        %968 = vrot.lane.b32.xlu0 %v878, 32
        %v969 = vpop.permute.xlu0 %968
        %970 = vrot.lane.b32.xlu0 %v895, 32
        %v971 = vpop.permute.xlu0 %970
        %972 = vrot.lane.b32.xlu0 %v912, 32
        %v973 = vpop.permute.xlu0 %972
        %974 = vrot.lane.b32.xlu0 %v929, 32
        %v975 = vpop.permute.xlu0 %974
        %976 = vrot.lane.b32.xlu0 %v946, 32
        %v977 = vpop.permute.xlu0 %976
        %978 = vrot.lane.b32.xlu0 %v963, 32
        %v979 = vpop.permute.xlu0 %978
        %vm988 = vcmask 392448
        %989 = vst.msk [vmem:[#allocation3] sm:$0xff] %vm988, %v965
        %990 = vst.msk [vmem:[#allocation3 + $0x10] sm:$0xff] %vm988, %v967
        %991 = vst.msk [vmem:[#allocation3 + $0x20] sm:$0xff] %vm988, %v969
        %992 = vst.msk [vmem:[#allocation3 + $0x30] sm:$0xff] %vm988, %v971
        %993 = vst.msk [vmem:[#allocation3 + $0x40] sm:$0xff] %vm988, %v973
        %994 = vst.msk [vmem:[#allocation3 + $0x50] sm:$0xff] %vm988, %v975
        %995 = vst.msk [vmem:[#allocation3 + $0x60] sm:$0xff] %vm988, %v977
        %996 = vst.msk [vmem:[#allocation3 + $0x70] sm:$0xff] %vm988, %v979
        %v997 = vld [vmem:[%s583] sm:$0xc0]
        %v998 = vld [vmem:[%s583 + $0x8] sm:$0x7f]
        %v999 = vld [vmem:[%s583 + $0x18] sm:$0xc0]
        %v1000 = vld [vmem:[%s583 + $0x20] sm:$0x7f]
        %v1001 = vld [vmem:[%s583 + $0x30] sm:$0xc0]
        %v1002 = vld [vmem:[%s583 + $0x38] sm:$0x7f]
        %v1003 = vld [vmem:[%s583 + $0x48] sm:$0xc0]
        %v1004 = vld [vmem:[%s583 + $0x50] sm:$0x7f]
        %v1005 = vld [vmem:[%s583 + $0x60] sm:$0xc0]
        %v1006 = vld [vmem:[%s583 + $0x68] sm:$0x7f]
        %v1007 = vld [vmem:[%s583 + $0x78] sm:$0xc0]
        %v1008 = vld [vmem:[%s583 + $0x80] sm:$0x7f]
        %v1009 = vld [vmem:[%s583 + $0x90] sm:$0xc0]
        %v1010 = vld [vmem:[%s583 + $0x98] sm:$0x7f]
        %v1011 = vld [vmem:[%s583 + $0xa8] sm:$0xc0]
        %v1012 = vld [vmem:[%s583 + $0xb0] sm:$0x7f]
        %v1014 = vshrl.u32 %v997, 16
        %v1016 = vrot.slane %v1014, 6
        %v1017 = vshll.u32 %v997, 16
        %v1019 = vrot.slane %v1017, 7
        %v1020 = vor.u32 %v1016, %v1019
        %v1022 = vshrl.u32 %v998, 16
        %v1024 = vrot.slane %v1022, 6
        %v1025 = vshll.u32 %v998, 16
        %v1027 = vrot.slane %v1025, 7
        %v1028 = vor.u32 %v1024, %v1027
        %v1029 = vsel %vm609, %v1020, %v1028
        %v1031 = vshrl.u32 %v999, 16
        %v1033 = vrot.slane %v1031, 6
        %v1034 = vshll.u32 %v999, 16
        %v1036 = vrot.slane %v1034, 7
        %v1037 = vor.u32 %v1033, %v1036
        %v1039 = vshrl.u32 %v1000, 16
        %v1041 = vrot.slane %v1039, 6
        %v1042 = vshll.u32 %v1000, 16
        %v1044 = vrot.slane %v1042, 7
        %v1045 = vor.u32 %v1041, %v1044
        %v1046 = vsel %vm609, %v1037, %v1045
        %v1048 = vshrl.u32 %v1001, 16
        %v1050 = vrot.slane %v1048, 6
        %v1051 = vshll.u32 %v1001, 16
        %v1053 = vrot.slane %v1051, 7
        %v1054 = vor.u32 %v1050, %v1053
        %v1056 = vshrl.u32 %v1002, 16
        %v1058 = vrot.slane %v1056, 6
        %v1059 = vshll.u32 %v1002, 16
        %v1061 = vrot.slane %v1059, 7
        %v1062 = vor.u32 %v1058, %v1061
        %v1063 = vsel %vm609, %v1054, %v1062
        %v1065 = vshrl.u32 %v1003, 16
        %v1067 = vrot.slane %v1065, 6
        %v1068 = vshll.u32 %v1003, 16
        %v1070 = vrot.slane %v1068, 7
        %v1071 = vor.u32 %v1067, %v1070
        %v1073 = vshrl.u32 %v1004, 16
        %v1075 = vrot.slane %v1073, 6
        %v1076 = vshll.u32 %v1004, 16
        %v1078 = vrot.slane %v1076, 7
        %v1079 = vor.u32 %v1075, %v1078
        %v1080 = vsel %vm609, %v1071, %v1079
        %v1082 = vshrl.u32 %v1005, 16
        %v1084 = vrot.slane %v1082, 6
        %v1085 = vshll.u32 %v1005, 16
        %v1087 = vrot.slane %v1085, 7
        %v1088 = vor.u32 %v1084, %v1087
        %v1090 = vshrl.u32 %v1006, 16
        %v1092 = vrot.slane %v1090, 6
        %v1093 = vshll.u32 %v1006, 16
        %v1095 = vrot.slane %v1093, 7
        %v1096 = vor.u32 %v1092, %v1095
        %v1097 = vsel %vm609, %v1088, %v1096
        %v1099 = vshrl.u32 %v1007, 16
        %v1101 = vrot.slane %v1099, 6
        %v1102 = vshll.u32 %v1007, 16
        %v1104 = vrot.slane %v1102, 7
        %v1105 = vor.u32 %v1101, %v1104
        %v1107 = vshrl.u32 %v1008, 16
        %v1109 = vrot.slane %v1107, 6
        %v1110 = vshll.u32 %v1008, 16
        %v1112 = vrot.slane %v1110, 7
        %v1113 = vor.u32 %v1109, %v1112
        %v1114 = vsel %vm609, %v1105, %v1113
        %v1116 = vshrl.u32 %v1009, 16
        %v1118 = vrot.slane %v1116, 6
        %v1119 = vshll.u32 %v1009, 16
        %v1121 = vrot.slane %v1119, 7
        %v1122 = vor.u32 %v1118, %v1121
        %v1124 = vshrl.u32 %v1010, 16
        %v1126 = vrot.slane %v1124, 6
        %v1127 = vshll.u32 %v1010, 16
        %v1129 = vrot.slane %v1127, 7
        %v1130 = vor.u32 %v1126, %v1129
        %v1131 = vsel %vm609, %v1122, %v1130
        %v1133 = vshrl.u32 %v1011, 16
        %v1135 = vrot.slane %v1133, 6
        %v1136 = vshll.u32 %v1011, 16
        %v1138 = vrot.slane %v1136, 7
        %v1139 = vor.u32 %v1135, %v1138
        %v1141 = vshrl.u32 %v1012, 16
        %v1143 = vrot.slane %v1141, 6
        %v1144 = vshll.u32 %v1012, 16
        %v1146 = vrot.slane %v1144, 7
        %v1147 = vor.u32 %v1143, %v1146
        %v1148 = vsel %vm609, %v1139, %v1147
        %1149 = vrot.lane.b32.xlu0 %v1029, 48
        %v1150 = vpop.permute.xlu0 %1149
        %1151 = vrot.lane.b32.xlu0 %v1046, 48
        %v1152 = vpop.permute.xlu0 %1151
        %1153 = vrot.lane.b32.xlu0 %v1063, 48
        %v1154 = vpop.permute.xlu0 %1153
        %1155 = vrot.lane.b32.xlu0 %v1080, 48
        %v1156 = vpop.permute.xlu0 %1155
        %1157 = vrot.lane.b32.xlu0 %v1097, 48
        %v1158 = vpop.permute.xlu0 %1157
        %1159 = vrot.lane.b32.xlu0 %v1114, 48
        %v1160 = vpop.permute.xlu0 %1159
        %1161 = vrot.lane.b32.xlu0 %v1131, 48
        %v1162 = vpop.permute.xlu0 %1161
        %1163 = vrot.lane.b32.xlu0 %v1148, 48
        %v1164 = vpop.permute.xlu0 %1163
        %vm1173 = vcmask 523648
        %1174 = vst.msk [vmem:[#allocation3] sm:$0xff] %vm1173, %v1150
        %1175 = vst.msk [vmem:[#allocation3 + $0x10] sm:$0xff] %vm1173, %v1152
        %1176 = vst.msk [vmem:[#allocation3 + $0x20] sm:$0xff] %vm1173, %v1154
        %1177 = vst.msk [vmem:[#allocation3 + $0x30] sm:$0xff] %vm1173, %v1156
        %1178 = vst.msk [vmem:[#allocation3 + $0x40] sm:$0xff] %vm1173, %v1158
        %1179 = vst.msk [vmem:[#allocation3 + $0x50] sm:$0xff] %vm1173, %v1160
        %1180 = vst.msk [vmem:[#allocation3 + $0x60] sm:$0xff] %vm1173, %v1162
        %1181 = vst.msk [vmem:[#allocation3 + $0x70] sm:$0xff] %vm1173, %v1164
        %v1182 = vld [vmem:[%s583 + $0x8] sm:$0xff]
        %v1183 = vld [vmem:[%s583 + $0x20] sm:$0xff]
        %v1184 = vld [vmem:[%s583 + $0x38] sm:$0xff]
        %v1185 = vld [vmem:[%s583 + $0x50] sm:$0xff]
        %v1186 = vld [vmem:[%s583 + $0x68] sm:$0xff]
        %v1187 = vld [vmem:[%s583 + $0x80] sm:$0xff]
        %v1188 = vld [vmem:[%s583 + $0x98] sm:$0xff]
        %v1189 = vld [vmem:[%s583 + $0xb0] sm:$0xff]
        %1198 = vrot.lane.b32.xlu0 %v1182, 64
        %v1199 = vpop.permute.xlu0 %1198
        %1200 = vrot.lane.b32.xlu0 %v1183, 64
        %v1201 = vpop.permute.xlu0 %1200
        %1202 = vrot.lane.b32.xlu0 %v1184, 64
        %v1203 = vpop.permute.xlu0 %1202
        %1204 = vrot.lane.b32.xlu0 %v1185, 64
        %v1205 = vpop.permute.xlu0 %1204
        %1206 = vrot.lane.b32.xlu0 %v1186, 64
        %v1207 = vpop.permute.xlu0 %1206
        %1208 = vrot.lane.b32.xlu0 %v1187, 64
        %v1209 = vpop.permute.xlu0 %1208
        %1210 = vrot.lane.b32.xlu0 %v1188, 64
        %v1211 = vpop.permute.xlu0 %1210
        %1212 = vrot.lane.b32.xlu0 %v1189, 64
        %v1213 = vpop.permute.xlu0 %1212
        %vm1222 = vcmask 654848
        %1223 = vst.msk [vmem:[#allocation3] sm:$0xff] %vm1222, %v1199
        %1224 = vst.msk [vmem:[#allocation3 + $0x10] sm:$0xff] %vm1222, %v1201
        %1225 = vst.msk [vmem:[#allocation3 + $0x20] sm:$0xff] %vm1222, %v1203
        %1226 = vst.msk [vmem:[#allocation3 + $0x30] sm:$0xff] %vm1222, %v1205
        %1227 = vst.msk [vmem:[#allocation3 + $0x40] sm:$0xff] %vm1222, %v1207
        %1228 = vst.msk [vmem:[#allocation3 + $0x50] sm:$0xff] %vm1222, %v1209
        %1229 = vst.msk [vmem:[#allocation3 + $0x60] sm:$0xff] %vm1222, %v1211
        %1230 = vst.msk [vmem:[#allocation3 + $0x70] sm:$0xff] %vm1222, %v1213
        %v1231 = vld [vmem:[%s583 + $0x8] sm:$0xfe]
        %v1232 = vld [vmem:[%s583 + $0x10] sm:$0x3]
        %v1233 = vld [vmem:[%s583 + $0x20] sm:$0xfe]
        %v1234 = vld [vmem:[%s583 + $0x28] sm:$0x3]
        %v1235 = vld [vmem:[%s583 + $0x38] sm:$0xfe]
        %v1236 = vld [vmem:[%s583 + $0x40] sm:$0x3]
        %v1237 = vld [vmem:[%s583 + $0x50] sm:$0xfe]
        %v1238 = vld [vmem:[%s583 + $0x58] sm:$0x3]
        %v1239 = vld [vmem:[%s583 + $0x68] sm:$0xfe]
        %v1240 = vld [vmem:[%s583 + $0x70] sm:$0x3]
        %v1241 = vld [vmem:[%s583 + $0x80] sm:$0xfe]
        %v1242 = vld [vmem:[%s583 + $0x88] sm:$0x3]
        %v1243 = vld [vmem:[%s583 + $0x98] sm:$0xfe]
        %v1244 = vld [vmem:[%s583 + $0xa0] sm:$0x3]
        %v1245 = vld [vmem:[%s583 + $0xb0] sm:$0xfe]
        %v1246 = vld [vmem:[%s583 + $0xb8] sm:$0x3]
        %v1248 = vshrl.u32 %v1231, 16
        %v1250 = vrot.slane %v1248, 1
        %v1251 = vshll.u32 %v1231, 16
        %v1253 = vrot.slane %v1251, 2
        %v1254 = vor.u32 %v1250, %v1253
        %v1256 = vshrl.u32 %v1232, 16
        %v1258 = vrot.slane %v1256, 1
        %v1259 = vshll.u32 %v1232, 16
        %v1261 = vrot.slane %v1259, 2
        %v1262 = vor.u32 %v1258, %v1261
        %v1263 = vsel %vm827, %v1254, %v1262
        %v1265 = vshrl.u32 %v1233, 16
        %v1267 = vrot.slane %v1265, 1
        %v1268 = vshll.u32 %v1233, 16
        %v1270 = vrot.slane %v1268, 2
        %v1271 = vor.u32 %v1267, %v1270
        %v1273 = vshrl.u32 %v1234, 16
        %v1275 = vrot.slane %v1273, 1
        %v1276 = vshll.u32 %v1234, 16
        %v1278 = vrot.slane %v1276, 2
        %v1279 = vor.u32 %v1275, %v1278
        %v1280 = vsel %vm827, %v1271, %v1279
        %v1282 = vshrl.u32 %v1235, 16
        %v1284 = vrot.slane %v1282, 1
        %v1285 = vshll.u32 %v1235, 16
        %v1287 = vrot.slane %v1285, 2
        %v1288 = vor.u32 %v1284, %v1287
        %v1290 = vshrl.u32 %v1236, 16
        %v1292 = vrot.slane %v1290, 1
        %v1293 = vshll.u32 %v1236, 16
        %v1295 = vrot.slane %v1293, 2
        %v1296 = vor.u32 %v1292, %v1295
        %v1297 = vsel %vm827, %v1288, %v1296
        %v1299 = vshrl.u32 %v1237, 16
        %v1301 = vrot.slane %v1299, 1
        %v1302 = vshll.u32 %v1237, 16
        %v1304 = vrot.slane %v1302, 2
        %v1305 = vor.u32 %v1301, %v1304
        %v1307 = vshrl.u32 %v1238, 16
        %v1309 = vrot.slane %v1307, 1
        %v1310 = vshll.u32 %v1238, 16
        %v1312 = vrot.slane %v1310, 2
        %v1313 = vor.u32 %v1309, %v1312
        %v1314 = vsel %vm827, %v1305, %v1313
        %v1316 = vshrl.u32 %v1239, 16
        %v1318 = vrot.slane %v1316, 1
        %v1319 = vshll.u32 %v1239, 16
        %v1321 = vrot.slane %v1319, 2
        %v1322 = vor.u32 %v1318, %v1321
        %v1324 = vshrl.u32 %v1240, 16
        %v1326 = vrot.slane %v1324, 1
        %v1327 = vshll.u32 %v1240, 16
        %v1329 = vrot.slane %v1327, 2
        %v1330 = vor.u32 %v1326, %v1329
        %v1331 = vsel %vm827, %v1322, %v1330
        %v1333 = vshrl.u32 %v1241, 16
        %v1335 = vrot.slane %v1333, 1
        %v1336 = vshll.u32 %v1241, 16
        %v1338 = vrot.slane %v1336, 2
        %v1339 = vor.u32 %v1335, %v1338
        %v1341 = vshrl.u32 %v1242, 16
        %v1343 = vrot.slane %v1341, 1
        %v1344 = vshll.u32 %v1242, 16
        %v1346 = vrot.slane %v1344, 2
        %v1347 = vor.u32 %v1343, %v1346
        %v1348 = vsel %vm827, %v1339, %v1347
        %v1350 = vshrl.u32 %v1243, 16
        %v1352 = vrot.slane %v1350, 1
        %v1353 = vshll.u32 %v1243, 16
        %v1355 = vrot.slane %v1353, 2
        %v1356 = vor.u32 %v1352, %v1355
        %v1358 = vshrl.u32 %v1244, 16
        %v1360 = vrot.slane %v1358, 1
        %v1361 = vshll.u32 %v1244, 16
        %v1363 = vrot.slane %v1361, 2
        %v1364 = vor.u32 %v1360, %v1363
        %v1365 = vsel %vm827, %v1356, %v1364
        %v1367 = vshrl.u32 %v1245, 16
        %v1369 = vrot.slane %v1367, 1
        %v1370 = vshll.u32 %v1245, 16
        %v1372 = vrot.slane %v1370, 2
        %v1373 = vor.u32 %v1369, %v1372
        %v1375 = vshrl.u32 %v1246, 16
        %v1377 = vrot.slane %v1375, 1
        %v1378 = vshll.u32 %v1246, 16
        %v1380 = vrot.slane %v1378, 2
        %v1381 = vor.u32 %v1377, %v1380
        %v1382 = vsel %vm827, %v1373, %v1381
        %1383 = vrot.lane.b32.xlu0 %v1263, 80
        %v1384 = vpop.permute.xlu0 %1383
        %1385 = vrot.lane.b32.xlu0 %v1280, 80
        %v1386 = vpop.permute.xlu0 %1385
        %1387 = vrot.lane.b32.xlu0 %v1297, 80
        %v1388 = vpop.permute.xlu0 %1387
        %1389 = vrot.lane.b32.xlu0 %v1314, 80
        %v1390 = vpop.permute.xlu0 %1389
        %1391 = vrot.lane.b32.xlu0 %v1331, 80
        %v1392 = vpop.permute.xlu0 %1391
        %1393 = vrot.lane.b32.xlu0 %v1348, 80
        %v1394 = vpop.permute.xlu0 %1393
        %1395 = vrot.lane.b32.xlu0 %v1365, 80
        %v1396 = vpop.permute.xlu0 %1395
        %1397 = vrot.lane.b32.xlu0 %v1382, 80
        %v1398 = vpop.permute.xlu0 %1397
        %vm1407 = vcmask 786048
        %1408 = vst.msk [vmem:[#allocation3] sm:$0xff] %vm1407, %v1384
        %1409 = vst.msk [vmem:[#allocation3 + $0x10] sm:$0xff] %vm1407, %v1386
        %1410 = vst.msk [vmem:[#allocation3 + $0x20] sm:$0xff] %vm1407, %v1388
        %1411 = vst.msk [vmem:[#allocation3 + $0x30] sm:$0xff] %vm1407, %v1390
        %1412 = vst.msk [vmem:[#allocation3 + $0x40] sm:$0xff] %vm1407, %v1392
        %1413 = vst.msk [vmem:[#allocation3 + $0x50] sm:$0xff] %vm1407, %v1394
        %1414 = vst.msk [vmem:[#allocation3 + $0x60] sm:$0xff] %vm1407, %v1396
        %1415 = vst.msk [vmem:[#allocation3 + $0x70] sm:$0xff] %vm1407, %v1398
        %s1416 = scalar_lea.vmem [#allocation2], 360
        %v1417 = vld [vmem:[%s1416] sm:$0xc0]
        %v1418 = vld [vmem:[%s1416 + $0x8] sm:$0x7f]
        %v1419 = vld [vmem:[%s1416 + $0x18] sm:$0xc0]
        %v1420 = vld [vmem:[%s1416 + $0x20] sm:$0x7f]
        %v1421 = vld [vmem:[%s1416 + $0x30] sm:$0xc0]
        %v1422 = vld [vmem:[%s1416 + $0x38] sm:$0x7f]
        %v1423 = vld [vmem:[%s1416 + $0x48] sm:$0xc0]
        %v1424 = vld [vmem:[%s1416 + $0x50] sm:$0x7f]
        %v1425 = vld [vmem:[%s1416 + $0x60] sm:$0xc0]
        %v1426 = vld [vmem:[%s1416 + $0x68] sm:$0x7f]
        %v1427 = vld [vmem:[%s1416 + $0x78] sm:$0xc0]
        %v1428 = vld [vmem:[%s1416 + $0x80] sm:$0x7f]
        %v1429 = vld [vmem:[%s1416 + $0x90] sm:$0xc0]
        %v1430 = vld [vmem:[%s1416 + $0x98] sm:$0x7f]
        %v1431 = vld [vmem:[%s1416 + $0xa8] sm:$0xc0]
        %v1432 = vld [vmem:[%s1416 + $0xb0] sm:$0x7f]
        %v1434 = vshrl.u32 %v1417, 16
        %v1436 = vrot.slane %v1434, 6
        %v1437 = vshll.u32 %v1417, 16
        %v1439 = vrot.slane %v1437, 7
        %v1440 = vor.u32 %v1436, %v1439
        %v1442 = vshrl.u32 %v1418, 16
        %v1444 = vrot.slane %v1442, 6
        %v1445 = vshll.u32 %v1418, 16
        %v1447 = vrot.slane %v1445, 7
        %v1448 = vor.u32 %v1444, %v1447
        %v1449 = vsel %vm609, %v1440, %v1448
        %v1451 = vshrl.u32 %v1419, 16
        %v1453 = vrot.slane %v1451, 6
        %v1454 = vshll.u32 %v1419, 16
        %v1456 = vrot.slane %v1454, 7
        %v1457 = vor.u32 %v1453, %v1456
        %v1459 = vshrl.u32 %v1420, 16
        %v1461 = vrot.slane %v1459, 6
        %v1462 = vshll.u32 %v1420, 16
        %v1464 = vrot.slane %v1462, 7
        %v1465 = vor.u32 %v1461, %v1464
        %v1466 = vsel %vm609, %v1457, %v1465
        %v1468 = vshrl.u32 %v1421, 16
        %v1470 = vrot.slane %v1468, 6
        %v1471 = vshll.u32 %v1421, 16
        %v1473 = vrot.slane %v1471, 7
        %v1474 = vor.u32 %v1470, %v1473
        %v1476 = vshrl.u32 %v1422, 16
        %v1478 = vrot.slane %v1476, 6
        %v1479 = vshll.u32 %v1422, 16
        %v1481 = vrot.slane %v1479, 7
        %v1482 = vor.u32 %v1478, %v1481
        %v1483 = vsel %vm609, %v1474, %v1482
        %v1485 = vshrl.u32 %v1423, 16
        %v1487 = vrot.slane %v1485, 6
        %v1488 = vshll.u32 %v1423, 16
        %v1490 = vrot.slane %v1488, 7
        %v1491 = vor.u32 %v1487, %v1490
        %v1493 = vshrl.u32 %v1424, 16
        %v1495 = vrot.slane %v1493, 6
        %v1496 = vshll.u32 %v1424, 16
        %v1498 = vrot.slane %v1496, 7
        %v1499 = vor.u32 %v1495, %v1498
        %v1500 = vsel %vm609, %v1491, %v1499
        %v1502 = vshrl.u32 %v1425, 16
        %v1504 = vrot.slane %v1502, 6
        %v1505 = vshll.u32 %v1425, 16
        %v1507 = vrot.slane %v1505, 7
        %v1508 = vor.u32 %v1504, %v1507
        %v1510 = vshrl.u32 %v1426, 16
        %v1512 = vrot.slane %v1510, 6
        %v1513 = vshll.u32 %v1426, 16
        %v1515 = vrot.slane %v1513, 7
        %v1516 = vor.u32 %v1512, %v1515
        %v1517 = vsel %vm609, %v1508, %v1516
        %v1519 = vshrl.u32 %v1427, 16
        %v1521 = vrot.slane %v1519, 6
        %v1522 = vshll.u32 %v1427, 16
        %v1524 = vrot.slane %v1522, 7
        %v1525 = vor.u32 %v1521, %v1524
        %v1527 = vshrl.u32 %v1428, 16
        %v1529 = vrot.slane %v1527, 6
        %v1530 = vshll.u32 %v1428, 16
        %v1532 = vrot.slane %v1530, 7
        %v1533 = vor.u32 %v1529, %v1532
        %v1534 = vsel %vm609, %v1525, %v1533
        %v1536 = vshrl.u32 %v1429, 16
        %v1538 = vrot.slane %v1536, 6
        %v1539 = vshll.u32 %v1429, 16
        %v1541 = vrot.slane %v1539, 7
        %v1542 = vor.u32 %v1538, %v1541
        %v1544 = vshrl.u32 %v1430, 16
        %v1546 = vrot.slane %v1544, 6
        %v1547 = vshll.u32 %v1430, 16
        %v1549 = vrot.slane %v1547, 7
        %v1550 = vor.u32 %v1546, %v1549
        %v1551 = vsel %vm609, %v1542, %v1550
        %v1553 = vshrl.u32 %v1431, 16
        %v1555 = vrot.slane %v1553, 6
        %v1556 = vshll.u32 %v1431, 16
        %v1558 = vrot.slane %v1556, 7
        %v1559 = vor.u32 %v1555, %v1558
        %v1561 = vshrl.u32 %v1432, 16
        %v1563 = vrot.slane %v1561, 6
        %v1564 = vshll.u32 %v1432, 16
        %v1566 = vrot.slane %v1564, 7
        %v1567 = vor.u32 %v1563, %v1566
        %v1568 = vsel %vm609, %v1559, %v1567
        %1569 = vrot.lane.b32.xlu0 %v1449, 96
        %v1570 = vpop.permute.xlu0 %1569
        %1571 = vrot.lane.b32.xlu0 %v1466, 96
        %v1572 = vpop.permute.xlu0 %1571
        %1573 = vrot.lane.b32.xlu0 %v1483, 96
        %v1574 = vpop.permute.xlu0 %1573
        %1575 = vrot.lane.b32.xlu0 %v1500, 96
        %v1576 = vpop.permute.xlu0 %1575
        %1577 = vrot.lane.b32.xlu0 %v1517, 96
        %v1578 = vpop.permute.xlu0 %1577
        %1579 = vrot.lane.b32.xlu0 %v1534, 96
        %v1580 = vpop.permute.xlu0 %1579
        %1581 = vrot.lane.b32.xlu0 %v1551, 96
        %v1582 = vpop.permute.xlu0 %1581
        %1583 = vrot.lane.b32.xlu0 %v1568, 96
        %v1584 = vpop.permute.xlu0 %1583
        %vm1593 = vcmask 917248
        %1594 = vst.msk [vmem:[#allocation3] sm:$0xff] %vm1593, %v1570
        %1595 = vst.msk [vmem:[#allocation3 + $0x10] sm:$0xff] %vm1593, %v1572
        %1596 = vst.msk [vmem:[#allocation3 + $0x20] sm:$0xff] %vm1593, %v1574
        %1597 = vst.msk [vmem:[#allocation3 + $0x30] sm:$0xff] %vm1593, %v1576
        %1598 = vst.msk [vmem:[#allocation3 + $0x40] sm:$0xff] %vm1593, %v1578
        %1599 = vst.msk [vmem:[#allocation3 + $0x50] sm:$0xff] %vm1593, %v1580
        %1600 = vst.msk [vmem:[#allocation3 + $0x60] sm:$0xff] %vm1593, %v1582
        %1601 = vst.msk [vmem:[#allocation3 + $0x70] sm:$0xff] %vm1593, %v1584
        %v1602 = vld [vmem:[%s1416 + $0x8] sm:$0xff]
        %v1603 = vld [vmem:[%s1416 + $0x20] sm:$0xff]
        %v1604 = vld [vmem:[%s1416 + $0x38] sm:$0xff]
        %v1605 = vld [vmem:[%s1416 + $0x50] sm:$0xff]
        %v1606 = vld [vmem:[%s1416 + $0x68] sm:$0xff]
        %v1607 = vld [vmem:[%s1416 + $0x80] sm:$0xff]
        %v1608 = vld [vmem:[%s1416 + $0x98] sm:$0xff]
        %v1609 = vld [vmem:[%s1416 + $0xb0] sm:$0xff]
        %1618 = vrot.lane.b32.xlu0 %v1602, 112
        %v1619 = vpop.permute.xlu0 %1618
        %1620 = vrot.lane.b32.xlu0 %v1603, 112
        %v1621 = vpop.permute.xlu0 %1620
        %1622 = vrot.lane.b32.xlu0 %v1604, 112
        %v1623 = vpop.permute.xlu0 %1622
        %1624 = vrot.lane.b32.xlu0 %v1605, 112
        %v1625 = vpop.permute.xlu0 %1624
        %1626 = vrot.lane.b32.xlu0 %v1606, 112
        %v1627 = vpop.permute.xlu0 %1626
        %1628 = vrot.lane.b32.xlu0 %v1607, 112
        %v1629 = vpop.permute.xlu0 %1628
        %1630 = vrot.lane.b32.xlu0 %v1608, 112
        %v1631 = vpop.permute.xlu0 %1630
        %1632 = vrot.lane.b32.xlu0 %v1609, 112
        %v1633 = vpop.permute.xlu0 %1632
        %vm1642 = vcmask 1048448
        %1643 = vst.msk [vmem:[#allocation3] sm:$0xff] %vm1642, %v1619
        %1644 = vst.msk [vmem:[#allocation3 + $0x10] sm:$0xff] %vm1642, %v1621
        %1645 = vst.msk [vmem:[#allocation3 + $0x20] sm:$0xff] %vm1642, %v1623
        %1646 = vst.msk [vmem:[#allocation3 + $0x30] sm:$0xff] %vm1642, %v1625
        %1647 = vst.msk [vmem:[#allocation3 + $0x40] sm:$0xff] %vm1642, %v1627
        %1648 = vst.msk [vmem:[#allocation3 + $0x50] sm:$0xff] %vm1642, %v1629
        %1649 = vst.msk [vmem:[#allocation3 + $0x60] sm:$0xff] %vm1642, %v1631
        %1650 = vst.msk [vmem:[#allocation3 + $0x70] sm:$0xff] %vm1642, %v1633
        %v1651 = vld [vmem:[%s1416 + $0x8] sm:$0xfe]
        %v1652 = vld [vmem:[%s1416 + $0x10] sm:$0x3]
        %v1653 = vld [vmem:[%s1416 + $0x20] sm:$0xfe]
        %v1654 = vld [vmem:[%s1416 + $0x28] sm:$0x3]
        %v1655 = vld [vmem:[%s1416 + $0x38] sm:$0xfe]
        %v1656 = vld [vmem:[%s1416 + $0x40] sm:$0x3]
        %v1657 = vld [vmem:[%s1416 + $0x50] sm:$0xfe]
        %v1658 = vld [vmem:[%s1416 + $0x58] sm:$0x3]
        %v1659 = vld [vmem:[%s1416 + $0x68] sm:$0xfe]
        %v1660 = vld [vmem:[%s1416 + $0x70] sm:$0x3]
        %v1661 = vld [vmem:[%s1416 + $0x80] sm:$0xfe]
        %v1662 = vld [vmem:[%s1416 + $0x88] sm:$0x3]
        %v1663 = vld [vmem:[%s1416 + $0x98] sm:$0xfe]
        %v1664 = vld [vmem:[%s1416 + $0xa0] sm:$0x3]
        %v1665 = vld [vmem:[%s1416 + $0xb0] sm:$0xfe]
        %v1666 = vld [vmem:[%s1416 + $0xb8] sm:$0x3]
        %v1668 = vshrl.u32 %v1651, 16
        %v1670 = vrot.slane %v1668, 1
        %v1671 = vshll.u32 %v1651, 16
        %v1673 = vrot.slane %v1671, 2
        %v1674 = vor.u32 %v1670, %v1673
        %v1676 = vshrl.u32 %v1652, 16
        %v1678 = vrot.slane %v1676, 1
        %v1679 = vshll.u32 %v1652, 16
        %v1681 = vrot.slane %v1679, 2
        %v1682 = vor.u32 %v1678, %v1681
        %v1683 = vsel %vm827, %v1674, %v1682
        %v1685 = vshrl.u32 %v1653, 16
        %v1687 = vrot.slane %v1685, 1
        %v1688 = vshll.u32 %v1653, 16
        %v1690 = vrot.slane %v1688, 2
        %v1691 = vor.u32 %v1687, %v1690
        %v1693 = vshrl.u32 %v1654, 16
        %v1695 = vrot.slane %v1693, 1
        %v1696 = vshll.u32 %v1654, 16
        %v1698 = vrot.slane %v1696, 2
        %v1699 = vor.u32 %v1695, %v1698
        %v1700 = vsel %vm827, %v1691, %v1699
        %v1702 = vshrl.u32 %v1655, 16
        %v1704 = vrot.slane %v1702, 1
        %v1705 = vshll.u32 %v1655, 16
        %v1707 = vrot.slane %v1705, 2
        %v1708 = vor.u32 %v1704, %v1707
        %v1710 = vshrl.u32 %v1656, 16
        %v1712 = vrot.slane %v1710, 1
        %v1713 = vshll.u32 %v1656, 16
        %v1715 = vrot.slane %v1713, 2
        %v1716 = vor.u32 %v1712, %v1715
        %v1717 = vsel %vm827, %v1708, %v1716
        %v1719 = vshrl.u32 %v1657, 16
        %v1721 = vrot.slane %v1719, 1
        %v1722 = vshll.u32 %v1657, 16
        %v1724 = vrot.slane %v1722, 2
        %v1725 = vor.u32 %v1721, %v1724
        %v1727 = vshrl.u32 %v1658, 16
        %v1729 = vrot.slane %v1727, 1
        %v1730 = vshll.u32 %v1658, 16
        %v1732 = vrot.slane %v1730, 2
        %v1733 = vor.u32 %v1729, %v1732
        %v1734 = vsel %vm827, %v1725, %v1733
        %v1736 = vshrl.u32 %v1659, 16
        %v1738 = vrot.slane %v1736, 1
        %v1739 = vshll.u32 %v1659, 16
        %v1741 = vrot.slane %v1739, 2
        %v1742 = vor.u32 %v1738, %v1741
        %v1744 = vshrl.u32 %v1660, 16
        %v1746 = vrot.slane %v1744, 1
        %v1747 = vshll.u32 %v1660, 16
        %v1749 = vrot.slane %v1747, 2
        %v1750 = vor.u32 %v1746, %v1749
        %v1751 = vsel %vm827, %v1742, %v1750
        %v1753 = vshrl.u32 %v1661, 16
        %v1755 = vrot.slane %v1753, 1
        %v1756 = vshll.u32 %v1661, 16
        %v1758 = vrot.slane %v1756, 2
        %v1759 = vor.u32 %v1755, %v1758
        %v1761 = vshrl.u32 %v1662, 16
        %v1763 = vrot.slane %v1761, 1
        %v1764 = vshll.u32 %v1662, 16
        %v1766 = vrot.slane %v1764, 2
        %v1767 = vor.u32 %v1763, %v1766
        %v1768 = vsel %vm827, %v1759, %v1767
        %v1770 = vshrl.u32 %v1663, 16
        %v1772 = vrot.slane %v1770, 1
        %v1773 = vshll.u32 %v1663, 16
        %v1775 = vrot.slane %v1773, 2
        %v1776 = vor.u32 %v1772, %v1775
        %v1778 = vshrl.u32 %v1664, 16
        %v1780 = vrot.slane %v1778, 1
        %v1781 = vshll.u32 %v1664, 16
        %v1783 = vrot.slane %v1781, 2
        %v1784 = vor.u32 %v1780, %v1783
        %v1785 = vsel %vm827, %v1776, %v1784
        %v1787 = vshrl.u32 %v1665, 16
        %v1789 = vrot.slane %v1787, 1
        %v1790 = vshll.u32 %v1665, 16
        %v1792 = vrot.slane %v1790, 2
        %v1793 = vor.u32 %v1789, %v1792
        %v1795 = vshrl.u32 %v1666, 16
        %v1797 = vrot.slane %v1795, 1
        %v1798 = vshll.u32 %v1666, 16
        %v1800 = vrot.slane %v1798, 2
        %v1801 = vor.u32 %v1797, %v1800
        %v1802 = vsel %vm827, %v1793, %v1801
        %1811 = vst.msk [vmem:[#allocation3 + $0x8] sm:$0xff] %vm422, %v1683
        %1812 = vst.msk [vmem:[#allocation3 + $0x18] sm:$0xff] %vm422, %v1700
        %1813 = vst.msk [vmem:[#allocation3 + $0x28] sm:$0xff] %vm422, %v1717
        %1814 = vst.msk [vmem:[#allocation3 + $0x38] sm:$0xff] %vm422, %v1734
        %1815 = vst.msk [vmem:[#allocation3 + $0x48] sm:$0xff] %vm422, %v1751
        %1816 = vst.msk [vmem:[#allocation3 + $0x58] sm:$0xff] %vm422, %v1768
        %1817 = vst.msk [vmem:[#allocation3 + $0x68] sm:$0xff] %vm422, %v1785
        %1818 = vst.msk [vmem:[#allocation3 + $0x78] sm:$0xff] %vm422, %v1802
        %v1819 = vld [vmem:[#allocation3] sm:$0xff]
        %v1820 = vld [vmem:[#allocation3 + $0x8] sm:$0xff]
        %v1821 = vld [vmem:[#allocation3 + $0x10] sm:$0xff]
        %v1822 = vld [vmem:[#allocation3 + $0x18] sm:$0xff]
        %v1823 = vld [vmem:[#allocation3 + $0x20] sm:$0xff]
        %v1824 = vld [vmem:[#allocation3 + $0x28] sm:$0xff]
        %v1825 = vld [vmem:[#allocation3 + $0x30] sm:$0xff]
        %v1826 = vld [vmem:[#allocation3 + $0x38] sm:$0xff]
        %v1827 = vld [vmem:[#allocation3 + $0x40] sm:$0xff]
        %v1828 = vld [vmem:[#allocation3 + $0x48] sm:$0xff]
        %v1829 = vld [vmem:[#allocation3 + $0x50] sm:$0xff]
        %v1830 = vld [vmem:[#allocation3 + $0x58] sm:$0xff]
        %v1831 = vld [vmem:[#allocation3 + $0x60] sm:$0xff]
        %v1832 = vld [vmem:[#allocation3 + $0x68] sm:$0xff]
        %v1833 = vld [vmem:[#allocation3 + $0x70] sm:$0xff]
        %v1834 = vld [vmem:[#allocation3 + $0x78] sm:$0xff]
        %v1835 = vld [vmem:[%s388] sm:$0xf]
        %v1836 = vld [vmem:[%s388 + $0x4] sm:$0xf]
        %v1837 = vld [vmem:[%s388 + $0x8] sm:$0xf]
        %v1838 = vld [vmem:[%s388 + $0xc] sm:$0xf]
        %v1839 = vld [vmem:[%s388 + $0x10] sm:$0xf]
        %v1840 = vld [vmem:[%s388 + $0x14] sm:$0xf]
        %v1841 = vld [vmem:[%s388 + $0x18] sm:$0xf]
        %v1842 = vld [vmem:[%s388 + $0x1c] sm:$0xf]
        %v1843 = vld [vmem:[%s388 + $0x20] sm:$0xf]
        %v1844 = vld [vmem:[%s388 + $0x24] sm:$0xf]
        %v1845 = vld [vmem:[%s388 + $0x28] sm:$0xf]
        %v1846 = vld [vmem:[%s388 + $0x2c] sm:$0xf]
        %v1847 = vld [vmem:[%s388 + $0x30] sm:$0xf]
        %v1848 = vld [vmem:[%s388 + $0x34] sm:$0xf]
        %v1849 = vld [vmem:[%s388 + $0x38] sm:$0xf]
        %v1850 = vld [vmem:[%s388 + $0x3c] sm:$0xf]
        %v1851 = vld [vmem:[%s388 + $0x40] sm:$0xf]
        %v1852 = vld [vmem:[%s388 + $0x44] sm:$0xf]
        %v1853 = vld [vmem:[%s391] sm:$0x1]
        %v1855 = vlaneseq
        %v1856 = vshrl.u32 %v1855, 7
        %v1857 = vsub.s32 0, %v1856
        %v1858 = vrot.slane %v1853, %v1857
        %v1878 = vunpack.c.l.b16 %v1835
        %v1879 = vunpack.c.l.b16 %v1836
        %v1880 = vunpack.c.l.b16 %v1837
        %v1881 = vunpack.c.l.b16 %v1838
        %v1882 = vunpack.c.l.b16 %v1839
        %v1883 = vunpack.c.l.b16 %v1840
        %v1884 = vunpack.c.l.b16 %v1841
        %v1885 = vunpack.c.l.b16 %v1842
        %v1886 = vunpack.c.l.b16 %v1843
        %v1887 = vunpack.c.l.b16 %v1844
        %v1888 = vunpack.c.l.b16 %v1845
        %v1889 = vunpack.c.l.b16 %v1846
        %v1890 = vunpack.c.l.b16 %v1847
        %v1891 = vunpack.c.l.b16 %v1848
        %v1892 = vunpack.c.l.b16 %v1849
        %v1893 = vunpack.c.l.b16 %v1850
        %v1894 = vunpack.c.l.b16 %v1851
        %v1895 = vunpack.c.l.b16 %v1852
        %v1896 = vpack.c.b16 %v1879, %v1878
        %v1897 = vpack.c.b16 %v1881, %v1880
        %v1898 = vpack.c.b16 %v1883, %v1882
        %v1899 = vpack.c.b16 %v1885, %v1884
        %v1900 = vpack.c.b16 %v1887, %v1886
        %v1901 = vpack.c.b16 %v1889, %v1888
        %v1902 = vpack.c.b16 %v1891, %v1890
        %v1903 = vpack.c.b16 %v1893, %v1892
        %v1904 = vpack.c.b16 %v1895, %v1894
        %v1915 = vsel %vm422, %v1820, 0
        %v1918 = vsel %vm422, %v1822, 0
        %v1921 = vsel %vm422, %v1824, 0
        %v1924 = vsel %vm422, %v1826, 0
        %v1927 = vsel %vm422, %v1828, 0
        %v1930 = vsel %vm422, %v1830, 0
        %v1933 = vsel %vm422, %v1832, 0
        %v1936 = vsel %vm422, %v1834, 0
        %1938 = vmatprep.subr.bf16.mxu0 0
        %1939 = vmatpush1.bf16.msra.mxu0 %v1896
        %1940 = vmatprep.subr.bf16.mxu0 0
        %1941 = vmatpush1.bf16.msra.mxu0 %v1897
        %1942 = vmatprep.subr.bf16.mxu0 0
        %1943 = vmatpush1.bf16.msra.mxu0 %v1898
        %1944 = vmatprep.subr.bf16.mxu0 0
        %1945 = vmatpush1.bf16.msra.mxu0 %v1899
        %1946 = vmatprep.subr.bf16.mxu0 0
        %1947 = vmatpush1.bf16.msra.mxu0 %v1900
        %1948 = vmatprep.subr.bf16.mxu0 0
        %1949 = vmatpush1.bf16.msra.mxu0 %v1901
        %1950 = vmatprep.subr.bf16.mxu0 0
        %1951 = vmatpush1.bf16.msra.mxu0 %v1902
        %1952 = vmatprep.subr.bf16.mxu0 0
        %1953 = vmatpush1.bf16.msra.mxu0 %v1903
        %1954 = vmatprep.subr.bf16.mxu0 0
        %1955 = vmatpush1.bf16.msra.mxu0 %v1904
        %1956 = vmatprep.subr.bf16.mxu0 0
        %1957 = vmatpush1.bf16.msra.mxu0 0
        %1958 = vmatprep.subr.bf16.mxu0 0
        %1959 = vmatpush1.bf16.msra.mxu0 0
        %1960 = vmatprep.subr.bf16.mxu0 0
        %1961 = vmatpush1.bf16.msra.mxu0 0
        %1962 = vmatprep.subr.bf16.mxu0 0
        %1963 = vmatpush1.bf16.msra.mxu0 0
        %1964 = vmatprep.subr.bf16.mxu0 0
        %1965 = vmatpush1.bf16.msra.mxu0 0
        %1966 = vmatprep.subr.bf16.mxu0 0
        %1967 = vmatpush1.bf16.msra.mxu0 0
        %1968 = vmatprep.subr.bf16.mxu0 0
        %1969 = vmatpush1.bf16.msra.mxu0 0
        %1970 = vmatprep.mubr.bf16.mxu0 %v1915
        %1971 = vmatmul.mubr.bf16.gmra.mrb[0].mxu0 %v1819
        %v1972 = vpop.f32.mrb[0].mxu0
        %v1973 = vadd.f32 %v1858, %v1972
        %v1974 = vpop.f32.mrb[0].mxu0
        %v1975 = vpop.f32.mrb[0].mxu0
        %v1976 = vadd.f32 %v1858, %v1975
        %v1977 = vpop.f32.mrb[0].mxu0
        %1978 = vmatprep.mubr.bf16.mxu0 %v1918
        %1979 = vmatmul.mubr.bf16.gmra.mrb[0].mxu0 %v1821
        %v1980 = vpop.f32.mrb[0].mxu0
        %v1981 = vadd.f32 %v1858, %v1980
        %v1982 = vpop.f32.mrb[0].mxu0
        %v1983 = vpop.f32.mrb[0].mxu0
        %v1984 = vadd.f32 %v1858, %v1983
        %v1985 = vpop.f32.mrb[0].mxu0
        %1986 = vmatprep.mubr.bf16.mxu0 %v1921
        %1987 = vmatmul.mubr.bf16.gmra.mrb[0].mxu0 %v1823
        %v1988 = vpop.f32.mrb[0].mxu0
        %v1989 = vadd.f32 %v1858, %v1988
        %v1990 = vpop.f32.mrb[0].mxu0
        %v1991 = vpop.f32.mrb[0].mxu0
        %v1992 = vadd.f32 %v1858, %v1991
        %v1993 = vpop.f32.mrb[0].mxu0
        %1994 = vmatprep.mubr.bf16.mxu0 %v1924
        %1995 = vmatmul.mubr.bf16.gmra.mrb[0].mxu0 %v1825
        %v1996 = vpop.f32.mrb[0].mxu0
        %v1997 = vadd.f32 %v1858, %v1996
        %v1998 = vpop.f32.mrb[0].mxu0
        %v1999 = vpop.f32.mrb[0].mxu0
        %v2000 = vadd.f32 %v1858, %v1999
        %v2001 = vpop.f32.mrb[0].mxu0
        %2002 = vmatprep.mubr.bf16.mxu0 %v1927
        %2003 = vmatmul.mubr.bf16.gmra.mrb[0].mxu0 %v1827
        %v2004 = vpop.f32.mrb[0].mxu0
        %v2005 = vadd.f32 %v1858, %v2004
        %v2006 = vpop.f32.mrb[0].mxu0
        %v2007 = vpop.f32.mrb[0].mxu0
        %v2008 = vadd.f32 %v1858, %v2007
        %v2009 = vpop.f32.mrb[0].mxu0
        %2010 = vmatprep.mubr.bf16.mxu0 %v1930
        %2011 = vmatmul.mubr.bf16.gmra.mrb[0].mxu0 %v1829
        %v2012 = vpop.f32.mrb[0].mxu0
        %v2013 = vadd.f32 %v1858, %v2012
        %v2014 = vpop.f32.mrb[0].mxu0
        %v2015 = vpop.f32.mrb[0].mxu0
        %v2016 = vadd.f32 %v1858, %v2015
        %v2017 = vpop.f32.mrb[0].mxu0
        %2018 = vmatprep.mubr.bf16.mxu0 %v1933
        %2019 = vmatmul.mubr.bf16.gmra.mrb[0].mxu0 %v1831
        %v2020 = vpop.f32.mrb[0].mxu0
        %v2021 = vadd.f32 %v1858, %v2020
        %v2022 = vpop.f32.mrb[0].mxu0
        %v2023 = vpop.f32.mrb[0].mxu0
        %v2024 = vadd.f32 %v1858, %v2023
        %v2025 = vpop.f32.mrb[0].mxu0
        %2026 = vmatprep.mubr.bf16.mxu0 %v1936
        %2027 = vmatmul.mubr.bf16.gmra.mrb[0].mxu0 %v1833
        %v2028 = vpop.f32.mrb[0].mxu0
        %v2029 = vadd.f32 %v1858, %v2028
        %v2030 = vpop.f32.mrb[0].mxu0
        %v2031 = vpop.f32.mrb[0].mxu0
        %v2032 = vadd.f32 %v1858, %v2031
        %v2033 = vpop.f32.mrb[0].mxu0
        %2034 = vdwg.mxu0
        %v2035 = vmax.f32 %v1973, 0.0
        %v2036 = vmax.f32 %v1976, 0.0
        %v2037 = vmax.f32 %v1981, 0.0
        %v2038 = vmax.f32 %v1984, 0.0
        %v2039 = vmax.f32 %v1989, 0.0
        %v2040 = vmax.f32 %v1992, 0.0
        %v2041 = vmax.f32 %v1997, 0.0
        %v2042 = vmax.f32 %v2000, 0.0
        %v2043 = vmax.f32 %v2005, 0.0
        %v2044 = vmax.f32 %v2008, 0.0
        %v2045 = vmax.f32 %v2013, 0.0
        %v2046 = vmax.f32 %v2016, 0.0
        %v2047 = vmax.f32 %v2021, 0.0
        %v2048 = vmax.f32 %v2024, 0.0
        %v2049 = vmax.f32 %v2029, 0.0
        %v2050 = vmax.f32 %v2032, 0.0
        %v2051 = vpack.c.bf16 %v2036, %v2035
        %v2052 = vpack.c.bf16 %v2038, %v2037
        %v2053 = vpack.c.bf16 %v2040, %v2039
        %v2054 = vpack.c.bf16 %v2042, %v2041
        %v2055 = vpack.c.bf16 %v2044, %v2043
        %v2056 = vpack.c.bf16 %v2046, %v2045
        %v2057 = vpack.c.bf16 %v2048, %v2047
        %v2058 = vpack.c.bf16 %v2050, %v2049
        %2059 = vst.msk [vmem:[%s583 + $0x8] sm:$0xff] %vm422, %v2051
        %2060 = vst.msk [vmem:[%s583 + $0x20] sm:$0xff] %vm422, %v2052
        %2061 = vst.msk [vmem:[%s583 + $0x38] sm:$0xff] %vm422, %v2053
        %2062 = vst.msk [vmem:[%s583 + $0x50] sm:$0xff] %vm422, %v2054
        %2063 = vst.msk [vmem:[%s583 + $0x68] sm:$0xff] %vm422, %v2055
        %2064 = vst.msk [vmem:[%s583 + $0x80] sm:$0xff] %vm422, %v2056
        %2065 = vst.msk [vmem:[%s583 + $0x98] sm:$0xff] %vm422, %v2057
        %2066 = vst.msk [vmem:[%s583 + $0xb0] sm:$0xff] %vm422, %v2058
        %v2067 = vld [vmem:[%s592] sm:$0xc0]
        %v2068 = vld [vmem:[%s592 + $0x8] sm:$0x7f]
        %v2069 = vld [vmem:[%s592 + $0x18] sm:$0xc0]
        %v2070 = vld [vmem:[%s592 + $0x20] sm:$0x7f]
        %v2071 = vld [vmem:[%s592 + $0x30] sm:$0xc0]
        %v2072 = vld [vmem:[%s592 + $0x38] sm:$0x7f]
        %v2073 = vld [vmem:[%s592 + $0x48] sm:$0xc0]
        %v2074 = vld [vmem:[%s592 + $0x50] sm:$0x7f]
        %v2075 = vld [vmem:[%s592 + $0x60] sm:$0xc0]
        %v2076 = vld [vmem:[%s592 + $0x68] sm:$0x7f]
        %v2077 = vld [vmem:[%s592 + $0x78] sm:$0xc0]
        %v2078 = vld [vmem:[%s592 + $0x80] sm:$0x7f]
        %v2079 = vld [vmem:[%s592 + $0x90] sm:$0xc0]
        %v2080 = vld [vmem:[%s592 + $0x98] sm:$0x7f]
        %v2081 = vld [vmem:[%s592 + $0xa8] sm:$0xc0]
        %v2082 = vld [vmem:[%s592 + $0xb0] sm:$0x7f]
        %v2084 = vshrl.u32 %v2067, 16
        %v2086 = vrot.slane %v2084, 6
        %v2087 = vshll.u32 %v2067, 16
        %v2089 = vrot.slane %v2087, 7
        %v2090 = vor.u32 %v2086, %v2089
        %v2092 = vshrl.u32 %v2068, 16
        %v2094 = vrot.slane %v2092, 6
        %v2095 = vshll.u32 %v2068, 16
        %v2097 = vrot.slane %v2095, 7
        %v2098 = vor.u32 %v2094, %v2097
        %v2099 = vsel %vm609, %v2090, %v2098
        %v2101 = vshrl.u32 %v2069, 16
        %v2103 = vrot.slane %v2101, 6
        %v2104 = vshll.u32 %v2069, 16
        %v2106 = vrot.slane %v2104, 7
        %v2107 = vor.u32 %v2103, %v2106
        %v2109 = vshrl.u32 %v2070, 16
        %v2111 = vrot.slane %v2109, 6
        %v2112 = vshll.u32 %v2070, 16
        %v2114 = vrot.slane %v2112, 7
        %v2115 = vor.u32 %v2111, %v2114
        %v2116 = vsel %vm609, %v2107, %v2115
        %v2118 = vshrl.u32 %v2071, 16
        %v2120 = vrot.slane %v2118, 6
        %v2121 = vshll.u32 %v2071, 16
        %v2123 = vrot.slane %v2121, 7
        %v2124 = vor.u32 %v2120, %v2123
        %v2126 = vshrl.u32 %v2072, 16
        %v2128 = vrot.slane %v2126, 6
        %v2129 = vshll.u32 %v2072, 16
        %v2131 = vrot.slane %v2129, 7
        %v2132 = vor.u32 %v2128, %v2131
        %v2133 = vsel %vm609, %v2124, %v2132
        %v2135 = vshrl.u32 %v2073, 16
        %v2137 = vrot.slane %v2135, 6
        %v2138 = vshll.u32 %v2073, 16
        %v2140 = vrot.slane %v2138, 7
        %v2141 = vor.u32 %v2137, %v2140
        %v2143 = vshrl.u32 %v2074, 16
        %v2145 = vrot.slane %v2143, 6
        %v2146 = vshll.u32 %v2074, 16
        %v2148 = vrot.slane %v2146, 7
        %v2149 = vor.u32 %v2145, %v2148
        %v2150 = vsel %vm609, %v2141, %v2149
        %v2152 = vshrl.u32 %v2075, 16
        %v2154 = vrot.slane %v2152, 6
        %v2155 = vshll.u32 %v2075, 16
        %v2157 = vrot.slane %v2155, 7
        %v2158 = vor.u32 %v2154, %v2157
        %v2160 = vshrl.u32 %v2076, 16
        %v2162 = vrot.slane %v2160, 6
        %v2163 = vshll.u32 %v2076, 16
        %v2165 = vrot.slane %v2163, 7
        %v2166 = vor.u32 %v2162, %v2165
        %v2167 = vsel %vm609, %v2158, %v2166
        %v2169 = vshrl.u32 %v2077, 16
        %v2171 = vrot.slane %v2169, 6
        %v2172 = vshll.u32 %v2077, 16
        %v2174 = vrot.slane %v2172, 7
        %v2175 = vor.u32 %v2171, %v2174
        %v2177 = vshrl.u32 %v2078, 16
        %v2179 = vrot.slane %v2177, 6
        %v2180 = vshll.u32 %v2078, 16
        %v2182 = vrot.slane %v2180, 7
        %v2183 = vor.u32 %v2179, %v2182
        %v2184 = vsel %vm609, %v2175, %v2183
        %v2186 = vshrl.u32 %v2079, 16
        %v2188 = vrot.slane %v2186, 6
        %v2189 = vshll.u32 %v2079, 16
        %v2191 = vrot.slane %v2189, 7
        %v2192 = vor.u32 %v2188, %v2191
        %v2194 = vshrl.u32 %v2080, 16
        %v2196 = vrot.slane %v2194, 6
        %v2197 = vshll.u32 %v2080, 16
        %v2199 = vrot.slane %v2197, 7
        %v2200 = vor.u32 %v2196, %v2199
        %v2201 = vsel %vm609, %v2192, %v2200
        %v2203 = vshrl.u32 %v2081, 16
        %v2205 = vrot.slane %v2203, 6
        %v2206 = vshll.u32 %v2081, 16
        %v2208 = vrot.slane %v2206, 7
        %v2209 = vor.u32 %v2205, %v2208
        %v2211 = vshrl.u32 %v2082, 16
        %v2213 = vrot.slane %v2211, 6
        %v2214 = vshll.u32 %v2082, 16
        %v2216 = vrot.slane %v2214, 7
        %v2217 = vor.u32 %v2213, %v2216
        %v2218 = vsel %vm609, %v2209, %v2217
        %2227 = vst.msk [vmem:[#allocation3] sm:$0xff] %vm422, %v2099
        %2228 = vst.msk [vmem:[#allocation3 + $0x10] sm:$0xff] %vm422, %v2116
        %2229 = vst.msk [vmem:[#allocation3 + $0x20] sm:$0xff] %vm422, %v2133
        %2230 = vst.msk [vmem:[#allocation3 + $0x30] sm:$0xff] %vm422, %v2150
        %2231 = vst.msk [vmem:[#allocation3 + $0x40] sm:$0xff] %vm422, %v2167
        %2232 = vst.msk [vmem:[#allocation3 + $0x50] sm:$0xff] %vm422, %v2184
        %2233 = vst.msk [vmem:[#allocation3 + $0x60] sm:$0xff] %vm422, %v2201
        %2234 = vst.msk [vmem:[#allocation3 + $0x70] sm:$0xff] %vm422, %v2218
        %v2235 = vld [vmem:[%s592 + $0x8] sm:$0xff]
        %v2236 = vld [vmem:[%s592 + $0x20] sm:$0xff]
        %v2237 = vld [vmem:[%s592 + $0x38] sm:$0xff]
        %v2238 = vld [vmem:[%s592 + $0x50] sm:$0xff]
        %v2239 = vld [vmem:[%s592 + $0x68] sm:$0xff]
        %v2240 = vld [vmem:[%s592 + $0x80] sm:$0xff]
        %v2241 = vld [vmem:[%s592 + $0x98] sm:$0xff]
        %v2242 = vld [vmem:[%s592 + $0xb0] sm:$0xff]
        %2251 = vrot.lane.b32.xlu0 %v2235, 16
        %v2252 = vpop.permute.xlu0 %2251
        %2253 = vrot.lane.b32.xlu0 %v2236, 16
        %v2254 = vpop.permute.xlu0 %2253
        %2255 = vrot.lane.b32.xlu0 %v2237, 16
        %v2256 = vpop.permute.xlu0 %2255
        %2257 = vrot.lane.b32.xlu0 %v2238, 16
        %v2258 = vpop.permute.xlu0 %2257
        %2259 = vrot.lane.b32.xlu0 %v2239, 16
        %v2260 = vpop.permute.xlu0 %2259
        %2261 = vrot.lane.b32.xlu0 %v2240, 16
        %v2262 = vpop.permute.xlu0 %2261
        %2263 = vrot.lane.b32.xlu0 %v2241, 16
        %v2264 = vpop.permute.xlu0 %2263
        %2265 = vrot.lane.b32.xlu0 %v2242, 16
        %v2266 = vpop.permute.xlu0 %2265
        %2275 = vst.msk [vmem:[#allocation3] sm:$0xff] %vm802, %v2252
        %2276 = vst.msk [vmem:[#allocation3 + $0x10] sm:$0xff] %vm802, %v2254
        %2277 = vst.msk [vmem:[#allocation3 + $0x20] sm:$0xff] %vm802, %v2256
        %2278 = vst.msk [vmem:[#allocation3 + $0x30] sm:$0xff] %vm802, %v2258
        %2279 = vst.msk [vmem:[#allocation3 + $0x40] sm:$0xff] %vm802, %v2260
        %2280 = vst.msk [vmem:[#allocation3 + $0x50] sm:$0xff] %vm802, %v2262
        %2281 = vst.msk [vmem:[#allocation3 + $0x60] sm:$0xff] %vm802, %v2264
        %2282 = vst.msk [vmem:[#allocation3 + $0x70] sm:$0xff] %vm802, %v2266
        %v2283 = vld [vmem:[%s592 + $0x8] sm:$0xfe]
        %v2284 = vld [vmem:[%s592 + $0x10] sm:$0x3]
        %v2285 = vld [vmem:[%s592 + $0x20] sm:$0xfe]
        %v2286 = vld [vmem:[%s592 + $0x28] sm:$0x3]
        %v2287 = vld [vmem:[%s592 + $0x38] sm:$0xfe]
        %v2288 = vld [vmem:[%s592 + $0x40] sm:$0x3]
        %v2289 = vld [vmem:[%s592 + $0x50] sm:$0xfe]
        %v2290 = vld [vmem:[%s592 + $0x58] sm:$0x3]
        %v2291 = vld [vmem:[%s592 + $0x68] sm:$0xfe]
        %v2292 = vld [vmem:[%s592 + $0x70] sm:$0x3]
        %v2293 = vld [vmem:[%s592 + $0x80] sm:$0xfe]
        %v2294 = vld [vmem:[%s592 + $0x88] sm:$0x3]
        %v2295 = vld [vmem:[%s592 + $0x98] sm:$0xfe]
        %v2296 = vld [vmem:[%s592 + $0xa0] sm:$0x3]
        %v2297 = vld [vmem:[%s592 + $0xb0] sm:$0xfe]
        %v2298 = vld [vmem:[%s592 + $0xb8] sm:$0x3]
        %v2300 = vshrl.u32 %v2283, 16
        %v2302 = vrot.slane %v2300, 1
        %v2303 = vshll.u32 %v2283, 16
        %v2305 = vrot.slane %v2303, 2
        %v2306 = vor.u32 %v2302, %v2305
        %v2308 = vshrl.u32 %v2284, 16
        %v2310 = vrot.slane %v2308, 1
        %v2311 = vshll.u32 %v2284, 16
        %v2313 = vrot.slane %v2311, 2
        %v2314 = vor.u32 %v2310, %v2313
        %v2315 = vsel %vm827, %v2306, %v2314
        %v2317 = vshrl.u32 %v2285, 16
        %v2319 = vrot.slane %v2317, 1
        %v2320 = vshll.u32 %v2285, 16
        %v2322 = vrot.slane %v2320, 2
        %v2323 = vor.u32 %v2319, %v2322
        %v2325 = vshrl.u32 %v2286, 16
        %v2327 = vrot.slane %v2325, 1
        %v2328 = vshll.u32 %v2286, 16
        %v2330 = vrot.slane %v2328, 2
        %v2331 = vor.u32 %v2327, %v2330
        %v2332 = vsel %vm827, %v2323, %v2331
        %v2334 = vshrl.u32 %v2287, 16
        %v2336 = vrot.slane %v2334, 1
        %v2337 = vshll.u32 %v2287, 16
        %v2339 = vrot.slane %v2337, 2
        %v2340 = vor.u32 %v2336, %v2339
        %v2342 = vshrl.u32 %v2288, 16
        %v2344 = vrot.slane %v2342, 1
        %v2345 = vshll.u32 %v2288, 16
        %v2347 = vrot.slane %v2345, 2
        %v2348 = vor.u32 %v2344, %v2347
        %v2349 = vsel %vm827, %v2340, %v2348
        %v2351 = vshrl.u32 %v2289, 16
        %v2353 = vrot.slane %v2351, 1
        %v2354 = vshll.u32 %v2289, 16
        %v2356 = vrot.slane %v2354, 2
        %v2357 = vor.u32 %v2353, %v2356
        %v2359 = vshrl.u32 %v2290, 16
        %v2361 = vrot.slane %v2359, 1
        %v2362 = vshll.u32 %v2290, 16
        %v2364 = vrot.slane %v2362, 2
        %v2365 = vor.u32 %v2361, %v2364
        %v2366 = vsel %vm827, %v2357, %v2365
        %v2368 = vshrl.u32 %v2291, 16
        %v2370 = vrot.slane %v2368, 1
        %v2371 = vshll.u32 %v2291, 16
        %v2373 = vrot.slane %v2371, 2
        %v2374 = vor.u32 %v2370, %v2373
        %v2376 = vshrl.u32 %v2292, 16
        %v2378 = vrot.slane %v2376, 1
        %v2379 = vshll.u32 %v2292, 16
        %v2381 = vrot.slane %v2379, 2
        %v2382 = vor.u32 %v2378, %v2381
        %v2383 = vsel %vm827, %v2374, %v2382
        %v2385 = vshrl.u32 %v2293, 16
        %v2387 = vrot.slane %v2385, 1
        %v2388 = vshll.u32 %v2293, 16
        %v2390 = vrot.slane %v2388, 2
        %v2391 = vor.u32 %v2387, %v2390
        %v2393 = vshrl.u32 %v2294, 16
        %v2395 = vrot.slane %v2393, 1
        %v2396 = vshll.u32 %v2294, 16
        %v2398 = vrot.slane %v2396, 2
        %v2399 = vor.u32 %v2395, %v2398
        %v2400 = vsel %vm827, %v2391, %v2399
        %v2402 = vshrl.u32 %v2295, 16
        %v2404 = vrot.slane %v2402, 1
        %v2405 = vshll.u32 %v2295, 16
        %v2407 = vrot.slane %v2405, 2
        %v2408 = vor.u32 %v2404, %v2407
        %v2410 = vshrl.u32 %v2296, 16
        %v2412 = vrot.slane %v2410, 1
        %v2413 = vshll.u32 %v2296, 16
        %v2415 = vrot.slane %v2413, 2
        %v2416 = vor.u32 %v2412, %v2415
        %v2417 = vsel %vm827, %v2408, %v2416
        %v2419 = vshrl.u32 %v2297, 16
        %v2421 = vrot.slane %v2419, 1
        %v2422 = vshll.u32 %v2297, 16
        %v2424 = vrot.slane %v2422, 2
        %v2425 = vor.u32 %v2421, %v2424
        %v2427 = vshrl.u32 %v2298, 16
        %v2429 = vrot.slane %v2427, 1
        %v2430 = vshll.u32 %v2298, 16
        %v2432 = vrot.slane %v2430, 2
        %v2433 = vor.u32 %v2429, %v2432
        %v2434 = vsel %vm827, %v2425, %v2433
        %2435 = vrot.lane.b32.xlu0 %v2315, 32
        %v2436 = vpop.permute.xlu0 %2435
        %2437 = vrot.lane.b32.xlu0 %v2332, 32
        %v2438 = vpop.permute.xlu0 %2437
        %2439 = vrot.lane.b32.xlu0 %v2349, 32
        %v2440 = vpop.permute.xlu0 %2439
        %2441 = vrot.lane.b32.xlu0 %v2366, 32
        %v2442 = vpop.permute.xlu0 %2441
        %2443 = vrot.lane.b32.xlu0 %v2383, 32
        %v2444 = vpop.permute.xlu0 %2443
        %2445 = vrot.lane.b32.xlu0 %v2400, 32
        %v2446 = vpop.permute.xlu0 %2445
        %2447 = vrot.lane.b32.xlu0 %v2417, 32
        %v2448 = vpop.permute.xlu0 %2447
        %2449 = vrot.lane.b32.xlu0 %v2434, 32
        %v2450 = vpop.permute.xlu0 %2449
        %2459 = vst.msk [vmem:[#allocation3] sm:$0xff] %vm988, %v2436
        %2460 = vst.msk [vmem:[#allocation3 + $0x10] sm:$0xff] %vm988, %v2438
        %2461 = vst.msk [vmem:[#allocation3 + $0x20] sm:$0xff] %vm988, %v2440
        %2462 = vst.msk [vmem:[#allocation3 + $0x30] sm:$0xff] %vm988, %v2442
        %2463 = vst.msk [vmem:[#allocation3 + $0x40] sm:$0xff] %vm988, %v2444
        %2464 = vst.msk [vmem:[#allocation3 + $0x50] sm:$0xff] %vm988, %v2446
        %2465 = vst.msk [vmem:[#allocation3 + $0x60] sm:$0xff] %vm988, %v2448
        %2466 = vst.msk [vmem:[#allocation3 + $0x70] sm:$0xff] %vm988, %v2450
        %v2467 = vld [vmem:[%s583] sm:$0xc0]
        %v2468 = vld [vmem:[%s583 + $0x8] sm:$0x7f]
        %v2469 = vld [vmem:[%s583 + $0x18] sm:$0xc0]
        %v2470 = vld [vmem:[%s583 + $0x20] sm:$0x7f]
        %v2471 = vld [vmem:[%s583 + $0x30] sm:$0xc0]
        %v2472 = vld [vmem:[%s583 + $0x38] sm:$0x7f]
        %v2473 = vld [vmem:[%s583 + $0x48] sm:$0xc0]
        %v2474 = vld [vmem:[%s583 + $0x50] sm:$0x7f]
        %v2475 = vld [vmem:[%s583 + $0x60] sm:$0xc0]
        %v2476 = vld [vmem:[%s583 + $0x68] sm:$0x7f]
        %v2477 = vld [vmem:[%s583 + $0x78] sm:$0xc0]
        %v2478 = vld [vmem:[%s583 + $0x80] sm:$0x7f]
        %v2479 = vld [vmem:[%s583 + $0x90] sm:$0xc0]
        %v2480 = vld [vmem:[%s583 + $0x98] sm:$0x7f]
        %v2481 = vld [vmem:[%s583 + $0xa8] sm:$0xc0]
        %v2482 = vld [vmem:[%s583 + $0xb0] sm:$0x7f]
        %v2484 = vshrl.u32 %v2467, 16
        %v2486 = vrot.slane %v2484, 6
        %v2487 = vshll.u32 %v2467, 16
        %v2489 = vrot.slane %v2487, 7
        %v2490 = vor.u32 %v2486, %v2489
        %v2492 = vshrl.u32 %v2468, 16
        %v2494 = vrot.slane %v2492, 6
        %v2495 = vshll.u32 %v2468, 16
        %v2497 = vrot.slane %v2495, 7
        %v2498 = vor.u32 %v2494, %v2497
        %v2499 = vsel %vm609, %v2490, %v2498
        %v2501 = vshrl.u32 %v2469, 16
        %v2503 = vrot.slane %v2501, 6
        %v2504 = vshll.u32 %v2469, 16
        %v2506 = vrot.slane %v2504, 7
        %v2507 = vor.u32 %v2503, %v2506
        %v2509 = vshrl.u32 %v2470, 16
        %v2511 = vrot.slane %v2509, 6
        %v2512 = vshll.u32 %v2470, 16
        %v2514 = vrot.slane %v2512, 7
        %v2515 = vor.u32 %v2511, %v2514
        %v2516 = vsel %vm609, %v2507, %v2515
        %v2518 = vshrl.u32 %v2471, 16
        %v2520 = vrot.slane %v2518, 6
        %v2521 = vshll.u32 %v2471, 16
        %v2523 = vrot.slane %v2521, 7
        %v2524 = vor.u32 %v2520, %v2523
        %v2526 = vshrl.u32 %v2472, 16
        %v2528 = vrot.slane %v2526, 6
        %v2529 = vshll.u32 %v2472, 16
        %v2531 = vrot.slane %v2529, 7
        %v2532 = vor.u32 %v2528, %v2531
        %v2533 = vsel %vm609, %v2524, %v2532
        %v2535 = vshrl.u32 %v2473, 16
        %v2537 = vrot.slane %v2535, 6
        %v2538 = vshll.u32 %v2473, 16
        %v2540 = vrot.slane %v2538, 7
        %v2541 = vor.u32 %v2537, %v2540
        %v2543 = vshrl.u32 %v2474, 16
        %v2545 = vrot.slane %v2543, 6
        %v2546 = vshll.u32 %v2474, 16
        %v2548 = vrot.slane %v2546, 7
        %v2549 = vor.u32 %v2545, %v2548
        %v2550 = vsel %vm609, %v2541, %v2549
        %v2552 = vshrl.u32 %v2475, 16
        %v2554 = vrot.slane %v2552, 6
        %v2555 = vshll.u32 %v2475, 16
        %v2557 = vrot.slane %v2555, 7
        %v2558 = vor.u32 %v2554, %v2557
        %v2560 = vshrl.u32 %v2476, 16
        %v2562 = vrot.slane %v2560, 6
        %v2563 = vshll.u32 %v2476, 16
        %v2565 = vrot.slane %v2563, 7
        %v2566 = vor.u32 %v2562, %v2565
        %v2567 = vsel %vm609, %v2558, %v2566
        %v2569 = vshrl.u32 %v2477, 16
        %v2571 = vrot.slane %v2569, 6
        %v2572 = vshll.u32 %v2477, 16
        %v2574 = vrot.slane %v2572, 7
        %v2575 = vor.u32 %v2571, %v2574
        %v2577 = vshrl.u32 %v2478, 16
        %v2579 = vrot.slane %v2577, 6
        %v2580 = vshll.u32 %v2478, 16
        %v2582 = vrot.slane %v2580, 7
        %v2583 = vor.u32 %v2579, %v2582
        %v2584 = vsel %vm609, %v2575, %v2583
        %v2586 = vshrl.u32 %v2479, 16
        %v2588 = vrot.slane %v2586, 6
        %v2589 = vshll.u32 %v2479, 16
        %v2591 = vrot.slane %v2589, 7
        %v2592 = vor.u32 %v2588, %v2591
        %v2594 = vshrl.u32 %v2480, 16
        %v2596 = vrot.slane %v2594, 6
        %v2597 = vshll.u32 %v2480, 16
        %v2599 = vrot.slane %v2597, 7
        %v2600 = vor.u32 %v2596, %v2599
        %v2601 = vsel %vm609, %v2592, %v2600
        %v2603 = vshrl.u32 %v2481, 16
        %v2605 = vrot.slane %v2603, 6
        %v2606 = vshll.u32 %v2481, 16
        %v2608 = vrot.slane %v2606, 7
        %v2609 = vor.u32 %v2605, %v2608
        %v2611 = vshrl.u32 %v2482, 16
        %v2613 = vrot.slane %v2611, 6
        %v2614 = vshll.u32 %v2482, 16
        %v2616 = vrot.slane %v2614, 7
        %v2617 = vor.u32 %v2613, %v2616
        %v2618 = vsel %vm609, %v2609, %v2617
        %2619 = vrot.lane.b32.xlu0 %v2499, 48
        %v2620 = vpop.permute.xlu0 %2619
        %2621 = vrot.lane.b32.xlu0 %v2516, 48
        %v2622 = vpop.permute.xlu0 %2621
        %2623 = vrot.lane.b32.xlu0 %v2533, 48
        %v2624 = vpop.permute.xlu0 %2623
        %2625 = vrot.lane.b32.xlu0 %v2550, 48
        %v2626 = vpop.permute.xlu0 %2625
        %2627 = vrot.lane.b32.xlu0 %v2567, 48
        %v2628 = vpop.permute.xlu0 %2627
        %2629 = vrot.lane.b32.xlu0 %v2584, 48
        %v2630 = vpop.permute.xlu0 %2629
        %2631 = vrot.lane.b32.xlu0 %v2601, 48
        %v2632 = vpop.permute.xlu0 %2631
        %2633 = vrot.lane.b32.xlu0 %v2618, 48
        %v2634 = vpop.permute.xlu0 %2633
        %2643 = vst.msk [vmem:[#allocation3] sm:$0xff] %vm1173, %v2620
        %2644 = vst.msk [vmem:[#allocation3 + $0x10] sm:$0xff] %vm1173, %v2622
        %2645 = vst.msk [vmem:[#allocation3 + $0x20] sm:$0xff] %vm1173, %v2624
        %2646 = vst.msk [vmem:[#allocation3 + $0x30] sm:$0xff] %vm1173, %v2626
        %2647 = vst.msk [vmem:[#allocation3 + $0x40] sm:$0xff] %vm1173, %v2628
        %2648 = vst.msk [vmem:[#allocation3 + $0x50] sm:$0xff] %vm1173, %v2630
        %2649 = vst.msk [vmem:[#allocation3 + $0x60] sm:$0xff] %vm1173, %v2632
        %2650 = vst.msk [vmem:[#allocation3 + $0x70] sm:$0xff] %vm1173, %v2634
        %v2651 = vld [vmem:[%s583 + $0x8] sm:$0xff]
        %v2652 = vld [vmem:[%s583 + $0x20] sm:$0xff]
        %v2653 = vld [vmem:[%s583 + $0x38] sm:$0xff]
        %v2654 = vld [vmem:[%s583 + $0x50] sm:$0xff]
        %v2655 = vld [vmem:[%s583 + $0x68] sm:$0xff]
        %v2656 = vld [vmem:[%s583 + $0x80] sm:$0xff]
        %v2657 = vld [vmem:[%s583 + $0x98] sm:$0xff]
        %v2658 = vld [vmem:[%s583 + $0xb0] sm:$0xff]
        %2667 = vrot.lane.b32.xlu0 %v2651, 64
        %v2668 = vpop.permute.xlu0 %2667
        %2669 = vrot.lane.b32.xlu0 %v2652, 64
        %v2670 = vpop.permute.xlu0 %2669
        %2671 = vrot.lane.b32.xlu0 %v2653, 64
        %v2672 = vpop.permute.xlu0 %2671
        %2673 = vrot.lane.b32.xlu0 %v2654, 64
        %v2674 = vpop.permute.xlu0 %2673
        %2675 = vrot.lane.b32.xlu0 %v2655, 64
        %v2676 = vpop.permute.xlu0 %2675
        %2677 = vrot.lane.b32.xlu0 %v2656, 64
        %v2678 = vpop.permute.xlu0 %2677
        %2679 = vrot.lane.b32.xlu0 %v2657, 64
        %v2680 = vpop.permute.xlu0 %2679
        %2681 = vrot.lane.b32.xlu0 %v2658, 64
        %v2682 = vpop.permute.xlu0 %2681
        %2691 = vst.msk [vmem:[#allocation3] sm:$0xff] %vm1222, %v2668
        %2692 = vst.msk [vmem:[#allocation3 + $0x10] sm:$0xff] %vm1222, %v2670
        %2693 = vst.msk [vmem:[#allocation3 + $0x20] sm:$0xff] %vm1222, %v2672
        %2694 = vst.msk [vmem:[#allocation3 + $0x30] sm:$0xff] %vm1222, %v2674
        %2695 = vst.msk [vmem:[#allocation3 + $0x40] sm:$0xff] %vm1222, %v2676
        %2696 = vst.msk [vmem:[#allocation3 + $0x50] sm:$0xff] %vm1222, %v2678
        %2697 = vst.msk [vmem:[#allocation3 + $0x60] sm:$0xff] %vm1222, %v2680
        %2698 = vst.msk [vmem:[#allocation3 + $0x70] sm:$0xff] %vm1222, %v2682
        %v2699 = vld [vmem:[%s583 + $0x8] sm:$0xfe]
        %v2700 = vld [vmem:[%s583 + $0x10] sm:$0x3]
        %v2701 = vld [vmem:[%s583 + $0x20] sm:$0xfe]
        %v2702 = vld [vmem:[%s583 + $0x28] sm:$0x3]
        %v2703 = vld [vmem:[%s583 + $0x38] sm:$0xfe]
        %v2704 = vld [vmem:[%s583 + $0x40] sm:$0x3]
        %v2705 = vld [vmem:[%s583 + $0x50] sm:$0xfe]
        %v2706 = vld [vmem:[%s583 + $0x58] sm:$0x3]
        %v2707 = vld [vmem:[%s583 + $0x68] sm:$0xfe]
        %v2708 = vld [vmem:[%s583 + $0x70] sm:$0x3]
        %v2709 = vld [vmem:[%s583 + $0x80] sm:$0xfe]
        %v2710 = vld [vmem:[%s583 + $0x88] sm:$0x3]
        %v2711 = vld [vmem:[%s583 + $0x98] sm:$0xfe]
        %v2712 = vld [vmem:[%s583 + $0xa0] sm:$0x3]
        %v2713 = vld [vmem:[%s583 + $0xb0] sm:$0xfe]
        %v2714 = vld [vmem:[%s583 + $0xb8] sm:$0x3]
        %v2716 = vshrl.u32 %v2699, 16
        %v2718 = vrot.slane %v2716, 1
        %v2719 = vshll.u32 %v2699, 16
        %v2721 = vrot.slane %v2719, 2
        %v2722 = vor.u32 %v2718, %v2721
        %v2724 = vshrl.u32 %v2700, 16
        %v2726 = vrot.slane %v2724, 1
        %v2727 = vshll.u32 %v2700, 16
        %v2729 = vrot.slane %v2727, 2
        %v2730 = vor.u32 %v2726, %v2729
        %v2731 = vsel %vm827, %v2722, %v2730
        %v2733 = vshrl.u32 %v2701, 16
        %v2735 = vrot.slane %v2733, 1
        %v2736 = vshll.u32 %v2701, 16
        %v2738 = vrot.slane %v2736, 2
        %v2739 = vor.u32 %v2735, %v2738
        %v2741 = vshrl.u32 %v2702, 16
        %v2743 = vrot.slane %v2741, 1
        %v2744 = vshll.u32 %v2702, 16
        %v2746 = vrot.slane %v2744, 2
        %v2747 = vor.u32 %v2743, %v2746
        %v2748 = vsel %vm827, %v2739, %v2747
        %v2750 = vshrl.u32 %v2703, 16
        %v2752 = vrot.slane %v2750, 1
        %v2753 = vshll.u32 %v2703, 16
        %v2755 = vrot.slane %v2753, 2
        %v2756 = vor.u32 %v2752, %v2755
        %v2758 = vshrl.u32 %v2704, 16
        %v2760 = vrot.slane %v2758, 1
        %v2761 = vshll.u32 %v2704, 16
        %v2763 = vrot.slane %v2761, 2
        %v2764 = vor.u32 %v2760, %v2763
        %v2765 = vsel %vm827, %v2756, %v2764
        %v2767 = vshrl.u32 %v2705, 16
        %v2769 = vrot.slane %v2767, 1
        %v2770 = vshll.u32 %v2705, 16
        %v2772 = vrot.slane %v2770, 2
        %v2773 = vor.u32 %v2769, %v2772
        %v2775 = vshrl.u32 %v2706, 16
        %v2777 = vrot.slane %v2775, 1
        %v2778 = vshll.u32 %v2706, 16
        %v2780 = vrot.slane %v2778, 2
        %v2781 = vor.u32 %v2777, %v2780
        %v2782 = vsel %vm827, %v2773, %v2781
        %v2784 = vshrl.u32 %v2707, 16
        %v2786 = vrot.slane %v2784, 1
        %v2787 = vshll.u32 %v2707, 16
        %v2789 = vrot.slane %v2787, 2
        %v2790 = vor.u32 %v2786, %v2789
        %v2792 = vshrl.u32 %v2708, 16
        %v2794 = vrot.slane %v2792, 1
        %v2795 = vshll.u32 %v2708, 16
        %v2797 = vrot.slane %v2795, 2
        %v2798 = vor.u32 %v2794, %v2797
        %v2799 = vsel %vm827, %v2790, %v2798
        %v2801 = vshrl.u32 %v2709, 16
        %v2803 = vrot.slane %v2801, 1
        %v2804 = vshll.u32 %v2709, 16
        %v2806 = vrot.slane %v2804, 2
        %v2807 = vor.u32 %v2803, %v2806
        %v2809 = vshrl.u32 %v2710, 16
        %v2811 = vrot.slane %v2809, 1
        %v2812 = vshll.u32 %v2710, 16
        %v2814 = vrot.slane %v2812, 2
        %v2815 = vor.u32 %v2811, %v2814
        %v2816 = vsel %vm827, %v2807, %v2815
        %v2818 = vshrl.u32 %v2711, 16
        %v2820 = vrot.slane %v2818, 1
        %v2821 = vshll.u32 %v2711, 16
        %v2823 = vrot.slane %v2821, 2
        %v2824 = vor.u32 %v2820, %v2823
        %v2826 = vshrl.u32 %v2712, 16
        %v2828 = vrot.slane %v2826, 1
        %v2829 = vshll.u32 %v2712, 16
        %v2831 = vrot.slane %v2829, 2
        %v2832 = vor.u32 %v2828, %v2831
        %v2833 = vsel %vm827, %v2824, %v2832
        %v2835 = vshrl.u32 %v2713, 16
        %v2837 = vrot.slane %v2835, 1
        %v2838 = vshll.u32 %v2713, 16
        %v2840 = vrot.slane %v2838, 2
        %v2841 = vor.u32 %v2837, %v2840
        %v2843 = vshrl.u32 %v2714, 16
        %v2845 = vrot.slane %v2843, 1
        %v2846 = vshll.u32 %v2714, 16
        %v2848 = vrot.slane %v2846, 2
        %v2849 = vor.u32 %v2845, %v2848
        %v2850 = vsel %vm827, %v2841, %v2849
        %2851 = vrot.lane.b32.xlu0 %v2731, 80
        %v2852 = vpop.permute.xlu0 %2851
        %2853 = vrot.lane.b32.xlu0 %v2748, 80
        %v2854 = vpop.permute.xlu0 %2853
        %2855 = vrot.lane.b32.xlu0 %v2765, 80
        %v2856 = vpop.permute.xlu0 %2855
        %2857 = vrot.lane.b32.xlu0 %v2782, 80
        %v2858 = vpop.permute.xlu0 %2857
        %2859 = vrot.lane.b32.xlu0 %v2799, 80
        %v2860 = vpop.permute.xlu0 %2859
        %2861 = vrot.lane.b32.xlu0 %v2816, 80
        %v2862 = vpop.permute.xlu0 %2861
        %2863 = vrot.lane.b32.xlu0 %v2833, 80
        %v2864 = vpop.permute.xlu0 %2863
        %2865 = vrot.lane.b32.xlu0 %v2850, 80
        %v2866 = vpop.permute.xlu0 %2865
        %2875 = vst.msk [vmem:[#allocation3] sm:$0xff] %vm1407, %v2852
        %2876 = vst.msk [vmem:[#allocation3 + $0x10] sm:$0xff] %vm1407, %v2854
        %2877 = vst.msk [vmem:[#allocation3 + $0x20] sm:$0xff] %vm1407, %v2856
        %2878 = vst.msk [vmem:[#allocation3 + $0x30] sm:$0xff] %vm1407, %v2858
        %2879 = vst.msk [vmem:[#allocation3 + $0x40] sm:$0xff] %vm1407, %v2860
        %2880 = vst.msk [vmem:[#allocation3 + $0x50] sm:$0xff] %vm1407, %v2862
        %2881 = vst.msk [vmem:[#allocation3 + $0x60] sm:$0xff] %vm1407, %v2864
        %2882 = vst.msk [vmem:[#allocation3 + $0x70] sm:$0xff] %vm1407, %v2866
        %v2883 = vld [vmem:[%s1416] sm:$0xc0]
        %v2884 = vld [vmem:[%s1416 + $0x8] sm:$0x7f]
        %v2885 = vld [vmem:[%s1416 + $0x18] sm:$0xc0]
        %v2886 = vld [vmem:[%s1416 + $0x20] sm:$0x7f]
        %v2887 = vld [vmem:[%s1416 + $0x30] sm:$0xc0]
        %v2888 = vld [vmem:[%s1416 + $0x38] sm:$0x7f]
        %v2889 = vld [vmem:[%s1416 + $0x48] sm:$0xc0]
        %v2890 = vld [vmem:[%s1416 + $0x50] sm:$0x7f]
        %v2891 = vld [vmem:[%s1416 + $0x60] sm:$0xc0]
        %v2892 = vld [vmem:[%s1416 + $0x68] sm:$0x7f]
        %v2893 = vld [vmem:[%s1416 + $0x78] sm:$0xc0]
        %v2894 = vld [vmem:[%s1416 + $0x80] sm:$0x7f]
        %v2895 = vld [vmem:[%s1416 + $0x90] sm:$0xc0]
        %v2896 = vld [vmem:[%s1416 + $0x98] sm:$0x7f]
        %v2897 = vld [vmem:[%s1416 + $0xa8] sm:$0xc0]
        %v2898 = vld [vmem:[%s1416 + $0xb0] sm:$0x7f]
        %v2900 = vshrl.u32 %v2883, 16
        %v2902 = vrot.slane %v2900, 6
        %v2903 = vshll.u32 %v2883, 16
        %v2905 = vrot.slane %v2903, 7
        %v2906 = vor.u32 %v2902, %v2905
        %v2908 = vshrl.u32 %v2884, 16
        %v2910 = vrot.slane %v2908, 6
        %v2911 = vshll.u32 %v2884, 16
        %v2913 = vrot.slane %v2911, 7
        %v2914 = vor.u32 %v2910, %v2913
        %v2915 = vsel %vm609, %v2906, %v2914
        %v2917 = vshrl.u32 %v2885, 16
        %v2919 = vrot.slane %v2917, 6
        %v2920 = vshll.u32 %v2885, 16
        %v2922 = vrot.slane %v2920, 7
        %v2923 = vor.u32 %v2919, %v2922
        %v2925 = vshrl.u32 %v2886, 16
        %v2927 = vrot.slane %v2925, 6
        %v2928 = vshll.u32 %v2886, 16
        %v2930 = vrot.slane %v2928, 7
        %v2931 = vor.u32 %v2927, %v2930
        %v2932 = vsel %vm609, %v2923, %v2931
        %v2934 = vshrl.u32 %v2887, 16
        %v2936 = vrot.slane %v2934, 6
        %v2937 = vshll.u32 %v2887, 16
        %v2939 = vrot.slane %v2937, 7
        %v2940 = vor.u32 %v2936, %v2939
        %v2942 = vshrl.u32 %v2888, 16
        %v2944 = vrot.slane %v2942, 6
        %v2945 = vshll.u32 %v2888, 16
        %v2947 = vrot.slane %v2945, 7
        %v2948 = vor.u32 %v2944, %v2947
        %v2949 = vsel %vm609, %v2940, %v2948
        %v2951 = vshrl.u32 %v2889, 16
        %v2953 = vrot.slane %v2951, 6
        %v2954 = vshll.u32 %v2889, 16
        %v2956 = vrot.slane %v2954, 7
        %v2957 = vor.u32 %v2953, %v2956
        %v2959 = vshrl.u32 %v2890, 16
        %v2961 = vrot.slane %v2959, 6
        %v2962 = vshll.u32 %v2890, 16
        %v2964 = vrot.slane %v2962, 7
        %v2965 = vor.u32 %v2961, %v2964
        %v2966 = vsel %vm609, %v2957, %v2965
        %v2968 = vshrl.u32 %v2891, 16
        %v2970 = vrot.slane %v2968, 6
        %v2971 = vshll.u32 %v2891, 16
        %v2973 = vrot.slane %v2971, 7
        %v2974 = vor.u32 %v2970, %v2973
        %v2976 = vshrl.u32 %v2892, 16
        %v2978 = vrot.slane %v2976, 6
        %v2979 = vshll.u32 %v2892, 16
        %v2981 = vrot.slane %v2979, 7
        %v2982 = vor.u32 %v2978, %v2981
        %v2983 = vsel %vm609, %v2974, %v2982
        %v2985 = vshrl.u32 %v2893, 16
        %v2987 = vrot.slane %v2985, 6
        %v2988 = vshll.u32 %v2893, 16
        %v2990 = vrot.slane %v2988, 7
        %v2991 = vor.u32 %v2987, %v2990
        %v2993 = vshrl.u32 %v2894, 16
        %v2995 = vrot.slane %v2993, 6
        %v2996 = vshll.u32 %v2894, 16
        %v2998 = vrot.slane %v2996, 7
        %v2999 = vor.u32 %v2995, %v2998
        %v3000 = vsel %vm609, %v2991, %v2999
        %v3002 = vshrl.u32 %v2895, 16
        %v3004 = vrot.slane %v3002, 6
        %v3005 = vshll.u32 %v2895, 16
        %v3007 = vrot.slane %v3005, 7
        %v3008 = vor.u32 %v3004, %v3007
        %v3010 = vshrl.u32 %v2896, 16
        %v3012 = vrot.slane %v3010, 6
        %v3013 = vshll.u32 %v2896, 16
        %v3015 = vrot.slane %v3013, 7
        %v3016 = vor.u32 %v3012, %v3015
        %v3017 = vsel %vm609, %v3008, %v3016
        %v3019 = vshrl.u32 %v2897, 16
        %v3021 = vrot.slane %v3019, 6
        %v3022 = vshll.u32 %v2897, 16
        %v3024 = vrot.slane %v3022, 7
        %v3025 = vor.u32 %v3021, %v3024
        %v3027 = vshrl.u32 %v2898, 16
        %v3029 = vrot.slane %v3027, 6
        %v3030 = vshll.u32 %v2898, 16
        %v3032 = vrot.slane %v3030, 7
        %v3033 = vor.u32 %v3029, %v3032
        %v3034 = vsel %vm609, %v3025, %v3033
        %3035 = vrot.lane.b32.xlu0 %v2915, 96
        %v3036 = vpop.permute.xlu0 %3035
        %3037 = vrot.lane.b32.xlu0 %v2932, 96
        %v3038 = vpop.permute.xlu0 %3037
        %3039 = vrot.lane.b32.xlu0 %v2949, 96
        %v3040 = vpop.permute.xlu0 %3039
        %3041 = vrot.lane.b32.xlu0 %v2966, 96
        %v3042 = vpop.permute.xlu0 %3041
        %3043 = vrot.lane.b32.xlu0 %v2983, 96
        %v3044 = vpop.permute.xlu0 %3043
        %3045 = vrot.lane.b32.xlu0 %v3000, 96
        %v3046 = vpop.permute.xlu0 %3045
        %3047 = vrot.lane.b32.xlu0 %v3017, 96
        %v3048 = vpop.permute.xlu0 %3047
        %3049 = vrot.lane.b32.xlu0 %v3034, 96
        %v3050 = vpop.permute.xlu0 %3049
        %3059 = vst.msk [vmem:[#allocation3] sm:$0xff] %vm1593, %v3036
        %3060 = vst.msk [vmem:[#allocation3 + $0x10] sm:$0xff] %vm1593, %v3038
        %3061 = vst.msk [vmem:[#allocation3 + $0x20] sm:$0xff] %vm1593, %v3040
        %3062 = vst.msk [vmem:[#allocation3 + $0x30] sm:$0xff] %vm1593, %v3042
        %3063 = vst.msk [vmem:[#allocation3 + $0x40] sm:$0xff] %vm1593, %v3044
        %3064 = vst.msk [vmem:[#allocation3 + $0x50] sm:$0xff] %vm1593, %v3046
        %3065 = vst.msk [vmem:[#allocation3 + $0x60] sm:$0xff] %vm1593, %v3048
        %3066 = vst.msk [vmem:[#allocation3 + $0x70] sm:$0xff] %vm1593, %v3050
        %v3067 = vld [vmem:[%s1416 + $0x8] sm:$0xff]
        %v3068 = vld [vmem:[%s1416 + $0x20] sm:$0xff]
        %v3069 = vld [vmem:[%s1416 + $0x38] sm:$0xff]
        %v3070 = vld [vmem:[%s1416 + $0x50] sm:$0xff]
        %v3071 = vld [vmem:[%s1416 + $0x68] sm:$0xff]
        %v3072 = vld [vmem:[%s1416 + $0x80] sm:$0xff]
        %v3073 = vld [vmem:[%s1416 + $0x98] sm:$0xff]
        %v3074 = vld [vmem:[%s1416 + $0xb0] sm:$0xff]
        %3083 = vrot.lane.b32.xlu0 %v3067, 112
        %v3084 = vpop.permute.xlu0 %3083
        %3085 = vrot.lane.b32.xlu0 %v3068, 112
        %v3086 = vpop.permute.xlu0 %3085
        %3087 = vrot.lane.b32.xlu0 %v3069, 112
        %v3088 = vpop.permute.xlu0 %3087
        %3089 = vrot.lane.b32.xlu0 %v3070, 112
        %v3090 = vpop.permute.xlu0 %3089
        %3091 = vrot.lane.b32.xlu0 %v3071, 112
        %v3092 = vpop.permute.xlu0 %3091
        %3093 = vrot.lane.b32.xlu0 %v3072, 112
        %v3094 = vpop.permute.xlu0 %3093
        %3095 = vrot.lane.b32.xlu0 %v3073, 112
        %v3096 = vpop.permute.xlu0 %3095
        %3097 = vrot.lane.b32.xlu0 %v3074, 112
        %v3098 = vpop.permute.xlu0 %3097
        %3107 = vst.msk [vmem:[#allocation3] sm:$0xff] %vm1642, %v3084
        %3108 = vst.msk [vmem:[#allocation3 + $0x10] sm:$0xff] %vm1642, %v3086
        %3109 = vst.msk [vmem:[#allocation3 + $0x20] sm:$0xff] %vm1642, %v3088
        %3110 = vst.msk [vmem:[#allocation3 + $0x30] sm:$0xff] %vm1642, %v3090
        %3111 = vst.msk [vmem:[#allocation3 + $0x40] sm:$0xff] %vm1642, %v3092
        %3112 = vst.msk [vmem:[#allocation3 + $0x50] sm:$0xff] %vm1642, %v3094
        %3113 = vst.msk [vmem:[#allocation3 + $0x60] sm:$0xff] %vm1642, %v3096
        %3114 = vst.msk [vmem:[#allocation3 + $0x70] sm:$0xff] %vm1642, %v3098
        %v3115 = vld [vmem:[%s1416 + $0x8] sm:$0xfe]
        %v3116 = vld [vmem:[%s1416 + $0x10] sm:$0x3]
        %v3117 = vld [vmem:[%s1416 + $0x20] sm:$0xfe]
        %v3118 = vld [vmem:[%s1416 + $0x28] sm:$0x3]
        %v3119 = vld [vmem:[%s1416 + $0x38] sm:$0xfe]
        %v3120 = vld [vmem:[%s1416 + $0x40] sm:$0x3]
        %v3121 = vld [vmem:[%s1416 + $0x50] sm:$0xfe]
        %v3122 = vld [vmem:[%s1416 + $0x58] sm:$0x3]
        %v3123 = vld [vmem:[%s1416 + $0x68] sm:$0xfe]
        %v3124 = vld [vmem:[%s1416 + $0x70] sm:$0x3]
        %v3125 = vld [vmem:[%s1416 + $0x80] sm:$0xfe]
        %v3126 = vld [vmem:[%s1416 + $0x88] sm:$0x3]
        %v3127 = vld [vmem:[%s1416 + $0x98] sm:$0xfe]
        %v3128 = vld [vmem:[%s1416 + $0xa0] sm:$0x3]
        %v3129 = vld [vmem:[%s1416 + $0xb0] sm:$0xfe]
        %v3130 = vld [vmem:[%s1416 + $0xb8] sm:$0x3]
        %v3132 = vshrl.u32 %v3115, 16
        %v3134 = vrot.slane %v3132, 1
        %v3135 = vshll.u32 %v3115, 16
        %v3137 = vrot.slane %v3135, 2
        %v3138 = vor.u32 %v3134, %v3137
        %v3140 = vshrl.u32 %v3116, 16
        %v3142 = vrot.slane %v3140, 1
        %v3143 = vshll.u32 %v3116, 16
        %v3145 = vrot.slane %v3143, 2
        %v3146 = vor.u32 %v3142, %v3145
        %v3147 = vsel %vm827, %v3138, %v3146
        %v3149 = vshrl.u32 %v3117, 16
        %v3151 = vrot.slane %v3149, 1
        %v3152 = vshll.u32 %v3117, 16
        %v3154 = vrot.slane %v3152, 2
        %v3155 = vor.u32 %v3151, %v3154
        %v3157 = vshrl.u32 %v3118, 16
        %v3159 = vrot.slane %v3157, 1
        %v3160 = vshll.u32 %v3118, 16
        %v3162 = vrot.slane %v3160, 2
        %v3163 = vor.u32 %v3159, %v3162
        %v3164 = vsel %vm827, %v3155, %v3163
        %v3166 = vshrl.u32 %v3119, 16
        %v3168 = vrot.slane %v3166, 1
        %v3169 = vshll.u32 %v3119, 16
        %v3171 = vrot.slane %v3169, 2
        %v3172 = vor.u32 %v3168, %v3171
        %v3174 = vshrl.u32 %v3120, 16
        %v3176 = vrot.slane %v3174, 1
        %v3177 = vshll.u32 %v3120, 16
        %v3179 = vrot.slane %v3177, 2
        %v3180 = vor.u32 %v3176, %v3179
        %v3181 = vsel %vm827, %v3172, %v3180
        %v3183 = vshrl.u32 %v3121, 16
        %v3185 = vrot.slane %v3183, 1
        %v3186 = vshll.u32 %v3121, 16
        %v3188 = vrot.slane %v3186, 2
        %v3189 = vor.u32 %v3185, %v3188
        %v3191 = vshrl.u32 %v3122, 16
        %v3193 = vrot.slane %v3191, 1
        %v3194 = vshll.u32 %v3122, 16
        %v3196 = vrot.slane %v3194, 2
        %v3197 = vor.u32 %v3193, %v3196
        %v3198 = vsel %vm827, %v3189, %v3197
        %v3200 = vshrl.u32 %v3123, 16
        %v3202 = vrot.slane %v3200, 1
        %v3203 = vshll.u32 %v3123, 16
        %v3205 = vrot.slane %v3203, 2
        %v3206 = vor.u32 %v3202, %v3205
        %v3208 = vshrl.u32 %v3124, 16
        %v3210 = vrot.slane %v3208, 1
        %v3211 = vshll.u32 %v3124, 16
        %v3213 = vrot.slane %v3211, 2
        %v3214 = vor.u32 %v3210, %v3213
        %v3215 = vsel %vm827, %v3206, %v3214
        %v3217 = vshrl.u32 %v3125, 16
        %v3219 = vrot.slane %v3217, 1
        %v3220 = vshll.u32 %v3125, 16
        %v3222 = vrot.slane %v3220, 2
        %v3223 = vor.u32 %v3219, %v3222
        %v3225 = vshrl.u32 %v3126, 16
        %v3227 = vrot.slane %v3225, 1
        %v3228 = vshll.u32 %v3126, 16
        %v3230 = vrot.slane %v3228, 2
        %v3231 = vor.u32 %v3227, %v3230
        %v3232 = vsel %vm827, %v3223, %v3231
        %v3234 = vshrl.u32 %v3127, 16
        %v3236 = vrot.slane %v3234, 1
        %v3237 = vshll.u32 %v3127, 16
        %v3239 = vrot.slane %v3237, 2
        %v3240 = vor.u32 %v3236, %v3239
        %v3242 = vshrl.u32 %v3128, 16
        %v3244 = vrot.slane %v3242, 1
        %v3245 = vshll.u32 %v3128, 16
        %v3247 = vrot.slane %v3245, 2
        %v3248 = vor.u32 %v3244, %v3247
        %v3249 = vsel %vm827, %v3240, %v3248
        %v3251 = vshrl.u32 %v3129, 16
        %v3253 = vrot.slane %v3251, 1
        %v3254 = vshll.u32 %v3129, 16
        %v3256 = vrot.slane %v3254, 2
        %v3257 = vor.u32 %v3253, %v3256
        %v3259 = vshrl.u32 %v3130, 16
        %v3261 = vrot.slane %v3259, 1
        %v3262 = vshll.u32 %v3130, 16
        %v3264 = vrot.slane %v3262, 2
        %v3265 = vor.u32 %v3261, %v3264
        %v3266 = vsel %vm827, %v3257, %v3265
        %3275 = vst.msk [vmem:[#allocation3 + $0x8] sm:$0xff] %vm422, %v3147
        %3276 = vst.msk [vmem:[#allocation3 + $0x18] sm:$0xff] %vm422, %v3164
        %3277 = vst.msk [vmem:[#allocation3 + $0x28] sm:$0xff] %vm422, %v3181
        %3278 = vst.msk [vmem:[#allocation3 + $0x38] sm:$0xff] %vm422, %v3198
        %3279 = vst.msk [vmem:[#allocation3 + $0x48] sm:$0xff] %vm422, %v3215
        %3280 = vst.msk [vmem:[#allocation3 + $0x58] sm:$0xff] %vm422, %v3232
        %3281 = vst.msk [vmem:[#allocation3 + $0x68] sm:$0xff] %vm422, %v3249
        %3282 = vst.msk [vmem:[#allocation3 + $0x78] sm:$0xff] %vm422, %v3266
        %v3283 = vld [vmem:[#allocation3] sm:$0xff]
        %v3284 = vld [vmem:[#allocation3 + $0x8] sm:$0xff]
        %v3285 = vld [vmem:[#allocation3 + $0x10] sm:$0xff]
        %v3286 = vld [vmem:[#allocation3 + $0x18] sm:$0xff]
        %v3287 = vld [vmem:[#allocation3 + $0x20] sm:$0xff]
        %v3288 = vld [vmem:[#allocation3 + $0x28] sm:$0xff]
        %v3289 = vld [vmem:[#allocation3 + $0x30] sm:$0xff]
        %v3290 = vld [vmem:[#allocation3 + $0x38] sm:$0xff]
        %v3291 = vld [vmem:[#allocation3 + $0x40] sm:$0xff]
        %v3292 = vld [vmem:[#allocation3 + $0x48] sm:$0xff]
        %v3293 = vld [vmem:[#allocation3 + $0x50] sm:$0xff]
        %v3294 = vld [vmem:[#allocation3 + $0x58] sm:$0xff]
        %v3295 = vld [vmem:[#allocation3 + $0x60] sm:$0xff]
        %v3296 = vld [vmem:[#allocation3 + $0x68] sm:$0xff]
        %v3297 = vld [vmem:[#allocation3 + $0x70] sm:$0xff]
        %v3298 = vld [vmem:[#allocation3 + $0x78] sm:$0xff]
        %v3299 = vld [vmem:[%s396] sm:$0xf]
        %v3300 = vld [vmem:[%s396 + $0x4] sm:$0xf]
        %v3301 = vld [vmem:[%s396 + $0x8] sm:$0xf]
        %v3302 = vld [vmem:[%s396 + $0xc] sm:$0xf]
        %v3303 = vld [vmem:[%s396 + $0x10] sm:$0xf]
        %v3304 = vld [vmem:[%s396 + $0x14] sm:$0xf]
        %v3305 = vld [vmem:[%s396 + $0x18] sm:$0xf]
        %v3306 = vld [vmem:[%s396 + $0x1c] sm:$0xf]
        %v3307 = vld [vmem:[%s396 + $0x20] sm:$0xf]
        %v3308 = vld [vmem:[%s396 + $0x24] sm:$0xf]
        %v3309 = vld [vmem:[%s396 + $0x28] sm:$0xf]
        %v3310 = vld [vmem:[%s396 + $0x2c] sm:$0xf]
        %v3311 = vld [vmem:[%s396 + $0x30] sm:$0xf]
        %v3312 = vld [vmem:[%s396 + $0x34] sm:$0xf]
        %v3313 = vld [vmem:[%s396 + $0x38] sm:$0xf]
        %v3314 = vld [vmem:[%s396 + $0x3c] sm:$0xf]
        %v3315 = vld [vmem:[%s396 + $0x40] sm:$0xf]
        %v3316 = vld [vmem:[%s396 + $0x44] sm:$0xf]
        %v3317 = vld [vmem:[%s399] sm:$0x1]
        %v3319 = vlaneseq
        %v3320 = vshrl.u32 %v3319, 7
        %v3321 = vsub.s32 0, %v3320
        %v3322 = vrot.slane %v3317, %v3321
        %v3342 = vunpack.c.l.b16 %v3299
        %v3343 = vunpack.c.l.b16 %v3300
        %v3344 = vunpack.c.l.b16 %v3301
        %v3345 = vunpack.c.l.b16 %v3302
        %v3346 = vunpack.c.l.b16 %v3303
        %v3347 = vunpack.c.l.b16 %v3304
        %v3348 = vunpack.c.l.b16 %v3305
        %v3349 = vunpack.c.l.b16 %v3306
        %v3350 = vunpack.c.l.b16 %v3307
        %v3351 = vunpack.c.l.b16 %v3308
        %v3352 = vunpack.c.l.b16 %v3309
        %v3353 = vunpack.c.l.b16 %v3310
        %v3354 = vunpack.c.l.b16 %v3311
        %v3355 = vunpack.c.l.b16 %v3312
        %v3356 = vunpack.c.l.b16 %v3313
        %v3357 = vunpack.c.l.b16 %v3314
        %v3358 = vunpack.c.l.b16 %v3315
        %v3359 = vunpack.c.l.b16 %v3316
        %v3360 = vpack.c.b16 %v3343, %v3342
        %v3361 = vpack.c.b16 %v3345, %v3344
        %v3362 = vpack.c.b16 %v3347, %v3346
        %v3363 = vpack.c.b16 %v3349, %v3348
        %v3364 = vpack.c.b16 %v3351, %v3350
        %v3365 = vpack.c.b16 %v3353, %v3352
        %v3366 = vpack.c.b16 %v3355, %v3354
        %v3367 = vpack.c.b16 %v3357, %v3356
        %v3368 = vpack.c.b16 %v3359, %v3358
        %v3379 = vsel %vm422, %v3284, 0
        %v3382 = vsel %vm422, %v3286, 0
        %v3385 = vsel %vm422, %v3288, 0
        %v3388 = vsel %vm422, %v3290, 0
        %v3391 = vsel %vm422, %v3292, 0
        %v3394 = vsel %vm422, %v3294, 0
        %v3397 = vsel %vm422, %v3296, 0
        %v3400 = vsel %vm422, %v3298, 0
        %3402 = vmatprep.subr.bf16.mxu0 0
        %3403 = vmatpush1.bf16.msra.mxu0 %v3360
        %3404 = vmatprep.subr.bf16.mxu0 0
        %3405 = vmatpush1.bf16.msra.mxu0 %v3361
        %3406 = vmatprep.subr.bf16.mxu0 0
        %3407 = vmatpush1.bf16.msra.mxu0 %v3362
        %3408 = vmatprep.subr.bf16.mxu0 0
        %3409 = vmatpush1.bf16.msra.mxu0 %v3363
        %3410 = vmatprep.subr.bf16.mxu0 0
        %3411 = vmatpush1.bf16.msra.mxu0 %v3364
        %3412 = vmatprep.subr.bf16.mxu0 0
        %3413 = vmatpush1.bf16.msra.mxu0 %v3365
        %3414 = vmatprep.subr.bf16.mxu0 0
        %3415 = vmatpush1.bf16.msra.mxu0 %v3366
        %3416 = vmatprep.subr.bf16.mxu0 0
        %3417 = vmatpush1.bf16.msra.mxu0 %v3367
        %3418 = vmatprep.subr.bf16.mxu0 0
        %3419 = vmatpush1.bf16.msra.mxu0 %v3368
        %3420 = vmatprep.subr.bf16.mxu0 0
        %3421 = vmatpush1.bf16.msra.mxu0 0
        %3422 = vmatprep.subr.bf16.mxu0 0
        %3423 = vmatpush1.bf16.msra.mxu0 0
        %3424 = vmatprep.subr.bf16.mxu0 0
        %3425 = vmatpush1.bf16.msra.mxu0 0
        %3426 = vmatprep.subr.bf16.mxu0 0
        %3427 = vmatpush1.bf16.msra.mxu0 0
        %3428 = vmatprep.subr.bf16.mxu0 0
        %3429 = vmatpush1.bf16.msra.mxu0 0
        %3430 = vmatprep.subr.bf16.mxu0 0
        %3431 = vmatpush1.bf16.msra.mxu0 0
        %3432 = vmatprep.subr.bf16.mxu0 0
        %3433 = vmatpush1.bf16.msra.mxu0 0
        %3434 = vmatprep.mubr.bf16.mxu0 %v3379
        %3435 = vmatmul.mubr.bf16.gmra.mrb[0].mxu0 %v3283
        %v3436 = vpop.f32.mrb[0].mxu0
        %v3437 = vadd.f32 %v3322, %v3436
        %v3438 = vpop.f32.mrb[0].mxu0
        %v3439 = vpop.f32.mrb[0].mxu0
        %v3440 = vadd.f32 %v3322, %v3439
        %v3441 = vpop.f32.mrb[0].mxu0
        %3442 = vmatprep.mubr.bf16.mxu0 %v3382
        %3443 = vmatmul.mubr.bf16.gmra.mrb[0].mxu0 %v3285
        %v3444 = vpop.f32.mrb[0].mxu0
        %v3445 = vadd.f32 %v3322, %v3444
        %v3446 = vpop.f32.mrb[0].mxu0
        %v3447 = vpop.f32.mrb[0].mxu0
        %v3448 = vadd.f32 %v3322, %v3447
        %v3449 = vpop.f32.mrb[0].mxu0
        %3450 = vmatprep.mubr.bf16.mxu0 %v3385
        %3451 = vmatmul.mubr.bf16.gmra.mrb[0].mxu0 %v3287
        %v3452 = vpop.f32.mrb[0].mxu0
        %v3453 = vadd.f32 %v3322, %v3452
        %v3454 = vpop.f32.mrb[0].mxu0
        %v3455 = vpop.f32.mrb[0].mxu0
        %v3456 = vadd.f32 %v3322, %v3455
        %v3457 = vpop.f32.mrb[0].mxu0
        %3458 = vmatprep.mubr.bf16.mxu0 %v3388
        %3459 = vmatmul.mubr.bf16.gmra.mrb[0].mxu0 %v3289
        %v3460 = vpop.f32.mrb[0].mxu0
        %v3461 = vadd.f32 %v3322, %v3460
        %v3462 = vpop.f32.mrb[0].mxu0
        %v3463 = vpop.f32.mrb[0].mxu0
        %v3464 = vadd.f32 %v3322, %v3463
        %v3465 = vpop.f32.mrb[0].mxu0
        %3466 = vmatprep.mubr.bf16.mxu0 %v3391
        %3467 = vmatmul.mubr.bf16.gmra.mrb[0].mxu0 %v3291
        %v3468 = vpop.f32.mrb[0].mxu0
        %v3469 = vadd.f32 %v3322, %v3468
        %v3470 = vpop.f32.mrb[0].mxu0
        %v3471 = vpop.f32.mrb[0].mxu0
        %v3472 = vadd.f32 %v3322, %v3471
        %v3473 = vpop.f32.mrb[0].mxu0
        %3474 = vmatprep.mubr.bf16.mxu0 %v3394
        %3475 = vmatmul.mubr.bf16.gmra.mrb[0].mxu0 %v3293
        %v3476 = vpop.f32.mrb[0].mxu0
        %v3477 = vadd.f32 %v3322, %v3476
        %v3478 = vpop.f32.mrb[0].mxu0
        %v3479 = vpop.f32.mrb[0].mxu0
        %v3480 = vadd.f32 %v3322, %v3479
        %v3481 = vpop.f32.mrb[0].mxu0
        %3482 = vmatprep.mubr.bf16.mxu0 %v3397
        %3483 = vmatmul.mubr.bf16.gmra.mrb[0].mxu0 %v3295
        %v3484 = vpop.f32.mrb[0].mxu0
        %v3485 = vadd.f32 %v3322, %v3484
        %v3486 = vpop.f32.mrb[0].mxu0
        %v3487 = vpop.f32.mrb[0].mxu0
        %v3488 = vadd.f32 %v3322, %v3487
        %v3489 = vpop.f32.mrb[0].mxu0
        %3490 = vmatprep.mubr.bf16.mxu0 %v3400
        %3491 = vmatmul.mubr.bf16.gmra.mrb[0].mxu0 %v3297
        %v3492 = vpop.f32.mrb[0].mxu0
        %v3493 = vadd.f32 %v3322, %v3492
        %v3494 = vpop.f32.mrb[0].mxu0
        %v3495 = vpop.f32.mrb[0].mxu0
        %v3496 = vadd.f32 %v3322, %v3495
        %v3497 = vpop.f32.mrb[0].mxu0
        %3498 = vdwg.mxu0
        %v3499 = vmax.f32 %v3437, 0.0
        %v3500 = vmax.f32 %v3440, 0.0
        %v3501 = vmax.f32 %v3445, 0.0
        %v3502 = vmax.f32 %v3448, 0.0
        %v3503 = vmax.f32 %v3453, 0.0
        %v3504 = vmax.f32 %v3456, 0.0
        %v3505 = vmax.f32 %v3461, 0.0
        %v3506 = vmax.f32 %v3464, 0.0
        %v3507 = vmax.f32 %v3469, 0.0
        %v3508 = vmax.f32 %v3472, 0.0
        %v3509 = vmax.f32 %v3477, 0.0
        %v3510 = vmax.f32 %v3480, 0.0
        %v3511 = vmax.f32 %v3485, 0.0
        %v3512 = vmax.f32 %v3488, 0.0
        %v3513 = vmax.f32 %v3493, 0.0
        %v3514 = vmax.f32 %v3496, 0.0
        %v3515 = vpack.c.bf16 %v3500, %v3499
        %v3516 = vpack.c.bf16 %v3502, %v3501
        %v3517 = vpack.c.bf16 %v3504, %v3503
        %v3518 = vpack.c.bf16 %v3506, %v3505
        %v3519 = vpack.c.bf16 %v3508, %v3507
        %v3520 = vpack.c.bf16 %v3510, %v3509
        %v3521 = vpack.c.bf16 %v3512, %v3511
        %v3522 = vpack.c.bf16 %v3514, %v3513
        %v3523 = vld [vmem:[%s404] sm:$0xf]
        %v3524 = vld [vmem:[%s404 + $0x4] sm:$0xf]
        %v3525 = vld [vmem:[%s407] sm:$0x1]
        %v3527 = vlaneseq
        %v3528 = vshrl.u32 %v3527, 7
        %v3529 = vsub.s32 0, %v3528
        %v3530 = vrot.slane %v3525, %v3529
        %v3534 = vunpack.c.l.b16 %v3523
        %v3535 = vunpack.c.l.b16 %v3524
        %v3536 = vpack.c.b16 %v3535, %v3534
        %v3539 = vsel %vm422, %v3515, 0
        %v3542 = vsel %vm422, %v3516, 0
        %v3545 = vsel %vm422, %v3517, 0
        %v3548 = vsel %vm422, %v3518, 0
        %v3551 = vsel %vm422, %v3519, 0
        %v3554 = vsel %vm422, %v3520, 0
        %v3557 = vsel %vm422, %v3521, 0
        %v3560 = vsel %vm422, %v3522, 0
        %3562 = vmatprep.subr.bf16.mxu0 0
        %3563 = vmatpush1.bf16.msra.mxu0 %v3536
        %3564 = vmatprep.subr.bf16.mxu0 0
        %3565 = vmatpush1.bf16.msra.mxu0 0
        %3566 = vmatprep.subr.bf16.mxu0 0
        %3567 = vmatpush1.bf16.msra.mxu0 0
        %3568 = vmatprep.subr.bf16.mxu0 0
        %3569 = vmatpush1.bf16.msra.mxu0 0
        %3570 = vmatprep.subr.bf16.mxu0 0
        %3571 = vmatpush1.bf16.msra.mxu0 0
        %3572 = vmatprep.subr.bf16.mxu0 0
        %3573 = vmatpush1.bf16.msra.mxu0 0
        %3574 = vmatprep.subr.bf16.mxu0 0
        %3575 = vmatpush1.bf16.msra.mxu0 0
        %3576 = vmatprep.subr.bf16.mxu0 0
        %3577 = vmatpush1.bf16.msra.mxu0 0
        %3578 = vmatprep.subr.bf16.mxu0 0
        %3579 = vmatpush1.bf16.msra.mxu0 0
        %3580 = vmatprep.subr.bf16.mxu0 0
        %3581 = vmatpush1.bf16.msra.mxu0 0
        %3582 = vmatprep.subr.bf16.mxu0 0
        %3583 = vmatpush1.bf16.msra.mxu0 0
        %3584 = vmatprep.subr.bf16.mxu0 0
        %3585 = vmatpush1.bf16.msra.mxu0 0
        %3586 = vmatprep.subr.bf16.mxu0 0
        %3587 = vmatpush1.bf16.msra.mxu0 0
        %3588 = vmatprep.subr.bf16.mxu0 0
        %3589 = vmatpush1.bf16.msra.mxu0 0
        %3590 = vmatprep.subr.bf16.mxu0 0
        %3591 = vmatpush1.bf16.msra.mxu0 0
        %3592 = vmatprep.subr.bf16.mxu0 0
        %3593 = vmatpush1.bf16.msra.mxu0 0
        %3594 = vmatprep.mubr.bf16.mxu0 0
        %3595 = vmatmul.mubr.bf16.gmra.mrb[0].mxu0 %v3539
        %v3596 = vpop.f32.mrb[0].mxu0
        %v3597 = vadd.f32 %v3530, %v3596
        %v3598 = vpop.f32.mrb[0].mxu0
        %v3599 = vpop.f32.mrb[0].mxu0
        %v3600 = vadd.f32 %v3530, %v3599
        %v3601 = vpop.f32.mrb[0].mxu0
        %3602 = vmatprep.mubr.bf16.mxu0 0
        %3603 = vmatmul.mubr.bf16.gmra.mrb[0].mxu0 %v3542
        %v3604 = vpop.f32.mrb[0].mxu0
        %v3605 = vadd.f32 %v3530, %v3604
        %v3606 = vpop.f32.mrb[0].mxu0
        %v3607 = vpop.f32.mrb[0].mxu0
        %v3608 = vadd.f32 %v3530, %v3607
        %v3609 = vpop.f32.mrb[0].mxu0
        %3610 = vmatprep.mubr.bf16.mxu0 0
        %3611 = vmatmul.mubr.bf16.gmra.mrb[0].mxu0 %v3545
        %v3612 = vpop.f32.mrb[0].mxu0
        %v3613 = vadd.f32 %v3530, %v3612
        %v3614 = vpop.f32.mrb[0].mxu0
        %v3615 = vpop.f32.mrb[0].mxu0
        %v3616 = vadd.f32 %v3530, %v3615
        %v3617 = vpop.f32.mrb[0].mxu0
        %3618 = vmatprep.mubr.bf16.mxu0 0
        %3619 = vmatmul.mubr.bf16.gmra.mrb[0].mxu0 %v3548
        %v3620 = vpop.f32.mrb[0].mxu0
        %v3621 = vadd.f32 %v3530, %v3620
        %v3622 = vpop.f32.mrb[0].mxu0
        %v3623 = vpop.f32.mrb[0].mxu0
        %v3624 = vadd.f32 %v3530, %v3623
        %v3625 = vpop.f32.mrb[0].mxu0
        %3626 = vmatprep.mubr.bf16.mxu0 0
        %3627 = vmatmul.mubr.bf16.gmra.mrb[0].mxu0 %v3551
        %v3628 = vpop.f32.mrb[0].mxu0
        %v3629 = vadd.f32 %v3530, %v3628
        %v3630 = vpop.f32.mrb[0].mxu0
        %v3631 = vpop.f32.mrb[0].mxu0
        %v3632 = vadd.f32 %v3530, %v3631
        %v3633 = vpop.f32.mrb[0].mxu0
        %3634 = vmatprep.mubr.bf16.mxu0 0
        %3635 = vmatmul.mubr.bf16.gmra.mrb[0].mxu0 %v3554
        %v3636 = vpop.f32.mrb[0].mxu0
        %v3637 = vadd.f32 %v3530, %v3636
        %v3638 = vpop.f32.mrb[0].mxu0
        %v3639 = vpop.f32.mrb[0].mxu0
        %v3640 = vadd.f32 %v3530, %v3639
        %v3641 = vpop.f32.mrb[0].mxu0
        %3642 = vmatprep.mubr.bf16.mxu0 0
        %3643 = vmatmul.mubr.bf16.gmra.mrb[0].mxu0 %v3557
        %v3644 = vpop.f32.mrb[0].mxu0
        %v3645 = vadd.f32 %v3530, %v3644
        %v3646 = vpop.f32.mrb[0].mxu0
        %v3647 = vpop.f32.mrb[0].mxu0
        %v3648 = vadd.f32 %v3530, %v3647
        %v3649 = vpop.f32.mrb[0].mxu0
        %3650 = vmatprep.mubr.bf16.mxu0 0
        %3651 = vmatmul.mubr.bf16.gmra.mrb[0].mxu0 %v3560
        %v3652 = vpop.f32.mrb[0].mxu0
        %v3653 = vadd.f32 %v3530, %v3652
        %v3654 = vpop.f32.mrb[0].mxu0
        %v3655 = vpop.f32.mrb[0].mxu0
        %v3656 = vadd.f32 %v3530, %v3655
        %v3657 = vpop.f32.mrb[0].mxu0
        %3658 = vdwg.mxu0
        %v3659 = vmax.f32 %v3597, 0.0
        %v3660 = vmax.f32 %v3600, 0.0
        %v3661 = vmax.f32 %v3605, 0.0
        %v3662 = vmax.f32 %v3608, 0.0
        %v3663 = vmax.f32 %v3613, 0.0
        %v3664 = vmax.f32 %v3616, 0.0
        %v3665 = vmax.f32 %v3621, 0.0
        %v3666 = vmax.f32 %v3624, 0.0
        %v3667 = vmax.f32 %v3629, 0.0
        %v3668 = vmax.f32 %v3632, 0.0
        %v3669 = vmax.f32 %v3637, 0.0
        %v3670 = vmax.f32 %v3640, 0.0
        %v3671 = vmax.f32 %v3645, 0.0
        %v3672 = vmax.f32 %v3648, 0.0
        %v3673 = vmax.f32 %v3653, 0.0
        %v3674 = vmax.f32 %v3656, 0.0
        %v3675 = vpack.c.bf16 %v3660, %v3659
        %v3676 = vpack.c.bf16 %v3662, %v3661
        %v3677 = vpack.c.bf16 %v3664, %v3663
        %v3678 = vpack.c.bf16 %v3666, %v3665
        %v3679 = vpack.c.bf16 %v3668, %v3667
        %v3680 = vpack.c.bf16 %v3670, %v3669
        %v3681 = vpack.c.bf16 %v3672, %v3671
        %v3682 = vpack.c.bf16 %v3674, %v3673
        %v3691 = vunpack.c.l.b16 %v3675
        %v3692 = vunpack.c.h.b16 %v3675
        %v3693 = vunpack.c.l.b16 %v3676
        %v3694 = vunpack.c.h.b16 %v3676
        %v3695 = vunpack.c.l.b16 %v3677
        %v3696 = vunpack.c.h.b16 %v3677
        %v3697 = vunpack.c.l.b16 %v3678
        %v3698 = vunpack.c.h.b16 %v3678
        %v3699 = vunpack.c.l.b16 %v3679
        %v3700 = vunpack.c.h.b16 %v3679
        %v3701 = vunpack.c.l.b16 %v3680
        %v3702 = vunpack.c.h.b16 %v3680
        %v3703 = vunpack.c.l.b16 %v3681
        %v3704 = vunpack.c.h.b16 %v3681
        %v3705 = vunpack.c.l.b16 %v3682
        %v3706 = vunpack.c.h.b16 %v3682
        %v3707 = vpack.c.b16 %v3691, %v3691
        %v3708 = vpack.c.b16 %v3692, %v3692
        %v3709 = vpack.c.b16 %v3693, %v3693
        %v3710 = vpack.c.b16 %v3694, %v3694
        %v3711 = vpack.c.b16 %v3695, %v3695
        %v3712 = vpack.c.b16 %v3696, %v3696
        %v3713 = vpack.c.b16 %v3697, %v3697
        %v3714 = vpack.c.b16 %v3698, %v3698
        %v3715 = vpack.c.b16 %v3699, %v3699
        %v3716 = vpack.c.b16 %v3700, %v3700
        %v3717 = vpack.c.b16 %v3701, %v3701
        %v3718 = vpack.c.b16 %v3702, %v3702
        %v3719 = vpack.c.b16 %v3703, %v3703
        %v3720 = vpack.c.b16 %v3704, %v3704
        %v3721 = vpack.c.b16 %v3705, %v3705
        %v3722 = vpack.c.b16 %v3706, %v3706
        %vm3739 = vcmask 257024
        %3740 = vst.msk [vmem:[%s416] sm:$0xf] %vm3739, %v3707
        %3741 = vst.msk [vmem:[%s416 + $0x4] sm:$0xf] %vm3739, %v3708
        %3742 = vst.msk [vmem:[%s416 + $0x8] sm:$0xf] %vm3739, %v3709
        %3743 = vst.msk [vmem:[%s416 + $0xc] sm:$0xf] %vm3739, %v3710
        %3744 = vst.msk [vmem:[%s416 + $0x10] sm:$0xf] %vm3739, %v3711
        %3745 = vst.msk [vmem:[%s416 + $0x14] sm:$0xf] %vm3739, %v3712
        %3746 = vst.msk [vmem:[%s416 + $0x18] sm:$0xf] %vm3739, %v3713
        %3747 = vst.msk [vmem:[%s416 + $0x1c] sm:$0xf] %vm3739, %v3714
        %3748 = vst.msk [vmem:[%s416 + $0x20] sm:$0xf] %vm3739, %v3715
        %3749 = vst.msk [vmem:[%s416 + $0x24] sm:$0xf] %vm3739, %v3716
        %3750 = vst.msk [vmem:[%s416 + $0x28] sm:$0xf] %vm3739, %v3717
        %3751 = vst.msk [vmem:[%s416 + $0x2c] sm:$0xf] %vm3739, %v3718
        %3752 = vst.msk [vmem:[%s416 + $0x30] sm:$0xf] %vm3739, %v3719
        %3753 = vst.msk [vmem:[%s416 + $0x34] sm:$0xf] %vm3739, %v3720
        %3754 = vst.msk [vmem:[%s416 + $0x38] sm:$0xf] %vm3739, %v3721
        %3755 = vst.msk [vmem:[%s416 + $0x3c] sm:$0xf] %vm3739, %v3722
      $region52: #{easpp_forward.4} parent=47 // pred_fallthru
        _
      %p3756 = scmp.eq.s32.totalorder %s22, 1
      // Predicated region
      $region53: #{easpp_forward.4} parent=47 // pred_check
        %p3757 = pneg %p3756
      $region54: #{easpp_forward.4} parent=47 // pred_check_branch
        %3759 = sbr.rel (%p3757) target = $region56
      $region55: #{easpp_forward.4} parent=47 // pred_region
        %v3760 = vld [vmem:[%s383] sm:$0xf]
        %v3761 = vld [vmem:[%s383 + $0x4] sm:$0xf]
        %v3762 = vld [vmem:[%s383 + $0x8] sm:$0xf]
        %v3763 = vld [vmem:[%s383 + $0xc] sm:$0xf]
        %v3764 = vld [vmem:[%s383 + $0x10] sm:$0xf]
        %v3765 = vld [vmem:[%s383 + $0x14] sm:$0xf]
        %v3766 = vld [vmem:[%s383 + $0x18] sm:$0xf]
        %v3767 = vld [vmem:[%s383 + $0x1c] sm:$0xf]
        %v3768 = vld [vmem:[%s383 + $0x20] sm:$0xf]
        %v3769 = vld [vmem:[%s383 + $0x24] sm:$0xf]
        %v3770 = vld [vmem:[%s383 + $0x28] sm:$0xf]
        %v3771 = vld [vmem:[%s383 + $0x2c] sm:$0xf]
        %v3772 = vld [vmem:[%s383 + $0x30] sm:$0xf]
        %v3773 = vld [vmem:[%s383 + $0x34] sm:$0xf]
        %v3774 = vld [vmem:[%s383 + $0x38] sm:$0xf]
        %v3775 = vld [vmem:[%s383 + $0x3c] sm:$0xf]
        %v3792 = vunpack.c.l.b16 %v3760
        %v3793 = vunpack.c.l.b16 %v3761
        %v3794 = vunpack.c.l.b16 %v3762
        %v3795 = vunpack.c.l.b16 %v3763
        %v3796 = vunpack.c.l.b16 %v3764
        %v3797 = vunpack.c.l.b16 %v3765
        %v3798 = vunpack.c.l.b16 %v3766
        %v3799 = vunpack.c.l.b16 %v3767
        %v3800 = vunpack.c.l.b16 %v3768
        %v3801 = vunpack.c.l.b16 %v3769
        %v3802 = vunpack.c.l.b16 %v3770
        %v3803 = vunpack.c.l.b16 %v3771
        %v3804 = vunpack.c.l.b16 %v3772
        %v3805 = vunpack.c.l.b16 %v3773
        %v3806 = vunpack.c.l.b16 %v3774
        %v3807 = vunpack.c.l.b16 %v3775
        %v3808 = vpack.c.b16 %v3793, %v3792
        %v3809 = vpack.c.b16 %v3795, %v3794
        %v3810 = vpack.c.b16 %v3797, %v3796
        %v3811 = vpack.c.b16 %v3799, %v3798
        %v3812 = vpack.c.b16 %v3801, %v3800
        %v3813 = vpack.c.b16 %v3803, %v3802
        %v3814 = vpack.c.b16 %v3805, %v3804
        %v3815 = vpack.c.b16 %v3807, %v3806
        %s3824 = scalar_lea.vmem [#allocation2], 288
        %vm3825 = vcmask 130048
        %3826 = vst.msk [vmem:[%s3824 + $0x8] sm:$0xff] %vm3825, %v3808
        %3827 = vst.msk [vmem:[%s3824 + $0x20] sm:$0xff] %vm3825, %v3809
        %3828 = vst.msk [vmem:[%s3824 + $0x38] sm:$0xff] %vm3825, %v3810
        %3829 = vst.msk [vmem:[%s3824 + $0x50] sm:$0xff] %vm3825, %v3811
        %3830 = vst.msk [vmem:[%s3824 + $0x68] sm:$0xff] %vm3825, %v3812
        %3831 = vst.msk [vmem:[%s3824 + $0x80] sm:$0xff] %vm3825, %v3813
        %3832 = vst.msk [vmem:[%s3824 + $0x98] sm:$0xff] %vm3825, %v3814
        %3833 = vst.msk [vmem:[%s3824 + $0xb0] sm:$0xff] %vm3825, %v3815
        %s3834 = scalar_lea.vmem [#allocation2], 144
        %v3835 = vld [vmem:[%s3834] sm:$0xe0]
        %v3836 = vld [vmem:[%s3834 + $0x8] sm:$0x1f]
        %v3837 = vld [vmem:[%s3834 + $0x18] sm:$0xe0]
        %v3838 = vld [vmem:[%s3834 + $0x20] sm:$0x1f]
        %v3839 = vld [vmem:[%s3834 + $0x30] sm:$0xe0]
        %v3840 = vld [vmem:[%s3834 + $0x38] sm:$0x1f]
        %v3841 = vld [vmem:[%s3834 + $0x48] sm:$0xe0]
        %v3842 = vld [vmem:[%s3834 + $0x50] sm:$0x1f]
        %v3843 = vld [vmem:[%s3834 + $0x60] sm:$0xe0]
        %v3844 = vld [vmem:[%s3834 + $0x68] sm:$0x1f]
        %v3845 = vld [vmem:[%s3834 + $0x78] sm:$0xe0]
        %v3846 = vld [vmem:[%s3834 + $0x80] sm:$0x1f]
        %v3847 = vld [vmem:[%s3834 + $0x90] sm:$0xe0]
        %v3848 = vld [vmem:[%s3834 + $0x98] sm:$0x1f]
        %v3849 = vld [vmem:[%s3834 + $0xa8] sm:$0xe0]
        %v3850 = vld [vmem:[%s3834 + $0xb0] sm:$0x1f]
        %vm3867 = vcmask 1042432
        %v3868 = vrot.slane %v3835, 5
        %v3869 = vrot.slane %v3836, 5
        %v3870 = vsel %vm3867, %v3868, %v3869
        %v3871 = vrot.slane %v3837, 5
        %v3872 = vrot.slane %v3838, 5
        %v3873 = vsel %vm3867, %v3871, %v3872
        %v3874 = vrot.slane %v3839, 5
        %v3875 = vrot.slane %v3840, 5
        %v3876 = vsel %vm3867, %v3874, %v3875
        %v3877 = vrot.slane %v3841, 5
        %v3878 = vrot.slane %v3842, 5
        %v3879 = vsel %vm3867, %v3877, %v3878
        %v3880 = vrot.slane %v3843, 5
        %v3881 = vrot.slane %v3844, 5
        %v3882 = vsel %vm3867, %v3880, %v3881
        %v3883 = vrot.slane %v3845, 5
        %v3884 = vrot.slane %v3846, 5
        %v3885 = vsel %vm3867, %v3883, %v3884
        %v3886 = vrot.slane %v3847, 5
        %v3887 = vrot.slane %v3848, 5
        %v3888 = vsel %vm3867, %v3886, %v3887
        %v3889 = vrot.slane %v3849, 5
        %v3890 = vrot.slane %v3850, 5
        %v3891 = vsel %vm3867, %v3889, %v3890
        %3900 = vst.msk [vmem:[#allocation3] sm:$0xff] %vm3825, %v3870
        %3901 = vst.msk [vmem:[#allocation3 + $0x10] sm:$0xff] %vm3825, %v3873
        %3902 = vst.msk [vmem:[#allocation3 + $0x20] sm:$0xff] %vm3825, %v3876
        %3903 = vst.msk [vmem:[#allocation3 + $0x30] sm:$0xff] %vm3825, %v3879
        %3904 = vst.msk [vmem:[#allocation3 + $0x40] sm:$0xff] %vm3825, %v3882
        %3905 = vst.msk [vmem:[#allocation3 + $0x50] sm:$0xff] %vm3825, %v3885
        %3906 = vst.msk [vmem:[#allocation3 + $0x60] sm:$0xff] %vm3825, %v3888
        %3907 = vst.msk [vmem:[#allocation3 + $0x70] sm:$0xff] %vm3825, %v3891
        %v3908 = vld [vmem:[%s3834 + $0x8] sm:$0xff]
        %v3909 = vld [vmem:[%s3834 + $0x20] sm:$0xff]
        %v3910 = vld [vmem:[%s3834 + $0x38] sm:$0xff]
        %v3911 = vld [vmem:[%s3834 + $0x50] sm:$0xff]
        %v3912 = vld [vmem:[%s3834 + $0x68] sm:$0xff]
        %v3913 = vld [vmem:[%s3834 + $0x80] sm:$0xff]
        %v3914 = vld [vmem:[%s3834 + $0x98] sm:$0xff]
        %v3915 = vld [vmem:[%s3834 + $0xb0] sm:$0xff]
        %3924 = vrot.lane.b32.xlu0 %v3908, 16
        %v3925 = vpop.permute.xlu0 %3924
        %3926 = vrot.lane.b32.xlu0 %v3909, 16
        %v3927 = vpop.permute.xlu0 %3926
        %3928 = vrot.lane.b32.xlu0 %v3910, 16
        %v3929 = vpop.permute.xlu0 %3928
        %3930 = vrot.lane.b32.xlu0 %v3911, 16
        %v3931 = vpop.permute.xlu0 %3930
        %3932 = vrot.lane.b32.xlu0 %v3912, 16
        %v3933 = vpop.permute.xlu0 %3932
        %3934 = vrot.lane.b32.xlu0 %v3913, 16
        %v3935 = vpop.permute.xlu0 %3934
        %3936 = vrot.lane.b32.xlu0 %v3914, 16
        %v3937 = vpop.permute.xlu0 %3936
        %3938 = vrot.lane.b32.xlu0 %v3915, 16
        %v3939 = vpop.permute.xlu0 %3938
        %vm3948 = vcmask 261248
        %3949 = vst.msk [vmem:[#allocation3] sm:$0xff] %vm3948, %v3925
        %3950 = vst.msk [vmem:[#allocation3 + $0x10] sm:$0xff] %vm3948, %v3927
        %3951 = vst.msk [vmem:[#allocation3 + $0x20] sm:$0xff] %vm3948, %v3929
        %3952 = vst.msk [vmem:[#allocation3 + $0x30] sm:$0xff] %vm3948, %v3931
        %3953 = vst.msk [vmem:[#allocation3 + $0x40] sm:$0xff] %vm3948, %v3933
        %3954 = vst.msk [vmem:[#allocation3 + $0x50] sm:$0xff] %vm3948, %v3935
        %3955 = vst.msk [vmem:[#allocation3 + $0x60] sm:$0xff] %vm3948, %v3937
        %3956 = vst.msk [vmem:[#allocation3 + $0x70] sm:$0xff] %vm3948, %v3939
        %v3957 = vld [vmem:[%s3834 + $0x8] sm:$0xf8]
        %v3958 = vld [vmem:[%s3834 + $0x10] sm:$0x7]
        %v3959 = vld [vmem:[%s3834 + $0x20] sm:$0xf8]
        %v3960 = vld [vmem:[%s3834 + $0x28] sm:$0x7]
        %v3961 = vld [vmem:[%s3834 + $0x38] sm:$0xf8]
        %v3962 = vld [vmem:[%s3834 + $0x40] sm:$0x7]
        %v3963 = vld [vmem:[%s3834 + $0x50] sm:$0xf8]
        %v3964 = vld [vmem:[%s3834 + $0x58] sm:$0x7]
        %v3965 = vld [vmem:[%s3834 + $0x68] sm:$0xf8]
        %v3966 = vld [vmem:[%s3834 + $0x70] sm:$0x7]
        %v3967 = vld [vmem:[%s3834 + $0x80] sm:$0xf8]
        %v3968 = vld [vmem:[%s3834 + $0x88] sm:$0x7]
        %v3969 = vld [vmem:[%s3834 + $0x98] sm:$0xf8]
        %v3970 = vld [vmem:[%s3834 + $0xa0] sm:$0x7]
        %v3971 = vld [vmem:[%s3834 + $0xb0] sm:$0xf8]
        %v3972 = vld [vmem:[%s3834 + $0xb8] sm:$0x7]
        %vm3989 = vcmask 1044480
        %v3990 = vrot.slane %v3957, 3
        %v3991 = vrot.slane %v3958, 3
        %v3992 = vsel %vm3989, %v3990, %v3991
        %v3993 = vrot.slane %v3959, 3
        %v3994 = vrot.slane %v3960, 3
        %v3995 = vsel %vm3989, %v3993, %v3994
        %v3996 = vrot.slane %v3961, 3
        %v3997 = vrot.slane %v3962, 3
        %v3998 = vsel %vm3989, %v3996, %v3997
        %v3999 = vrot.slane %v3963, 3
        %v4000 = vrot.slane %v3964, 3
        %v4001 = vsel %vm3989, %v3999, %v4000
        %v4002 = vrot.slane %v3965, 3
        %v4003 = vrot.slane %v3966, 3
        %v4004 = vsel %vm3989, %v4002, %v4003
        %v4005 = vrot.slane %v3967, 3
        %v4006 = vrot.slane %v3968, 3
        %v4007 = vsel %vm3989, %v4005, %v4006
        %v4008 = vrot.slane %v3969, 3
        %v4009 = vrot.slane %v3970, 3
        %v4010 = vsel %vm3989, %v4008, %v4009
        %v4011 = vrot.slane %v3971, 3
        %v4012 = vrot.slane %v3972, 3
        %v4013 = vsel %vm3989, %v4011, %v4012
        %4014 = vrot.lane.b32.xlu0 %v3992, 32
        %v4015 = vpop.permute.xlu0 %4014
        %4016 = vrot.lane.b32.xlu0 %v3995, 32
        %v4017 = vpop.permute.xlu0 %4016
        %4018 = vrot.lane.b32.xlu0 %v3998, 32
        %v4019 = vpop.permute.xlu0 %4018
        %4020 = vrot.lane.b32.xlu0 %v4001, 32
        %v4021 = vpop.permute.xlu0 %4020
        %4022 = vrot.lane.b32.xlu0 %v4004, 32
        %v4023 = vpop.permute.xlu0 %4022
        %4024 = vrot.lane.b32.xlu0 %v4007, 32
        %v4025 = vpop.permute.xlu0 %4024
        %4026 = vrot.lane.b32.xlu0 %v4010, 32
        %v4027 = vpop.permute.xlu0 %4026
        %4028 = vrot.lane.b32.xlu0 %v4013, 32
        %v4029 = vpop.permute.xlu0 %4028
        %vm4038 = vcmask 392448
        %4039 = vst.msk [vmem:[#allocation3] sm:$0xff] %vm4038, %v4015
        %4040 = vst.msk [vmem:[#allocation3 + $0x10] sm:$0xff] %vm4038, %v4017
        %4041 = vst.msk [vmem:[#allocation3 + $0x20] sm:$0xff] %vm4038, %v4019
        %4042 = vst.msk [vmem:[#allocation3 + $0x30] sm:$0xff] %vm4038, %v4021
        %4043 = vst.msk [vmem:[#allocation3 + $0x40] sm:$0xff] %vm4038, %v4023
        %4044 = vst.msk [vmem:[#allocation3 + $0x50] sm:$0xff] %vm4038, %v4025
        %4045 = vst.msk [vmem:[#allocation3 + $0x60] sm:$0xff] %vm4038, %v4027
        %4046 = vst.msk [vmem:[#allocation3 + $0x70] sm:$0xff] %vm4038, %v4029
        %v4047 = vld [vmem:[%s3824] sm:$0xe0]
        %v4048 = vld [vmem:[%s3824 + $0x8] sm:$0x1f]
        %v4049 = vld [vmem:[%s3824 + $0x18] sm:$0xe0]
        %v4050 = vld [vmem:[%s3824 + $0x20] sm:$0x1f]
        %v4051 = vld [vmem:[%s3824 + $0x30] sm:$0xe0]
        %v4052 = vld [vmem:[%s3824 + $0x38] sm:$0x1f]
        %v4053 = vld [vmem:[%s3824 + $0x48] sm:$0xe0]
        %v4054 = vld [vmem:[%s3824 + $0x50] sm:$0x1f]
        %v4055 = vld [vmem:[%s3824 + $0x60] sm:$0xe0]
        %v4056 = vld [vmem:[%s3824 + $0x68] sm:$0x1f]
        %v4057 = vld [vmem:[%s3824 + $0x78] sm:$0xe0]
        %v4058 = vld [vmem:[%s3824 + $0x80] sm:$0x1f]
        %v4059 = vld [vmem:[%s3824 + $0x90] sm:$0xe0]
        %v4060 = vld [vmem:[%s3824 + $0x98] sm:$0x1f]
        %v4061 = vld [vmem:[%s3824 + $0xa8] sm:$0xe0]
        %v4062 = vld [vmem:[%s3824 + $0xb0] sm:$0x1f]
        %v4079 = vrot.slane %v4047, 5
        %v4080 = vrot.slane %v4048, 5
        %v4081 = vsel %vm3867, %v4079, %v4080
        %v4082 = vrot.slane %v4049, 5
        %v4083 = vrot.slane %v4050, 5
        %v4084 = vsel %vm3867, %v4082, %v4083
        %v4085 = vrot.slane %v4051, 5
        %v4086 = vrot.slane %v4052, 5
        %v4087 = vsel %vm3867, %v4085, %v4086
        %v4088 = vrot.slane %v4053, 5
        %v4089 = vrot.slane %v4054, 5
        %v4090 = vsel %vm3867, %v4088, %v4089
        %v4091 = vrot.slane %v4055, 5
        %v4092 = vrot.slane %v4056, 5
        %v4093 = vsel %vm3867, %v4091, %v4092
        %v4094 = vrot.slane %v4057, 5
        %v4095 = vrot.slane %v4058, 5
        %v4096 = vsel %vm3867, %v4094, %v4095
        %v4097 = vrot.slane %v4059, 5
        %v4098 = vrot.slane %v4060, 5
        %v4099 = vsel %vm3867, %v4097, %v4098
        %v4100 = vrot.slane %v4061, 5
        %v4101 = vrot.slane %v4062, 5
        %v4102 = vsel %vm3867, %v4100, %v4101
        %4103 = vrot.lane.b32.xlu0 %v4081, 48
        %v4104 = vpop.permute.xlu0 %4103
        %4105 = vrot.lane.b32.xlu0 %v4084, 48
        %v4106 = vpop.permute.xlu0 %4105
        %4107 = vrot.lane.b32.xlu0 %v4087, 48
        %v4108 = vpop.permute.xlu0 %4107
        %4109 = vrot.lane.b32.xlu0 %v4090, 48
        %v4110 = vpop.permute.xlu0 %4109
        %4111 = vrot.lane.b32.xlu0 %v4093, 48
        %v4112 = vpop.permute.xlu0 %4111
        %4113 = vrot.lane.b32.xlu0 %v4096, 48
        %v4114 = vpop.permute.xlu0 %4113
        %4115 = vrot.lane.b32.xlu0 %v4099, 48
        %v4116 = vpop.permute.xlu0 %4115
        %4117 = vrot.lane.b32.xlu0 %v4102, 48
        %v4118 = vpop.permute.xlu0 %4117
        %vm4127 = vcmask 523648
        %4128 = vst.msk [vmem:[#allocation3] sm:$0xff] %vm4127, %v4104
        %4129 = vst.msk [vmem:[#allocation3 + $0x10] sm:$0xff] %vm4127, %v4106
        %4130 = vst.msk [vmem:[#allocation3 + $0x20] sm:$0xff] %vm4127, %v4108
        %4131 = vst.msk [vmem:[#allocation3 + $0x30] sm:$0xff] %vm4127, %v4110
        %4132 = vst.msk [vmem:[#allocation3 + $0x40] sm:$0xff] %vm4127, %v4112
        %4133 = vst.msk [vmem:[#allocation3 + $0x50] sm:$0xff] %vm4127, %v4114
        %4134 = vst.msk [vmem:[#allocation3 + $0x60] sm:$0xff] %vm4127, %v4116
        %4135 = vst.msk [vmem:[#allocation3 + $0x70] sm:$0xff] %vm4127, %v4118
        %v4136 = vld [vmem:[%s3824 + $0x8] sm:$0xff]
        %v4137 = vld [vmem:[%s3824 + $0x20] sm:$0xff]
        %v4138 = vld [vmem:[%s3824 + $0x38] sm:$0xff]
        %v4139 = vld [vmem:[%s3824 + $0x50] sm:$0xff]
        %v4140 = vld [vmem:[%s3824 + $0x68] sm:$0xff]
        %v4141 = vld [vmem:[%s3824 + $0x80] sm:$0xff]
        %v4142 = vld [vmem:[%s3824 + $0x98] sm:$0xff]
        %v4143 = vld [vmem:[%s3824 + $0xb0] sm:$0xff]
        %4152 = vrot.lane.b32.xlu0 %v4136, 64
        %v4153 = vpop.permute.xlu0 %4152
        %4154 = vrot.lane.b32.xlu0 %v4137, 64
        %v4155 = vpop.permute.xlu0 %4154
        %4156 = vrot.lane.b32.xlu0 %v4138, 64
        %v4157 = vpop.permute.xlu0 %4156
        %4158 = vrot.lane.b32.xlu0 %v4139, 64
        %v4159 = vpop.permute.xlu0 %4158
        %4160 = vrot.lane.b32.xlu0 %v4140, 64
        %v4161 = vpop.permute.xlu0 %4160
        %4162 = vrot.lane.b32.xlu0 %v4141, 64
        %v4163 = vpop.permute.xlu0 %4162
        %4164 = vrot.lane.b32.xlu0 %v4142, 64
        %v4165 = vpop.permute.xlu0 %4164
        %4166 = vrot.lane.b32.xlu0 %v4143, 64
        %v4167 = vpop.permute.xlu0 %4166
        %vm4176 = vcmask 654848
        %4177 = vst.msk [vmem:[#allocation3] sm:$0xff] %vm4176, %v4153
        %4178 = vst.msk [vmem:[#allocation3 + $0x10] sm:$0xff] %vm4176, %v4155
        %4179 = vst.msk [vmem:[#allocation3 + $0x20] sm:$0xff] %vm4176, %v4157
        %4180 = vst.msk [vmem:[#allocation3 + $0x30] sm:$0xff] %vm4176, %v4159
        %4181 = vst.msk [vmem:[#allocation3 + $0x40] sm:$0xff] %vm4176, %v4161
        %4182 = vst.msk [vmem:[#allocation3 + $0x50] sm:$0xff] %vm4176, %v4163
        %4183 = vst.msk [vmem:[#allocation3 + $0x60] sm:$0xff] %vm4176, %v4165
        %4184 = vst.msk [vmem:[#allocation3 + $0x70] sm:$0xff] %vm4176, %v4167
        %v4185 = vld [vmem:[%s3824 + $0x8] sm:$0xf8]
        %v4186 = vld [vmem:[%s3824 + $0x10] sm:$0x7]
        %v4187 = vld [vmem:[%s3824 + $0x20] sm:$0xf8]
        %v4188 = vld [vmem:[%s3824 + $0x28] sm:$0x7]
        %v4189 = vld [vmem:[%s3824 + $0x38] sm:$0xf8]
        %v4190 = vld [vmem:[%s3824 + $0x40] sm:$0x7]
        %v4191 = vld [vmem:[%s3824 + $0x50] sm:$0xf8]
        %v4192 = vld [vmem:[%s3824 + $0x58] sm:$0x7]
        %v4193 = vld [vmem:[%s3824 + $0x68] sm:$0xf8]
        %v4194 = vld [vmem:[%s3824 + $0x70] sm:$0x7]
        %v4195 = vld [vmem:[%s3824 + $0x80] sm:$0xf8]
        %v4196 = vld [vmem:[%s3824 + $0x88] sm:$0x7]
        %v4197 = vld [vmem:[%s3824 + $0x98] sm:$0xf8]
        %v4198 = vld [vmem:[%s3824 + $0xa0] sm:$0x7]
        %v4199 = vld [vmem:[%s3824 + $0xb0] sm:$0xf8]
        %v4200 = vld [vmem:[%s3824 + $0xb8] sm:$0x7]
        %v4217 = vrot.slane %v4185, 3
        %v4218 = vrot.slane %v4186, 3
        %v4219 = vsel %vm3989, %v4217, %v4218
        %v4220 = vrot.slane %v4187, 3
        %v4221 = vrot.slane %v4188, 3
        %v4222 = vsel %vm3989, %v4220, %v4221
        %v4223 = vrot.slane %v4189, 3
        %v4224 = vrot.slane %v4190, 3
        %v4225 = vsel %vm3989, %v4223, %v4224
        %v4226 = vrot.slane %v4191, 3
        %v4227 = vrot.slane %v4192, 3
        %v4228 = vsel %vm3989, %v4226, %v4227
        %v4229 = vrot.slane %v4193, 3
        %v4230 = vrot.slane %v4194, 3
        %v4231 = vsel %vm3989, %v4229, %v4230
        %v4232 = vrot.slane %v4195, 3
        %v4233 = vrot.slane %v4196, 3
        %v4234 = vsel %vm3989, %v4232, %v4233
        %v4235 = vrot.slane %v4197, 3
        %v4236 = vrot.slane %v4198, 3
        %v4237 = vsel %vm3989, %v4235, %v4236
        %v4238 = vrot.slane %v4199, 3
        %v4239 = vrot.slane %v4200, 3
        %v4240 = vsel %vm3989, %v4238, %v4239
        %4241 = vrot.lane.b32.xlu0 %v4219, 80
        %v4242 = vpop.permute.xlu0 %4241
        %4243 = vrot.lane.b32.xlu0 %v4222, 80
        %v4244 = vpop.permute.xlu0 %4243
        %4245 = vrot.lane.b32.xlu0 %v4225, 80
        %v4246 = vpop.permute.xlu0 %4245
        %4247 = vrot.lane.b32.xlu0 %v4228, 80
        %v4248 = vpop.permute.xlu0 %4247
        %4249 = vrot.lane.b32.xlu0 %v4231, 80
        %v4250 = vpop.permute.xlu0 %4249
        %4251 = vrot.lane.b32.xlu0 %v4234, 80
        %v4252 = vpop.permute.xlu0 %4251
        %4253 = vrot.lane.b32.xlu0 %v4237, 80
        %v4254 = vpop.permute.xlu0 %4253
        %4255 = vrot.lane.b32.xlu0 %v4240, 80
        %v4256 = vpop.permute.xlu0 %4255
        %vm4265 = vcmask 786048
        %4266 = vst.msk [vmem:[#allocation3] sm:$0xff] %vm4265, %v4242
        %4267 = vst.msk [vmem:[#allocation3 + $0x10] sm:$0xff] %vm4265, %v4244
        %4268 = vst.msk [vmem:[#allocation3 + $0x20] sm:$0xff] %vm4265, %v4246
        %4269 = vst.msk [vmem:[#allocation3 + $0x30] sm:$0xff] %vm4265, %v4248
        %4270 = vst.msk [vmem:[#allocation3 + $0x40] sm:$0xff] %vm4265, %v4250
        %4271 = vst.msk [vmem:[#allocation3 + $0x50] sm:$0xff] %vm4265, %v4252
        %4272 = vst.msk [vmem:[#allocation3 + $0x60] sm:$0xff] %vm4265, %v4254
        %4273 = vst.msk [vmem:[#allocation3 + $0x70] sm:$0xff] %vm4265, %v4256
        %s4274 = scalar_lea.vmem [#allocation2], 432
        %v4275 = vld [vmem:[%s4274] sm:$0xe0]
        %v4276 = vld [vmem:[%s4274 + $0x8] sm:$0x1f]
        %v4277 = vld [vmem:[%s4274 + $0x18] sm:$0xe0]
        %v4278 = vld [vmem:[%s4274 + $0x20] sm:$0x1f]
        %v4279 = vld [vmem:[%s4274 + $0x30] sm:$0xe0]
        %v4280 = vld [vmem:[%s4274 + $0x38] sm:$0x1f]
        %v4281 = vld [vmem:[%s4274 + $0x48] sm:$0xe0]
        %v4282 = vld [vmem:[%s4274 + $0x50] sm:$0x1f]
        %v4283 = vld [vmem:[%s4274 + $0x60] sm:$0xe0]
        %v4284 = vld [vmem:[%s4274 + $0x68] sm:$0x1f]
        %v4285 = vld [vmem:[%s4274 + $0x78] sm:$0xe0]
        %v4286 = vld [vmem:[%s4274 + $0x80] sm:$0x1f]
        %v4287 = vld [vmem:[%s4274 + $0x90] sm:$0xe0]
        %v4288 = vld [vmem:[%s4274 + $0x98] sm:$0x1f]
        %v4289 = vld [vmem:[%s4274 + $0xa8] sm:$0xe0]
        %v4290 = vld [vmem:[%s4274 + $0xb0] sm:$0x1f]
        %v4307 = vrot.slane %v4275, 5
        %v4308 = vrot.slane %v4276, 5
        %v4309 = vsel %vm3867, %v4307, %v4308
        %v4310 = vrot.slane %v4277, 5
        %v4311 = vrot.slane %v4278, 5
        %v4312 = vsel %vm3867, %v4310, %v4311
        %v4313 = vrot.slane %v4279, 5
        %v4314 = vrot.slane %v4280, 5
        %v4315 = vsel %vm3867, %v4313, %v4314
        %v4316 = vrot.slane %v4281, 5
        %v4317 = vrot.slane %v4282, 5
        %v4318 = vsel %vm3867, %v4316, %v4317
        %v4319 = vrot.slane %v4283, 5
        %v4320 = vrot.slane %v4284, 5
        %v4321 = vsel %vm3867, %v4319, %v4320
        %v4322 = vrot.slane %v4285, 5
        %v4323 = vrot.slane %v4286, 5
        %v4324 = vsel %vm3867, %v4322, %v4323
        %v4325 = vrot.slane %v4287, 5
        %v4326 = vrot.slane %v4288, 5
        %v4327 = vsel %vm3867, %v4325, %v4326
        %v4328 = vrot.slane %v4289, 5
        %v4329 = vrot.slane %v4290, 5
        %v4330 = vsel %vm3867, %v4328, %v4329
        %4331 = vrot.lane.b32.xlu0 %v4309, 96
        %v4332 = vpop.permute.xlu0 %4331
        %4333 = vrot.lane.b32.xlu0 %v4312, 96
        %v4334 = vpop.permute.xlu0 %4333
        %4335 = vrot.lane.b32.xlu0 %v4315, 96
        %v4336 = vpop.permute.xlu0 %4335
        %4337 = vrot.lane.b32.xlu0 %v4318, 96
        %v4338 = vpop.permute.xlu0 %4337
        %4339 = vrot.lane.b32.xlu0 %v4321, 96
        %v4340 = vpop.permute.xlu0 %4339
        %4341 = vrot.lane.b32.xlu0 %v4324, 96
        %v4342 = vpop.permute.xlu0 %4341
        %4343 = vrot.lane.b32.xlu0 %v4327, 96
        %v4344 = vpop.permute.xlu0 %4343
        %4345 = vrot.lane.b32.xlu0 %v4330, 96
        %v4346 = vpop.permute.xlu0 %4345
        %vm4355 = vcmask 917248
        %4356 = vst.msk [vmem:[#allocation3] sm:$0xff] %vm4355, %v4332
        %4357 = vst.msk [vmem:[#allocation3 + $0x10] sm:$0xff] %vm4355, %v4334
        %4358 = vst.msk [vmem:[#allocation3 + $0x20] sm:$0xff] %vm4355, %v4336
        %4359 = vst.msk [vmem:[#allocation3 + $0x30] sm:$0xff] %vm4355, %v4338
        %4360 = vst.msk [vmem:[#allocation3 + $0x40] sm:$0xff] %vm4355, %v4340
        %4361 = vst.msk [vmem:[#allocation3 + $0x50] sm:$0xff] %vm4355, %v4342
        %4362 = vst.msk [vmem:[#allocation3 + $0x60] sm:$0xff] %vm4355, %v4344
        %4363 = vst.msk [vmem:[#allocation3 + $0x70] sm:$0xff] %vm4355, %v4346
        %v4364 = vld [vmem:[%s4274 + $0x8] sm:$0xff]
        %v4365 = vld [vmem:[%s4274 + $0x20] sm:$0xff]
        %v4366 = vld [vmem:[%s4274 + $0x38] sm:$0xff]
        %v4367 = vld [vmem:[%s4274 + $0x50] sm:$0xff]
        %v4368 = vld [vmem:[%s4274 + $0x68] sm:$0xff]
        %v4369 = vld [vmem:[%s4274 + $0x80] sm:$0xff]
        %v4370 = vld [vmem:[%s4274 + $0x98] sm:$0xff]
        %v4371 = vld [vmem:[%s4274 + $0xb0] sm:$0xff]
        %4380 = vrot.lane.b32.xlu0 %v4364, 112
        %v4381 = vpop.permute.xlu0 %4380
        %4382 = vrot.lane.b32.xlu0 %v4365, 112
        %v4383 = vpop.permute.xlu0 %4382
        %4384 = vrot.lane.b32.xlu0 %v4366, 112
        %v4385 = vpop.permute.xlu0 %4384
        %4386 = vrot.lane.b32.xlu0 %v4367, 112
        %v4387 = vpop.permute.xlu0 %4386
        %4388 = vrot.lane.b32.xlu0 %v4368, 112
        %v4389 = vpop.permute.xlu0 %4388
        %4390 = vrot.lane.b32.xlu0 %v4369, 112
        %v4391 = vpop.permute.xlu0 %4390
        %4392 = vrot.lane.b32.xlu0 %v4370, 112
        %v4393 = vpop.permute.xlu0 %4392
        %4394 = vrot.lane.b32.xlu0 %v4371, 112
        %v4395 = vpop.permute.xlu0 %4394
        %vm4404 = vcmask 1048448
        %4405 = vst.msk [vmem:[#allocation3] sm:$0xff] %vm4404, %v4381
        %4406 = vst.msk [vmem:[#allocation3 + $0x10] sm:$0xff] %vm4404, %v4383
        %4407 = vst.msk [vmem:[#allocation3 + $0x20] sm:$0xff] %vm4404, %v4385
        %4408 = vst.msk [vmem:[#allocation3 + $0x30] sm:$0xff] %vm4404, %v4387
        %4409 = vst.msk [vmem:[#allocation3 + $0x40] sm:$0xff] %vm4404, %v4389
        %4410 = vst.msk [vmem:[#allocation3 + $0x50] sm:$0xff] %vm4404, %v4391
        %4411 = vst.msk [vmem:[#allocation3 + $0x60] sm:$0xff] %vm4404, %v4393
        %4412 = vst.msk [vmem:[#allocation3 + $0x70] sm:$0xff] %vm4404, %v4395
        %v4413 = vld [vmem:[%s4274 + $0x8] sm:$0xf8]
        %v4414 = vld [vmem:[%s4274 + $0x10] sm:$0x7]
        %v4415 = vld [vmem:[%s4274 + $0x20] sm:$0xf8]
        %v4416 = vld [vmem:[%s4274 + $0x28] sm:$0x7]
        %v4417 = vld [vmem:[%s4274 + $0x38] sm:$0xf8]
        %v4418 = vld [vmem:[%s4274 + $0x40] sm:$0x7]
        %v4419 = vld [vmem:[%s4274 + $0x50] sm:$0xf8]
        %v4420 = vld [vmem:[%s4274 + $0x58] sm:$0x7]
        %v4421 = vld [vmem:[%s4274 + $0x68] sm:$0xf8]
        %v4422 = vld [vmem:[%s4274 + $0x70] sm:$0x7]
        %v4423 = vld [vmem:[%s4274 + $0x80] sm:$0xf8]
        %v4424 = vld [vmem:[%s4274 + $0x88] sm:$0x7]
        %v4425 = vld [vmem:[%s4274 + $0x98] sm:$0xf8]
        %v4426 = vld [vmem:[%s4274 + $0xa0] sm:$0x7]
        %v4427 = vld [vmem:[%s4274 + $0xb0] sm:$0xf8]
        %v4428 = vld [vmem:[%s4274 + $0xb8] sm:$0x7]
        %v4445 = vrot.slane %v4413, 3
        %v4446 = vrot.slane %v4414, 3
        %v4447 = vsel %vm3989, %v4445, %v4446
        %v4448 = vrot.slane %v4415, 3
        %v4449 = vrot.slane %v4416, 3
        %v4450 = vsel %vm3989, %v4448, %v4449
        %v4451 = vrot.slane %v4417, 3
        %v4452 = vrot.slane %v4418, 3
        %v4453 = vsel %vm3989, %v4451, %v4452
        %v4454 = vrot.slane %v4419, 3
        %v4455 = vrot.slane %v4420, 3
        %v4456 = vsel %vm3989, %v4454, %v4455
        %v4457 = vrot.slane %v4421, 3
        %v4458 = vrot.slane %v4422, 3
        %v4459 = vsel %vm3989, %v4457, %v4458
        %v4460 = vrot.slane %v4423, 3
        %v4461 = vrot.slane %v4424, 3
        %v4462 = vsel %vm3989, %v4460, %v4461
        %v4463 = vrot.slane %v4425, 3
        %v4464 = vrot.slane %v4426, 3
        %v4465 = vsel %vm3989, %v4463, %v4464
        %v4466 = vrot.slane %v4427, 3
        %v4467 = vrot.slane %v4428, 3
        %v4468 = vsel %vm3989, %v4466, %v4467
        %4477 = vst.msk [vmem:[#allocation3 + $0x8] sm:$0xff] %vm3825, %v4447
        %4478 = vst.msk [vmem:[#allocation3 + $0x18] sm:$0xff] %vm3825, %v4450
        %4479 = vst.msk [vmem:[#allocation3 + $0x28] sm:$0xff] %vm3825, %v4453
        %4480 = vst.msk [vmem:[#allocation3 + $0x38] sm:$0xff] %vm3825, %v4456
        %4481 = vst.msk [vmem:[#allocation3 + $0x48] sm:$0xff] %vm3825, %v4459
        %4482 = vst.msk [vmem:[#allocation3 + $0x58] sm:$0xff] %vm3825, %v4462
        %4483 = vst.msk [vmem:[#allocation3 + $0x68] sm:$0xff] %vm3825, %v4465
        %4484 = vst.msk [vmem:[#allocation3 + $0x78] sm:$0xff] %vm3825, %v4468
        %v4485 = vld [vmem:[#allocation3] sm:$0xff]
        %v4486 = vld [vmem:[#allocation3 + $0x8] sm:$0xff]
        %v4487 = vld [vmem:[#allocation3 + $0x10] sm:$0xff]
        %v4488 = vld [vmem:[#allocation3 + $0x18] sm:$0xff]
        %v4489 = vld [vmem:[#allocation3 + $0x20] sm:$0xff]
        %v4490 = vld [vmem:[#allocation3 + $0x28] sm:$0xff]
        %v4491 = vld [vmem:[#allocation3 + $0x30] sm:$0xff]
        %v4492 = vld [vmem:[#allocation3 + $0x38] sm:$0xff]
        %v4493 = vld [vmem:[#allocation3 + $0x40] sm:$0xff]
        %v4494 = vld [vmem:[#allocation3 + $0x48] sm:$0xff]
        %v4495 = vld [vmem:[#allocation3 + $0x50] sm:$0xff]
        %v4496 = vld [vmem:[#allocation3 + $0x58] sm:$0xff]
        %v4497 = vld [vmem:[#allocation3 + $0x60] sm:$0xff]
        %v4498 = vld [vmem:[#allocation3 + $0x68] sm:$0xff]
        %v4499 = vld [vmem:[#allocation3 + $0x70] sm:$0xff]
        %v4500 = vld [vmem:[#allocation3 + $0x78] sm:$0xff]
        %v4501 = vld [vmem:[%s388] sm:$0xf]
        %v4502 = vld [vmem:[%s388 + $0x4] sm:$0xf]
        %v4503 = vld [vmem:[%s388 + $0x8] sm:$0xf]
        %v4504 = vld [vmem:[%s388 + $0xc] sm:$0xf]
        %v4505 = vld [vmem:[%s388 + $0x10] sm:$0xf]
        %v4506 = vld [vmem:[%s388 + $0x14] sm:$0xf]
        %v4507 = vld [vmem:[%s388 + $0x18] sm:$0xf]
        %v4508 = vld [vmem:[%s388 + $0x1c] sm:$0xf]
        %v4509 = vld [vmem:[%s388 + $0x20] sm:$0xf]
        %v4510 = vld [vmem:[%s388 + $0x24] sm:$0xf]
        %v4511 = vld [vmem:[%s388 + $0x28] sm:$0xf]
        %v4512 = vld [vmem:[%s388 + $0x2c] sm:$0xf]
        %v4513 = vld [vmem:[%s388 + $0x30] sm:$0xf]
        %v4514 = vld [vmem:[%s388 + $0x34] sm:$0xf]
        %v4515 = vld [vmem:[%s388 + $0x38] sm:$0xf]
        %v4516 = vld [vmem:[%s388 + $0x3c] sm:$0xf]
        %v4517 = vld [vmem:[%s388 + $0x40] sm:$0xf]
        %v4518 = vld [vmem:[%s388 + $0x44] sm:$0xf]
        %v4519 = vld [vmem:[%s391] sm:$0x1]
        %v4521 = vlaneseq
        %v4522 = vshrl.u32 %v4521, 7
        %v4523 = vsub.s32 0, %v4522
        %v4524 = vrot.slane %v4519, %v4523
        %v4544 = vunpack.c.l.b16 %v4501
        %v4545 = vunpack.c.l.b16 %v4502
        %v4546 = vunpack.c.l.b16 %v4503
        %v4547 = vunpack.c.l.b16 %v4504
        %v4548 = vunpack.c.l.b16 %v4505
        %v4549 = vunpack.c.l.b16 %v4506
        %v4550 = vunpack.c.l.b16 %v4507
        %v4551 = vunpack.c.l.b16 %v4508
        %v4552 = vunpack.c.l.b16 %v4509
        %v4553 = vunpack.c.l.b16 %v4510
        %v4554 = vunpack.c.l.b16 %v4511
        %v4555 = vunpack.c.l.b16 %v4512
        %v4556 = vunpack.c.l.b16 %v4513
        %v4557 = vunpack.c.l.b16 %v4514
        %v4558 = vunpack.c.l.b16 %v4515
        %v4559 = vunpack.c.l.b16 %v4516
        %v4560 = vunpack.c.l.b16 %v4517
        %v4561 = vunpack.c.l.b16 %v4518
        %v4562 = vpack.c.b16 %v4545, %v4544
        %v4563 = vpack.c.b16 %v4547, %v4546
        %v4564 = vpack.c.b16 %v4549, %v4548
        %v4565 = vpack.c.b16 %v4551, %v4550
        %v4566 = vpack.c.b16 %v4553, %v4552
        %v4567 = vpack.c.b16 %v4555, %v4554
        %v4568 = vpack.c.b16 %v4557, %v4556
        %v4569 = vpack.c.b16 %v4559, %v4558
        %v4570 = vpack.c.b16 %v4561, %v4560
        %v4581 = vsel %vm3825, %v4486, 0
        %v4584 = vsel %vm3825, %v4488, 0
        %v4587 = vsel %vm3825, %v4490, 0
        %v4590 = vsel %vm3825, %v4492, 0
        %v4593 = vsel %vm3825, %v4494, 0
        %v4596 = vsel %vm3825, %v4496, 0
        %v4599 = vsel %vm3825, %v4498, 0
        %v4602 = vsel %vm3825, %v4500, 0
        %4604 = vmatprep.subr.bf16.mxu0 0
        %4605 = vmatpush1.bf16.msra.mxu0 %v4562
        %4606 = vmatprep.subr.bf16.mxu0 0
        %4607 = vmatpush1.bf16.msra.mxu0 %v4563
        %4608 = vmatprep.subr.bf16.mxu0 0
        %4609 = vmatpush1.bf16.msra.mxu0 %v4564
        %4610 = vmatprep.subr.bf16.mxu0 0
        %4611 = vmatpush1.bf16.msra.mxu0 %v4565
        %4612 = vmatprep.subr.bf16.mxu0 0
        %4613 = vmatpush1.bf16.msra.mxu0 %v4566
        %4614 = vmatprep.subr.bf16.mxu0 0
        %4615 = vmatpush1.bf16.msra.mxu0 %v4567
        %4616 = vmatprep.subr.bf16.mxu0 0
        %4617 = vmatpush1.bf16.msra.mxu0 %v4568
        %4618 = vmatprep.subr.bf16.mxu0 0
        %4619 = vmatpush1.bf16.msra.mxu0 %v4569
        %4620 = vmatprep.subr.bf16.mxu0 0
        %4621 = vmatpush1.bf16.msra.mxu0 %v4570
        %4622 = vmatprep.subr.bf16.mxu0 0
        %4623 = vmatpush1.bf16.msra.mxu0 0
        %4624 = vmatprep.subr.bf16.mxu0 0
        %4625 = vmatpush1.bf16.msra.mxu0 0
        %4626 = vmatprep.subr.bf16.mxu0 0
        %4627 = vmatpush1.bf16.msra.mxu0 0
        %4628 = vmatprep.subr.bf16.mxu0 0
        %4629 = vmatpush1.bf16.msra.mxu0 0
        %4630 = vmatprep.subr.bf16.mxu0 0
        %4631 = vmatpush1.bf16.msra.mxu0 0
        %4632 = vmatprep.subr.bf16.mxu0 0
        %4633 = vmatpush1.bf16.msra.mxu0 0
        %4634 = vmatprep.subr.bf16.mxu0 0
        %4635 = vmatpush1.bf16.msra.mxu0 0
        %4636 = vmatprep.mubr.bf16.mxu0 %v4581
        %4637 = vmatmul.mubr.bf16.gmra.mrb[0].mxu0 %v4485
        %v4638 = vpop.f32.mrb[0].mxu0
        %v4639 = vadd.f32 %v4524, %v4638
        %v4640 = vpop.f32.mrb[0].mxu0
        %v4641 = vpop.f32.mrb[0].mxu0
        %v4642 = vadd.f32 %v4524, %v4641
        %v4643 = vpop.f32.mrb[0].mxu0
        %4644 = vmatprep.mubr.bf16.mxu0 %v4584
        %4645 = vmatmul.mubr.bf16.gmra.mrb[0].mxu0 %v4487
        %v4646 = vpop.f32.mrb[0].mxu0
        %v4647 = vadd.f32 %v4524, %v4646
        %v4648 = vpop.f32.mrb[0].mxu0
        %v4649 = vpop.f32.mrb[0].mxu0
        %v4650 = vadd.f32 %v4524, %v4649
        %v4651 = vpop.f32.mrb[0].mxu0
        %4652 = vmatprep.mubr.bf16.mxu0 %v4587
        %4653 = vmatmul.mubr.bf16.gmra.mrb[0].mxu0 %v4489
        %v4654 = vpop.f32.mrb[0].mxu0
        %v4655 = vadd.f32 %v4524, %v4654
        %v4656 = vpop.f32.mrb[0].mxu0
        %v4657 = vpop.f32.mrb[0].mxu0
        %v4658 = vadd.f32 %v4524, %v4657
        %v4659 = vpop.f32.mrb[0].mxu0
        %4660 = vmatprep.mubr.bf16.mxu0 %v4590
        %4661 = vmatmul.mubr.bf16.gmra.mrb[0].mxu0 %v4491
        %v4662 = vpop.f32.mrb[0].mxu0
        %v4663 = vadd.f32 %v4524, %v4662
        %v4664 = vpop.f32.mrb[0].mxu0
        %v4665 = vpop.f32.mrb[0].mxu0
        %v4666 = vadd.f32 %v4524, %v4665
        %v4667 = vpop.f32.mrb[0].mxu0
        %4668 = vmatprep.mubr.bf16.mxu0 %v4593
        %4669 = vmatmul.mubr.bf16.gmra.mrb[0].mxu0 %v4493
        %v4670 = vpop.f32.mrb[0].mxu0
        %v4671 = vadd.f32 %v4524, %v4670
        %v4672 = vpop.f32.mrb[0].mxu0
        %v4673 = vpop.f32.mrb[0].mxu0
        %v4674 = vadd.f32 %v4524, %v4673
        %v4675 = vpop.f32.mrb[0].mxu0
        %4676 = vmatprep.mubr.bf16.mxu0 %v4596
        %4677 = vmatmul.mubr.bf16.gmra.mrb[0].mxu0 %v4495
        %v4678 = vpop.f32.mrb[0].mxu0
        %v4679 = vadd.f32 %v4524, %v4678
        %v4680 = vpop.f32.mrb[0].mxu0
        %v4681 = vpop.f32.mrb[0].mxu0
        %v4682 = vadd.f32 %v4524, %v4681
        %v4683 = vpop.f32.mrb[0].mxu0
        %4684 = vmatprep.mubr.bf16.mxu0 %v4599
        %4685 = vmatmul.mubr.bf16.gmra.mrb[0].mxu0 %v4497
        %v4686 = vpop.f32.mrb[0].mxu0
        %v4687 = vadd.f32 %v4524, %v4686
        %v4688 = vpop.f32.mrb[0].mxu0
        %v4689 = vpop.f32.mrb[0].mxu0
        %v4690 = vadd.f32 %v4524, %v4689
        %v4691 = vpop.f32.mrb[0].mxu0
        %4692 = vmatprep.mubr.bf16.mxu0 %v4602
        %4693 = vmatmul.mubr.bf16.gmra.mrb[0].mxu0 %v4499
        %v4694 = vpop.f32.mrb[0].mxu0
        %v4695 = vadd.f32 %v4524, %v4694
        %v4696 = vpop.f32.mrb[0].mxu0
        %v4697 = vpop.f32.mrb[0].mxu0
        %v4698 = vadd.f32 %v4524, %v4697
        %v4699 = vpop.f32.mrb[0].mxu0
        %4700 = vdwg.mxu0
        %v4701 = vmax.f32 %v4639, 0.0
        %v4702 = vmax.f32 %v4642, 0.0
        %v4703 = vmax.f32 %v4647, 0.0
        %v4704 = vmax.f32 %v4650, 0.0
        %v4705 = vmax.f32 %v4655, 0.0
        %v4706 = vmax.f32 %v4658, 0.0
        %v4707 = vmax.f32 %v4663, 0.0
        %v4708 = vmax.f32 %v4666, 0.0
        %v4709 = vmax.f32 %v4671, 0.0
        %v4710 = vmax.f32 %v4674, 0.0
        %v4711 = vmax.f32 %v4679, 0.0
        %v4712 = vmax.f32 %v4682, 0.0
        %v4713 = vmax.f32 %v4687, 0.0
        %v4714 = vmax.f32 %v4690, 0.0
        %v4715 = vmax.f32 %v4695, 0.0
        %v4716 = vmax.f32 %v4698, 0.0
        %v4717 = vpack.c.bf16 %v4702, %v4701
        %v4718 = vpack.c.bf16 %v4704, %v4703
        %v4719 = vpack.c.bf16 %v4706, %v4705
        %v4720 = vpack.c.bf16 %v4708, %v4707
        %v4721 = vpack.c.bf16 %v4710, %v4709
        %v4722 = vpack.c.bf16 %v4712, %v4711
        %v4723 = vpack.c.bf16 %v4714, %v4713
        %v4724 = vpack.c.bf16 %v4716, %v4715
        %4725 = vst.msk [vmem:[%s3824 + $0x8] sm:$0xff] %vm3825, %v4717
        %4726 = vst.msk [vmem:[%s3824 + $0x20] sm:$0xff] %vm3825, %v4718
        %4727 = vst.msk [vmem:[%s3824 + $0x38] sm:$0xff] %vm3825, %v4719
        %4728 = vst.msk [vmem:[%s3824 + $0x50] sm:$0xff] %vm3825, %v4720
        %4729 = vst.msk [vmem:[%s3824 + $0x68] sm:$0xff] %vm3825, %v4721
        %4730 = vst.msk [vmem:[%s3824 + $0x80] sm:$0xff] %vm3825, %v4722
        %4731 = vst.msk [vmem:[%s3824 + $0x98] sm:$0xff] %vm3825, %v4723
        %4732 = vst.msk [vmem:[%s3824 + $0xb0] sm:$0xff] %vm3825, %v4724
        %v4733 = vld [vmem:[%s3834] sm:$0xe0]
        %v4734 = vld [vmem:[%s3834 + $0x8] sm:$0x1f]
        %v4735 = vld [vmem:[%s3834 + $0x18] sm:$0xe0]
        %v4736 = vld [vmem:[%s3834 + $0x20] sm:$0x1f]
        %v4737 = vld [vmem:[%s3834 + $0x30] sm:$0xe0]
        %v4738 = vld [vmem:[%s3834 + $0x38] sm:$0x1f]
        %v4739 = vld [vmem:[%s3834 + $0x48] sm:$0xe0]
        %v4740 = vld [vmem:[%s3834 + $0x50] sm:$0x1f]
        %v4741 = vld [vmem:[%s3834 + $0x60] sm:$0xe0]
        %v4742 = vld [vmem:[%s3834 + $0x68] sm:$0x1f]
        %v4743 = vld [vmem:[%s3834 + $0x78] sm:$0xe0]
        %v4744 = vld [vmem:[%s3834 + $0x80] sm:$0x1f]
        %v4745 = vld [vmem:[%s3834 + $0x90] sm:$0xe0]
        %v4746 = vld [vmem:[%s3834 + $0x98] sm:$0x1f]
        %v4747 = vld [vmem:[%s3834 + $0xa8] sm:$0xe0]
        %v4748 = vld [vmem:[%s3834 + $0xb0] sm:$0x1f]
        %v4765 = vrot.slane %v4733, 5
        %v4766 = vrot.slane %v4734, 5
        %v4767 = vsel %vm3867, %v4765, %v4766
        %v4768 = vrot.slane %v4735, 5
        %v4769 = vrot.slane %v4736, 5
        %v4770 = vsel %vm3867, %v4768, %v4769
        %v4771 = vrot.slane %v4737, 5
        %v4772 = vrot.slane %v4738, 5
        %v4773 = vsel %vm3867, %v4771, %v4772
        %v4774 = vrot.slane %v4739, 5
        %v4775 = vrot.slane %v4740, 5
        %v4776 = vsel %vm3867, %v4774, %v4775
        %v4777 = vrot.slane %v4741, 5
        %v4778 = vrot.slane %v4742, 5
        %v4779 = vsel %vm3867, %v4777, %v4778
        %v4780 = vrot.slane %v4743, 5
        %v4781 = vrot.slane %v4744, 5
        %v4782 = vsel %vm3867, %v4780, %v4781
        %v4783 = vrot.slane %v4745, 5
        %v4784 = vrot.slane %v4746, 5
        %v4785 = vsel %vm3867, %v4783, %v4784
        %v4786 = vrot.slane %v4747, 5
        %v4787 = vrot.slane %v4748, 5
        %v4788 = vsel %vm3867, %v4786, %v4787
        %4797 = vst.msk [vmem:[#allocation3] sm:$0xff] %vm3825, %v4767
        %4798 = vst.msk [vmem:[#allocation3 + $0x10] sm:$0xff] %vm3825, %v4770
        %4799 = vst.msk [vmem:[#allocation3 + $0x20] sm:$0xff] %vm3825, %v4773
        %4800 = vst.msk [vmem:[#allocation3 + $0x30] sm:$0xff] %vm3825, %v4776
        %4801 = vst.msk [vmem:[#allocation3 + $0x40] sm:$0xff] %vm3825, %v4779
        %4802 = vst.msk [vmem:[#allocation3 + $0x50] sm:$0xff] %vm3825, %v4782
        %4803 = vst.msk [vmem:[#allocation3 + $0x60] sm:$0xff] %vm3825, %v4785
        %4804 = vst.msk [vmem:[#allocation3 + $0x70] sm:$0xff] %vm3825, %v4788
        %v4805 = vld [vmem:[%s3834 + $0x8] sm:$0xff]
        %v4806 = vld [vmem:[%s3834 + $0x20] sm:$0xff]
        %v4807 = vld [vmem:[%s3834 + $0x38] sm:$0xff]
        %v4808 = vld [vmem:[%s3834 + $0x50] sm:$0xff]
        %v4809 = vld [vmem:[%s3834 + $0x68] sm:$0xff]
        %v4810 = vld [vmem:[%s3834 + $0x80] sm:$0xff]
        %v4811 = vld [vmem:[%s3834 + $0x98] sm:$0xff]
        %v4812 = vld [vmem:[%s3834 + $0xb0] sm:$0xff]
        %4821 = vrot.lane.b32.xlu0 %v4805, 16
        %v4822 = vpop.permute.xlu0 %4821
        %4823 = vrot.lane.b32.xlu0 %v4806, 16
        %v4824 = vpop.permute.xlu0 %4823
        %4825 = vrot.lane.b32.xlu0 %v4807, 16
        %v4826 = vpop.permute.xlu0 %4825
        %4827 = vrot.lane.b32.xlu0 %v4808, 16
        %v4828 = vpop.permute.xlu0 %4827
        %4829 = vrot.lane.b32.xlu0 %v4809, 16
        %v4830 = vpop.permute.xlu0 %4829
        %4831 = vrot.lane.b32.xlu0 %v4810, 16
        %v4832 = vpop.permute.xlu0 %4831
        %4833 = vrot.lane.b32.xlu0 %v4811, 16
        %v4834 = vpop.permute.xlu0 %4833
        %4835 = vrot.lane.b32.xlu0 %v4812, 16
        %v4836 = vpop.permute.xlu0 %4835
        %4845 = vst.msk [vmem:[#allocation3] sm:$0xff] %vm3948, %v4822
        %4846 = vst.msk [vmem:[#allocation3 + $0x10] sm:$0xff] %vm3948, %v4824
        %4847 = vst.msk [vmem:[#allocation3 + $0x20] sm:$0xff] %vm3948, %v4826
        %4848 = vst.msk [vmem:[#allocation3 + $0x30] sm:$0xff] %vm3948, %v4828
        %4849 = vst.msk [vmem:[#allocation3 + $0x40] sm:$0xff] %vm3948, %v4830
        %4850 = vst.msk [vmem:[#allocation3 + $0x50] sm:$0xff] %vm3948, %v4832
        %4851 = vst.msk [vmem:[#allocation3 + $0x60] sm:$0xff] %vm3948, %v4834
        %4852 = vst.msk [vmem:[#allocation3 + $0x70] sm:$0xff] %vm3948, %v4836
        %v4853 = vld [vmem:[%s3834 + $0x8] sm:$0xf8]
        %v4854 = vld [vmem:[%s3834 + $0x10] sm:$0x7]
        %v4855 = vld [vmem:[%s3834 + $0x20] sm:$0xf8]
        %v4856 = vld [vmem:[%s3834 + $0x28] sm:$0x7]
        %v4857 = vld [vmem:[%s3834 + $0x38] sm:$0xf8]
        %v4858 = vld [vmem:[%s3834 + $0x40] sm:$0x7]
        %v4859 = vld [vmem:[%s3834 + $0x50] sm:$0xf8]
        %v4860 = vld [vmem:[%s3834 + $0x58] sm:$0x7]
        %v4861 = vld [vmem:[%s3834 + $0x68] sm:$0xf8]
        %v4862 = vld [vmem:[%s3834 + $0x70] sm:$0x7]
        %v4863 = vld [vmem:[%s3834 + $0x80] sm:$0xf8]
        %v4864 = vld [vmem:[%s3834 + $0x88] sm:$0x7]
        %v4865 = vld [vmem:[%s3834 + $0x98] sm:$0xf8]
        %v4866 = vld [vmem:[%s3834 + $0xa0] sm:$0x7]
        %v4867 = vld [vmem:[%s3834 + $0xb0] sm:$0xf8]
        %v4868 = vld [vmem:[%s3834 + $0xb8] sm:$0x7]
        %v4885 = vrot.slane %v4853, 3
        %v4886 = vrot.slane %v4854, 3
        %v4887 = vsel %vm3989, %v4885, %v4886
        %v4888 = vrot.slane %v4855, 3
        %v4889 = vrot.slane %v4856, 3
        %v4890 = vsel %vm3989, %v4888, %v4889
        %v4891 = vrot.slane %v4857, 3
        %v4892 = vrot.slane %v4858, 3
        %v4893 = vsel %vm3989, %v4891, %v4892
        %v4894 = vrot.slane %v4859, 3
        %v4895 = vrot.slane %v4860, 3
        %v4896 = vsel %vm3989, %v4894, %v4895
        %v4897 = vrot.slane %v4861, 3
        %v4898 = vrot.slane %v4862, 3
        %v4899 = vsel %vm3989, %v4897, %v4898
        %v4900 = vrot.slane %v4863, 3
        %v4901 = vrot.slane %v4864, 3
        %v4902 = vsel %vm3989, %v4900, %v4901
        %v4903 = vrot.slane %v4865, 3
        %v4904 = vrot.slane %v4866, 3
        %v4905 = vsel %vm3989, %v4903, %v4904
        %v4906 = vrot.slane %v4867, 3
        %v4907 = vrot.slane %v4868, 3
        %v4908 = vsel %vm3989, %v4906, %v4907
        %4909 = vrot.lane.b32.xlu0 %v4887, 32
        %v4910 = vpop.permute.xlu0 %4909
        %4911 = vrot.lane.b32.xlu0 %v4890, 32
        %v4912 = vpop.permute.xlu0 %4911
        %4913 = vrot.lane.b32.xlu0 %v4893, 32
        %v4914 = vpop.permute.xlu0 %4913
        %4915 = vrot.lane.b32.xlu0 %v4896, 32
        %v4916 = vpop.permute.xlu0 %4915
        %4917 = vrot.lane.b32.xlu0 %v4899, 32
        %v4918 = vpop.permute.xlu0 %4917
        %4919 = vrot.lane.b32.xlu0 %v4902, 32
        %v4920 = vpop.permute.xlu0 %4919
        %4921 = vrot.lane.b32.xlu0 %v4905, 32
        %v4922 = vpop.permute.xlu0 %4921
        %4923 = vrot.lane.b32.xlu0 %v4908, 32
        %v4924 = vpop.permute.xlu0 %4923
        %4933 = vst.msk [vmem:[#allocation3] sm:$0xff] %vm4038, %v4910
        %4934 = vst.msk [vmem:[#allocation3 + $0x10] sm:$0xff] %vm4038, %v4912
        %4935 = vst.msk [vmem:[#allocation3 + $0x20] sm:$0xff] %vm4038, %v4914
        %4936 = vst.msk [vmem:[#allocation3 + $0x30] sm:$0xff] %vm4038, %v4916
        %4937 = vst.msk [vmem:[#allocation3 + $0x40] sm:$0xff] %vm4038, %v4918
        %4938 = vst.msk [vmem:[#allocation3 + $0x50] sm:$0xff] %vm4038, %v4920
        %4939 = vst.msk [vmem:[#allocation3 + $0x60] sm:$0xff] %vm4038, %v4922
        %4940 = vst.msk [vmem:[#allocation3 + $0x70] sm:$0xff] %vm4038, %v4924
        %v4941 = vld [vmem:[%s3824] sm:$0xe0]
        %v4942 = vld [vmem:[%s3824 + $0x8] sm:$0x1f]
        %v4943 = vld [vmem:[%s3824 + $0x18] sm:$0xe0]
        %v4944 = vld [vmem:[%s3824 + $0x20] sm:$0x1f]
        %v4945 = vld [vmem:[%s3824 + $0x30] sm:$0xe0]
        %v4946 = vld [vmem:[%s3824 + $0x38] sm:$0x1f]
        %v4947 = vld [vmem:[%s3824 + $0x48] sm:$0xe0]
        %v4948 = vld [vmem:[%s3824 + $0x50] sm:$0x1f]
        %v4949 = vld [vmem:[%s3824 + $0x60] sm:$0xe0]
        %v4950 = vld [vmem:[%s3824 + $0x68] sm:$0x1f]
        %v4951 = vld [vmem:[%s3824 + $0x78] sm:$0xe0]
        %v4952 = vld [vmem:[%s3824 + $0x80] sm:$0x1f]
        %v4953 = vld [vmem:[%s3824 + $0x90] sm:$0xe0]
        %v4954 = vld [vmem:[%s3824 + $0x98] sm:$0x1f]
        %v4955 = vld [vmem:[%s3824 + $0xa8] sm:$0xe0]
        %v4956 = vld [vmem:[%s3824 + $0xb0] sm:$0x1f]
        %v4973 = vrot.slane %v4941, 5
        %v4974 = vrot.slane %v4942, 5
        %v4975 = vsel %vm3867, %v4973, %v4974
        %v4976 = vrot.slane %v4943, 5
        %v4977 = vrot.slane %v4944, 5
        %v4978 = vsel %vm3867, %v4976, %v4977
        %v4979 = vrot.slane %v4945, 5
        %v4980 = vrot.slane %v4946, 5
        %v4981 = vsel %vm3867, %v4979, %v4980
        %v4982 = vrot.slane %v4947, 5
        %v4983 = vrot.slane %v4948, 5
        %v4984 = vsel %vm3867, %v4982, %v4983
        %v4985 = vrot.slane %v4949, 5
        %v4986 = vrot.slane %v4950, 5
        %v4987 = vsel %vm3867, %v4985, %v4986
        %v4988 = vrot.slane %v4951, 5
        %v4989 = vrot.slane %v4952, 5
        %v4990 = vsel %vm3867, %v4988, %v4989
        %v4991 = vrot.slane %v4953, 5
        %v4992 = vrot.slane %v4954, 5
        %v4993 = vsel %vm3867, %v4991, %v4992
        %v4994 = vrot.slane %v4955, 5
        %v4995 = vrot.slane %v4956, 5
        %v4996 = vsel %vm3867, %v4994, %v4995
        %4997 = vrot.lane.b32.xlu0 %v4975, 48
        %v4998 = vpop.permute.xlu0 %4997
        %4999 = vrot.lane.b32.xlu0 %v4978, 48
        %v5000 = vpop.permute.xlu0 %4999
        %5001 = vrot.lane.b32.xlu0 %v4981, 48
        %v5002 = vpop.permute.xlu0 %5001
        %5003 = vrot.lane.b32.xlu0 %v4984, 48
        %v5004 = vpop.permute.xlu0 %5003
        %5005 = vrot.lane.b32.xlu0 %v4987, 48
        %v5006 = vpop.permute.xlu0 %5005
        %5007 = vrot.lane.b32.xlu0 %v4990, 48
        %v5008 = vpop.permute.xlu0 %5007
        %5009 = vrot.lane.b32.xlu0 %v4993, 48
        %v5010 = vpop.permute.xlu0 %5009
        %5011 = vrot.lane.b32.xlu0 %v4996, 48
        %v5012 = vpop.permute.xlu0 %5011
        %5021 = vst.msk [vmem:[#allocation3] sm:$0xff] %vm4127, %v4998
        %5022 = vst.msk [vmem:[#allocation3 + $0x10] sm:$0xff] %vm4127, %v5000
        %5023 = vst.msk [vmem:[#allocation3 + $0x20] sm:$0xff] %vm4127, %v5002
        %5024 = vst.msk [vmem:[#allocation3 + $0x30] sm:$0xff] %vm4127, %v5004
        %5025 = vst.msk [vmem:[#allocation3 + $0x40] sm:$0xff] %vm4127, %v5006
        %5026 = vst.msk [vmem:[#allocation3 + $0x50] sm:$0xff] %vm4127, %v5008
        %5027 = vst.msk [vmem:[#allocation3 + $0x60] sm:$0xff] %vm4127, %v5010
        %5028 = vst.msk [vmem:[#allocation3 + $0x70] sm:$0xff] %vm4127, %v5012
        %v5029 = vld [vmem:[%s3824 + $0x8] sm:$0xff]
        %v5030 = vld [vmem:[%s3824 + $0x20] sm:$0xff]
        %v5031 = vld [vmem:[%s3824 + $0x38] sm:$0xff]
        %v5032 = vld [vmem:[%s3824 + $0x50] sm:$0xff]
        %v5033 = vld [vmem:[%s3824 + $0x68] sm:$0xff]
        %v5034 = vld [vmem:[%s3824 + $0x80] sm:$0xff]
        %v5035 = vld [vmem:[%s3824 + $0x98] sm:$0xff]
        %v5036 = vld [vmem:[%s3824 + $0xb0] sm:$0xff]
        %5045 = vrot.lane.b32.xlu0 %v5029, 64
        %v5046 = vpop.permute.xlu0 %5045
        %5047 = vrot.lane.b32.xlu0 %v5030, 64
        %v5048 = vpop.permute.xlu0 %5047
        %5049 = vrot.lane.b32.xlu0 %v5031, 64
        %v5050 = vpop.permute.xlu0 %5049
        %5051 = vrot.lane.b32.xlu0 %v5032, 64
        %v5052 = vpop.permute.xlu0 %5051
        %5053 = vrot.lane.b32.xlu0 %v5033, 64
        %v5054 = vpop.permute.xlu0 %5053
        %5055 = vrot.lane.b32.xlu0 %v5034, 64
        %v5056 = vpop.permute.xlu0 %5055
        %5057 = vrot.lane.b32.xlu0 %v5035, 64
        %v5058 = vpop.permute.xlu0 %5057
        %5059 = vrot.lane.b32.xlu0 %v5036, 64
        %v5060 = vpop.permute.xlu0 %5059
        %5069 = vst.msk [vmem:[#allocation3] sm:$0xff] %vm4176, %v5046
        %5070 = vst.msk [vmem:[#allocation3 + $0x10] sm:$0xff] %vm4176, %v5048
        %5071 = vst.msk [vmem:[#allocation3 + $0x20] sm:$0xff] %vm4176, %v5050
        %5072 = vst.msk [vmem:[#allocation3 + $0x30] sm:$0xff] %vm4176, %v5052
        %5073 = vst.msk [vmem:[#allocation3 + $0x40] sm:$0xff] %vm4176, %v5054
        %5074 = vst.msk [vmem:[#allocation3 + $0x50] sm:$0xff] %vm4176, %v5056
        %5075 = vst.msk [vmem:[#allocation3 + $0x60] sm:$0xff] %vm4176, %v5058
        %5076 = vst.msk [vmem:[#allocation3 + $0x70] sm:$0xff] %vm4176, %v5060
        %v5077 = vld [vmem:[%s3824 + $0x8] sm:$0xf8]
        %v5078 = vld [vmem:[%s3824 + $0x10] sm:$0x7]
        %v5079 = vld [vmem:[%s3824 + $0x20] sm:$0xf8]
        %v5080 = vld [vmem:[%s3824 + $0x28] sm:$0x7]
        %v5081 = vld [vmem:[%s3824 + $0x38] sm:$0xf8]
        %v5082 = vld [vmem:[%s3824 + $0x40] sm:$0x7]
        %v5083 = vld [vmem:[%s3824 + $0x50] sm:$0xf8]
        %v5084 = vld [vmem:[%s3824 + $0x58] sm:$0x7]
        %v5085 = vld [vmem:[%s3824 + $0x68] sm:$0xf8]
        %v5086 = vld [vmem:[%s3824 + $0x70] sm:$0x7]
        %v5087 = vld [vmem:[%s3824 + $0x80] sm:$0xf8]
        %v5088 = vld [vmem:[%s3824 + $0x88] sm:$0x7]
        %v5089 = vld [vmem:[%s3824 + $0x98] sm:$0xf8]
        %v5090 = vld [vmem:[%s3824 + $0xa0] sm:$0x7]
        %v5091 = vld [vmem:[%s3824 + $0xb0] sm:$0xf8]
        %v5092 = vld [vmem:[%s3824 + $0xb8] sm:$0x7]
        %v5109 = vrot.slane %v5077, 3
        %v5110 = vrot.slane %v5078, 3
        %v5111 = vsel %vm3989, %v5109, %v5110
        %v5112 = vrot.slane %v5079, 3
        %v5113 = vrot.slane %v5080, 3
        %v5114 = vsel %vm3989, %v5112, %v5113
        %v5115 = vrot.slane %v5081, 3
        %v5116 = vrot.slane %v5082, 3
        %v5117 = vsel %vm3989, %v5115, %v5116
        %v5118 = vrot.slane %v5083, 3
        %v5119 = vrot.slane %v5084, 3
        %v5120 = vsel %vm3989, %v5118, %v5119
        %v5121 = vrot.slane %v5085, 3
        %v5122 = vrot.slane %v5086, 3
        %v5123 = vsel %vm3989, %v5121, %v5122
        %v5124 = vrot.slane %v5087, 3
        %v5125 = vrot.slane %v5088, 3
        %v5126 = vsel %vm3989, %v5124, %v5125
        %v5127 = vrot.slane %v5089, 3
        %v5128 = vrot.slane %v5090, 3
        %v5129 = vsel %vm3989, %v5127, %v5128
        %v5130 = vrot.slane %v5091, 3
        %v5131 = vrot.slane %v5092, 3
        %v5132 = vsel %vm3989, %v5130, %v5131
        %5133 = vrot.lane.b32.xlu0 %v5111, 80
        %v5134 = vpop.permute.xlu0 %5133
        %5135 = vrot.lane.b32.xlu0 %v5114, 80
        %v5136 = vpop.permute.xlu0 %5135
        %5137 = vrot.lane.b32.xlu0 %v5117, 80
        %v5138 = vpop.permute.xlu0 %5137
        %5139 = vrot.lane.b32.xlu0 %v5120, 80
        %v5140 = vpop.permute.xlu0 %5139
        %5141 = vrot.lane.b32.xlu0 %v5123, 80
        %v5142 = vpop.permute.xlu0 %5141
        %5143 = vrot.lane.b32.xlu0 %v5126, 80
        %v5144 = vpop.permute.xlu0 %5143
        %5145 = vrot.lane.b32.xlu0 %v5129, 80
        %v5146 = vpop.permute.xlu0 %5145
        %5147 = vrot.lane.b32.xlu0 %v5132, 80
        %v5148 = vpop.permute.xlu0 %5147
        %5157 = vst.msk [vmem:[#allocation3] sm:$0xff] %vm4265, %v5134
        %5158 = vst.msk [vmem:[#allocation3 + $0x10] sm:$0xff] %vm4265, %v5136
        %5159 = vst.msk [vmem:[#allocation3 + $0x20] sm:$0xff] %vm4265, %v5138
        %5160 = vst.msk [vmem:[#allocation3 + $0x30] sm:$0xff] %vm4265, %v5140
        %5161 = vst.msk [vmem:[#allocation3 + $0x40] sm:$0xff] %vm4265, %v5142
        %5162 = vst.msk [vmem:[#allocation3 + $0x50] sm:$0xff] %vm4265, %v5144
        %5163 = vst.msk [vmem:[#allocation3 + $0x60] sm:$0xff] %vm4265, %v5146
        %5164 = vst.msk [vmem:[#allocation3 + $0x70] sm:$0xff] %vm4265, %v5148
        %v5165 = vld [vmem:[%s4274] sm:$0xe0]
        %v5166 = vld [vmem:[%s4274 + $0x8] sm:$0x1f]
        %v5167 = vld [vmem:[%s4274 + $0x18] sm:$0xe0]
        %v5168 = vld [vmem:[%s4274 + $0x20] sm:$0x1f]
        %v5169 = vld [vmem:[%s4274 + $0x30] sm:$0xe0]
        %v5170 = vld [vmem:[%s4274 + $0x38] sm:$0x1f]
        %v5171 = vld [vmem:[%s4274 + $0x48] sm:$0xe0]
        %v5172 = vld [vmem:[%s4274 + $0x50] sm:$0x1f]
        %v5173 = vld [vmem:[%s4274 + $0x60] sm:$0xe0]
        %v5174 = vld [vmem:[%s4274 + $0x68] sm:$0x1f]
        %v5175 = vld [vmem:[%s4274 + $0x78] sm:$0xe0]
        %v5176 = vld [vmem:[%s4274 + $0x80] sm:$0x1f]
        %v5177 = vld [vmem:[%s4274 + $0x90] sm:$0xe0]
        %v5178 = vld [vmem:[%s4274 + $0x98] sm:$0x1f]
        %v5179 = vld [vmem:[%s4274 + $0xa8] sm:$0xe0]
        %v5180 = vld [vmem:[%s4274 + $0xb0] sm:$0x1f]
        %v5197 = vrot.slane %v5165, 5
        %v5198 = vrot.slane %v5166, 5
        %v5199 = vsel %vm3867, %v5197, %v5198
        %v5200 = vrot.slane %v5167, 5
        %v5201 = vrot.slane %v5168, 5
        %v5202 = vsel %vm3867, %v5200, %v5201
        %v5203 = vrot.slane %v5169, 5
        %v5204 = vrot.slane %v5170, 5
        %v5205 = vsel %vm3867, %v5203, %v5204
        %v5206 = vrot.slane %v5171, 5
        %v5207 = vrot.slane %v5172, 5
        %v5208 = vsel %vm3867, %v5206, %v5207
        %v5209 = vrot.slane %v5173, 5
        %v5210 = vrot.slane %v5174, 5
        %v5211 = vsel %vm3867, %v5209, %v5210
        %v5212 = vrot.slane %v5175, 5
        %v5213 = vrot.slane %v5176, 5
        %v5214 = vsel %vm3867, %v5212, %v5213
        %v5215 = vrot.slane %v5177, 5
        %v5216 = vrot.slane %v5178, 5
        %v5217 = vsel %vm3867, %v5215, %v5216
        %v5218 = vrot.slane %v5179, 5
        %v5219 = vrot.slane %v5180, 5
        %v5220 = vsel %vm3867, %v5218, %v5219
        %5221 = vrot.lane.b32.xlu0 %v5199, 96
        %v5222 = vpop.permute.xlu0 %5221
        %5223 = vrot.lane.b32.xlu0 %v5202, 96
        %v5224 = vpop.permute.xlu0 %5223
        %5225 = vrot.lane.b32.xlu0 %v5205, 96
        %v5226 = vpop.permute.xlu0 %5225
        %5227 = vrot.lane.b32.xlu0 %v5208, 96
        %v5228 = vpop.permute.xlu0 %5227
        %5229 = vrot.lane.b32.xlu0 %v5211, 96
        %v5230 = vpop.permute.xlu0 %5229
        %5231 = vrot.lane.b32.xlu0 %v5214, 96
        %v5232 = vpop.permute.xlu0 %5231
        %5233 = vrot.lane.b32.xlu0 %v5217, 96
        %v5234 = vpop.permute.xlu0 %5233
        %5235 = vrot.lane.b32.xlu0 %v5220, 96
        %v5236 = vpop.permute.xlu0 %5235
        %5245 = vst.msk [vmem:[#allocation3] sm:$0xff] %vm4355, %v5222
        %5246 = vst.msk [vmem:[#allocation3 + $0x10] sm:$0xff] %vm4355, %v5224
        %5247 = vst.msk [vmem:[#allocation3 + $0x20] sm:$0xff] %vm4355, %v5226
        %5248 = vst.msk [vmem:[#allocation3 + $0x30] sm:$0xff] %vm4355, %v5228
        %5249 = vst.msk [vmem:[#allocation3 + $0x40] sm:$0xff] %vm4355, %v5230
        %5250 = vst.msk [vmem:[#allocation3 + $0x50] sm:$0xff] %vm4355, %v5232
        %5251 = vst.msk [vmem:[#allocation3 + $0x60] sm:$0xff] %vm4355, %v5234
        %5252 = vst.msk [vmem:[#allocation3 + $0x70] sm:$0xff] %vm4355, %v5236
        %v5253 = vld [vmem:[%s4274 + $0x8] sm:$0xff]
        %v5254 = vld [vmem:[%s4274 + $0x20] sm:$0xff]
        %v5255 = vld [vmem:[%s4274 + $0x38] sm:$0xff]
        %v5256 = vld [vmem:[%s4274 + $0x50] sm:$0xff]
        %v5257 = vld [vmem:[%s4274 + $0x68] sm:$0xff]
        %v5258 = vld [vmem:[%s4274 + $0x80] sm:$0xff]
        %v5259 = vld [vmem:[%s4274 + $0x98] sm:$0xff]
        %v5260 = vld [vmem:[%s4274 + $0xb0] sm:$0xff]
        %5269 = vrot.lane.b32.xlu0 %v5253, 112
        %v5270 = vpop.permute.xlu0 %5269
        %5271 = vrot.lane.b32.xlu0 %v5254, 112
        %v5272 = vpop.permute.xlu0 %5271
        %5273 = vrot.lane.b32.xlu0 %v5255, 112
        %v5274 = vpop.permute.xlu0 %5273
        %5275 = vrot.lane.b32.xlu0 %v5256, 112
        %v5276 = vpop.permute.xlu0 %5275
        %5277 = vrot.lane.b32.xlu0 %v5257, 112
        %v5278 = vpop.permute.xlu0 %5277
        %5279 = vrot.lane.b32.xlu0 %v5258, 112
        %v5280 = vpop.permute.xlu0 %5279
        %5281 = vrot.lane.b32.xlu0 %v5259, 112
        %v5282 = vpop.permute.xlu0 %5281
        %5283 = vrot.lane.b32.xlu0 %v5260, 112
        %v5284 = vpop.permute.xlu0 %5283
        %5293 = vst.msk [vmem:[#allocation3] sm:$0xff] %vm4404, %v5270
        %5294 = vst.msk [vmem:[#allocation3 + $0x10] sm:$0xff] %vm4404, %v5272
        %5295 = vst.msk [vmem:[#allocation3 + $0x20] sm:$0xff] %vm4404, %v5274
        %5296 = vst.msk [vmem:[#allocation3 + $0x30] sm:$0xff] %vm4404, %v5276
        %5297 = vst.msk [vmem:[#allocation3 + $0x40] sm:$0xff] %vm4404, %v5278
        %5298 = vst.msk [vmem:[#allocation3 + $0x50] sm:$0xff] %vm4404, %v5280
        %5299 = vst.msk [vmem:[#allocation3 + $0x60] sm:$0xff] %vm4404, %v5282
        %5300 = vst.msk [vmem:[#allocation3 + $0x70] sm:$0xff] %vm4404, %v5284
        %v5301 = vld [vmem:[%s4274 + $0x8] sm:$0xf8]
        %v5302 = vld [vmem:[%s4274 + $0x10] sm:$0x7]
        %v5303 = vld [vmem:[%s4274 + $0x20] sm:$0xf8]
        %v5304 = vld [vmem:[%s4274 + $0x28] sm:$0x7]
        %v5305 = vld [vmem:[%s4274 + $0x38] sm:$0xf8]
        %v5306 = vld [vmem:[%s4274 + $0x40] sm:$0x7]
        %v5307 = vld [vmem:[%s4274 + $0x50] sm:$0xf8]
        %v5308 = vld [vmem:[%s4274 + $0x58] sm:$0x7]
        %v5309 = vld [vmem:[%s4274 + $0x68] sm:$0xf8]
        %v5310 = vld [vmem:[%s4274 + $0x70] sm:$0x7]
        %v5311 = vld [vmem:[%s4274 + $0x80] sm:$0xf8]
        %v5312 = vld [vmem:[%s4274 + $0x88] sm:$0x7]
        %v5313 = vld [vmem:[%s4274 + $0x98] sm:$0xf8]
        %v5314 = vld [vmem:[%s4274 + $0xa0] sm:$0x7]
        %v5315 = vld [vmem:[%s4274 + $0xb0] sm:$0xf8]
        %v5316 = vld [vmem:[%s4274 + $0xb8] sm:$0x7]
        %v5333 = vrot.slane %v5301, 3
        %v5334 = vrot.slane %v5302, 3
        %v5335 = vsel %vm3989, %v5333, %v5334
        %v5336 = vrot.slane %v5303, 3
        %v5337 = vrot.slane %v5304, 3
        %v5338 = vsel %vm3989, %v5336, %v5337
        %v5339 = vrot.slane %v5305, 3
        %v5340 = vrot.slane %v5306, 3
        %v5341 = vsel %vm3989, %v5339, %v5340
        %v5342 = vrot.slane %v5307, 3
        %v5343 = vrot.slane %v5308, 3
        %v5344 = vsel %vm3989, %v5342, %v5343
        %v5345 = vrot.slane %v5309, 3
        %v5346 = vrot.slane %v5310, 3
        %v5347 = vsel %vm3989, %v5345, %v5346
        %v5348 = vrot.slane %v5311, 3
        %v5349 = vrot.slane %v5312, 3
        %v5350 = vsel %vm3989, %v5348, %v5349
        %v5351 = vrot.slane %v5313, 3
        %v5352 = vrot.slane %v5314, 3
        %v5353 = vsel %vm3989, %v5351, %v5352
        %v5354 = vrot.slane %v5315, 3
        %v5355 = vrot.slane %v5316, 3
        %v5356 = vsel %vm3989, %v5354, %v5355
        %5365 = vst.msk [vmem:[#allocation3 + $0x8] sm:$0xff] %vm3825, %v5335
        %5366 = vst.msk [vmem:[#allocation3 + $0x18] sm:$0xff] %vm3825, %v5338
        %5367 = vst.msk [vmem:[#allocation3 + $0x28] sm:$0xff] %vm3825, %v5341
        %5368 = vst.msk [vmem:[#allocation3 + $0x38] sm:$0xff] %vm3825, %v5344
        %5369 = vst.msk [vmem:[#allocation3 + $0x48] sm:$0xff] %vm3825, %v5347
        %5370 = vst.msk [vmem:[#allocation3 + $0x58] sm:$0xff] %vm3825, %v5350
        %5371 = vst.msk [vmem:[#allocation3 + $0x68] sm:$0xff] %vm3825, %v5353
        %5372 = vst.msk [vmem:[#allocation3 + $0x78] sm:$0xff] %vm3825, %v5356
        %v5373 = vld [vmem:[#allocation3] sm:$0xff]
        %v5374 = vld [vmem:[#allocation3 + $0x8] sm:$0xff]
        %v5375 = vld [vmem:[#allocation3 + $0x10] sm:$0xff]
        %v5376 = vld [vmem:[#allocation3 + $0x18] sm:$0xff]
        %v5377 = vld [vmem:[#allocation3 + $0x20] sm:$0xff]
        %v5378 = vld [vmem:[#allocation3 + $0x28] sm:$0xff]
        %v5379 = vld [vmem:[#allocation3 + $0x30] sm:$0xff]
        %v5380 = vld [vmem:[#allocation3 + $0x38] sm:$0xff]
        %v5381 = vld [vmem:[#allocation3 + $0x40] sm:$0xff]
        %v5382 = vld [vmem:[#allocation3 + $0x48] sm:$0xff]
        %v5383 = vld [vmem:[#allocation3 + $0x50] sm:$0xff]
        %v5384 = vld [vmem:[#allocation3 + $0x58] sm:$0xff]
        %v5385 = vld [vmem:[#allocation3 + $0x60] sm:$0xff]
        %v5386 = vld [vmem:[#allocation3 + $0x68] sm:$0xff]
        %v5387 = vld [vmem:[#allocation3 + $0x70] sm:$0xff]
        %v5388 = vld [vmem:[#allocation3 + $0x78] sm:$0xff]
        %v5389 = vld [vmem:[%s396] sm:$0xf]
        %v5390 = vld [vmem:[%s396 + $0x4] sm:$0xf]
        %v5391 = vld [vmem:[%s396 + $0x8] sm:$0xf]
        %v5392 = vld [vmem:[%s396 + $0xc] sm:$0xf]
        %v5393 = vld [vmem:[%s396 + $0x10] sm:$0xf]
        %v5394 = vld [vmem:[%s396 + $0x14] sm:$0xf]
        %v5395 = vld [vmem:[%s396 + $0x18] sm:$0xf]
        %v5396 = vld [vmem:[%s396 + $0x1c] sm:$0xf]
        %v5397 = vld [vmem:[%s396 + $0x20] sm:$0xf]
        %v5398 = vld [vmem:[%s396 + $0x24] sm:$0xf]
        %v5399 = vld [vmem:[%s396 + $0x28] sm:$0xf]
        %v5400 = vld [vmem:[%s396 + $0x2c] sm:$0xf]
        %v5401 = vld [vmem:[%s396 + $0x30] sm:$0xf]
        %v5402 = vld [vmem:[%s396 + $0x34] sm:$0xf]
        %v5403 = vld [vmem:[%s396 + $0x38] sm:$0xf]
        %v5404 = vld [vmem:[%s396 + $0x3c] sm:$0xf]
        %v5405 = vld [vmem:[%s396 + $0x40] sm:$0xf]
        %v5406 = vld [vmem:[%s396 + $0x44] sm:$0xf]
        %v5407 = vld [vmem:[%s399] sm:$0x1]
        %v5409 = vlaneseq
        %v5410 = vshrl.u32 %v5409, 7
        %v5411 = vsub.s32 0, %v5410
        %v5412 = vrot.slane %v5407, %v5411
        %v5432 = vunpack.c.l.b16 %v5389
        %v5433 = vunpack.c.l.b16 %v5390
        %v5434 = vunpack.c.l.b16 %v5391
        %v5435 = vunpack.c.l.b16 %v5392
        %v5436 = vunpack.c.l.b16 %v5393
        %v5437 = vunpack.c.l.b16 %v5394
        %v5438 = vunpack.c.l.b16 %v5395
        %v5439 = vunpack.c.l.b16 %v5396
        %v5440 = vunpack.c.l.b16 %v5397
        %v5441 = vunpack.c.l.b16 %v5398
        %v5442 = vunpack.c.l.b16 %v5399
        %v5443 = vunpack.c.l.b16 %v5400
        %v5444 = vunpack.c.l.b16 %v5401
        %v5445 = vunpack.c.l.b16 %v5402
        %v5446 = vunpack.c.l.b16 %v5403
        %v5447 = vunpack.c.l.b16 %v5404
        %v5448 = vunpack.c.l.b16 %v5405
        %v5449 = vunpack.c.l.b16 %v5406
        %v5450 = vpack.c.b16 %v5433, %v5432
        %v5451 = vpack.c.b16 %v5435, %v5434
        %v5452 = vpack.c.b16 %v5437, %v5436
        %v5453 = vpack.c.b16 %v5439, %v5438
        %v5454 = vpack.c.b16 %v5441, %v5440
        %v5455 = vpack.c.b16 %v5443, %v5442
        %v5456 = vpack.c.b16 %v5445, %v5444
        %v5457 = vpack.c.b16 %v5447, %v5446
        %v5458 = vpack.c.b16 %v5449, %v5448
        %v5469 = vsel %vm3825, %v5374, 0
        %v5472 = vsel %vm3825, %v5376, 0
        %v5475 = vsel %vm3825, %v5378, 0
        %v5478 = vsel %vm3825, %v5380, 0
        %v5481 = vsel %vm3825, %v5382, 0
        %v5484 = vsel %vm3825, %v5384, 0
        %v5487 = vsel %vm3825, %v5386, 0
        %v5490 = vsel %vm3825, %v5388, 0
        %5492 = vmatprep.subr.bf16.mxu0 0
        %5493 = vmatpush1.bf16.msra.mxu0 %v5450
        %5494 = vmatprep.subr.bf16.mxu0 0
        %5495 = vmatpush1.bf16.msra.mxu0 %v5451
        %5496 = vmatprep.subr.bf16.mxu0 0
        %5497 = vmatpush1.bf16.msra.mxu0 %v5452
        %5498 = vmatprep.subr.bf16.mxu0 0
        %5499 = vmatpush1.bf16.msra.mxu0 %v5453
        %5500 = vmatprep.subr.bf16.mxu0 0
        %5501 = vmatpush1.bf16.msra.mxu0 %v5454
        %5502 = vmatprep.subr.bf16.mxu0 0
        %5503 = vmatpush1.bf16.msra.mxu0 %v5455
        %5504 = vmatprep.subr.bf16.mxu0 0
        %5505 = vmatpush1.bf16.msra.mxu0 %v5456
        %5506 = vmatprep.subr.bf16.mxu0 0
        %5507 = vmatpush1.bf16.msra.mxu0 %v5457
        %5508 = vmatprep.subr.bf16.mxu0 0
        %5509 = vmatpush1.bf16.msra.mxu0 %v5458
        %5510 = vmatprep.subr.bf16.mxu0 0
        %5511 = vmatpush1.bf16.msra.mxu0 0
        %5512 = vmatprep.subr.bf16.mxu0 0
        %5513 = vmatpush1.bf16.msra.mxu0 0
        %5514 = vmatprep.subr.bf16.mxu0 0
        %5515 = vmatpush1.bf16.msra.mxu0 0
        %5516 = vmatprep.subr.bf16.mxu0 0
        %5517 = vmatpush1.bf16.msra.mxu0 0
        %5518 = vmatprep.subr.bf16.mxu0 0
        %5519 = vmatpush1.bf16.msra.mxu0 0
        %5520 = vmatprep.subr.bf16.mxu0 0
        %5521 = vmatpush1.bf16.msra.mxu0 0
        %5522 = vmatprep.subr.bf16.mxu0 0
        %5523 = vmatpush1.bf16.msra.mxu0 0
        %5524 = vmatprep.mubr.bf16.mxu0 %v5469
        %5525 = vmatmul.mubr.bf16.gmra.mrb[0].mxu0 %v5373
        %v5526 = vpop.f32.mrb[0].mxu0
        %v5527 = vadd.f32 %v5412, %v5526
        %v5528 = vpop.f32.mrb[0].mxu0
        %v5529 = vpop.f32.mrb[0].mxu0
        %v5530 = vadd.f32 %v5412, %v5529
        %v5531 = vpop.f32.mrb[0].mxu0
        %5532 = vmatprep.mubr.bf16.mxu0 %v5472
        %5533 = vmatmul.mubr.bf16.gmra.mrb[0].mxu0 %v5375
        %v5534 = vpop.f32.mrb[0].mxu0
        %v5535 = vadd.f32 %v5412, %v5534
        %v5536 = vpop.f32.mrb[0].mxu0
        %v5537 = vpop.f32.mrb[0].mxu0
        %v5538 = vadd.f32 %v5412, %v5537
        %v5539 = vpop.f32.mrb[0].mxu0
        %5540 = vmatprep.mubr.bf16.mxu0 %v5475
        %5541 = vmatmul.mubr.bf16.gmra.mrb[0].mxu0 %v5377
        %v5542 = vpop.f32.mrb[0].mxu0
        %v5543 = vadd.f32 %v5412, %v5542
        %v5544 = vpop.f32.mrb[0].mxu0
        %v5545 = vpop.f32.mrb[0].mxu0
        %v5546 = vadd.f32 %v5412, %v5545
        %v5547 = vpop.f32.mrb[0].mxu0
        %5548 = vmatprep.mubr.bf16.mxu0 %v5478
        %5549 = vmatmul.mubr.bf16.gmra.mrb[0].mxu0 %v5379
        %v5550 = vpop.f32.mrb[0].mxu0
        %v5551 = vadd.f32 %v5412, %v5550
        %v5552 = vpop.f32.mrb[0].mxu0
        %v5553 = vpop.f32.mrb[0].mxu0
        %v5554 = vadd.f32 %v5412, %v5553
        %v5555 = vpop.f32.mrb[0].mxu0
        %5556 = vmatprep.mubr.bf16.mxu0 %v5481
        %5557 = vmatmul.mubr.bf16.gmra.mrb[0].mxu0 %v5381
        %v5558 = vpop.f32.mrb[0].mxu0
        %v5559 = vadd.f32 %v5412, %v5558
        %v5560 = vpop.f32.mrb[0].mxu0
        %v5561 = vpop.f32.mrb[0].mxu0
        %v5562 = vadd.f32 %v5412, %v5561
        %v5563 = vpop.f32.mrb[0].mxu0
        %5564 = vmatprep.mubr.bf16.mxu0 %v5484
        %5565 = vmatmul.mubr.bf16.gmra.mrb[0].mxu0 %v5383
        %v5566 = vpop.f32.mrb[0].mxu0
        %v5567 = vadd.f32 %v5412, %v5566
        %v5568 = vpop.f32.mrb[0].mxu0
        %v5569 = vpop.f32.mrb[0].mxu0
        %v5570 = vadd.f32 %v5412, %v5569
        %v5571 = vpop.f32.mrb[0].mxu0
        %5572 = vmatprep.mubr.bf16.mxu0 %v5487
        %5573 = vmatmul.mubr.bf16.gmra.mrb[0].mxu0 %v5385
        %v5574 = vpop.f32.mrb[0].mxu0
        %v5575 = vadd.f32 %v5412, %v5574
        %v5576 = vpop.f32.mrb[0].mxu0
        %v5577 = vpop.f32.mrb[0].mxu0
        %v5578 = vadd.f32 %v5412, %v5577
        %v5579 = vpop.f32.mrb[0].mxu0
        %5580 = vmatprep.mubr.bf16.mxu0 %v5490
        %5581 = vmatmul.mubr.bf16.gmra.mrb[0].mxu0 %v5387
        %v5582 = vpop.f32.mrb[0].mxu0
        %v5583 = vadd.f32 %v5412, %v5582
        %v5584 = vpop.f32.mrb[0].mxu0
        %v5585 = vpop.f32.mrb[0].mxu0
        %v5586 = vadd.f32 %v5412, %v5585
        %v5587 = vpop.f32.mrb[0].mxu0
        %5588 = vdwg.mxu0
        %v5589 = vmax.f32 %v5527, 0.0
        %v5590 = vmax.f32 %v5530, 0.0
        %v5591 = vmax.f32 %v5535, 0.0
        %v5592 = vmax.f32 %v5538, 0.0
        %v5593 = vmax.f32 %v5543, 0.0
        %v5594 = vmax.f32 %v5546, 0.0
        %v5595 = vmax.f32 %v5551, 0.0
        %v5596 = vmax.f32 %v5554, 0.0
        %v5597 = vmax.f32 %v5559, 0.0
        %v5598 = vmax.f32 %v5562, 0.0
        %v5599 = vmax.f32 %v5567, 0.0
        %v5600 = vmax.f32 %v5570, 0.0
        %v5601 = vmax.f32 %v5575, 0.0
        %v5602 = vmax.f32 %v5578, 0.0
        %v5603 = vmax.f32 %v5583, 0.0
        %v5604 = vmax.f32 %v5586, 0.0
        %v5605 = vpack.c.bf16 %v5590, %v5589
        %v5606 = vpack.c.bf16 %v5592, %v5591
        %v5607 = vpack.c.bf16 %v5594, %v5593
        %v5608 = vpack.c.bf16 %v5596, %v5595
        %v5609 = vpack.c.bf16 %v5598, %v5597
        %v5610 = vpack.c.bf16 %v5600, %v5599
        %v5611 = vpack.c.bf16 %v5602, %v5601
        %v5612 = vpack.c.bf16 %v5604, %v5603
        %v5613 = vld [vmem:[%s404] sm:$0xf]
        %v5614 = vld [vmem:[%s404 + $0x4] sm:$0xf]
        %v5615 = vld [vmem:[%s407] sm:$0x1]
        %v5617 = vlaneseq
        %v5618 = vshrl.u32 %v5617, 7
        %v5619 = vsub.s32 0, %v5618
        %v5620 = vrot.slane %v5615, %v5619
        %v5624 = vunpack.c.l.b16 %v5613
        %v5625 = vunpack.c.l.b16 %v5614
        %v5626 = vpack.c.b16 %v5625, %v5624
        %v5629 = vsel %vm3825, %v5605, 0
        %v5632 = vsel %vm3825, %v5606, 0
        %v5635 = vsel %vm3825, %v5607, 0
        %v5638 = vsel %vm3825, %v5608, 0
        %v5641 = vsel %vm3825, %v5609, 0
        %v5644 = vsel %vm3825, %v5610, 0
        %v5647 = vsel %vm3825, %v5611, 0
        %v5650 = vsel %vm3825, %v5612, 0
        %5652 = vmatprep.subr.bf16.mxu0 0
        %5653 = vmatpush1.bf16.msra.mxu0 %v5626
        %5654 = vmatprep.subr.bf16.mxu0 0
        %5655 = vmatpush1.bf16.msra.mxu0 0
        %5656 = vmatprep.subr.bf16.mxu0 0
        %5657 = vmatpush1.bf16.msra.mxu0 0
        %5658 = vmatprep.subr.bf16.mxu0 0
        %5659 = vmatpush1.bf16.msra.mxu0 0
        %5660 = vmatprep.subr.bf16.mxu0 0
        %5661 = vmatpush1.bf16.msra.mxu0 0
        %5662 = vmatprep.subr.bf16.mxu0 0
        %5663 = vmatpush1.bf16.msra.mxu0 0
        %5664 = vmatprep.subr.bf16.mxu0 0
        %5665 = vmatpush1.bf16.msra.mxu0 0
        %5666 = vmatprep.subr.bf16.mxu0 0
        %5667 = vmatpush1.bf16.msra.mxu0 0
        %5668 = vmatprep.subr.bf16.mxu0 0
        %5669 = vmatpush1.bf16.msra.mxu0 0
        %5670 = vmatprep.subr.bf16.mxu0 0
        %5671 = vmatpush1.bf16.msra.mxu0 0
        %5672 = vmatprep.subr.bf16.mxu0 0
        %5673 = vmatpush1.bf16.msra.mxu0 0
        %5674 = vmatprep.subr.bf16.mxu0 0
        %5675 = vmatpush1.bf16.msra.mxu0 0
        %5676 = vmatprep.subr.bf16.mxu0 0
        %5677 = vmatpush1.bf16.msra.mxu0 0
        %5678 = vmatprep.subr.bf16.mxu0 0
        %5679 = vmatpush1.bf16.msra.mxu0 0
        %5680 = vmatprep.subr.bf16.mxu0 0
        %5681 = vmatpush1.bf16.msra.mxu0 0
        %5682 = vmatprep.subr.bf16.mxu0 0
        %5683 = vmatpush1.bf16.msra.mxu0 0
        %5684 = vmatprep.mubr.bf16.mxu0 0
        %5685 = vmatmul.mubr.bf16.gmra.mrb[0].mxu0 %v5629
        %v5686 = vpop.f32.mrb[0].mxu0
        %v5687 = vadd.f32 %v5620, %v5686
        %v5688 = vpop.f32.mrb[0].mxu0
        %v5689 = vpop.f32.mrb[0].mxu0
        %v5690 = vadd.f32 %v5620, %v5689
        %v5691 = vpop.f32.mrb[0].mxu0
        %5692 = vmatprep.mubr.bf16.mxu0 0
        %5693 = vmatmul.mubr.bf16.gmra.mrb[0].mxu0 %v5632
        %v5694 = vpop.f32.mrb[0].mxu0
        %v5695 = vadd.f32 %v5620, %v5694
        %v5696 = vpop.f32.mrb[0].mxu0
        %v5697 = vpop.f32.mrb[0].mxu0
        %v5698 = vadd.f32 %v5620, %v5697
        %v5699 = vpop.f32.mrb[0].mxu0
        %5700 = vmatprep.mubr.bf16.mxu0 0
        %5701 = vmatmul.mubr.bf16.gmra.mrb[0].mxu0 %v5635
        %v5702 = vpop.f32.mrb[0].mxu0
        %v5703 = vadd.f32 %v5620, %v5702
        %v5704 = vpop.f32.mrb[0].mxu0
        %v5705 = vpop.f32.mrb[0].mxu0
        %v5706 = vadd.f32 %v5620, %v5705
        %v5707 = vpop.f32.mrb[0].mxu0
        %5708 = vmatprep.mubr.bf16.mxu0 0
        %5709 = vmatmul.mubr.bf16.gmra.mrb[0].mxu0 %v5638
        %v5710 = vpop.f32.mrb[0].mxu0
        %v5711 = vadd.f32 %v5620, %v5710
        %v5712 = vpop.f32.mrb[0].mxu0
        %v5713 = vpop.f32.mrb[0].mxu0
        %v5714 = vadd.f32 %v5620, %v5713
        %v5715 = vpop.f32.mrb[0].mxu0
        %5716 = vmatprep.mubr.bf16.mxu0 0
        %5717 = vmatmul.mubr.bf16.gmra.mrb[0].mxu0 %v5641
        %v5718 = vpop.f32.mrb[0].mxu0
        %v5719 = vadd.f32 %v5620, %v5718
        %v5720 = vpop.f32.mrb[0].mxu0
        %v5721 = vpop.f32.mrb[0].mxu0
        %v5722 = vadd.f32 %v5620, %v5721
        %v5723 = vpop.f32.mrb[0].mxu0
        %5724 = vmatprep.mubr.bf16.mxu0 0
        %5725 = vmatmul.mubr.bf16.gmra.mrb[0].mxu0 %v5644
        %v5726 = vpop.f32.mrb[0].mxu0
        %v5727 = vadd.f32 %v5620, %v5726
        %v5728 = vpop.f32.mrb[0].mxu0
        %v5729 = vpop.f32.mrb[0].mxu0
        %v5730 = vadd.f32 %v5620, %v5729
        %v5731 = vpop.f32.mrb[0].mxu0
        %5732 = vmatprep.mubr.bf16.mxu0 0
        %5733 = vmatmul.mubr.bf16.gmra.mrb[0].mxu0 %v5647
        %v5734 = vpop.f32.mrb[0].mxu0
        %v5735 = vadd.f32 %v5620, %v5734
        %v5736 = vpop.f32.mrb[0].mxu0
        %v5737 = vpop.f32.mrb[0].mxu0
        %v5738 = vadd.f32 %v5620, %v5737
        %v5739 = vpop.f32.mrb[0].mxu0
        %5740 = vmatprep.mubr.bf16.mxu0 0
        %5741 = vmatmul.mubr.bf16.gmra.mrb[0].mxu0 %v5650
        %v5742 = vpop.f32.mrb[0].mxu0
        %v5743 = vadd.f32 %v5620, %v5742
        %v5744 = vpop.f32.mrb[0].mxu0
        %v5745 = vpop.f32.mrb[0].mxu0
        %v5746 = vadd.f32 %v5620, %v5745
        %v5747 = vpop.f32.mrb[0].mxu0
        %5748 = vdwg.mxu0
        %v5749 = vmax.f32 %v5687, 0.0
        %v5750 = vmax.f32 %v5690, 0.0
        %v5751 = vmax.f32 %v5695, 0.0
        %v5752 = vmax.f32 %v5698, 0.0
        %v5753 = vmax.f32 %v5703, 0.0
        %v5754 = vmax.f32 %v5706, 0.0
        %v5755 = vmax.f32 %v5711, 0.0
        %v5756 = vmax.f32 %v5714, 0.0
        %v5757 = vmax.f32 %v5719, 0.0
        %v5758 = vmax.f32 %v5722, 0.0
        %v5759 = vmax.f32 %v5727, 0.0
        %v5760 = vmax.f32 %v5730, 0.0
        %v5761 = vmax.f32 %v5735, 0.0
        %v5762 = vmax.f32 %v5738, 0.0
        %v5763 = vmax.f32 %v5743, 0.0
        %v5764 = vmax.f32 %v5746, 0.0
        %v5765 = vpack.c.bf16 %v5750, %v5749
        %v5766 = vpack.c.bf16 %v5752, %v5751
        %v5767 = vpack.c.bf16 %v5754, %v5753
        %v5768 = vpack.c.bf16 %v5756, %v5755
        %v5769 = vpack.c.bf16 %v5758, %v5757
        %v5770 = vpack.c.bf16 %v5760, %v5759
        %v5771 = vpack.c.bf16 %v5762, %v5761
        %v5772 = vpack.c.bf16 %v5764, %v5763
        %v5781 = vunpack.c.l.b16 %v5765
        %v5782 = vunpack.c.h.b16 %v5765
        %v5783 = vunpack.c.l.b16 %v5766
        %v5784 = vunpack.c.h.b16 %v5766
        %v5785 = vunpack.c.l.b16 %v5767
        %v5786 = vunpack.c.h.b16 %v5767
        %v5787 = vunpack.c.l.b16 %v5768
        %v5788 = vunpack.c.h.b16 %v5768
        %v5789 = vunpack.c.l.b16 %v5769
        %v5790 = vunpack.c.h.b16 %v5769
        %v5791 = vunpack.c.l.b16 %v5770
        %v5792 = vunpack.c.h.b16 %v5770
        %v5793 = vunpack.c.l.b16 %v5771
        %v5794 = vunpack.c.h.b16 %v5771
        %v5795 = vunpack.c.l.b16 %v5772
        %v5796 = vunpack.c.h.b16 %v5772
        %v5797 = vpack.c.b16 %v5781, %v5781
        %v5798 = vpack.c.b16 %v5782, %v5782
        %v5799 = vpack.c.b16 %v5783, %v5783
        %v5800 = vpack.c.b16 %v5784, %v5784
        %v5801 = vpack.c.b16 %v5785, %v5785
        %v5802 = vpack.c.b16 %v5786, %v5786
        %v5803 = vpack.c.b16 %v5787, %v5787
        %v5804 = vpack.c.b16 %v5788, %v5788
        %v5805 = vpack.c.b16 %v5789, %v5789
        %v5806 = vpack.c.b16 %v5790, %v5790
        %v5807 = vpack.c.b16 %v5791, %v5791
        %v5808 = vpack.c.b16 %v5792, %v5792
        %v5809 = vpack.c.b16 %v5793, %v5793
        %v5810 = vpack.c.b16 %v5794, %v5794
        %v5811 = vpack.c.b16 %v5795, %v5795
        %v5812 = vpack.c.b16 %v5796, %v5796
        %vm5829 = vcmask 257024
        %5830 = vst.msk [vmem:[%s416] sm:$0xf] %vm5829, %v5797
        %5831 = vst.msk [vmem:[%s416 + $0x4] sm:$0xf] %vm5829, %v5798
        %5832 = vst.msk [vmem:[%s416 + $0x8] sm:$0xf] %vm5829, %v5799
        %5833 = vst.msk [vmem:[%s416 + $0xc] sm:$0xf] %vm5829, %v5800
        %5834 = vst.msk [vmem:[%s416 + $0x10] sm:$0xf] %vm5829, %v5801
        %5835 = vst.msk [vmem:[%s416 + $0x14] sm:$0xf] %vm5829, %v5802
        %5836 = vst.msk [vmem:[%s416 + $0x18] sm:$0xf] %vm5829, %v5803
        %5837 = vst.msk [vmem:[%s416 + $0x1c] sm:$0xf] %vm5829, %v5804
        %5838 = vst.msk [vmem:[%s416 + $0x20] sm:$0xf] %vm5829, %v5805
        %5839 = vst.msk [vmem:[%s416 + $0x24] sm:$0xf] %vm5829, %v5806
        %5840 = vst.msk [vmem:[%s416 + $0x28] sm:$0xf] %vm5829, %v5807
        %5841 = vst.msk [vmem:[%s416 + $0x2c] sm:$0xf] %vm5829, %v5808
        %5842 = vst.msk [vmem:[%s416 + $0x30] sm:$0xf] %vm5829, %v5809
        %5843 = vst.msk [vmem:[%s416 + $0x34] sm:$0xf] %vm5829, %v5810
        %5844 = vst.msk [vmem:[%s416 + $0x38] sm:$0xf] %vm5829, %v5811
        %5845 = vst.msk [vmem:[%s416 + $0x3c] sm:$0xf] %vm5829, %v5812
      $region56: #{easpp_forward.4} parent=47 // pred_fallthru
        _
      %p5846 = scmp.eq.s32.totalorder %s22, 2
      // Predicated region
      $region57: #{easpp_forward.4} parent=47 // pred_check
        %p5847 = pneg %p5846
      $region58: #{easpp_forward.4} parent=47 // pred_check_branch
        %5849 = sbr.rel (%p5847) target = $region60
      $region59: #{easpp_forward.4} parent=47 // pred_region
        %v5850 = vld [vmem:[%s383] sm:$0xf]
        %v5851 = vld [vmem:[%s383 + $0x4] sm:$0xf]
        %v5852 = vld [vmem:[%s383 + $0x8] sm:$0xf]
        %v5853 = vld [vmem:[%s383 + $0xc] sm:$0xf]
        %v5854 = vld [vmem:[%s383 + $0x10] sm:$0xf]
        %v5855 = vld [vmem:[%s383 + $0x14] sm:$0xf]
        %v5856 = vld [vmem:[%s383 + $0x18] sm:$0xf]
        %v5857 = vld [vmem:[%s383 + $0x1c] sm:$0xf]
        %v5858 = vld [vmem:[%s383 + $0x20] sm:$0xf]
        %v5859 = vld [vmem:[%s383 + $0x24] sm:$0xf]
        %v5860 = vld [vmem:[%s383 + $0x28] sm:$0xf]
        %v5861 = vld [vmem:[%s383 + $0x2c] sm:$0xf]
        %v5862 = vld [vmem:[%s383 + $0x30] sm:$0xf]
        %v5863 = vld [vmem:[%s383 + $0x34] sm:$0xf]
        %v5864 = vld [vmem:[%s383 + $0x38] sm:$0xf]
        %v5865 = vld [vmem:[%s383 + $0x3c] sm:$0xf]
        %v5882 = vunpack.c.l.b16 %v5850
        %v5883 = vunpack.c.l.b16 %v5851
        %v5884 = vunpack.c.l.b16 %v5852
        %v5885 = vunpack.c.l.b16 %v5853
        %v5886 = vunpack.c.l.b16 %v5854
        %v5887 = vunpack.c.l.b16 %v5855
        %v5888 = vunpack.c.l.b16 %v5856
        %v5889 = vunpack.c.l.b16 %v5857
        %v5890 = vunpack.c.l.b16 %v5858
        %v5891 = vunpack.c.l.b16 %v5859
        %v5892 = vunpack.c.l.b16 %v5860
        %v5893 = vunpack.c.l.b16 %v5861
        %v5894 = vunpack.c.l.b16 %v5862
        %v5895 = vunpack.c.l.b16 %v5863
        %v5896 = vunpack.c.l.b16 %v5864
        %v5897 = vunpack.c.l.b16 %v5865
        %v5898 = vpack.c.b16 %v5883, %v5882
        %v5899 = vpack.c.b16 %v5885, %v5884
        %v5900 = vpack.c.b16 %v5887, %v5886
        %v5901 = vpack.c.b16 %v5889, %v5888
        %v5902 = vpack.c.b16 %v5891, %v5890
        %v5903 = vpack.c.b16 %v5893, %v5892
        %v5904 = vpack.c.b16 %v5895, %v5894
        %v5905 = vpack.c.b16 %v5897, %v5896
        %s5914 = scalar_lea.vmem [#allocation2], 288
        %vm5915 = vcmask 130048
        %5916 = vst.msk [vmem:[%s5914 + $0x8] sm:$0xff] %vm5915, %v5898
        %5917 = vst.msk [vmem:[%s5914 + $0x20] sm:$0xff] %vm5915, %v5899
        %5918 = vst.msk [vmem:[%s5914 + $0x38] sm:$0xff] %vm5915, %v5900
        %5919 = vst.msk [vmem:[%s5914 + $0x50] sm:$0xff] %vm5915, %v5901
        %5920 = vst.msk [vmem:[%s5914 + $0x68] sm:$0xff] %vm5915, %v5902
        %5921 = vst.msk [vmem:[%s5914 + $0x80] sm:$0xff] %vm5915, %v5903
        %5922 = vst.msk [vmem:[%s5914 + $0x98] sm:$0xff] %vm5915, %v5904
        %5923 = vst.msk [vmem:[%s5914 + $0xb0] sm:$0xff] %vm5915, %v5905
        %v5924 = vld [vmem:[#allocation2] sm:$0xfc]
        %v5925 = vld [vmem:[#allocation2 + $0x8] sm:$0x3]
        %v5926 = vld [vmem:[#allocation2 + $0x18] sm:$0xfc]
        %v5927 = vld [vmem:[#allocation2 + $0x20] sm:$0x3]
        %v5928 = vld [vmem:[#allocation2 + $0x30] sm:$0xfc]
        %v5929 = vld [vmem:[#allocation2 + $0x38] sm:$0x3]
        %v5930 = vld [vmem:[#allocation2 + $0x48] sm:$0xfc]
        %v5931 = vld [vmem:[#allocation2 + $0x50] sm:$0x3]
        %v5932 = vld [vmem:[#allocation2 + $0x60] sm:$0xfc]
        %v5933 = vld [vmem:[#allocation2 + $0x68] sm:$0x3]
        %v5934 = vld [vmem:[#allocation2 + $0x78] sm:$0xfc]
        %v5935 = vld [vmem:[#allocation2 + $0x80] sm:$0x3]
        %v5936 = vld [vmem:[#allocation2 + $0x90] sm:$0xfc]
        %v5937 = vld [vmem:[#allocation2 + $0x98] sm:$0x3]
        %v5938 = vld [vmem:[#allocation2 + $0xa8] sm:$0xfc]
        %v5939 = vld [vmem:[#allocation2 + $0xb0] sm:$0x3]
        %vm5956 = vcmask 1045504
        %v5957 = vrot.slane %v5924, 2
        %v5958 = vrot.slane %v5925, 2
        %v5959 = vsel %vm5956, %v5957, %v5958
        %v5960 = vrot.slane %v5926, 2
        %v5961 = vrot.slane %v5927, 2
        %v5962 = vsel %vm5956, %v5960, %v5961
        %v5963 = vrot.slane %v5928, 2
        %v5964 = vrot.slane %v5929, 2
        %v5965 = vsel %vm5956, %v5963, %v5964
        %v5966 = vrot.slane %v5930, 2
        %v5967 = vrot.slane %v5931, 2
        %v5968 = vsel %vm5956, %v5966, %v5967
        %v5969 = vrot.slane %v5932, 2
        %v5970 = vrot.slane %v5933, 2
        %v5971 = vsel %vm5956, %v5969, %v5970
        %v5972 = vrot.slane %v5934, 2
        %v5973 = vrot.slane %v5935, 2
        %v5974 = vsel %vm5956, %v5972, %v5973
        %v5975 = vrot.slane %v5936, 2
        %v5976 = vrot.slane %v5937, 2
        %v5977 = vsel %vm5956, %v5975, %v5976
        %v5978 = vrot.slane %v5938, 2
        %v5979 = vrot.slane %v5939, 2
        %v5980 = vsel %vm5956, %v5978, %v5979
        %5989 = vst.msk [vmem:[#allocation3] sm:$0xff] %vm5915, %v5959
        %5990 = vst.msk [vmem:[#allocation3 + $0x10] sm:$0xff] %vm5915, %v5962
        %5991 = vst.msk [vmem:[#allocation3 + $0x20] sm:$0xff] %vm5915, %v5965
        %5992 = vst.msk [vmem:[#allocation3 + $0x30] sm:$0xff] %vm5915, %v5968
        %5993 = vst.msk [vmem:[#allocation3 + $0x40] sm:$0xff] %vm5915, %v5971
        %5994 = vst.msk [vmem:[#allocation3 + $0x50] sm:$0xff] %vm5915, %v5974
        %5995 = vst.msk [vmem:[#allocation3 + $0x60] sm:$0xff] %vm5915, %v5977
        %5996 = vst.msk [vmem:[#allocation3 + $0x70] sm:$0xff] %vm5915, %v5980
        %v5997 = vld [vmem:[#allocation2 + $0x8] sm:$0xff]
        %v5998 = vld [vmem:[#allocation2 + $0x20] sm:$0xff]
        %v5999 = vld [vmem:[#allocation2 + $0x38] sm:$0xff]
        %v6000 = vld [vmem:[#allocation2 + $0x50] sm:$0xff]
        %v6001 = vld [vmem:[#allocation2 + $0x68] sm:$0xff]
        %v6002 = vld [vmem:[#allocation2 + $0x80] sm:$0xff]
        %v6003 = vld [vmem:[#allocation2 + $0x98] sm:$0xff]
        %v6004 = vld [vmem:[#allocation2 + $0xb0] sm:$0xff]
        %6013 = vrot.lane.b32.xlu0 %v5997, 16
        %v6014 = vpop.permute.xlu0 %6013
        %6015 = vrot.lane.b32.xlu0 %v5998, 16
        %v6016 = vpop.permute.xlu0 %6015
        %6017 = vrot.lane.b32.xlu0 %v5999, 16
        %v6018 = vpop.permute.xlu0 %6017
        %6019 = vrot.lane.b32.xlu0 %v6000, 16
        %v6020 = vpop.permute.xlu0 %6019
        %6021 = vrot.lane.b32.xlu0 %v6001, 16
        %v6022 = vpop.permute.xlu0 %6021
        %6023 = vrot.lane.b32.xlu0 %v6002, 16
        %v6024 = vpop.permute.xlu0 %6023
        %6025 = vrot.lane.b32.xlu0 %v6003, 16
        %v6026 = vpop.permute.xlu0 %6025
        %6027 = vrot.lane.b32.xlu0 %v6004, 16
        %v6028 = vpop.permute.xlu0 %6027
        %vm6037 = vcmask 261248
        %6038 = vst.msk [vmem:[#allocation3] sm:$0xff] %vm6037, %v6014
        %6039 = vst.msk [vmem:[#allocation3 + $0x10] sm:$0xff] %vm6037, %v6016
        %6040 = vst.msk [vmem:[#allocation3 + $0x20] sm:$0xff] %vm6037, %v6018
        %6041 = vst.msk [vmem:[#allocation3 + $0x30] sm:$0xff] %vm6037, %v6020
        %6042 = vst.msk [vmem:[#allocation3 + $0x40] sm:$0xff] %vm6037, %v6022
        %6043 = vst.msk [vmem:[#allocation3 + $0x50] sm:$0xff] %vm6037, %v6024
        %6044 = vst.msk [vmem:[#allocation3 + $0x60] sm:$0xff] %vm6037, %v6026
        %6045 = vst.msk [vmem:[#allocation3 + $0x70] sm:$0xff] %vm6037, %v6028
        %v6046 = vld [vmem:[#allocation2 + $0x8] sm:$0xc0]
        %v6047 = vld [vmem:[#allocation2 + $0x10] sm:$0x3f]
        %v6048 = vld [vmem:[#allocation2 + $0x20] sm:$0xc0]
        %v6049 = vld [vmem:[#allocation2 + $0x28] sm:$0x3f]
        %v6050 = vld [vmem:[#allocation2 + $0x38] sm:$0xc0]
        %v6051 = vld [vmem:[#allocation2 + $0x40] sm:$0x3f]
        %v6052 = vld [vmem:[#allocation2 + $0x50] sm:$0xc0]
        %v6053 = vld [vmem:[#allocation2 + $0x58] sm:$0x3f]
        %v6054 = vld [vmem:[#allocation2 + $0x68] sm:$0xc0]
        %v6055 = vld [vmem:[#allocation2 + $0x70] sm:$0x3f]
        %v6056 = vld [vmem:[#allocation2 + $0x80] sm:$0xc0]
        %v6057 = vld [vmem:[#allocation2 + $0x88] sm:$0x3f]
        %v6058 = vld [vmem:[#allocation2 + $0x98] sm:$0xc0]
        %v6059 = vld [vmem:[#allocation2 + $0xa0] sm:$0x3f]
        %v6060 = vld [vmem:[#allocation2 + $0xb0] sm:$0xc0]
        %v6061 = vld [vmem:[#allocation2 + $0xb8] sm:$0x3f]
        %vm6078 = vcmask 1041408
        %v6079 = vrot.slane %v6046, 6
        %v6080 = vrot.slane %v6047, 6
        %v6081 = vsel %vm6078, %v6079, %v6080
        %v6082 = vrot.slane %v6048, 6
        %v6083 = vrot.slane %v6049, 6
        %v6084 = vsel %vm6078, %v6082, %v6083
        %v6085 = vrot.slane %v6050, 6
        %v6086 = vrot.slane %v6051, 6
        %v6087 = vsel %vm6078, %v6085, %v6086
        %v6088 = vrot.slane %v6052, 6
        %v6089 = vrot.slane %v6053, 6
        %v6090 = vsel %vm6078, %v6088, %v6089
        %v6091 = vrot.slane %v6054, 6
        %v6092 = vrot.slane %v6055, 6
        %v6093 = vsel %vm6078, %v6091, %v6092
        %v6094 = vrot.slane %v6056, 6
        %v6095 = vrot.slane %v6057, 6
        %v6096 = vsel %vm6078, %v6094, %v6095
        %v6097 = vrot.slane %v6058, 6
        %v6098 = vrot.slane %v6059, 6
        %v6099 = vsel %vm6078, %v6097, %v6098
        %v6100 = vrot.slane %v6060, 6
        %v6101 = vrot.slane %v6061, 6
        %v6102 = vsel %vm6078, %v6100, %v6101
        %6103 = vrot.lane.b32.xlu0 %v6081, 32
        %v6104 = vpop.permute.xlu0 %6103
        %6105 = vrot.lane.b32.xlu0 %v6084, 32
        %v6106 = vpop.permute.xlu0 %6105
        %6107 = vrot.lane.b32.xlu0 %v6087, 32
        %v6108 = vpop.permute.xlu0 %6107
        %6109 = vrot.lane.b32.xlu0 %v6090, 32
        %v6110 = vpop.permute.xlu0 %6109
        %6111 = vrot.lane.b32.xlu0 %v6093, 32
        %v6112 = vpop.permute.xlu0 %6111
        %6113 = vrot.lane.b32.xlu0 %v6096, 32
        %v6114 = vpop.permute.xlu0 %6113
        %6115 = vrot.lane.b32.xlu0 %v6099, 32
        %v6116 = vpop.permute.xlu0 %6115
        %6117 = vrot.lane.b32.xlu0 %v6102, 32
        %v6118 = vpop.permute.xlu0 %6117
        %vm6127 = vcmask 392448
        %6128 = vst.msk [vmem:[#allocation3] sm:$0xff] %vm6127, %v6104
        %6129 = vst.msk [vmem:[#allocation3 + $0x10] sm:$0xff] %vm6127, %v6106
        %6130 = vst.msk [vmem:[#allocation3 + $0x20] sm:$0xff] %vm6127, %v6108
        %6131 = vst.msk [vmem:[#allocation3 + $0x30] sm:$0xff] %vm6127, %v6110
        %6132 = vst.msk [vmem:[#allocation3 + $0x40] sm:$0xff] %vm6127, %v6112
        %6133 = vst.msk [vmem:[#allocation3 + $0x50] sm:$0xff] %vm6127, %v6114
        %6134 = vst.msk [vmem:[#allocation3 + $0x60] sm:$0xff] %vm6127, %v6116
        %6135 = vst.msk [vmem:[#allocation3 + $0x70] sm:$0xff] %vm6127, %v6118
        %v6136 = vld [vmem:[%s5914] sm:$0xfc]
        %v6137 = vld [vmem:[%s5914 + $0x8] sm:$0x3]
        %v6138 = vld [vmem:[%s5914 + $0x18] sm:$0xfc]
        %v6139 = vld [vmem:[%s5914 + $0x20] sm:$0x3]
        %v6140 = vld [vmem:[%s5914 + $0x30] sm:$0xfc]
        %v6141 = vld [vmem:[%s5914 + $0x38] sm:$0x3]
        %v6142 = vld [vmem:[%s5914 + $0x48] sm:$0xfc]
        %v6143 = vld [vmem:[%s5914 + $0x50] sm:$0x3]
        %v6144 = vld [vmem:[%s5914 + $0x60] sm:$0xfc]
        %v6145 = vld [vmem:[%s5914 + $0x68] sm:$0x3]
        %v6146 = vld [vmem:[%s5914 + $0x78] sm:$0xfc]
        %v6147 = vld [vmem:[%s5914 + $0x80] sm:$0x3]
        %v6148 = vld [vmem:[%s5914 + $0x90] sm:$0xfc]
        %v6149 = vld [vmem:[%s5914 + $0x98] sm:$0x3]
        %v6150 = vld [vmem:[%s5914 + $0xa8] sm:$0xfc]
        %v6151 = vld [vmem:[%s5914 + $0xb0] sm:$0x3]
        %v6168 = vrot.slane %v6136, 2
        %v6169 = vrot.slane %v6137, 2
        %v6170 = vsel %vm5956, %v6168, %v6169
        %v6171 = vrot.slane %v6138, 2
        %v6172 = vrot.slane %v6139, 2
        %v6173 = vsel %vm5956, %v6171, %v6172
        %v6174 = vrot.slane %v6140, 2
        %v6175 = vrot.slane %v6141, 2
        %v6176 = vsel %vm5956, %v6174, %v6175
        %v6177 = vrot.slane %v6142, 2
        %v6178 = vrot.slane %v6143, 2
        %v6179 = vsel %vm5956, %v6177, %v6178
        %v6180 = vrot.slane %v6144, 2
        %v6181 = vrot.slane %v6145, 2
        %v6182 = vsel %vm5956, %v6180, %v6181
        %v6183 = vrot.slane %v6146, 2
        %v6184 = vrot.slane %v6147, 2
        %v6185 = vsel %vm5956, %v6183, %v6184
        %v6186 = vrot.slane %v6148, 2
        %v6187 = vrot.slane %v6149, 2
        %v6188 = vsel %vm5956, %v6186, %v6187
        %v6189 = vrot.slane %v6150, 2
        %v6190 = vrot.slane %v6151, 2
        %v6191 = vsel %vm5956, %v6189, %v6190
        %6192 = vrot.lane.b32.xlu0 %v6170, 48
        %v6193 = vpop.permute.xlu0 %6192
        %6194 = vrot.lane.b32.xlu0 %v6173, 48
        %v6195 = vpop.permute.xlu0 %6194
        %6196 = vrot.lane.b32.xlu0 %v6176, 48
        %v6197 = vpop.permute.xlu0 %6196
        %6198 = vrot.lane.b32.xlu0 %v6179, 48
        %v6199 = vpop.permute.xlu0 %6198
        %6200 = vrot.lane.b32.xlu0 %v6182, 48
        %v6201 = vpop.permute.xlu0 %6200
        %6202 = vrot.lane.b32.xlu0 %v6185, 48
        %v6203 = vpop.permute.xlu0 %6202
        %6204 = vrot.lane.b32.xlu0 %v6188, 48
        %v6205 = vpop.permute.xlu0 %6204
        %6206 = vrot.lane.b32.xlu0 %v6191, 48
        %v6207 = vpop.permute.xlu0 %6206
        %vm6216 = vcmask 523648
        %6217 = vst.msk [vmem:[#allocation3] sm:$0xff] %vm6216, %v6193
        %6218 = vst.msk [vmem:[#allocation3 + $0x10] sm:$0xff] %vm6216, %v6195
        %6219 = vst.msk [vmem:[#allocation3 + $0x20] sm:$0xff] %vm6216, %v6197
        %6220 = vst.msk [vmem:[#allocation3 + $0x30] sm:$0xff] %vm6216, %v6199
        %6221 = vst.msk [vmem:[#allocation3 + $0x40] sm:$0xff] %vm6216, %v6201
        %6222 = vst.msk [vmem:[#allocation3 + $0x50] sm:$0xff] %vm6216, %v6203
        %6223 = vst.msk [vmem:[#allocation3 + $0x60] sm:$0xff] %vm6216, %v6205
        %6224 = vst.msk [vmem:[#allocation3 + $0x70] sm:$0xff] %vm6216, %v6207
        %v6225 = vld [vmem:[%s5914 + $0x8] sm:$0xff]
        %v6226 = vld [vmem:[%s5914 + $0x20] sm:$0xff]
        %v6227 = vld [vmem:[%s5914 + $0x38] sm:$0xff]
        %v6228 = vld [vmem:[%s5914 + $0x50] sm:$0xff]
        %v6229 = vld [vmem:[%s5914 + $0x68] sm:$0xff]
        %v6230 = vld [vmem:[%s5914 + $0x80] sm:$0xff]
        %v6231 = vld [vmem:[%s5914 + $0x98] sm:$0xff]
        %v6232 = vld [vmem:[%s5914 + $0xb0] sm:$0xff]
        %6241 = vrot.lane.b32.xlu0 %v6225, 64
        %v6242 = vpop.permute.xlu0 %6241
        %6243 = vrot.lane.b32.xlu0 %v6226, 64
        %v6244 = vpop.permute.xlu0 %6243
        %6245 = vrot.lane.b32.xlu0 %v6227, 64
        %v6246 = vpop.permute.xlu0 %6245
        %6247 = vrot.lane.b32.xlu0 %v6228, 64
        %v6248 = vpop.permute.xlu0 %6247
        %6249 = vrot.lane.b32.xlu0 %v6229, 64
        %v6250 = vpop.permute.xlu0 %6249
        %6251 = vrot.lane.b32.xlu0 %v6230, 64
        %v6252 = vpop.permute.xlu0 %6251
        %6253 = vrot.lane.b32.xlu0 %v6231, 64
        %v6254 = vpop.permute.xlu0 %6253
        %6255 = vrot.lane.b32.xlu0 %v6232, 64
        %v6256 = vpop.permute.xlu0 %6255
        %vm6265 = vcmask 654848
        %6266 = vst.msk [vmem:[#allocation3] sm:$0xff] %vm6265, %v6242
        %6267 = vst.msk [vmem:[#allocation3 + $0x10] sm:$0xff] %vm6265, %v6244
        %6268 = vst.msk [vmem:[#allocation3 + $0x20] sm:$0xff] %vm6265, %v6246
        %6269 = vst.msk [vmem:[#allocation3 + $0x30] sm:$0xff] %vm6265, %v6248
        %6270 = vst.msk [vmem:[#allocation3 + $0x40] sm:$0xff] %vm6265, %v6250
        %6271 = vst.msk [vmem:[#allocation3 + $0x50] sm:$0xff] %vm6265, %v6252
        %6272 = vst.msk [vmem:[#allocation3 + $0x60] sm:$0xff] %vm6265, %v6254
        %6273 = vst.msk [vmem:[#allocation3 + $0x70] sm:$0xff] %vm6265, %v6256
        %v6274 = vld [vmem:[%s5914 + $0x8] sm:$0xc0]
        %v6275 = vld [vmem:[%s5914 + $0x10] sm:$0x3f]
        %v6276 = vld [vmem:[%s5914 + $0x20] sm:$0xc0]
        %v6277 = vld [vmem:[%s5914 + $0x28] sm:$0x3f]
        %v6278 = vld [vmem:[%s5914 + $0x38] sm:$0xc0]
        %v6279 = vld [vmem:[%s5914 + $0x40] sm:$0x3f]
        %v6280 = vld [vmem:[%s5914 + $0x50] sm:$0xc0]
        %v6281 = vld [vmem:[%s5914 + $0x58] sm:$0x3f]
        %v6282 = vld [vmem:[%s5914 + $0x68] sm:$0xc0]
        %v6283 = vld [vmem:[%s5914 + $0x70] sm:$0x3f]
        %v6284 = vld [vmem:[%s5914 + $0x80] sm:$0xc0]
        %v6285 = vld [vmem:[%s5914 + $0x88] sm:$0x3f]
        %v6286 = vld [vmem:[%s5914 + $0x98] sm:$0xc0]
        %v6287 = vld [vmem:[%s5914 + $0xa0] sm:$0x3f]
        %v6288 = vld [vmem:[%s5914 + $0xb0] sm:$0xc0]
        %v6289 = vld [vmem:[%s5914 + $0xb8] sm:$0x3f]
        %v6306 = vrot.slane %v6274, 6
        %v6307 = vrot.slane %v6275, 6
        %v6308 = vsel %vm6078, %v6306, %v6307
        %v6309 = vrot.slane %v6276, 6
        %v6310 = vrot.slane %v6277, 6
        %v6311 = vsel %vm6078, %v6309, %v6310
        %v6312 = vrot.slane %v6278, 6
        %v6313 = vrot.slane %v6279, 6
        %v6314 = vsel %vm6078, %v6312, %v6313
        %v6315 = vrot.slane %v6280, 6
        %v6316 = vrot.slane %v6281, 6
        %v6317 = vsel %vm6078, %v6315, %v6316
        %v6318 = vrot.slane %v6282, 6
        %v6319 = vrot.slane %v6283, 6
        %v6320 = vsel %vm6078, %v6318, %v6319
        %v6321 = vrot.slane %v6284, 6
        %v6322 = vrot.slane %v6285, 6
        %v6323 = vsel %vm6078, %v6321, %v6322
        %v6324 = vrot.slane %v6286, 6
        %v6325 = vrot.slane %v6287, 6
        %v6326 = vsel %vm6078, %v6324, %v6325
        %v6327 = vrot.slane %v6288, 6
        %v6328 = vrot.slane %v6289, 6
        %v6329 = vsel %vm6078, %v6327, %v6328
        %6330 = vrot.lane.b32.xlu0 %v6308, 80
        %v6331 = vpop.permute.xlu0 %6330
        %6332 = vrot.lane.b32.xlu0 %v6311, 80
        %v6333 = vpop.permute.xlu0 %6332
        %6334 = vrot.lane.b32.xlu0 %v6314, 80
        %v6335 = vpop.permute.xlu0 %6334
        %6336 = vrot.lane.b32.xlu0 %v6317, 80
        %v6337 = vpop.permute.xlu0 %6336
        %6338 = vrot.lane.b32.xlu0 %v6320, 80
        %v6339 = vpop.permute.xlu0 %6338
        %6340 = vrot.lane.b32.xlu0 %v6323, 80
        %v6341 = vpop.permute.xlu0 %6340
        %6342 = vrot.lane.b32.xlu0 %v6326, 80
        %v6343 = vpop.permute.xlu0 %6342
        %6344 = vrot.lane.b32.xlu0 %v6329, 80
        %v6345 = vpop.permute.xlu0 %6344
        %vm6354 = vcmask 786048
        %6355 = vst.msk [vmem:[#allocation3] sm:$0xff] %vm6354, %v6331
        %6356 = vst.msk [vmem:[#allocation3 + $0x10] sm:$0xff] %vm6354, %v6333
        %6357 = vst.msk [vmem:[#allocation3 + $0x20] sm:$0xff] %vm6354, %v6335
        %6358 = vst.msk [vmem:[#allocation3 + $0x30] sm:$0xff] %vm6354, %v6337
        %6359 = vst.msk [vmem:[#allocation3 + $0x40] sm:$0xff] %vm6354, %v6339
        %6360 = vst.msk [vmem:[#allocation3 + $0x50] sm:$0xff] %vm6354, %v6341
        %6361 = vst.msk [vmem:[#allocation3 + $0x60] sm:$0xff] %vm6354, %v6343
        %6362 = vst.msk [vmem:[#allocation3 + $0x70] sm:$0xff] %vm6354, %v6345
        %s6363 = scalar_lea.vmem [#allocation2], 576
        %v6364 = vld [vmem:[%s6363] sm:$0xfc]
        %v6365 = vld [vmem:[%s6363 + $0x8] sm:$0x3]
        %v6366 = vld [vmem:[%s6363 + $0x18] sm:$0xfc]
        %v6367 = vld [vmem:[%s6363 + $0x20] sm:$0x3]
        %v6368 = vld [vmem:[%s6363 + $0x30] sm:$0xfc]
        %v6369 = vld [vmem:[%s6363 + $0x38] sm:$0x3]
        %v6370 = vld [vmem:[%s6363 + $0x48] sm:$0xfc]
        %v6371 = vld [vmem:[%s6363 + $0x50] sm:$0x3]
        %v6372 = vld [vmem:[%s6363 + $0x60] sm:$0xfc]
        %v6373 = vld [vmem:[%s6363 + $0x68] sm:$0x3]
        %v6374 = vld [vmem:[%s6363 + $0x78] sm:$0xfc]
        %v6375 = vld [vmem:[%s6363 + $0x80] sm:$0x3]
        %v6376 = vld [vmem:[%s6363 + $0x90] sm:$0xfc]
        %v6377 = vld [vmem:[%s6363 + $0x98] sm:$0x3]
        %v6378 = vld [vmem:[%s6363 + $0xa8] sm:$0xfc]
        %v6379 = vld [vmem:[%s6363 + $0xb0] sm:$0x3]
        %v6396 = vrot.slane %v6364, 2
        %v6397 = vrot.slane %v6365, 2
        %v6398 = vsel %vm5956, %v6396, %v6397
        %v6399 = vrot.slane %v6366, 2
        %v6400 = vrot.slane %v6367, 2
        %v6401 = vsel %vm5956, %v6399, %v6400
        %v6402 = vrot.slane %v6368, 2
        %v6403 = vrot.slane %v6369, 2
        %v6404 = vsel %vm5956, %v6402, %v6403
        %v6405 = vrot.slane %v6370, 2
        %v6406 = vrot.slane %v6371, 2
        %v6407 = vsel %vm5956, %v6405, %v6406
        %v6408 = vrot.slane %v6372, 2
        %v6409 = vrot.slane %v6373, 2
        %v6410 = vsel %vm5956, %v6408, %v6409
        %v6411 = vrot.slane %v6374, 2
        %v6412 = vrot.slane %v6375, 2
        %v6413 = vsel %vm5956, %v6411, %v6412
        %v6414 = vrot.slane %v6376, 2
        %v6415 = vrot.slane %v6377, 2
        %v6416 = vsel %vm5956, %v6414, %v6415
        %v6417 = vrot.slane %v6378, 2
        %v6418 = vrot.slane %v6379, 2
        %v6419 = vsel %vm5956, %v6417, %v6418
        %6420 = vrot.lane.b32.xlu0 %v6398, 96
        %v6421 = vpop.permute.xlu0 %6420
        %6422 = vrot.lane.b32.xlu0 %v6401, 96
        %v6423 = vpop.permute.xlu0 %6422
        %6424 = vrot.lane.b32.xlu0 %v6404, 96
        %v6425 = vpop.permute.xlu0 %6424
        %6426 = vrot.lane.b32.xlu0 %v6407, 96
        %v6427 = vpop.permute.xlu0 %6426
        %6428 = vrot.lane.b32.xlu0 %v6410, 96
        %v6429 = vpop.permute.xlu0 %6428
        %6430 = vrot.lane.b32.xlu0 %v6413, 96
        %v6431 = vpop.permute.xlu0 %6430
        %6432 = vrot.lane.b32.xlu0 %v6416, 96
        %v6433 = vpop.permute.xlu0 %6432
        %6434 = vrot.lane.b32.xlu0 %v6419, 96
        %v6435 = vpop.permute.xlu0 %6434
        %vm6444 = vcmask 917248
        %6445 = vst.msk [vmem:[#allocation3] sm:$0xff] %vm6444, %v6421
        %6446 = vst.msk [vmem:[#allocation3 + $0x10] sm:$0xff] %vm6444, %v6423
        %6447 = vst.msk [vmem:[#allocation3 + $0x20] sm:$0xff] %vm6444, %v6425
        %6448 = vst.msk [vmem:[#allocation3 + $0x30] sm:$0xff] %vm6444, %v6427
        %6449 = vst.msk [vmem:[#allocation3 + $0x40] sm:$0xff] %vm6444, %v6429
        %6450 = vst.msk [vmem:[#allocation3 + $0x50] sm:$0xff] %vm6444, %v6431
        %6451 = vst.msk [vmem:[#allocation3 + $0x60] sm:$0xff] %vm6444, %v6433
        %6452 = vst.msk [vmem:[#allocation3 + $0x70] sm:$0xff] %vm6444, %v6435
        %v6453 = vld [vmem:[%s6363 + $0x8] sm:$0xff]
        %v6454 = vld [vmem:[%s6363 + $0x20] sm:$0xff]
        %v6455 = vld [vmem:[%s6363 + $0x38] sm:$0xff]
        %v6456 = vld [vmem:[%s6363 + $0x50] sm:$0xff]
        %v6457 = vld [vmem:[%s6363 + $0x68] sm:$0xff]
        %v6458 = vld [vmem:[%s6363 + $0x80] sm:$0xff]
        %v6459 = vld [vmem:[%s6363 + $0x98] sm:$0xff]
        %v6460 = vld [vmem:[%s6363 + $0xb0] sm:$0xff]
        %6469 = vrot.lane.b32.xlu0 %v6453, 112
        %v6470 = vpop.permute.xlu0 %6469
        %6471 = vrot.lane.b32.xlu0 %v6454, 112
        %v6472 = vpop.permute.xlu0 %6471
        %6473 = vrot.lane.b32.xlu0 %v6455, 112
        %v6474 = vpop.permute.xlu0 %6473
        %6475 = vrot.lane.b32.xlu0 %v6456, 112
        %v6476 = vpop.permute.xlu0 %6475
        %6477 = vrot.lane.b32.xlu0 %v6457, 112
        %v6478 = vpop.permute.xlu0 %6477
        %6479 = vrot.lane.b32.xlu0 %v6458, 112
        %v6480 = vpop.permute.xlu0 %6479
        %6481 = vrot.lane.b32.xlu0 %v6459, 112
        %v6482 = vpop.permute.xlu0 %6481
        %6483 = vrot.lane.b32.xlu0 %v6460, 112
        %v6484 = vpop.permute.xlu0 %6483
        %vm6493 = vcmask 1048448
        %6494 = vst.msk [vmem:[#allocation3] sm:$0xff] %vm6493, %v6470
        %6495 = vst.msk [vmem:[#allocation3 + $0x10] sm:$0xff] %vm6493, %v6472
        %6496 = vst.msk [vmem:[#allocation3 + $0x20] sm:$0xff] %vm6493, %v6474
        %6497 = vst.msk [vmem:[#allocation3 + $0x30] sm:$0xff] %vm6493, %v6476
        %6498 = vst.msk [vmem:[#allocation3 + $0x40] sm:$0xff] %vm6493, %v6478
        %6499 = vst.msk [vmem:[#allocation3 + $0x50] sm:$0xff] %vm6493, %v6480
        %6500 = vst.msk [vmem:[#allocation3 + $0x60] sm:$0xff] %vm6493, %v6482
        %6501 = vst.msk [vmem:[#allocation3 + $0x70] sm:$0xff] %vm6493, %v6484
        %v6502 = vld [vmem:[%s6363 + $0x8] sm:$0xc0]
        %v6503 = vld [vmem:[%s6363 + $0x10] sm:$0x3f]
        %v6504 = vld [vmem:[%s6363 + $0x20] sm:$0xc0]
        %v6505 = vld [vmem:[%s6363 + $0x28] sm:$0x3f]
        %v6506 = vld [vmem:[%s6363 + $0x38] sm:$0xc0]
        %v6507 = vld [vmem:[%s6363 + $0x40] sm:$0x3f]
        %v6508 = vld [vmem:[%s6363 + $0x50] sm:$0xc0]
        %v6509 = vld [vmem:[%s6363 + $0x58] sm:$0x3f]
        %v6510 = vld [vmem:[%s6363 + $0x68] sm:$0xc0]
        %v6511 = vld [vmem:[%s6363 + $0x70] sm:$0x3f]
        %v6512 = vld [vmem:[%s6363 + $0x80] sm:$0xc0]
        %v6513 = vld [vmem:[%s6363 + $0x88] sm:$0x3f]
        %v6514 = vld [vmem:[%s6363 + $0x98] sm:$0xc0]
        %v6515 = vld [vmem:[%s6363 + $0xa0] sm:$0x3f]
        %v6516 = vld [vmem:[%s6363 + $0xb0] sm:$0xc0]
        %v6517 = vld [vmem:[%s6363 + $0xb8] sm:$0x3f]
        %v6534 = vrot.slane %v6502, 6
        %v6535 = vrot.slane %v6503, 6
        %v6536 = vsel %vm6078, %v6534, %v6535
        %v6537 = vrot.slane %v6504, 6
        %v6538 = vrot.slane %v6505, 6
        %v6539 = vsel %vm6078, %v6537, %v6538
        %v6540 = vrot.slane %v6506, 6
        %v6541 = vrot.slane %v6507, 6
        %v6542 = vsel %vm6078, %v6540, %v6541
        %v6543 = vrot.slane %v6508, 6
        %v6544 = vrot.slane %v6509, 6
        %v6545 = vsel %vm6078, %v6543, %v6544
        %v6546 = vrot.slane %v6510, 6
        %v6547 = vrot.slane %v6511, 6
        %v6548 = vsel %vm6078, %v6546, %v6547
        %v6549 = vrot.slane %v6512, 6
        %v6550 = vrot.slane %v6513, 6
        %v6551 = vsel %vm6078, %v6549, %v6550
        %v6552 = vrot.slane %v6514, 6
        %v6553 = vrot.slane %v6515, 6
        %v6554 = vsel %vm6078, %v6552, %v6553
        %v6555 = vrot.slane %v6516, 6
        %v6556 = vrot.slane %v6517, 6
        %v6557 = vsel %vm6078, %v6555, %v6556
        %6566 = vst.msk [vmem:[#allocation3 + $0x8] sm:$0xff] %vm5915, %v6536
        %6567 = vst.msk [vmem:[#allocation3 + $0x18] sm:$0xff] %vm5915, %v6539
        %6568 = vst.msk [vmem:[#allocation3 + $0x28] sm:$0xff] %vm5915, %v6542
        %6569 = vst.msk [vmem:[#allocation3 + $0x38] sm:$0xff] %vm5915, %v6545
        %6570 = vst.msk [vmem:[#allocation3 + $0x48] sm:$0xff] %vm5915, %v6548
        %6571 = vst.msk [vmem:[#allocation3 + $0x58] sm:$0xff] %vm5915, %v6551
        %6572 = vst.msk [vmem:[#allocation3 + $0x68] sm:$0xff] %vm5915, %v6554
        %6573 = vst.msk [vmem:[#allocation3 + $0x78] sm:$0xff] %vm5915, %v6557
        %v6574 = vld [vmem:[#allocation3] sm:$0xff]
        %v6575 = vld [vmem:[#allocation3 + $0x8] sm:$0xff]
        %v6576 = vld [vmem:[#allocation3 + $0x10] sm:$0xff]
        %v6577 = vld [vmem:[#allocation3 + $0x18] sm:$0xff]
        %v6578 = vld [vmem:[#allocation3 + $0x20] sm:$0xff]
        %v6579 = vld [vmem:[#allocation3 + $0x28] sm:$0xff]
        %v6580 = vld [vmem:[#allocation3 + $0x30] sm:$0xff]
        %v6581 = vld [vmem:[#allocation3 + $0x38] sm:$0xff]
        %v6582 = vld [vmem:[#allocation3 + $0x40] sm:$0xff]
        %v6583 = vld [vmem:[#allocation3 + $0x48] sm:$0xff]
        %v6584 = vld [vmem:[#allocation3 + $0x50] sm:$0xff]
        %v6585 = vld [vmem:[#allocation3 + $0x58] sm:$0xff]
        %v6586 = vld [vmem:[#allocation3 + $0x60] sm:$0xff]
        %v6587 = vld [vmem:[#allocation3 + $0x68] sm:$0xff]
        %v6588 = vld [vmem:[#allocation3 + $0x70] sm:$0xff]
        %v6589 = vld [vmem:[#allocation3 + $0x78] sm:$0xff]
        %v6590 = vld [vmem:[%s388] sm:$0xf]
        %v6591 = vld [vmem:[%s388 + $0x4] sm:$0xf]
        %v6592 = vld [vmem:[%s388 + $0x8] sm:$0xf]
        %v6593 = vld [vmem:[%s388 + $0xc] sm:$0xf]
        %v6594 = vld [vmem:[%s388 + $0x10] sm:$0xf]
        %v6595 = vld [vmem:[%s388 + $0x14] sm:$0xf]
        %v6596 = vld [vmem:[%s388 + $0x18] sm:$0xf]
        %v6597 = vld [vmem:[%s388 + $0x1c] sm:$0xf]
        %v6598 = vld [vmem:[%s388 + $0x20] sm:$0xf]
        %v6599 = vld [vmem:[%s388 + $0x24] sm:$0xf]
        %v6600 = vld [vmem:[%s388 + $0x28] sm:$0xf]
        %v6601 = vld [vmem:[%s388 + $0x2c] sm:$0xf]
        %v6602 = vld [vmem:[%s388 + $0x30] sm:$0xf]
        %v6603 = vld [vmem:[%s388 + $0x34] sm:$0xf]
        %v6604 = vld [vmem:[%s388 + $0x38] sm:$0xf]
        %v6605 = vld [vmem:[%s388 + $0x3c] sm:$0xf]
        %v6606 = vld [vmem:[%s388 + $0x40] sm:$0xf]
        %v6607 = vld [vmem:[%s388 + $0x44] sm:$0xf]
        %v6608 = vld [vmem:[%s391] sm:$0x1]
        %v6610 = vlaneseq
        %v6611 = vshrl.u32 %v6610, 7
        %v6612 = vsub.s32 0, %v6611
        %v6613 = vrot.slane %v6608, %v6612
        %v6633 = vunpack.c.l.b16 %v6590
        %v6634 = vunpack.c.l.b16 %v6591
        %v6635 = vunpack.c.l.b16 %v6592
        %v6636 = vunpack.c.l.b16 %v6593
        %v6637 = vunpack.c.l.b16 %v6594
        %v6638 = vunpack.c.l.b16 %v6595
        %v6639 = vunpack.c.l.b16 %v6596
        %v6640 = vunpack.c.l.b16 %v6597
        %v6641 = vunpack.c.l.b16 %v6598
        %v6642 = vunpack.c.l.b16 %v6599
        %v6643 = vunpack.c.l.b16 %v6600
        %v6644 = vunpack.c.l.b16 %v6601
        %v6645 = vunpack.c.l.b16 %v6602
        %v6646 = vunpack.c.l.b16 %v6603
        %v6647 = vunpack.c.l.b16 %v6604
        %v6648 = vunpack.c.l.b16 %v6605
        %v6649 = vunpack.c.l.b16 %v6606
        %v6650 = vunpack.c.l.b16 %v6607
        %v6651 = vpack.c.b16 %v6634, %v6633
        %v6652 = vpack.c.b16 %v6636, %v6635
        %v6653 = vpack.c.b16 %v6638, %v6637
        %v6654 = vpack.c.b16 %v6640, %v6639
        %v6655 = vpack.c.b16 %v6642, %v6641
        %v6656 = vpack.c.b16 %v6644, %v6643
        %v6657 = vpack.c.b16 %v6646, %v6645
        %v6658 = vpack.c.b16 %v6648, %v6647
        %v6659 = vpack.c.b16 %v6650, %v6649
        %v6670 = vsel %vm5915, %v6575, 0
        %v6673 = vsel %vm5915, %v6577, 0
        %v6676 = vsel %vm5915, %v6579, 0
        %v6679 = vsel %vm5915, %v6581, 0
        %v6682 = vsel %vm5915, %v6583, 0
        %v6685 = vsel %vm5915, %v6585, 0
        %v6688 = vsel %vm5915, %v6587, 0
        %v6691 = vsel %vm5915, %v6589, 0
        %6693 = vmatprep.subr.bf16.mxu0 0
        %6694 = vmatpush1.bf16.msra.mxu0 %v6651
        %6695 = vmatprep.subr.bf16.mxu0 0
        %6696 = vmatpush1.bf16.msra.mxu0 %v6652
        %6697 = vmatprep.subr.bf16.mxu0 0
        %6698 = vmatpush1.bf16.msra.mxu0 %v6653
        %6699 = vmatprep.subr.bf16.mxu0 0
        %6700 = vmatpush1.bf16.msra.mxu0 %v6654
        %6701 = vmatprep.subr.bf16.mxu0 0
        %6702 = vmatpush1.bf16.msra.mxu0 %v6655
        %6703 = vmatprep.subr.bf16.mxu0 0
        %6704 = vmatpush1.bf16.msra.mxu0 %v6656
        %6705 = vmatprep.subr.bf16.mxu0 0
        %6706 = vmatpush1.bf16.msra.mxu0 %v6657
        %6707 = vmatprep.subr.bf16.mxu0 0
        %6708 = vmatpush1.bf16.msra.mxu0 %v6658
        %6709 = vmatprep.subr.bf16.mxu0 0
        %6710 = vmatpush1.bf16.msra.mxu0 %v6659
        %6711 = vmatprep.subr.bf16.mxu0 0
        %6712 = vmatpush1.bf16.msra.mxu0 0
        %6713 = vmatprep.subr.bf16.mxu0 0
        %6714 = vmatpush1.bf16.msra.mxu0 0
        %6715 = vmatprep.subr.bf16.mxu0 0
        %6716 = vmatpush1.bf16.msra.mxu0 0
        %6717 = vmatprep.subr.bf16.mxu0 0
        %6718 = vmatpush1.bf16.msra.mxu0 0
        %6719 = vmatprep.subr.bf16.mxu0 0
        %6720 = vmatpush1.bf16.msra.mxu0 0
        %6721 = vmatprep.subr.bf16.mxu0 0
        %6722 = vmatpush1.bf16.msra.mxu0 0
        %6723 = vmatprep.subr.bf16.mxu0 0
        %6724 = vmatpush1.bf16.msra.mxu0 0
        %6725 = vmatprep.mubr.bf16.mxu0 %v6670
        %6726 = vmatmul.mubr.bf16.gmra.mrb[0].mxu0 %v6574
        %v6727 = vpop.f32.mrb[0].mxu0
        %v6728 = vadd.f32 %v6613, %v6727
        %v6729 = vpop.f32.mrb[0].mxu0
        %v6730 = vpop.f32.mrb[0].mxu0
        %v6731 = vadd.f32 %v6613, %v6730
        %v6732 = vpop.f32.mrb[0].mxu0
        %6733 = vmatprep.mubr.bf16.mxu0 %v6673
        %6734 = vmatmul.mubr.bf16.gmra.mrb[0].mxu0 %v6576
        %v6735 = vpop.f32.mrb[0].mxu0
        %v6736 = vadd.f32 %v6613, %v6735
        %v6737 = vpop.f32.mrb[0].mxu0
        %v6738 = vpop.f32.mrb[0].mxu0
        %v6739 = vadd.f32 %v6613, %v6738
        %v6740 = vpop.f32.mrb[0].mxu0
        %6741 = vmatprep.mubr.bf16.mxu0 %v6676
        %6742 = vmatmul.mubr.bf16.gmra.mrb[0].mxu0 %v6578
        %v6743 = vpop.f32.mrb[0].mxu0
        %v6744 = vadd.f32 %v6613, %v6743
        %v6745 = vpop.f32.mrb[0].mxu0
        %v6746 = vpop.f32.mrb[0].mxu0
        %v6747 = vadd.f32 %v6613, %v6746
        %v6748 = vpop.f32.mrb[0].mxu0
        %6749 = vmatprep.mubr.bf16.mxu0 %v6679
        %6750 = vmatmul.mubr.bf16.gmra.mrb[0].mxu0 %v6580
        %v6751 = vpop.f32.mrb[0].mxu0
        %v6752 = vadd.f32 %v6613, %v6751
        %v6753 = vpop.f32.mrb[0].mxu0
        %v6754 = vpop.f32.mrb[0].mxu0
        %v6755 = vadd.f32 %v6613, %v6754
        %v6756 = vpop.f32.mrb[0].mxu0
        %6757 = vmatprep.mubr.bf16.mxu0 %v6682
        %6758 = vmatmul.mubr.bf16.gmra.mrb[0].mxu0 %v6582
        %v6759 = vpop.f32.mrb[0].mxu0
        %v6760 = vadd.f32 %v6613, %v6759
        %v6761 = vpop.f32.mrb[0].mxu0
        %v6762 = vpop.f32.mrb[0].mxu0
        %v6763 = vadd.f32 %v6613, %v6762
        %v6764 = vpop.f32.mrb[0].mxu0
        %6765 = vmatprep.mubr.bf16.mxu0 %v6685
        %6766 = vmatmul.mubr.bf16.gmra.mrb[0].mxu0 %v6584
        %v6767 = vpop.f32.mrb[0].mxu0
        %v6768 = vadd.f32 %v6613, %v6767
        %v6769 = vpop.f32.mrb[0].mxu0
        %v6770 = vpop.f32.mrb[0].mxu0
        %v6771 = vadd.f32 %v6613, %v6770
        %v6772 = vpop.f32.mrb[0].mxu0
        %6773 = vmatprep.mubr.bf16.mxu0 %v6688
        %6774 = vmatmul.mubr.bf16.gmra.mrb[0].mxu0 %v6586
        %v6775 = vpop.f32.mrb[0].mxu0
        %v6776 = vadd.f32 %v6613, %v6775
        %v6777 = vpop.f32.mrb[0].mxu0
        %v6778 = vpop.f32.mrb[0].mxu0
        %v6779 = vadd.f32 %v6613, %v6778
        %v6780 = vpop.f32.mrb[0].mxu0
        %6781 = vmatprep.mubr.bf16.mxu0 %v6691
        %6782 = vmatmul.mubr.bf16.gmra.mrb[0].mxu0 %v6588
        %v6783 = vpop.f32.mrb[0].mxu0
        %v6784 = vadd.f32 %v6613, %v6783
        %v6785 = vpop.f32.mrb[0].mxu0
        %v6786 = vpop.f32.mrb[0].mxu0
        %v6787 = vadd.f32 %v6613, %v6786
        %v6788 = vpop.f32.mrb[0].mxu0
        %6789 = vdwg.mxu0
        %v6790 = vmax.f32 %v6728, 0.0
        %v6791 = vmax.f32 %v6731, 0.0
        %v6792 = vmax.f32 %v6736, 0.0
        %v6793 = vmax.f32 %v6739, 0.0
        %v6794 = vmax.f32 %v6744, 0.0
        %v6795 = vmax.f32 %v6747, 0.0
        %v6796 = vmax.f32 %v6752, 0.0
        %v6797 = vmax.f32 %v6755, 0.0
        %v6798 = vmax.f32 %v6760, 0.0
        %v6799 = vmax.f32 %v6763, 0.0
        %v6800 = vmax.f32 %v6768, 0.0
        %v6801 = vmax.f32 %v6771, 0.0
        %v6802 = vmax.f32 %v6776, 0.0
        %v6803 = vmax.f32 %v6779, 0.0
        %v6804 = vmax.f32 %v6784, 0.0
        %v6805 = vmax.f32 %v6787, 0.0
        %v6806 = vpack.c.bf16 %v6791, %v6790
        %v6807 = vpack.c.bf16 %v6793, %v6792
        %v6808 = vpack.c.bf16 %v6795, %v6794
        %v6809 = vpack.c.bf16 %v6797, %v6796
        %v6810 = vpack.c.bf16 %v6799, %v6798
        %v6811 = vpack.c.bf16 %v6801, %v6800
        %v6812 = vpack.c.bf16 %v6803, %v6802
        %v6813 = vpack.c.bf16 %v6805, %v6804
        %6814 = vst.msk [vmem:[%s5914 + $0x8] sm:$0xff] %vm5915, %v6806
        %6815 = vst.msk [vmem:[%s5914 + $0x20] sm:$0xff] %vm5915, %v6807
        %6816 = vst.msk [vmem:[%s5914 + $0x38] sm:$0xff] %vm5915, %v6808
        %6817 = vst.msk [vmem:[%s5914 + $0x50] sm:$0xff] %vm5915, %v6809
        %6818 = vst.msk [vmem:[%s5914 + $0x68] sm:$0xff] %vm5915, %v6810
        %6819 = vst.msk [vmem:[%s5914 + $0x80] sm:$0xff] %vm5915, %v6811
        %6820 = vst.msk [vmem:[%s5914 + $0x98] sm:$0xff] %vm5915, %v6812
        %6821 = vst.msk [vmem:[%s5914 + $0xb0] sm:$0xff] %vm5915, %v6813
        %v6822 = vld [vmem:[#allocation2] sm:$0xfc]
        %v6823 = vld [vmem:[#allocation2 + $0x8] sm:$0x3]
        %v6824 = vld [vmem:[#allocation2 + $0x18] sm:$0xfc]
        %v6825 = vld [vmem:[#allocation2 + $0x20] sm:$0x3]
        %v6826 = vld [vmem:[#allocation2 + $0x30] sm:$0xfc]
        %v6827 = vld [vmem:[#allocation2 + $0x38] sm:$0x3]
        %v6828 = vld [vmem:[#allocation2 + $0x48] sm:$0xfc]
        %v6829 = vld [vmem:[#allocation2 + $0x50] sm:$0x3]
        %v6830 = vld [vmem:[#allocation2 + $0x60] sm:$0xfc]
        %v6831 = vld [vmem:[#allocation2 + $0x68] sm:$0x3]
        %v6832 = vld [vmem:[#allocation2 + $0x78] sm:$0xfc]
        %v6833 = vld [vmem:[#allocation2 + $0x80] sm:$0x3]
        %v6834 = vld [vmem:[#allocation2 + $0x90] sm:$0xfc]
        %v6835 = vld [vmem:[#allocation2 + $0x98] sm:$0x3]
        %v6836 = vld [vmem:[#allocation2 + $0xa8] sm:$0xfc]
        %v6837 = vld [vmem:[#allocation2 + $0xb0] sm:$0x3]
        %v6854 = vrot.slane %v6822, 2
        %v6855 = vrot.slane %v6823, 2
        %v6856 = vsel %vm5956, %v6854, %v6855
        %v6857 = vrot.slane %v6824, 2
        %v6858 = vrot.slane %v6825, 2
        %v6859 = vsel %vm5956, %v6857, %v6858
        %v6860 = vrot.slane %v6826, 2
        %v6861 = vrot.slane %v6827, 2
        %v6862 = vsel %vm5956, %v6860, %v6861
        %v6863 = vrot.slane %v6828, 2
        %v6864 = vrot.slane %v6829, 2
        %v6865 = vsel %vm5956, %v6863, %v6864
        %v6866 = vrot.slane %v6830, 2
        %v6867 = vrot.slane %v6831, 2
        %v6868 = vsel %vm5956, %v6866, %v6867
        %v6869 = vrot.slane %v6832, 2
        %v6870 = vrot.slane %v6833, 2
        %v6871 = vsel %vm5956, %v6869, %v6870
        %v6872 = vrot.slane %v6834, 2
        %v6873 = vrot.slane %v6835, 2
        %v6874 = vsel %vm5956, %v6872, %v6873
        %v6875 = vrot.slane %v6836, 2
        %v6876 = vrot.slane %v6837, 2
        %v6877 = vsel %vm5956, %v6875, %v6876
        %6886 = vst.msk [vmem:[#allocation3] sm:$0xff] %vm5915, %v6856
        %6887 = vst.msk [vmem:[#allocation3 + $0x10] sm:$0xff] %vm5915, %v6859
        %6888 = vst.msk [vmem:[#allocation3 + $0x20] sm:$0xff] %vm5915, %v6862
        %6889 = vst.msk [vmem:[#allocation3 + $0x30] sm:$0xff] %vm5915, %v6865
        %6890 = vst.msk [vmem:[#allocation3 + $0x40] sm:$0xff] %vm5915, %v6868
        %6891 = vst.msk [vmem:[#allocation3 + $0x50] sm:$0xff] %vm5915, %v6871
        %6892 = vst.msk [vmem:[#allocation3 + $0x60] sm:$0xff] %vm5915, %v6874
        %6893 = vst.msk [vmem:[#allocation3 + $0x70] sm:$0xff] %vm5915, %v6877
        %v6894 = vld [vmem:[#allocation2 + $0x8] sm:$0xff]
        %v6895 = vld [vmem:[#allocation2 + $0x20] sm:$0xff]
        %v6896 = vld [vmem:[#allocation2 + $0x38] sm:$0xff]
        %v6897 = vld [vmem:[#allocation2 + $0x50] sm:$0xff]
        %v6898 = vld [vmem:[#allocation2 + $0x68] sm:$0xff]
        %v6899 = vld [vmem:[#allocation2 + $0x80] sm:$0xff]
        %v6900 = vld [vmem:[#allocation2 + $0x98] sm:$0xff]
        %v6901 = vld [vmem:[#allocation2 + $0xb0] sm:$0xff]
        %6910 = vrot.lane.b32.xlu0 %v6894, 16
        %v6911 = vpop.permute.xlu0 %6910
        %6912 = vrot.lane.b32.xlu0 %v6895, 16
        %v6913 = vpop.permute.xlu0 %6912
        %6914 = vrot.lane.b32.xlu0 %v6896, 16
        %v6915 = vpop.permute.xlu0 %6914
        %6916 = vrot.lane.b32.xlu0 %v6897, 16
        %v6917 = vpop.permute.xlu0 %6916
        %6918 = vrot.lane.b32.xlu0 %v6898, 16
        %v6919 = vpop.permute.xlu0 %6918
        %6920 = vrot.lane.b32.xlu0 %v6899, 16
        %v6921 = vpop.permute.xlu0 %6920
        %6922 = vrot.lane.b32.xlu0 %v6900, 16
        %v6923 = vpop.permute.xlu0 %6922
        %6924 = vrot.lane.b32.xlu0 %v6901, 16
        %v6925 = vpop.permute.xlu0 %6924
        %6934 = vst.msk [vmem:[#allocation3] sm:$0xff] %vm6037, %v6911
        %6935 = vst.msk [vmem:[#allocation3 + $0x10] sm:$0xff] %vm6037, %v6913
        %6936 = vst.msk [vmem:[#allocation3 + $0x20] sm:$0xff] %vm6037, %v6915
        %6937 = vst.msk [vmem:[#allocation3 + $0x30] sm:$0xff] %vm6037, %v6917
        %6938 = vst.msk [vmem:[#allocation3 + $0x40] sm:$0xff] %vm6037, %v6919
        %6939 = vst.msk [vmem:[#allocation3 + $0x50] sm:$0xff] %vm6037, %v6921
        %6940 = vst.msk [vmem:[#allocation3 + $0x60] sm:$0xff] %vm6037, %v6923
        %6941 = vst.msk [vmem:[#allocation3 + $0x70] sm:$0xff] %vm6037, %v6925
        %v6942 = vld [vmem:[#allocation2 + $0x8] sm:$0xc0]
        %v6943 = vld [vmem:[#allocation2 + $0x10] sm:$0x3f]
        %v6944 = vld [vmem:[#allocation2 + $0x20] sm:$0xc0]
        %v6945 = vld [vmem:[#allocation2 + $0x28] sm:$0x3f]
        %v6946 = vld [vmem:[#allocation2 + $0x38] sm:$0xc0]
        %v6947 = vld [vmem:[#allocation2 + $0x40] sm:$0x3f]
        %v6948 = vld [vmem:[#allocation2 + $0x50] sm:$0xc0]
        %v6949 = vld [vmem:[#allocation2 + $0x58] sm:$0x3f]
        %v6950 = vld [vmem:[#allocation2 + $0x68] sm:$0xc0]
        %v6951 = vld [vmem:[#allocation2 + $0x70] sm:$0x3f]
        %v6952 = vld [vmem:[#allocation2 + $0x80] sm:$0xc0]
        %v6953 = vld [vmem:[#allocation2 + $0x88] sm:$0x3f]
        %v6954 = vld [vmem:[#allocation2 + $0x98] sm:$0xc0]
        %v6955 = vld [vmem:[#allocation2 + $0xa0] sm:$0x3f]
        %v6956 = vld [vmem:[#allocation2 + $0xb0] sm:$0xc0]
        %v6957 = vld [vmem:[#allocation2 + $0xb8] sm:$0x3f]
        %v6974 = vrot.slane %v6942, 6
        %v6975 = vrot.slane %v6943, 6
        %v6976 = vsel %vm6078, %v6974, %v6975
        %v6977 = vrot.slane %v6944, 6
        %v6978 = vrot.slane %v6945, 6
        %v6979 = vsel %vm6078, %v6977, %v6978
        %v6980 = vrot.slane %v6946, 6
        %v6981 = vrot.slane %v6947, 6
        %v6982 = vsel %vm6078, %v6980, %v6981
        %v6983 = vrot.slane %v6948, 6
        %v6984 = vrot.slane %v6949, 6
        %v6985 = vsel %vm6078, %v6983, %v6984
        %v6986 = vrot.slane %v6950, 6
        %v6987 = vrot.slane %v6951, 6
        %v6988 = vsel %vm6078, %v6986, %v6987
        %v6989 = vrot.slane %v6952, 6
        %v6990 = vrot.slane %v6953, 6
        %v6991 = vsel %vm6078, %v6989, %v6990
        %v6992 = vrot.slane %v6954, 6
        %v6993 = vrot.slane %v6955, 6
        %v6994 = vsel %vm6078, %v6992, %v6993
        %v6995 = vrot.slane %v6956, 6
        %v6996 = vrot.slane %v6957, 6
        %v6997 = vsel %vm6078, %v6995, %v6996
        %6998 = vrot.lane.b32.xlu0 %v6976, 32
        %v6999 = vpop.permute.xlu0 %6998
        %7000 = vrot.lane.b32.xlu0 %v6979, 32
        %v7001 = vpop.permute.xlu0 %7000
        %7002 = vrot.lane.b32.xlu0 %v6982, 32
        %v7003 = vpop.permute.xlu0 %7002
        %7004 = vrot.lane.b32.xlu0 %v6985, 32
        %v7005 = vpop.permute.xlu0 %7004
        %7006 = vrot.lane.b32.xlu0 %v6988, 32
        %v7007 = vpop.permute.xlu0 %7006
        %7008 = vrot.lane.b32.xlu0 %v6991, 32
        %v7009 = vpop.permute.xlu0 %7008
        %7010 = vrot.lane.b32.xlu0 %v6994, 32
        %v7011 = vpop.permute.xlu0 %7010
        %7012 = vrot.lane.b32.xlu0 %v6997, 32
        %v7013 = vpop.permute.xlu0 %7012
        %7022 = vst.msk [vmem:[#allocation3] sm:$0xff] %vm6127, %v6999
        %7023 = vst.msk [vmem:[#allocation3 + $0x10] sm:$0xff] %vm6127, %v7001
        %7024 = vst.msk [vmem:[#allocation3 + $0x20] sm:$0xff] %vm6127, %v7003
        %7025 = vst.msk [vmem:[#allocation3 + $0x30] sm:$0xff] %vm6127, %v7005
        %7026 = vst.msk [vmem:[#allocation3 + $0x40] sm:$0xff] %vm6127, %v7007
        %7027 = vst.msk [vmem:[#allocation3 + $0x50] sm:$0xff] %vm6127, %v7009
        %7028 = vst.msk [vmem:[#allocation3 + $0x60] sm:$0xff] %vm6127, %v7011
        %7029 = vst.msk [vmem:[#allocation3 + $0x70] sm:$0xff] %vm6127, %v7013
        %v7030 = vld [vmem:[%s5914] sm:$0xfc]
        %v7031 = vld [vmem:[%s5914 + $0x8] sm:$0x3]
        %v7032 = vld [vmem:[%s5914 + $0x18] sm:$0xfc]
        %v7033 = vld [vmem:[%s5914 + $0x20] sm:$0x3]
        %v7034 = vld [vmem:[%s5914 + $0x30] sm:$0xfc]
        %v7035 = vld [vmem:[%s5914 + $0x38] sm:$0x3]
        %v7036 = vld [vmem:[%s5914 + $0x48] sm:$0xfc]
        %v7037 = vld [vmem:[%s5914 + $0x50] sm:$0x3]
        %v7038 = vld [vmem:[%s5914 + $0x60] sm:$0xfc]
        %v7039 = vld [vmem:[%s5914 + $0x68] sm:$0x3]
        %v7040 = vld [vmem:[%s5914 + $0x78] sm:$0xfc]
        %v7041 = vld [vmem:[%s5914 + $0x80] sm:$0x3]
        %v7042 = vld [vmem:[%s5914 + $0x90] sm:$0xfc]
        %v7043 = vld [vmem:[%s5914 + $0x98] sm:$0x3]
        %v7044 = vld [vmem:[%s5914 + $0xa8] sm:$0xfc]
        %v7045 = vld [vmem:[%s5914 + $0xb0] sm:$0x3]
        %v7062 = vrot.slane %v7030, 2
        %v7063 = vrot.slane %v7031, 2
        %v7064 = vsel %vm5956, %v7062, %v7063
        %v7065 = vrot.slane %v7032, 2
        %v7066 = vrot.slane %v7033, 2
        %v7067 = vsel %vm5956, %v7065, %v7066
        %v7068 = vrot.slane %v7034, 2
        %v7069 = vrot.slane %v7035, 2
        %v7070 = vsel %vm5956, %v7068, %v7069
        %v7071 = vrot.slane %v7036, 2
        %v7072 = vrot.slane %v7037, 2
        %v7073 = vsel %vm5956, %v7071, %v7072
        %v7074 = vrot.slane %v7038, 2
        %v7075 = vrot.slane %v7039, 2
        %v7076 = vsel %vm5956, %v7074, %v7075
        %v7077 = vrot.slane %v7040, 2
        %v7078 = vrot.slane %v7041, 2
        %v7079 = vsel %vm5956, %v7077, %v7078
        %v7080 = vrot.slane %v7042, 2
        %v7081 = vrot.slane %v7043, 2
        %v7082 = vsel %vm5956, %v7080, %v7081
        %v7083 = vrot.slane %v7044, 2
        %v7084 = vrot.slane %v7045, 2
        %v7085 = vsel %vm5956, %v7083, %v7084
        %7086 = vrot.lane.b32.xlu0 %v7064, 48
        %v7087 = vpop.permute.xlu0 %7086
        %7088 = vrot.lane.b32.xlu0 %v7067, 48
        %v7089 = vpop.permute.xlu0 %7088
        %7090 = vrot.lane.b32.xlu0 %v7070, 48
        %v7091 = vpop.permute.xlu0 %7090
        %7092 = vrot.lane.b32.xlu0 %v7073, 48
        %v7093 = vpop.permute.xlu0 %7092
        %7094 = vrot.lane.b32.xlu0 %v7076, 48
        %v7095 = vpop.permute.xlu0 %7094
        %7096 = vrot.lane.b32.xlu0 %v7079, 48
        %v7097 = vpop.permute.xlu0 %7096
        %7098 = vrot.lane.b32.xlu0 %v7082, 48
        %v7099 = vpop.permute.xlu0 %7098
        %7100 = vrot.lane.b32.xlu0 %v7085, 48
        %v7101 = vpop.permute.xlu0 %7100
        %7110 = vst.msk [vmem:[#allocation3] sm:$0xff] %vm6216, %v7087
        %7111 = vst.msk [vmem:[#allocation3 + $0x10] sm:$0xff] %vm6216, %v7089
        %7112 = vst.msk [vmem:[#allocation3 + $0x20] sm:$0xff] %vm6216, %v7091
        %7113 = vst.msk [vmem:[#allocation3 + $0x30] sm:$0xff] %vm6216, %v7093
        %7114 = vst.msk [vmem:[#allocation3 + $0x40] sm:$0xff] %vm6216, %v7095
        %7115 = vst.msk [vmem:[#allocation3 + $0x50] sm:$0xff] %vm6216, %v7097
        %7116 = vst.msk [vmem:[#allocation3 + $0x60] sm:$0xff] %vm6216, %v7099
        %7117 = vst.msk [vmem:[#allocation3 + $0x70] sm:$0xff] %vm6216, %v7101
        %v7118 = vld [vmem:[%s5914 + $0x8] sm:$0xff]
        %v7119 = vld [vmem:[%s5914 + $0x20] sm:$0xff]
        %v7120 = vld [vmem:[%s5914 + $0x38] sm:$0xff]
        %v7121 = vld [vmem:[%s5914 + $0x50] sm:$0xff]
        %v7122 = vld [vmem:[%s5914 + $0x68] sm:$0xff]
        %v7123 = vld [vmem:[%s5914 + $0x80] sm:$0xff]
        %v7124 = vld [vmem:[%s5914 + $0x98] sm:$0xff]
        %v7125 = vld [vmem:[%s5914 + $0xb0] sm:$0xff]
        %7134 = vrot.lane.b32.xlu0 %v7118, 64
        %v7135 = vpop.permute.xlu0 %7134
        %7136 = vrot.lane.b32.xlu0 %v7119, 64
        %v7137 = vpop.permute.xlu0 %7136
        %7138 = vrot.lane.b32.xlu0 %v7120, 64
        %v7139 = vpop.permute.xlu0 %7138
        %7140 = vrot.lane.b32.xlu0 %v7121, 64
        %v7141 = vpop.permute.xlu0 %7140
        %7142 = vrot.lane.b32.xlu0 %v7122, 64
        %v7143 = vpop.permute.xlu0 %7142
        %7144 = vrot.lane.b32.xlu0 %v7123, 64
        %v7145 = vpop.permute.xlu0 %7144
        %7146 = vrot.lane.b32.xlu0 %v7124, 64
        %v7147 = vpop.permute.xlu0 %7146
        %7148 = vrot.lane.b32.xlu0 %v7125, 64
        %v7149 = vpop.permute.xlu0 %7148
        %7158 = vst.msk [vmem:[#allocation3] sm:$0xff] %vm6265, %v7135
        %7159 = vst.msk [vmem:[#allocation3 + $0x10] sm:$0xff] %vm6265, %v7137
        %7160 = vst.msk [vmem:[#allocation3 + $0x20] sm:$0xff] %vm6265, %v7139
        %7161 = vst.msk [vmem:[#allocation3 + $0x30] sm:$0xff] %vm6265, %v7141
        %7162 = vst.msk [vmem:[#allocation3 + $0x40] sm:$0xff] %vm6265, %v7143
        %7163 = vst.msk [vmem:[#allocation3 + $0x50] sm:$0xff] %vm6265, %v7145
        %7164 = vst.msk [vmem:[#allocation3 + $0x60] sm:$0xff] %vm6265, %v7147
        %7165 = vst.msk [vmem:[#allocation3 + $0x70] sm:$0xff] %vm6265, %v7149
        %v7166 = vld [vmem:[%s5914 + $0x8] sm:$0xc0]
        %v7167 = vld [vmem:[%s5914 + $0x10] sm:$0x3f]
        %v7168 = vld [vmem:[%s5914 + $0x20] sm:$0xc0]
        %v7169 = vld [vmem:[%s5914 + $0x28] sm:$0x3f]
        %v7170 = vld [vmem:[%s5914 + $0x38] sm:$0xc0]
        %v7171 = vld [vmem:[%s5914 + $0x40] sm:$0x3f]
        %v7172 = vld [vmem:[%s5914 + $0x50] sm:$0xc0]
        %v7173 = vld [vmem:[%s5914 + $0x58] sm:$0x3f]
        %v7174 = vld [vmem:[%s5914 + $0x68] sm:$0xc0]
        %v7175 = vld [vmem:[%s5914 + $0x70] sm:$0x3f]
        %v7176 = vld [vmem:[%s5914 + $0x80] sm:$0xc0]
        %v7177 = vld [vmem:[%s5914 + $0x88] sm:$0x3f]
        %v7178 = vld [vmem:[%s5914 + $0x98] sm:$0xc0]
        %v7179 = vld [vmem:[%s5914 + $0xa0] sm:$0x3f]
        %v7180 = vld [vmem:[%s5914 + $0xb0] sm:$0xc0]
        %v7181 = vld [vmem:[%s5914 + $0xb8] sm:$0x3f]
        %v7198 = vrot.slane %v7166, 6
        %v7199 = vrot.slane %v7167, 6
        %v7200 = vsel %vm6078, %v7198, %v7199
        %v7201 = vrot.slane %v7168, 6
        %v7202 = vrot.slane %v7169, 6
        %v7203 = vsel %vm6078, %v7201, %v7202
        %v7204 = vrot.slane %v7170, 6
        %v7205 = vrot.slane %v7171, 6
        %v7206 = vsel %vm6078, %v7204, %v7205
        %v7207 = vrot.slane %v7172, 6
        %v7208 = vrot.slane %v7173, 6
        %v7209 = vsel %vm6078, %v7207, %v7208
        %v7210 = vrot.slane %v7174, 6
        %v7211 = vrot.slane %v7175, 6
        %v7212 = vsel %vm6078, %v7210, %v7211
        %v7213 = vrot.slane %v7176, 6
        %v7214 = vrot.slane %v7177, 6
        %v7215 = vsel %vm6078, %v7213, %v7214
        %v7216 = vrot.slane %v7178, 6
        %v7217 = vrot.slane %v7179, 6
        %v7218 = vsel %vm6078, %v7216, %v7217
        %v7219 = vrot.slane %v7180, 6
        %v7220 = vrot.slane %v7181, 6
        %v7221 = vsel %vm6078, %v7219, %v7220
        %7222 = vrot.lane.b32.xlu0 %v7200, 80
        %v7223 = vpop.permute.xlu0 %7222
        %7224 = vrot.lane.b32.xlu0 %v7203, 80
        %v7225 = vpop.permute.xlu0 %7224
        %7226 = vrot.lane.b32.xlu0 %v7206, 80
        %v7227 = vpop.permute.xlu0 %7226
        %7228 = vrot.lane.b32.xlu0 %v7209, 80
        %v7229 = vpop.permute.xlu0 %7228
        %7230 = vrot.lane.b32.xlu0 %v7212, 80
        %v7231 = vpop.permute.xlu0 %7230
        %7232 = vrot.lane.b32.xlu0 %v7215, 80
        %v7233 = vpop.permute.xlu0 %7232
        %7234 = vrot.lane.b32.xlu0 %v7218, 80
        %v7235 = vpop.permute.xlu0 %7234
        %7236 = vrot.lane.b32.xlu0 %v7221, 80
        %v7237 = vpop.permute.xlu0 %7236
        %7246 = vst.msk [vmem:[#allocation3] sm:$0xff] %vm6354, %v7223
        %7247 = vst.msk [vmem:[#allocation3 + $0x10] sm:$0xff] %vm6354, %v7225
        %7248 = vst.msk [vmem:[#allocation3 + $0x20] sm:$0xff] %vm6354, %v7227
        %7249 = vst.msk [vmem:[#allocation3 + $0x30] sm:$0xff] %vm6354, %v7229
        %7250 = vst.msk [vmem:[#allocation3 + $0x40] sm:$0xff] %vm6354, %v7231
        %7251 = vst.msk [vmem:[#allocation3 + $0x50] sm:$0xff] %vm6354, %v7233
        %7252 = vst.msk [vmem:[#allocation3 + $0x60] sm:$0xff] %vm6354, %v7235
        %7253 = vst.msk [vmem:[#allocation3 + $0x70] sm:$0xff] %vm6354, %v7237
        %v7254 = vld [vmem:[%s6363] sm:$0xfc]
        %v7255 = vld [vmem:[%s6363 + $0x8] sm:$0x3]
        %v7256 = vld [vmem:[%s6363 + $0x18] sm:$0xfc]
        %v7257 = vld [vmem:[%s6363 + $0x20] sm:$0x3]
        %v7258 = vld [vmem:[%s6363 + $0x30] sm:$0xfc]
        %v7259 = vld [vmem:[%s6363 + $0x38] sm:$0x3]
        %v7260 = vld [vmem:[%s6363 + $0x48] sm:$0xfc]
        %v7261 = vld [vmem:[%s6363 + $0x50] sm:$0x3]
        %v7262 = vld [vmem:[%s6363 + $0x60] sm:$0xfc]
        %v7263 = vld [vmem:[%s6363 + $0x68] sm:$0x3]
        %v7264 = vld [vmem:[%s6363 + $0x78] sm:$0xfc]
        %v7265 = vld [vmem:[%s6363 + $0x80] sm:$0x3]
        %v7266 = vld [vmem:[%s6363 + $0x90] sm:$0xfc]
        %v7267 = vld [vmem:[%s6363 + $0x98] sm:$0x3]
        %v7268 = vld [vmem:[%s6363 + $0xa8] sm:$0xfc]
        %v7269 = vld [vmem:[%s6363 + $0xb0] sm:$0x3]
        %v7286 = vrot.slane %v7254, 2
        %v7287 = vrot.slane %v7255, 2
        %v7288 = vsel %vm5956, %v7286, %v7287
        %v7289 = vrot.slane %v7256, 2
        %v7290 = vrot.slane %v7257, 2
        %v7291 = vsel %vm5956, %v7289, %v7290
        %v7292 = vrot.slane %v7258, 2
        %v7293 = vrot.slane %v7259, 2
        %v7294 = vsel %vm5956, %v7292, %v7293
        %v7295 = vrot.slane %v7260, 2
        %v7296 = vrot.slane %v7261, 2
        %v7297 = vsel %vm5956, %v7295, %v7296
        %v7298 = vrot.slane %v7262, 2
        %v7299 = vrot.slane %v7263, 2
        %v7300 = vsel %vm5956, %v7298, %v7299
        %v7301 = vrot.slane %v7264, 2
        %v7302 = vrot.slane %v7265, 2
        %v7303 = vsel %vm5956, %v7301, %v7302
        %v7304 = vrot.slane %v7266, 2
        %v7305 = vrot.slane %v7267, 2
        %v7306 = vsel %vm5956, %v7304, %v7305
        %v7307 = vrot.slane %v7268, 2
        %v7308 = vrot.slane %v7269, 2
        %v7309 = vsel %vm5956, %v7307, %v7308
        %7310 = vrot.lane.b32.xlu0 %v7288, 96
        %v7311 = vpop.permute.xlu0 %7310
        %7312 = vrot.lane.b32.xlu0 %v7291, 96
        %v7313 = vpop.permute.xlu0 %7312
        %7314 = vrot.lane.b32.xlu0 %v7294, 96
        %v7315 = vpop.permute.xlu0 %7314
        %7316 = vrot.lane.b32.xlu0 %v7297, 96
        %v7317 = vpop.permute.xlu0 %7316
        %7318 = vrot.lane.b32.xlu0 %v7300, 96
        %v7319 = vpop.permute.xlu0 %7318
        %7320 = vrot.lane.b32.xlu0 %v7303, 96
        %v7321 = vpop.permute.xlu0 %7320
        %7322 = vrot.lane.b32.xlu0 %v7306, 96
        %v7323 = vpop.permute.xlu0 %7322
        %7324 = vrot.lane.b32.xlu0 %v7309, 96
        %v7325 = vpop.permute.xlu0 %7324
        %7334 = vst.msk [vmem:[#allocation3] sm:$0xff] %vm6444, %v7311
        %7335 = vst.msk [vmem:[#allocation3 + $0x10] sm:$0xff] %vm6444, %v7313
        %7336 = vst.msk [vmem:[#allocation3 + $0x20] sm:$0xff] %vm6444, %v7315
        %7337 = vst.msk [vmem:[#allocation3 + $0x30] sm:$0xff] %vm6444, %v7317
        %7338 = vst.msk [vmem:[#allocation3 + $0x40] sm:$0xff] %vm6444, %v7319
        %7339 = vst.msk [vmem:[#allocation3 + $0x50] sm:$0xff] %vm6444, %v7321
        %7340 = vst.msk [vmem:[#allocation3 + $0x60] sm:$0xff] %vm6444, %v7323
        %7341 = vst.msk [vmem:[#allocation3 + $0x70] sm:$0xff] %vm6444, %v7325
        %v7342 = vld [vmem:[%s6363 + $0x8] sm:$0xff]
        %v7343 = vld [vmem:[%s6363 + $0x20] sm:$0xff]
        %v7344 = vld [vmem:[%s6363 + $0x38] sm:$0xff]
        %v7345 = vld [vmem:[%s6363 + $0x50] sm:$0xff]
        %v7346 = vld [vmem:[%s6363 + $0x68] sm:$0xff]
        %v7347 = vld [vmem:[%s6363 + $0x80] sm:$0xff]
        %v7348 = vld [vmem:[%s6363 + $0x98] sm:$0xff]
        %v7349 = vld [vmem:[%s6363 + $0xb0] sm:$0xff]
        %7358 = vrot.lane.b32.xlu0 %v7342, 112
        %v7359 = vpop.permute.xlu0 %7358
        %7360 = vrot.lane.b32.xlu0 %v7343, 112
        %v7361 = vpop.permute.xlu0 %7360
        %7362 = vrot.lane.b32.xlu0 %v7344, 112
        %v7363 = vpop.permute.xlu0 %7362
        %7364 = vrot.lane.b32.xlu0 %v7345, 112
        %v7365 = vpop.permute.xlu0 %7364
        %7366 = vrot.lane.b32.xlu0 %v7346, 112
        %v7367 = vpop.permute.xlu0 %7366
        %7368 = vrot.lane.b32.xlu0 %v7347, 112
        %v7369 = vpop.permute.xlu0 %7368
        %7370 = vrot.lane.b32.xlu0 %v7348, 112
        %v7371 = vpop.permute.xlu0 %7370
        %7372 = vrot.lane.b32.xlu0 %v7349, 112
        %v7373 = vpop.permute.xlu0 %7372
        %7382 = vst.msk [vmem:[#allocation3] sm:$0xff] %vm6493, %v7359
        %7383 = vst.msk [vmem:[#allocation3 + $0x10] sm:$0xff] %vm6493, %v7361
        %7384 = vst.msk [vmem:[#allocation3 + $0x20] sm:$0xff] %vm6493, %v7363
        %7385 = vst.msk [vmem:[#allocation3 + $0x30] sm:$0xff] %vm6493, %v7365
        %7386 = vst.msk [vmem:[#allocation3 + $0x40] sm:$0xff] %vm6493, %v7367
        %7387 = vst.msk [vmem:[#allocation3 + $0x50] sm:$0xff] %vm6493, %v7369
        %7388 = vst.msk [vmem:[#allocation3 + $0x60] sm:$0xff] %vm6493, %v7371
        %7389 = vst.msk [vmem:[#allocation3 + $0x70] sm:$0xff] %vm6493, %v7373
        %v7390 = vld [vmem:[%s6363 + $0x8] sm:$0xc0]
        %v7391 = vld [vmem:[%s6363 + $0x10] sm:$0x3f]
        %v7392 = vld [vmem:[%s6363 + $0x20] sm:$0xc0]
        %v7393 = vld [vmem:[%s6363 + $0x28] sm:$0x3f]
        %v7394 = vld [vmem:[%s6363 + $0x38] sm:$0xc0]
        %v7395 = vld [vmem:[%s6363 + $0x40] sm:$0x3f]
        %v7396 = vld [vmem:[%s6363 + $0x50] sm:$0xc0]
        %v7397 = vld [vmem:[%s6363 + $0x58] sm:$0x3f]
        %v7398 = vld [vmem:[%s6363 + $0x68] sm:$0xc0]
        %v7399 = vld [vmem:[%s6363 + $0x70] sm:$0x3f]
        %v7400 = vld [vmem:[%s6363 + $0x80] sm:$0xc0]
        %v7401 = vld [vmem:[%s6363 + $0x88] sm:$0x3f]
        %v7402 = vld [vmem:[%s6363 + $0x98] sm:$0xc0]
        %v7403 = vld [vmem:[%s6363 + $0xa0] sm:$0x3f]
        %v7404 = vld [vmem:[%s6363 + $0xb0] sm:$0xc0]
        %v7405 = vld [vmem:[%s6363 + $0xb8] sm:$0x3f]
        %v7422 = vrot.slane %v7390, 6
        %v7423 = vrot.slane %v7391, 6
        %v7424 = vsel %vm6078, %v7422, %v7423
        %v7425 = vrot.slane %v7392, 6
        %v7426 = vrot.slane %v7393, 6
        %v7427 = vsel %vm6078, %v7425, %v7426
        %v7428 = vrot.slane %v7394, 6
        %v7429 = vrot.slane %v7395, 6
        %v7430 = vsel %vm6078, %v7428, %v7429
        %v7431 = vrot.slane %v7396, 6
        %v7432 = vrot.slane %v7397, 6
        %v7433 = vsel %vm6078, %v7431, %v7432
        %v7434 = vrot.slane %v7398, 6
        %v7435 = vrot.slane %v7399, 6
        %v7436 = vsel %vm6078, %v7434, %v7435
        %v7437 = vrot.slane %v7400, 6
        %v7438 = vrot.slane %v7401, 6
        %v7439 = vsel %vm6078, %v7437, %v7438
        %v7440 = vrot.slane %v7402, 6
        %v7441 = vrot.slane %v7403, 6
        %v7442 = vsel %vm6078, %v7440, %v7441
        %v7443 = vrot.slane %v7404, 6
        %v7444 = vrot.slane %v7405, 6
        %v7445 = vsel %vm6078, %v7443, %v7444
        %7454 = vst.msk [vmem:[#allocation3 + $0x8] sm:$0xff] %vm5915, %v7424
        %7455 = vst.msk [vmem:[#allocation3 + $0x18] sm:$0xff] %vm5915, %v7427
        %7456 = vst.msk [vmem:[#allocation3 + $0x28] sm:$0xff] %vm5915, %v7430
        %7457 = vst.msk [vmem:[#allocation3 + $0x38] sm:$0xff] %vm5915, %v7433
        %7458 = vst.msk [vmem:[#allocation3 + $0x48] sm:$0xff] %vm5915, %v7436
        %7459 = vst.msk [vmem:[#allocation3 + $0x58] sm:$0xff] %vm5915, %v7439
        %7460 = vst.msk [vmem:[#allocation3 + $0x68] sm:$0xff] %vm5915, %v7442
        %7461 = vst.msk [vmem:[#allocation3 + $0x78] sm:$0xff] %vm5915, %v7445
        %v7462 = vld [vmem:[#allocation3] sm:$0xff]
        %v7463 = vld [vmem:[#allocation3 + $0x8] sm:$0xff]
        %v7464 = vld [vmem:[#allocation3 + $0x10] sm:$0xff]
        %v7465 = vld [vmem:[#allocation3 + $0x18] sm:$0xff]
        %v7466 = vld [vmem:[#allocation3 + $0x20] sm:$0xff]
        %v7467 = vld [vmem:[#allocation3 + $0x28] sm:$0xff]
        %v7468 = vld [vmem:[#allocation3 + $0x30] sm:$0xff]
        %v7469 = vld [vmem:[#allocation3 + $0x38] sm:$0xff]
        %v7470 = vld [vmem:[#allocation3 + $0x40] sm:$0xff]
        %v7471 = vld [vmem:[#allocation3 + $0x48] sm:$0xff]
        %v7472 = vld [vmem:[#allocation3 + $0x50] sm:$0xff]
        %v7473 = vld [vmem:[#allocation3 + $0x58] sm:$0xff]
        %v7474 = vld [vmem:[#allocation3 + $0x60] sm:$0xff]
        %v7475 = vld [vmem:[#allocation3 + $0x68] sm:$0xff]
        %v7476 = vld [vmem:[#allocation3 + $0x70] sm:$0xff]
        %v7477 = vld [vmem:[#allocation3 + $0x78] sm:$0xff]
        %v7478 = vld [vmem:[%s396] sm:$0xf]
        %v7479 = vld [vmem:[%s396 + $0x4] sm:$0xf]
        %v7480 = vld [vmem:[%s396 + $0x8] sm:$0xf]
        %v7481 = vld [vmem:[%s396 + $0xc] sm:$0xf]
        %v7482 = vld [vmem:[%s396 + $0x10] sm:$0xf]
        %v7483 = vld [vmem:[%s396 + $0x14] sm:$0xf]
        %v7484 = vld [vmem:[%s396 + $0x18] sm:$0xf]
        %v7485 = vld [vmem:[%s396 + $0x1c] sm:$0xf]
        %v7486 = vld [vmem:[%s396 + $0x20] sm:$0xf]
        %v7487 = vld [vmem:[%s396 + $0x24] sm:$0xf]
        %v7488 = vld [vmem:[%s396 + $0x28] sm:$0xf]
        %v7489 = vld [vmem:[%s396 + $0x2c] sm:$0xf]
        %v7490 = vld [vmem:[%s396 + $0x30] sm:$0xf]
        %v7491 = vld [vmem:[%s396 + $0x34] sm:$0xf]
        %v7492 = vld [vmem:[%s396 + $0x38] sm:$0xf]
        %v7493 = vld [vmem:[%s396 + $0x3c] sm:$0xf]
        %v7494 = vld [vmem:[%s396 + $0x40] sm:$0xf]
        %v7495 = vld [vmem:[%s396 + $0x44] sm:$0xf]
        %v7496 = vld [vmem:[%s399] sm:$0x1]
        %v7498 = vlaneseq
        %v7499 = vshrl.u32 %v7498, 7
        %v7500 = vsub.s32 0, %v7499
        %v7501 = vrot.slane %v7496, %v7500
        %v7521 = vunpack.c.l.b16 %v7478
        %v7522 = vunpack.c.l.b16 %v7479
        %v7523 = vunpack.c.l.b16 %v7480
        %v7524 = vunpack.c.l.b16 %v7481
        %v7525 = vunpack.c.l.b16 %v7482
        %v7526 = vunpack.c.l.b16 %v7483
        %v7527 = vunpack.c.l.b16 %v7484
        %v7528 = vunpack.c.l.b16 %v7485
        %v7529 = vunpack.c.l.b16 %v7486
        %v7530 = vunpack.c.l.b16 %v7487
        %v7531 = vunpack.c.l.b16 %v7488
        %v7532 = vunpack.c.l.b16 %v7489
        %v7533 = vunpack.c.l.b16 %v7490
        %v7534 = vunpack.c.l.b16 %v7491
        %v7535 = vunpack.c.l.b16 %v7492
        %v7536 = vunpack.c.l.b16 %v7493
        %v7537 = vunpack.c.l.b16 %v7494
        %v7538 = vunpack.c.l.b16 %v7495
        %v7539 = vpack.c.b16 %v7522, %v7521
        %v7540 = vpack.c.b16 %v7524, %v7523
        %v7541 = vpack.c.b16 %v7526, %v7525
        %v7542 = vpack.c.b16 %v7528, %v7527
        %v7543 = vpack.c.b16 %v7530, %v7529
        %v7544 = vpack.c.b16 %v7532, %v7531
        %v7545 = vpack.c.b16 %v7534, %v7533
        %v7546 = vpack.c.b16 %v7536, %v7535
        %v7547 = vpack.c.b16 %v7538, %v7537
        %v7558 = vsel %vm5915, %v7463, 0
        %v7561 = vsel %vm5915, %v7465, 0
        %v7564 = vsel %vm5915, %v7467, 0
        %v7567 = vsel %vm5915, %v7469, 0
        %v7570 = vsel %vm5915, %v7471, 0
        %v7573 = vsel %vm5915, %v7473, 0
        %v7576 = vsel %vm5915, %v7475, 0
        %v7579 = vsel %vm5915, %v7477, 0
        %7581 = vmatprep.subr.bf16.mxu0 0
        %7582 = vmatpush1.bf16.msra.mxu0 %v7539
        %7583 = vmatprep.subr.bf16.mxu0 0
        %7584 = vmatpush1.bf16.msra.mxu0 %v7540
        %7585 = vmatprep.subr.bf16.mxu0 0
        %7586 = vmatpush1.bf16.msra.mxu0 %v7541
        %7587 = vmatprep.subr.bf16.mxu0 0
        %7588 = vmatpush1.bf16.msra.mxu0 %v7542
        %7589 = vmatprep.subr.bf16.mxu0 0
        %7590 = vmatpush1.bf16.msra.mxu0 %v7543
        %7591 = vmatprep.subr.bf16.mxu0 0
        %7592 = vmatpush1.bf16.msra.mxu0 %v7544
        %7593 = vmatprep.subr.bf16.mxu0 0
        %7594 = vmatpush1.bf16.msra.mxu0 %v7545
        %7595 = vmatprep.subr.bf16.mxu0 0
        %7596 = vmatpush1.bf16.msra.mxu0 %v7546
        %7597 = vmatprep.subr.bf16.mxu0 0
        %7598 = vmatpush1.bf16.msra.mxu0 %v7547
        %7599 = vmatprep.subr.bf16.mxu0 0
        %7600 = vmatpush1.bf16.msra.mxu0 0
        %7601 = vmatprep.subr.bf16.mxu0 0
        %7602 = vmatpush1.bf16.msra.mxu0 0
        %7603 = vmatprep.subr.bf16.mxu0 0
        %7604 = vmatpush1.bf16.msra.mxu0 0
        %7605 = vmatprep.subr.bf16.mxu0 0
        %7606 = vmatpush1.bf16.msra.mxu0 0
        %7607 = vmatprep.subr.bf16.mxu0 0
        %7608 = vmatpush1.bf16.msra.mxu0 0
        %7609 = vmatprep.subr.bf16.mxu0 0
        %7610 = vmatpush1.bf16.msra.mxu0 0
        %7611 = vmatprep.subr.bf16.mxu0 0
        %7612 = vmatpush1.bf16.msra.mxu0 0
        %7613 = vmatprep.mubr.bf16.mxu0 %v7558
        %7614 = vmatmul.mubr.bf16.gmra.mrb[0].mxu0 %v7462
        %v7615 = vpop.f32.mrb[0].mxu0
        %v7616 = vadd.f32 %v7501, %v7615
        %v7617 = vpop.f32.mrb[0].mxu0
        %v7618 = vpop.f32.mrb[0].mxu0
        %v7619 = vadd.f32 %v7501, %v7618
        %v7620 = vpop.f32.mrb[0].mxu0
        %7621 = vmatprep.mubr.bf16.mxu0 %v7561
        %7622 = vmatmul.mubr.bf16.gmra.mrb[0].mxu0 %v7464
        %v7623 = vpop.f32.mrb[0].mxu0
        %v7624 = vadd.f32 %v7501, %v7623
        %v7625 = vpop.f32.mrb[0].mxu0
        %v7626 = vpop.f32.mrb[0].mxu0
        %v7627 = vadd.f32 %v7501, %v7626
        %v7628 = vpop.f32.mrb[0].mxu0
        %7629 = vmatprep.mubr.bf16.mxu0 %v7564
        %7630 = vmatmul.mubr.bf16.gmra.mrb[0].mxu0 %v7466
        %v7631 = vpop.f32.mrb[0].mxu0
        %v7632 = vadd.f32 %v7501, %v7631
        %v7633 = vpop.f32.mrb[0].mxu0
        %v7634 = vpop.f32.mrb[0].mxu0
        %v7635 = vadd.f32 %v7501, %v7634
        %v7636 = vpop.f32.mrb[0].mxu0
        %7637 = vmatprep.mubr.bf16.mxu0 %v7567
        %7638 = vmatmul.mubr.bf16.gmra.mrb[0].mxu0 %v7468
        %v7639 = vpop.f32.mrb[0].mxu0
        %v7640 = vadd.f32 %v7501, %v7639
        %v7641 = vpop.f32.mrb[0].mxu0
        %v7642 = vpop.f32.mrb[0].mxu0
        %v7643 = vadd.f32 %v7501, %v7642
        %v7644 = vpop.f32.mrb[0].mxu0
        %7645 = vmatprep.mubr.bf16.mxu0 %v7570
        %7646 = vmatmul.mubr.bf16.gmra.mrb[0].mxu0 %v7470
        %v7647 = vpop.f32.mrb[0].mxu0
        %v7648 = vadd.f32 %v7501, %v7647
        %v7649 = vpop.f32.mrb[0].mxu0
        %v7650 = vpop.f32.mrb[0].mxu0
        %v7651 = vadd.f32 %v7501, %v7650
        %v7652 = vpop.f32.mrb[0].mxu0
        %7653 = vmatprep.mubr.bf16.mxu0 %v7573
        %7654 = vmatmul.mubr.bf16.gmra.mrb[0].mxu0 %v7472
        %v7655 = vpop.f32.mrb[0].mxu0
        %v7656 = vadd.f32 %v7501, %v7655
        %v7657 = vpop.f32.mrb[0].mxu0
        %v7658 = vpop.f32.mrb[0].mxu0
        %v7659 = vadd.f32 %v7501, %v7658
        %v7660 = vpop.f32.mrb[0].mxu0
        %7661 = vmatprep.mubr.bf16.mxu0 %v7576
        %7662 = vmatmul.mubr.bf16.gmra.mrb[0].mxu0 %v7474
        %v7663 = vpop.f32.mrb[0].mxu0
        %v7664 = vadd.f32 %v7501, %v7663
        %v7665 = vpop.f32.mrb[0].mxu0
        %v7666 = vpop.f32.mrb[0].mxu0
        %v7667 = vadd.f32 %v7501, %v7666
        %v7668 = vpop.f32.mrb[0].mxu0
        %7669 = vmatprep.mubr.bf16.mxu0 %v7579
        %7670 = vmatmul.mubr.bf16.gmra.mrb[0].mxu0 %v7476
        %v7671 = vpop.f32.mrb[0].mxu0
        %v7672 = vadd.f32 %v7501, %v7671
        %v7673 = vpop.f32.mrb[0].mxu0
        %v7674 = vpop.f32.mrb[0].mxu0
        %v7675 = vadd.f32 %v7501, %v7674
        %v7676 = vpop.f32.mrb[0].mxu0
        %7677 = vdwg.mxu0
        %v7678 = vmax.f32 %v7616, 0.0
        %v7679 = vmax.f32 %v7619, 0.0
        %v7680 = vmax.f32 %v7624, 0.0
        %v7681 = vmax.f32 %v7627, 0.0
        %v7682 = vmax.f32 %v7632, 0.0
        %v7683 = vmax.f32 %v7635, 0.0
        %v7684 = vmax.f32 %v7640, 0.0
        %v7685 = vmax.f32 %v7643, 0.0
        %v7686 = vmax.f32 %v7648, 0.0
        %v7687 = vmax.f32 %v7651, 0.0
        %v7688 = vmax.f32 %v7656, 0.0
        %v7689 = vmax.f32 %v7659, 0.0
        %v7690 = vmax.f32 %v7664, 0.0
        %v7691 = vmax.f32 %v7667, 0.0
        %v7692 = vmax.f32 %v7672, 0.0
        %v7693 = vmax.f32 %v7675, 0.0
        %v7694 = vpack.c.bf16 %v7679, %v7678
        %v7695 = vpack.c.bf16 %v7681, %v7680
        %v7696 = vpack.c.bf16 %v7683, %v7682
        %v7697 = vpack.c.bf16 %v7685, %v7684
        %v7698 = vpack.c.bf16 %v7687, %v7686
        %v7699 = vpack.c.bf16 %v7689, %v7688
        %v7700 = vpack.c.bf16 %v7691, %v7690
        %v7701 = vpack.c.bf16 %v7693, %v7692
        %v7702 = vld [vmem:[%s404] sm:$0xf]
        %v7703 = vld [vmem:[%s404 + $0x4] sm:$0xf]
        %v7704 = vld [vmem:[%s407] sm:$0x1]
        %v7706 = vlaneseq
        %v7707 = vshrl.u32 %v7706, 7
        %v7708 = vsub.s32 0, %v7707
        %v7709 = vrot.slane %v7704, %v7708
        %v7713 = vunpack.c.l.b16 %v7702
        %v7714 = vunpack.c.l.b16 %v7703
        %v7715 = vpack.c.b16 %v7714, %v7713
        %v7718 = vsel %vm5915, %v7694, 0
        %v7721 = vsel %vm5915, %v7695, 0
        %v7724 = vsel %vm5915, %v7696, 0
        %v7727 = vsel %vm5915, %v7697, 0
        %v7730 = vsel %vm5915, %v7698, 0
        %v7733 = vsel %vm5915, %v7699, 0
        %v7736 = vsel %vm5915, %v7700, 0
        %v7739 = vsel %vm5915, %v7701, 0
        %7741 = vmatprep.subr.bf16.mxu0 0
        %7742 = vmatpush1.bf16.msra.mxu0 %v7715
        %7743 = vmatprep.subr.bf16.mxu0 0
        %7744 = vmatpush1.bf16.msra.mxu0 0
        %7745 = vmatprep.subr.bf16.mxu0 0
        %7746 = vmatpush1.bf16.msra.mxu0 0
        %7747 = vmatprep.subr.bf16.mxu0 0
        %7748 = vmatpush1.bf16.msra.mxu0 0
        %7749 = vmatprep.subr.bf16.mxu0 0
        %7750 = vmatpush1.bf16.msra.mxu0 0
        %7751 = vmatprep.subr.bf16.mxu0 0
        %7752 = vmatpush1.bf16.msra.mxu0 0
        %7753 = vmatprep.subr.bf16.mxu0 0
        %7754 = vmatpush1.bf16.msra.mxu0 0
        %7755 = vmatprep.subr.bf16.mxu0 0
        %7756 = vmatpush1.bf16.msra.mxu0 0
        %7757 = vmatprep.subr.bf16.mxu0 0
        %7758 = vmatpush1.bf16.msra.mxu0 0
        %7759 = vmatprep.subr.bf16.mxu0 0
        %7760 = vmatpush1.bf16.msra.mxu0 0
        %7761 = vmatprep.subr.bf16.mxu0 0
        %7762 = vmatpush1.bf16.msra.mxu0 0
        %7763 = vmatprep.subr.bf16.mxu0 0
        %7764 = vmatpush1.bf16.msra.mxu0 0
        %7765 = vmatprep.subr.bf16.mxu0 0
        %7766 = vmatpush1.bf16.msra.mxu0 0
        %7767 = vmatprep.subr.bf16.mxu0 0
        %7768 = vmatpush1.bf16.msra.mxu0 0
        %7769 = vmatprep.subr.bf16.mxu0 0
        %7770 = vmatpush1.bf16.msra.mxu0 0
        %7771 = vmatprep.subr.bf16.mxu0 0
        %7772 = vmatpush1.bf16.msra.mxu0 0
        %7773 = vmatprep.mubr.bf16.mxu0 0
        %7774 = vmatmul.mubr.bf16.gmra.mrb[0].mxu0 %v7718
        %v7775 = vpop.f32.mrb[0].mxu0
        %v7776 = vadd.f32 %v7709, %v7775
        %v7777 = vpop.f32.mrb[0].mxu0
        %v7778 = vpop.f32.mrb[0].mxu0
        %v7779 = vadd.f32 %v7709, %v7778
        %v7780 = vpop.f32.mrb[0].mxu0
        %7781 = vmatprep.mubr.bf16.mxu0 0
        %7782 = vmatmul.mubr.bf16.gmra.mrb[0].mxu0 %v7721
        %v7783 = vpop.f32.mrb[0].mxu0
        %v7784 = vadd.f32 %v7709, %v7783
        %v7785 = vpop.f32.mrb[0].mxu0
        %v7786 = vpop.f32.mrb[0].mxu0
        %v7787 = vadd.f32 %v7709, %v7786
        %v7788 = vpop.f32.mrb[0].mxu0
        %7789 = vmatprep.mubr.bf16.mxu0 0
        %7790 = vmatmul.mubr.bf16.gmra.mrb[0].mxu0 %v7724
        %v7791 = vpop.f32.mrb[0].mxu0
        %v7792 = vadd.f32 %v7709, %v7791
        %v7793 = vpop.f32.mrb[0].mxu0
        %v7794 = vpop.f32.mrb[0].mxu0
        %v7795 = vadd.f32 %v7709, %v7794
        %v7796 = vpop.f32.mrb[0].mxu0
        %7797 = vmatprep.mubr.bf16.mxu0 0
        %7798 = vmatmul.mubr.bf16.gmra.mrb[0].mxu0 %v7727
        %v7799 = vpop.f32.mrb[0].mxu0
        %v7800 = vadd.f32 %v7709, %v7799
        %v7801 = vpop.f32.mrb[0].mxu0
        %v7802 = vpop.f32.mrb[0].mxu0
        %v7803 = vadd.f32 %v7709, %v7802
        %v7804 = vpop.f32.mrb[0].mxu0
        %7805 = vmatprep.mubr.bf16.mxu0 0
        %7806 = vmatmul.mubr.bf16.gmra.mrb[0].mxu0 %v7730
        %v7807 = vpop.f32.mrb[0].mxu0
        %v7808 = vadd.f32 %v7709, %v7807
        %v7809 = vpop.f32.mrb[0].mxu0
        %v7810 = vpop.f32.mrb[0].mxu0
        %v7811 = vadd.f32 %v7709, %v7810
        %v7812 = vpop.f32.mrb[0].mxu0
        %7813 = vmatprep.mubr.bf16.mxu0 0
        %7814 = vmatmul.mubr.bf16.gmra.mrb[0].mxu0 %v7733
        %v7815 = vpop.f32.mrb[0].mxu0
        %v7816 = vadd.f32 %v7709, %v7815
        %v7817 = vpop.f32.mrb[0].mxu0
        %v7818 = vpop.f32.mrb[0].mxu0
        %v7819 = vadd.f32 %v7709, %v7818
        %v7820 = vpop.f32.mrb[0].mxu0
        %7821 = vmatprep.mubr.bf16.mxu0 0
        %7822 = vmatmul.mubr.bf16.gmra.mrb[0].mxu0 %v7736
        %v7823 = vpop.f32.mrb[0].mxu0
        %v7824 = vadd.f32 %v7709, %v7823
        %v7825 = vpop.f32.mrb[0].mxu0
        %v7826 = vpop.f32.mrb[0].mxu0
        %v7827 = vadd.f32 %v7709, %v7826
        %v7828 = vpop.f32.mrb[0].mxu0
        %7829 = vmatprep.mubr.bf16.mxu0 0
        %7830 = vmatmul.mubr.bf16.gmra.mrb[0].mxu0 %v7739
        %v7831 = vpop.f32.mrb[0].mxu0
        %v7832 = vadd.f32 %v7709, %v7831
        %v7833 = vpop.f32.mrb[0].mxu0
        %v7834 = vpop.f32.mrb[0].mxu0
        %v7835 = vadd.f32 %v7709, %v7834
        %v7836 = vpop.f32.mrb[0].mxu0
        %7837 = vdwg.mxu0
        %v7838 = vmax.f32 %v7776, 0.0
        %v7839 = vmax.f32 %v7779, 0.0
        %v7840 = vmax.f32 %v7784, 0.0
        %v7841 = vmax.f32 %v7787, 0.0
        %v7842 = vmax.f32 %v7792, 0.0
        %v7843 = vmax.f32 %v7795, 0.0
        %v7844 = vmax.f32 %v7800, 0.0
        %v7845 = vmax.f32 %v7803, 0.0
        %v7846 = vmax.f32 %v7808, 0.0
        %v7847 = vmax.f32 %v7811, 0.0
        %v7848 = vmax.f32 %v7816, 0.0
        %v7849 = vmax.f32 %v7819, 0.0
        %v7850 = vmax.f32 %v7824, 0.0
        %v7851 = vmax.f32 %v7827, 0.0
        %v7852 = vmax.f32 %v7832, 0.0
        %v7853 = vmax.f32 %v7835, 0.0
        %v7854 = vpack.c.bf16 %v7839, %v7838
        %v7855 = vpack.c.bf16 %v7841, %v7840
        %v7856 = vpack.c.bf16 %v7843, %v7842
        %v7857 = vpack.c.bf16 %v7845, %v7844
        %v7858 = vpack.c.bf16 %v7847, %v7846
        %v7859 = vpack.c.bf16 %v7849, %v7848
        %v7860 = vpack.c.bf16 %v7851, %v7850
        %v7861 = vpack.c.bf16 %v7853, %v7852
        %v7870 = vunpack.c.l.b16 %v7854
        %v7871 = vunpack.c.h.b16 %v7854
        %v7872 = vunpack.c.l.b16 %v7855
        %v7873 = vunpack.c.h.b16 %v7855
        %v7874 = vunpack.c.l.b16 %v7856
        %v7875 = vunpack.c.h.b16 %v7856
        %v7876 = vunpack.c.l.b16 %v7857
        %v7877 = vunpack.c.h.b16 %v7857
        %v7878 = vunpack.c.l.b16 %v7858
        %v7879 = vunpack.c.h.b16 %v7858
        %v7880 = vunpack.c.l.b16 %v7859
        %v7881 = vunpack.c.h.b16 %v7859
        %v7882 = vunpack.c.l.b16 %v7860
        %v7883 = vunpack.c.h.b16 %v7860
        %v7884 = vunpack.c.l.b16 %v7861
        %v7885 = vunpack.c.h.b16 %v7861
        %v7886 = vpack.c.b16 %v7870, %v7870
        %v7887 = vpack.c.b16 %v7871, %v7871
        %v7888 = vpack.c.b16 %v7872, %v7872
        %v7889 = vpack.c.b16 %v7873, %v7873
        %v7890 = vpack.c.b16 %v7874, %v7874
        %v7891 = vpack.c.b16 %v7875, %v7875
        %v7892 = vpack.c.b16 %v7876, %v7876
        %v7893 = vpack.c.b16 %v7877, %v7877
        %v7894 = vpack.c.b16 %v7878, %v7878
        %v7895 = vpack.c.b16 %v7879, %v7879
        %v7896 = vpack.c.b16 %v7880, %v7880
        %v7897 = vpack.c.b16 %v7881, %v7881
        %v7898 = vpack.c.b16 %v7882, %v7882
        %v7899 = vpack.c.b16 %v7883, %v7883
        %v7900 = vpack.c.b16 %v7884, %v7884
        %v7901 = vpack.c.b16 %v7885, %v7885
        %vm7918 = vcmask 257024
        %7919 = vst.msk [vmem:[%s416] sm:$0xf] %vm7918, %v7886
        %7920 = vst.msk [vmem:[%s416 + $0x4] sm:$0xf] %vm7918, %v7887
        %7921 = vst.msk [vmem:[%s416 + $0x8] sm:$0xf] %vm7918, %v7888
        %7922 = vst.msk [vmem:[%s416 + $0xc] sm:$0xf] %vm7918, %v7889
        %7923 = vst.msk [vmem:[%s416 + $0x10] sm:$0xf] %vm7918, %v7890
        %7924 = vst.msk [vmem:[%s416 + $0x14] sm:$0xf] %vm7918, %v7891
        %7925 = vst.msk [vmem:[%s416 + $0x18] sm:$0xf] %vm7918, %v7892
        %7926 = vst.msk [vmem:[%s416 + $0x1c] sm:$0xf] %vm7918, %v7893
        %7927 = vst.msk [vmem:[%s416 + $0x20] sm:$0xf] %vm7918, %v7894
        %7928 = vst.msk [vmem:[%s416 + $0x24] sm:$0xf] %vm7918, %v7895
        %7929 = vst.msk [vmem:[%s416 + $0x28] sm:$0xf] %vm7918, %v7896
        %7930 = vst.msk [vmem:[%s416 + $0x2c] sm:$0xf] %vm7918, %v7897
        %7931 = vst.msk [vmem:[%s416 + $0x30] sm:$0xf] %vm7918, %v7898
        %7932 = vst.msk [vmem:[%s416 + $0x34] sm:$0xf] %vm7918, %v7899
        %7933 = vst.msk [vmem:[%s416 + $0x38] sm:$0xf] %vm7918, %v7900
        %7934 = vst.msk [vmem:[%s416 + $0x3c] sm:$0xf] %vm7918, %v7901
      $region60: #{easpp_forward.4} parent=47 // pred_fallthru
        _
      %p7935 = scmp.lt.s32.totalorder %s23, 1
      %s7936 = scalar_select %p7935, %s23, 1
      %p7937 = scmp.lt.s32.totalorder %s22, 2
      %s7938 = scalar_select %p7937, %s22, 2
      %s7939 = smul.addr %s7938, 16
      %s7940 = smul.addr %s7936, 48
      %s7941 = sadd.s32 %s7939, %s7940
      %s7942 = smul.addr %s7941, 4
      %s7943 = scalar_lea.vmem %s7, %s7942
      // Predicated region
      $region61: #{easpp_forward.4} parent=47 // pred_check
        %p7944 = pneg %p234
      $region62: #{easpp_forward.4} parent=47 // pred_check_branch
        %7946 = sbr.rel (%p7944) target = $region64
      $region63: #{easpp_forward.4} parent=47 // pred_region
        _
      $region64: #{easpp_forward.4} parent=47 // pred_fallthru
        _
    $region48: #{easpp_forward.4} parent=5 // pred_fallthru
      _
    %p7947 = scmp.le.s32.totalorder 2, %s13
    // Predicated region
    $region65: #{easpp_forward.4} parent=5 // pred_check
      %p7948 = pneg %p7947
    $region66: #{easpp_forward.4} parent=5 // pred_check_branch
      %7950 = sbr.rel (%p7948) target = $region68
    $region67: #{easpp_forward.4} parent=5 // pred_region
      %s7951 = ssub.s32 %s13, 2
      // Predicated region
      $region69: #{easpp_forward.4} parent=67 // pred_check
        %p7952 = pneg %p240
      $region70: #{easpp_forward.4} parent=67 // pred_check_branch
        %7954 = sbr.rel (%p7952) target = $region72
      $region71: #{easpp_forward.4} parent=67 // pred_region
        %p7955 = scmp.lt.s32.totalorder %s25, 1
        %s7956 = scalar_select %p7955, %s25, 1
        %p7957 = scmp.lt.s32.totalorder %s24, 2
        %s7958 = scalar_select %p7957, %s24, 2
        %s7959 = smul.addr %s7958, 16
        %s7960 = smul.addr %s7956, 48
        %s7961 = sadd.s32 %s7959, %s7960
        %s7962 = smul.addr %s7961, 4
        %s7963 = scalar_lea.vmem %s7, %s7962
      $region72: #{easpp_forward.4} parent=67 // pred_fallthru
        _
    $region68: #{easpp_forward.4} parent=5 // pred_fallthru
      _
  $region6: #{easpp_forward.4} parent=0 // loop_footer
    %s17 = sadd.s32 1, %s13
  $region7: #{easpp_forward.4} parent=0 // loop_footer_branch
    %12 = sbr.rel target = $region3
  $region8: #{easpp_forward.4} parent=0 // loop_exit
    _

</llo_original>
